<compile_context>
chip_gen: v5e
topology: v5e:2x2
jax: 0.10.0
libtpu: 0.0.40
codegen_flags: <defaults>
</compile_context>

<pallas_src>
import functools

import jax
import jax.numpy as jnp
from jax.experimental import pallas as pl
from jax.experimental.pallas import tpu as pltpu

HIDDEN = 16                                   # conv1 / conv2 output channels
N_FILTERS = 32                                # gated conv channels
DIL_PER_REP = [2 ** i for i in range(11)]     # 1 .. 1024
N_REPS = 3
DILATION_RATES = DIL_PER_REP * N_REPS         # 33 layers
N_LAYERS = len(DILATION_RATES)
LAYERS_PER_REP = len(DIL_PER_REP)             # 11

# largest shift needed by any dilation, rounded up to a lane multiple so all
# interior stores stay 128-lane aligned (only the tap *loads* are unaligned).
_HALO_RAW = max(max(d // 2, d - d // 2) for d in DILATION_RATES)
HALO = ((_HALO_RAW + 127) // 128) * 128       # = 512 for d <= 1024


# ---------------------------------------------------------------------------
# Pallas kernel: whole 33-layer forward for one batch element
# ---------------------------------------------------------------------------
def wavenet_kernel(x_ref, w1f_ref, b1f_ref, w1n_ref, b1n_ref,
                   wfg_ref, bfg_ref, w2_ref, b2_ref,
                   out_ref, bufh_ref, skip_ref,
                   *, time_chunk, mm_dtype):
    length = skip_ref.shape[-1]
    tc = time_chunk
    n_chunks = length // tc

    # --- per-grid-step init: zero the halos of BOTH ping-pong slots and the
    #     skip accumulator.  Interiors are fully rewritten before being read.
    zhalo = jnp.zeros((HIDDEN, HALO), jnp.float32)
    for s in (0, 1):
        bufh_ref[s, :, 0:HALO] = zhalo
        bufh_ref[s, :, HALO + length:] = zhalo
    skip_ref[...] = jnp.zeros(skip_ref.shape, skip_ref.dtype)

    # --- layer-0 1x1 conv (1 -> 16 channels): VPU broadcast-multiply, f32 ----
    w1f = w1f_ref[...]                         # (16, 1) f32
    b1f = b1f_ref[...]                         # (16, 1) f32
    for c in range(n_chunks):
        lo = c * tc
        xr = x_ref[0, :, lo:lo + tc]                           # (1, tc) f32
        h0 = jnp.maximum(w1f * xr + b1f, 0.0)                  # (16, tc)
        bufh_ref[0, :, HALO + lo:HALO + lo + tc] = h0

    # --- fused layer: gated dilated conv + 1x1 conv + residual + skip, then
    #     the NEXT layer's 1x1 conv on x_new, written to the other bufh slot.
    def run_layer(layer_idx, dilation, src, dst):
        wfg = wfg_ref[layer_idx]               # (64, 32) mm_dtype
        bfg = bfg_ref[layer_idx]               # (64, 1)  f32
        w2 = w2_ref[layer_idx]                 # (16, 32) mm_dtype
        b2 = b2_ref[layer_idx]                 # (16, 1)  f32
        w1n = w1n_ref[layer_idx]               # (16, 16) mm_dtype (next conv1)
        b1n = b1n_ref[layer_idx]               # (16, 1)  f32

        left = dilation // 2
        right = dilation - left

        for c in range(n_chunks):
            lo = c * tc
            # dilation taps: static lane slices of the zero-halo buffer
            t0 = bufh_ref[src, :, HALO - left + lo:HALO - left + lo + tc]
            t1 = bufh_ref[src, :, HALO + right + lo:HALO + right + lo + tc]
            xx = jnp.concatenate([t0, t1], axis=0).astype(mm_dtype)   # (32, tc)
            fg = jnp.dot(wfg, xx, preferred_element_type=jnp.float32) + bfg
            # gating math in f32 (safe on all generations)
            z = jnp.tanh(fg[:N_FILTERS]) * jax.nn.sigmoid(fg[N_FILTERS:])
            z = jnp.maximum(
                jnp.dot(w2, z.astype(mm_dtype),
                        preferred_element_type=jnp.float32) + b2, 0.0)  # (16, tc)
            skip_ref[:, lo:lo + tc] = skip_ref[:, lo:lo + tc] + z
            # residual (exact f32 h) + next layer's 1x1 conv + ReLU
            h = t0 if left == 0 else bufh_ref[src, :, HALO + lo:HALO + lo + tc]
            x_new = (h + z).astype(mm_dtype)
            h_next = jnp.maximum(
                jnp.dot(w1n, x_new, preferred_element_type=jnp.float32) + b1n,
                0.0)
            bufh_ref[dst, :, HALO + lo:HALO + lo + tc] = h_next

    def rep_body(rep, carry):
        base = rep % 2                         # 11 layers/rep (odd) -> parity flips
        for j, d in enumerate(DIL_PER_REP):
            src = base if (j % 2 == 0) else 1 - base
            run_layer(rep * LAYERS_PER_REP + j, d, src, 1 - src)
        return carry

    jax.lax.fori_loop(0, N_REPS, rep_body, 0)

    out_ref[0] = jnp.maximum(skip_ref[...], 0.0).astype(out_ref.dtype)


# ---------------------------------------------------------------------------
# wrapper
# ---------------------------------------------------------------------------
def _full_spec(arr):
    zeros = (0,) * arr.ndim
    return pl.BlockSpec(arr.shape, lambda b, _z=zeros: _z)


def submodule_forward(x, packed, *, time_chunk=256):
    """x: (B, 1, L) float32 -> (B, 16, L) float32."""
    batch, in_ch, length = x.shape
    assert in_ch == 1
    assert length % 128 == 0, "sequence length must be a multiple of 128"
    tc = min(time_chunk, length)
    if length % tc:
        tc = length                               # fallback: single chunk

    (w1f, b1f, w1n, b1n, wfg, bfg, w2, b2) = packed
    mm_dtype = wfg.dtype
    params = [w1f, b1f, w1n, b1n, wfg, bfg, w2, b2]

    kernel = functools.partial(wavenet_kernel, time_chunk=tc, mm_dtype=mm_dtype)

    grid_spec = pltpu.PrefetchScalarGridSpec(
        num_scalar_prefetch=0,
        grid=(batch,),
        in_specs=[pl.BlockSpec((1, 1, length), lambda b: (b, 0, 0))]
                 + [_full_spec(p) for p in params],
        out_specs=pl.BlockSpec((1, HIDDEN, length), lambda b: (b, 0, 0)),
        scratch_shapes=[
            pltpu.VMEM((2, HIDDEN, length + 2 * HALO), jnp.float32),  # ping-pong h
            pltpu.VMEM((HIDDEN, length), jnp.float32),                # skip sum
        ],
    )
    return pl.pallas_call(
        kernel,
        out_shape=jax.ShapeDtypeStruct((batch, HIDDEN, length), jnp.float32),
        grid_spec=grid_spec,
        compiler_params=pltpu.CompilerParams(
            dimension_semantics=("parallel",),       # batch across cores (v7x)
            vmem_limit_bytes=32 * 1024 * 1024),
    )(x, *params)


def client_model_forward(x, packed, *, time_chunk=256):
    """ClientModel.forward: x (B, L, n_det) -> embeddings (B, 16, L)."""
    x_a = jnp.transpose(x[:, :, 0:1], (0, 2, 1))      # channel 0 -> (B, 1, L)
    return submodule_forward(x_a, packed, time_chunk=time_chunk)


# ---------------------------------------------------------------------------
# parameter init (PyTorch Conv1d-like shapes) and packing for the kernel
# ---------------------------------------------------------------------------
def init_params(key):
    keys = jax.random.split(key, 13)
    scale = 0.1
    n = jax.random.normal
    w1_first = n(keys[0], (HIDDEN, 1)) * scale                      # Conv1d(1,16,1)
    b1_first = n(keys[1], (HIDDEN, 1)) * scale
    w1_post = n(keys[2], (N_LAYERS - 1, HIDDEN, HIDDEN)) * scale    # Conv1d(16,16,1) x32
    b1_post = n(keys[3], (N_LAYERS - 1, HIDDEN, 1)) * scale
    wf0 = n(keys[4], (N_LAYERS, N_FILTERS, HIDDEN)) * scale         # Conv1d(16,32,2) tap0
    wf1 = n(keys[5], (N_LAYERS, N_FILTERS, HIDDEN)) * scale         # tap1
    bf = n(keys[6], (N_LAYERS, N_FILTERS, 1)) * scale
    wg0 = n(keys[7], (N_LAYERS, N_FILTERS, HIDDEN)) * scale
    wg1 = n(keys[8], (N_LAYERS, N_FILTERS, HIDDEN)) * scale
    bg = n(keys[9], (N_LAYERS, N_FILTERS, 1)) * scale
    w2 = n(keys[10], (N_LAYERS, HIDDEN, N_FILTERS)) * scale         # Conv1d(32,16,1) x33
    b2 = n(keys[11], (N_LAYERS, HIDDEN, 1)) * scale
    return tuple(jnp.asarray(p, jnp.float32) for p in
                 (w1_first, b1_first, w1_post, b1_post,
                  wf0, wf1, bf, wg0, wg1, bg, w2, b2))


def pack_params(params, mm_dtype=jnp.bfloat16):
    """Stack per-layer weights for the fused kernel; cast matmul weights.

    bf16 matmul operands are recommended on ALL TPU generations (incl. v5e);
    biases, layer-0 conv1 and all element-wise math stay f32.
    """
    (w1_first, b1_first, w1_post, b1_post,
     wf0, wf1, bf, wg0, wg1, bg, w2, b2) = params
    # conv1 of the NEXT layer, indexed by the current layer l (0..32);
    # entry 32 is a zero dummy (the last layer has no successor).
    w1_next = jnp.concatenate(
        [w1_post, jnp.zeros((1, HIDDEN, HIDDEN), jnp.float32)], axis=0)  # (33,16,16)
    b1_next = jnp.concatenate(
        [b1_post, jnp.zeros((1, HIDDEN, 1), jnp.float32)], axis=0)       # (33,16,1)
    # fused gated weights: rows [filter; gate], cols [tap0 | tap1]
    w_f = jnp.concatenate([wf0, wf1], axis=2)                       # (33,32,32)
    w_g = jnp.concatenate([wg0, wg1], axis=2)                       # (33,32,32)
    w_fg = jnp.concatenate([w_f, w_g], axis=1)                      # (33,64,32)
    b_fg = jnp.concatenate([bf, bg], axis=1)                        # (33,64,1)
    return (w1_first, b1_first,
            w1_next.astype(mm_dtype), b1_next,
            w_fg.astype(mm_dtype), b_fg,
            w2.astype(mm_dtype), b2)


# ---------------------------------------------------------------------------
# pure-JAX references (mirror PyTorch semantics)
#   mm_dtype=None         -> f32 HIGHEST-precision reference
#   mm_dtype=jnp.bfloat16 -> emulates the kernel's bf16 matmul-operand numerics
#                            (residual / skip / gating stay f32, as in the kernel)
# ---------------------------------------------------------------------------
def reference_forward(x, params, mm_dtype=None):
    (w1_first, b1_first, w1_post, b1_post,
     wf0, wf1, bf, wg0, wg1, bg, w2, b2) = params
    length = x.shape[-1]

    if mm_dtype is None:
        def mm(w, a):
            return jnp.einsum('oc,bcl->bol', w, a,
                              precision=jax.lax.Precision.HIGHEST)
    else:
        def mm(w, a):
            return jnp.einsum('oc,bcl->bol', w.astype(mm_dtype),
                              a.astype(mm_dtype),
                              preferred_element_type=jnp.float32)

    def sr(a, s):                         # a[..., t - s]
        if s == 0:
            return a
        if s >= length:
            return jnp.zeros_like(a)
        return jnp.pad(a, ((0, 0), (0, 0), (s, 0)))[..., :length]

    def sl(a, s):                         # a[..., t + s]
        if s == 0:
            return a
        if s >= length:
            return jnp.zeros_like(a)
        return jnp.pad(a, ((0, 0), (0, 0), (0, s)))[..., s:]

    skips = None
    for i, d in enumerate(DILATION_RATES):
        if i == 0:
            h = jax.nn.relu(w1_first[None] * x + b1_first[None])   # f32 elementwise
        else:
            h = jax.nn.relu(mm(w1_post[i - 1], x) + b1_post[i - 1][None])
        left, right = d // 2, d - d // 2
        x0, x1 = sr(h, left), sl(h, right)
        x_f = mm(wf0[i], x0) + mm(wf1[i], x1) + bf[i][None]
        x_g = mm(wg0[i], x0) + mm(wg1[i], x1) + bg[i][None]
        z = jnp.tanh(x_f) * jax.nn.sigmoid(x_g)
        z = jax.nn.relu(mm(w2[i], z) + b2[i][None])
        x = h + z
        skips = z if skips is None else skips + z
    return jax.nn.relu(skips)


if __name__ == "__main__":
    key = jax.random.PRNGKey(0)
    pkey, xkey = jax.random.split(key)
    params = init_params(pkey)

    B, L = 2, 256                          # small stand-in for inp_shape=(4096, 1)
    x_raw = jax.random.normal(xkey, (B, L, 2), dtype=jnp.float32)   # (B, L, n_det)
    x_a = jnp.transpose(x_raw[:, :, 0:1], (0, 2, 1))                # (B, 1, L)

    ref_f32 = jax.block_until_ready(reference_forward(x_a, params, mm_dtype=None))
    ref_b16 = jax.block_until_ready(
        reference_forward(x_a, params, mm_dtype=jnp.bfloat16))

    # bf16-matmul-operand kernel (recommended on all generations)
    out_b16 = jax.block_until_ready(
        client_model_forward(x_raw, pack_params(params, jnp.bfloat16)))
    # f32-matmul-operand kernel (accuracy-comparison path)
    out_f32 = jax.block_until_ready(
        client_model_forward(x_raw, pack_params(params, jnp.float32)))

    assert out_b16.shape == (B, HIDDEN, L), out_b16.shape
    assert out_f32.shape == (B, HIDDEN, L), out_f32.shape
    assert bool(jnp.all(jnp.isfinite(out_b16)))
    assert bool(jnp.all(jnp.isfinite(out_f32)))

    # tight check: kernel vs a reference emulating the same bf16 matmul
    # numerics -- catches indexing / weight-packing / shift / parity bugs.
    d_logic = float(jnp.max(jnp.abs(out_b16 - ref_b16)))
    assert d_logic < 3e-3, f"bf16 kernel vs matched reference: {d_logic}"

    # sanity check vs the full-f32 reference (gap is bf16 matmul rounding only,
    # since the residual/skip streams now stay f32 inside the kernel)
    ref_mag = float(jnp.max(jnp.abs(ref_f32)))
    d_dtype = float(jnp.max(jnp.abs(out_b16 - ref_f32)))
    assert d_dtype < 5e-2 * (1.0 + ref_mag), \
        f"bf16 kernel vs f32 reference: {d_dtype}"

    # f32 kernel vs f32 HIGHEST reference (MXU default-precision gap)
    d_f32 = float(jnp.max(jnp.abs(out_f32 - ref_f32)))
    assert d_f32 < 2e-2, f"f32 kernel vs f32 reference: {d_f32}"

    print("KERNEL_OK")
</pallas_src>

<mosaic_0001>
module attributes {stable_mosaic.version = 11 : i64} {
  func.func @wavenet_kernel(%arg0: i32, %arg1: memref<1x1x256xf32, #tpu.memory_space<vmem>>, %arg2: memref<16x1xf32, #tpu.memory_space<vmem>>, %arg3: memref<16x1xf32, #tpu.memory_space<vmem>>, %arg4: memref<33x16x16xbf16, #tpu.memory_space<vmem>>, %arg5: memref<33x16x1xf32, #tpu.memory_space<vmem>>, %arg6: memref<33x64x32xbf16, #tpu.memory_space<vmem>>, %arg7: memref<33x64x1xf32, #tpu.memory_space<vmem>>, %arg8: memref<33x16x32xbf16, #tpu.memory_space<vmem>>, %arg9: memref<33x16x1xf32, #tpu.memory_space<vmem>>, %arg10: memref<1x16x256xf32, #tpu.memory_space<vmem>>, %arg11: memref<2x16x1280xf32, #tpu.memory_space<vmem>>, %arg12: memref<16x256xf32, #tpu.memory_space<vmem>>) attributes {dimension_semantics = [#tpu.dimension_semantics<parallel>], iteration_bounds = array<i64: 2>, scalar_prefetch = 0 : i64, scratch_operands = 2 : i64, tpu.core_type = #tpu.core_type<tc>, window_params = [{transform_indices = @transform_0, window_bounds = array<i64: 1, 1, 256>}, {pipeline_mode = #tpu.pipeline_mode<synchronous>, transform_indices = @transform_1, window_bounds = array<i64: 16, 1>}, {pipeline_mode = #tpu.pipeline_mode<synchronous>, transform_indices = @transform_2, window_bounds = array<i64: 16, 1>}, {pipeline_mode = #tpu.pipeline_mode<synchronous>, transform_indices = @transform_3, window_bounds = array<i64: 33, 16, 16>}, {pipeline_mode = #tpu.pipeline_mode<synchronous>, transform_indices = @transform_4, window_bounds = array<i64: 33, 16, 1>}, {pipeline_mode = #tpu.pipeline_mode<synchronous>, transform_indices = @transform_5, window_bounds = array<i64: 33, 64, 32>}, {pipeline_mode = #tpu.pipeline_mode<synchronous>, transform_indices = @transform_6, window_bounds = array<i64: 33, 64, 1>}, {pipeline_mode = #tpu.pipeline_mode<synchronous>, transform_indices = @transform_7, window_bounds = array<i64: 33, 16, 32>}, {pipeline_mode = #tpu.pipeline_mode<synchronous>, transform_indices = @transform_8, window_bounds = array<i64: 33, 16, 1>}, {transform_indices = @transform_9, window_bounds = array<i64: 1, 16, 256>}]} {
    %cst = arith.constant 0.000000e+00 : f32
    %0 = vector.broadcast %cst : f32 to vector<16x512xf32>
    %c0 = arith.constant 0 : index
    %c0_0 = arith.constant 0 : index
    %c0_1 = arith.constant 0 : index
    %1 = vector.load %arg11[%c0, %c0_0, %c0_1] : memref<2x16x1280xf32, #tpu.memory_space<vmem>>, vector<1x16x512xf32>
    %2 = vector.shape_cast %1 : vector<1x16x512xf32> to vector<16x512xf32>
    %3 = vector.shape_cast %0 : vector<16x512xf32> to vector<1x16x512xf32>
    tpu.vector_store %arg11[%c0, %c0_0, %c0_1], %3 {strides = array<i32>} : memref<2x16x1280xf32, #tpu.memory_space<vmem>>, vector<1x16x512xf32>,
    %c0_2 = arith.constant 0 : index
    %c0_3 = arith.constant 0 : index
    %c768 = arith.constant 768 : index
    %4 = vector.load %arg11[%c0_2, %c0_3, %c768] : memref<2x16x1280xf32, #tpu.memory_space<vmem>>, vector<1x16x512xf32>
    %5 = vector.shape_cast %4 : vector<1x16x512xf32> to vector<16x512xf32>
    %6 = vector.shape_cast %0 : vector<16x512xf32> to vector<1x16x512xf32>
    tpu.vector_store %arg11[%c0_2, %c0_3, %c768], %6 {strides = array<i32>} : memref<2x16x1280xf32, #tpu.memory_space<vmem>>, vector<1x16x512xf32>,
    %c1 = arith.constant 1 : index
    %c0_4 = arith.constant 0 : index
    %c0_5 = arith.constant 0 : index
    %7 = vector.load %arg11[%c1, %c0_4, %c0_5] : memref<2x16x1280xf32, #tpu.memory_space<vmem>>, vector<1x16x512xf32>
    %8 = vector.shape_cast %7 : vector<1x16x512xf32> to vector<16x512xf32>
    %9 = vector.shape_cast %0 : vector<16x512xf32> to vector<1x16x512xf32>
    tpu.vector_store %arg11[%c1, %c0_4, %c0_5], %9 {strides = array<i32>} : memref<2x16x1280xf32, #tpu.memory_space<vmem>>, vector<1x16x512xf32>,
    %c1_6 = arith.constant 1 : index
    %c0_7 = arith.constant 0 : index
    %c768_8 = arith.constant 768 : index
    %10 = vector.load %arg11[%c1_6, %c0_7, %c768_8] : memref<2x16x1280xf32, #tpu.memory_space<vmem>>, vector<1x16x512xf32>
    %11 = vector.shape_cast %10 : vector<1x16x512xf32> to vector<16x512xf32>
    %12 = vector.shape_cast %0 : vector<16x512xf32> to vector<1x16x512xf32>
    tpu.vector_store %arg11[%c1_6, %c0_7, %c768_8], %12 {strides = array<i32>} : memref<2x16x1280xf32, #tpu.memory_space<vmem>>, vector<1x16x512xf32>,
    %cst_9 = arith.constant 0.000000e+00 : f32
    %13 = vector.broadcast %cst_9 : f32 to vector<16x256xf32>
    %c0_10 = arith.constant 0 : index
    %c0_11 = arith.constant 0 : index
    %14 = vector.load %arg12[%c0_10, %c0_11] : memref<16x256xf32, #tpu.memory_space<vmem>>, vector<16x256xf32>
    tpu.vector_store %arg12[%c0_10, %c0_11], %13 {strides = array<i32>} : memref<16x256xf32, #tpu.memory_space<vmem>>, vector<16x256xf32>,
    %c0_12 = arith.constant 0 : index
    %c0_13 = arith.constant 0 : index
    %15 = vector.load %arg2[%c0_12, %c0_13] : memref<16x1xf32, #tpu.memory_space<vmem>>, vector<16x1xf32>
    %c0_14 = arith.constant 0 : index
    %c0_15 = arith.constant 0 : index
    %16 = vector.load %arg3[%c0_14, %c0_15] : memref<16x1xf32, #tpu.memory_space<vmem>>, vector<16x1xf32>
    %c0_16 = arith.constant 0 : index
    %c0_17 = arith.constant 0 : index
    %c0_18 = arith.constant 0 : index
    %17 = vector.load %arg1[%c0_16, %c0_17, %c0_18] : memref<1x1x256xf32, #tpu.memory_space<vmem>>, vector<1x1x256xf32>
    %18 = vector.shape_cast %17 : vector<1x1x256xf32> to vector<1x256xf32>
    %19 = vector.broadcast %15 : vector<16x1xf32> to vector<16x256xf32>
    %20 = vector.broadcast %18 : vector<1x256xf32> to vector<16x256xf32>
    %21 = arith.mulf %19, %20 : vector<16x256xf32>
    %22 = vector.broadcast %16 : vector<16x1xf32> to vector<16x256xf32>
    %23 = arith.addf %21, %22 : vector<16x256xf32>
    %cst_19 = arith.constant 0.000000e+00 : f32
    %24 = vector.broadcast %cst_19 : f32 to vector<16x256xf32>
    %25 = arith.maximumf %23, %24 : vector<16x256xf32>
    %c0_20 = arith.constant 0 : index
    %c0_21 = arith.constant 0 : index
    %c512 = arith.constant 512 : index
    %26 = vector.load %arg11[%c0_20, %c0_21, %c512] : memref<2x16x1280xf32, #tpu.memory_space<vmem>>, vector<1x16x256xf32>
    %27 = vector.shape_cast %26 : vector<1x16x256xf32> to vector<16x256xf32>
    %28 = vector.shape_cast %25 : vector<16x256xf32> to vector<1x16x256xf32>
    tpu.vector_store %arg11[%c0_20, %c0_21, %c512], %28 {strides = array<i32>} : memref<2x16x1280xf32, #tpu.memory_space<vmem>>, vector<1x16x256xf32>,
    %c0_i32 = arith.constant 0 : i32
    %c3_i32 = arith.constant 3 : i32
    %29 = arith.addi %c0_i32, %c3_i32 : i32
    %c1_i32 = arith.constant 1 : i32
    scf.for %arg13 = %c0_i32 to %29 step %c1_i32  : i32 {
      %c2_i32 = arith.constant 2 : i32
      %c0_i32_29 = arith.constant 0 : i32
      %36 = arith.cmpi eq, %c2_i32, %c0_i32_29 : i32
      %c1_i32_30 = arith.constant 1 : i32
      %37 = arith.select %36, %c1_i32_30, %c2_i32 : i32
      %38 = arith.remsi %arg13, %37 : i32
      %c0_i32_31 = arith.constant 0 : i32
      %39 = arith.cmpi ne, %38, %c0_i32_31 : i32
      %c0_i32_32 = arith.constant 0 : i32
      %40 = arith.cmpi slt, %38, %c0_i32_32 : i32
      %c0_i32_33 = arith.constant 0 : i32
      %41 = arith.cmpi slt, %37, %c0_i32_33 : i32
      %42 = arith.xori %40, %41 : i1
      %43 = arith.andi %42, %39 : i1
      %44 = arith.addi %38, %37 : i32
      %45 = arith.select %43, %44, %38 : i32
      %c11_i32 = arith.constant 11 : i32
      %46 = arith.muli %arg13, %c11_i32 : i32
      %c0_i32_34 = arith.constant 0 : i32
      %47 = arith.addi %46, %c0_i32_34 : i32
      %c1_i32_35 = arith.constant 1 : i32
      %48 = arith.subi %c1_i32_35, %45 : i32
      %49 = arith.index_cast %47 : i32 to index
      %c0_36 = arith.constant 0 : index
      %c0_37 = arith.constant 0 : index
      %50 = vector.load %arg6[%49, %c0_36, %c0_37] : memref<33x64x32xbf16, #tpu.memory_space<vmem>>, vector<1x64x32xbf16>
      %51 = vector.shape_cast %50 : vector<1x64x32xbf16> to vector<64x32xbf16>
      %52 = arith.index_cast %47 : i32 to index
      %c0_38 = arith.constant 0 : index
      %c0_39 = arith.constant 0 : index
      %53 = vector.load %arg7[%52, %c0_38, %c0_39] : memref<33x64x1xf32, #tpu.memory_space<vmem>>, vector<1x64x1xf32>
      %54 = vector.shape_cast %53 : vector<1x64x1xf32> to vector<64x1xf32>
      %55 = arith.index_cast %47 : i32 to index
      %c0_40 = arith.constant 0 : index
      %c0_41 = arith.constant 0 : index
      %56 = vector.load %arg8[%55, %c0_40, %c0_41] : memref<33x16x32xbf16, #tpu.memory_space<vmem>>, vector<1x16x32xbf16>
      %57 = vector.shape_cast %56 : vector<1x16x32xbf16> to vector<16x32xbf16>
      %58 = arith.index_cast %47 : i32 to index
      %c0_42 = arith.constant 0 : index
      %c0_43 = arith.constant 0 : index
      %59 = vector.load %arg9[%58, %c0_42, %c0_43] : memref<33x16x1xf32, #tpu.memory_space<vmem>>, vector<1x16x1xf32>
      %60 = vector.shape_cast %59 : vector<1x16x1xf32> to vector<16x1xf32>
      %61 = arith.index_cast %47 : i32 to index
      %c0_44 = arith.constant 0 : index
      %c0_45 = arith.constant 0 : index
      %62 = vector.load %arg4[%61, %c0_44, %c0_45] : memref<33x16x16xbf16, #tpu.memory_space<vmem>>, vector<1x16x16xbf16>
      %63 = vector.shape_cast %62 : vector<1x16x16xbf16> to vector<16x16xbf16>
      %64 = arith.index_cast %47 : i32 to index
      %c0_46 = arith.constant 0 : index
      %c0_47 = arith.constant 0 : index
      %65 = vector.load %arg5[%64, %c0_46, %c0_47] : memref<33x16x1xf32, #tpu.memory_space<vmem>>, vector<1x16x1xf32>
      %66 = vector.shape_cast %65 : vector<1x16x1xf32> to vector<16x1xf32>
      %67 = arith.index_cast %45 : i32 to index
      %c0_48 = arith.constant 0 : index
      %c512_49 = arith.constant 512 : index
      %68 = vector.load %arg11[%67, %c0_48, %c512_49] : memref<2x16x1280xf32, #tpu.memory_space<vmem>>, vector<1x16x256xf32>
      %69 = vector.shape_cast %68 : vector<1x16x256xf32> to vector<16x256xf32>
      %70 = arith.index_cast %45 : i32 to index
      %c0_50 = arith.constant 0 : index
      %c513 = arith.constant 513 : index
      %71 = vector.load %arg11[%70, %c0_50, %c513] : memref<2x16x1280xf32, #tpu.memory_space<vmem>>, vector<1x16x256xf32>
      %72 = vector.shape_cast %71 : vector<1x16x256xf32> to vector<16x256xf32>
      %73 = tpu.concatenate %69, %72 in 0 : vector<16x256xf32>, vector<16x256xf32> -> vector<32x256xf32>
      %74 = arith.truncf %73 : vector<32x256xf32> to vector<32x256xbf16>
      %cst_51 = arith.constant dense<0.000000e+00> : vector<64x256xf32>
      %75 = tpu.matmul %51, %74, %cst_51 {dimension_numbers = #tpu.dot_dimension_numbers<[1], [0], [0], [1], [0, 0, 1, 1], [], []>} : vector<64x32xbf16>, vector<32x256xbf16>, vector<64x256xf32> -> vector<64x256xf32>
      %76 = vector.broadcast %54 : vector<64x1xf32> to vector<64x256xf32>
      %77 = arith.addf %75, %76 : vector<64x256xf32>
      %78 = vector.extract_strided_slice %77 {offsets = [0, 0], sizes = [32, 256], strides = [1, 1]} : vector<64x256xf32> to vector<32x256xf32>
      %79 = math.tanh %78 : vector<32x256xf32>
      %80 = vector.extract_strided_slice %77 {offsets = [32, 0], sizes = [32, 256], strides = [1, 1]} : vector<64x256xf32> to vector<32x256xf32>
      %81 = arith.negf %80 : vector<32x256xf32>
      %82 = math.exp %81 : vector<32x256xf32>
      %cst_52 = arith.constant 1.000000e+00 : f32
      %83 = vector.broadcast %cst_52 : f32 to vector<32x256xf32>
      %84 = arith.addf %83, %82 : vector<32x256xf32>
      %85 = arith.divf %83, %84 : vector<32x256xf32>
      %86 = arith.mulf %79, %85 : vector<32x256xf32>
      %87 = arith.truncf %86 : vector<32x256xf32> to vector<32x256xbf16>
      %cst_53 = arith.constant dense<0.000000e+00> : vector<16x256xf32>
      %88 = tpu.matmul %57, %87, %cst_53 {dimension_numbers = #tpu.dot_dimension_numbers<[1], [0], [0], [1], [0, 0, 1, 1], [], []>} : vector<16x32xbf16>, vector<32x256xbf16>, vector<16x256xf32> -> vector<16x256xf32>
      %89 = vector.broadcast %60 : vector<16x1xf32> to vector<16x256xf32>
      %90 = arith.addf %88, %89 : vector<16x256xf32>
      %cst_54 = arith.constant 0.000000e+00 : f32
      %91 = vector.broadcast %cst_54 : f32 to vector<16x256xf32>
      %92 = arith.maximumf %90, %91 : vector<16x256xf32>
      %c0_55 = arith.constant 0 : index
      %c0_56 = arith.constant 0 : index
      %93 = vector.load %arg12[%c0_55, %c0_56] : memref<16x256xf32, #tpu.memory_space<vmem>>, vector<16x256xf32>
      %94 = arith.addf %93, %92 : vector<16x256xf32>
      %c0_57 = arith.constant 0 : index
      %c0_58 = arith.constant 0 : index
      %95 = vector.load %arg12[%c0_57, %c0_58] : memref<16x256xf32, #tpu.memory_space<vmem>>, vector<16x256xf32>
      tpu.vector_store %arg12[%c0_57, %c0_58], %94 {strides = array<i32>} : memref<16x256xf32, #tpu.memory_space<vmem>>, vector<16x256xf32>,
      %96 = arith.addf %69, %92 : vector<16x256xf32>
      %97 = arith.truncf %96 : vector<16x256xf32> to vector<16x256xbf16>
      %cst_59 = arith.constant dense<0.000000e+00> : vector<16x256xf32>
      %98 = tpu.matmul %63, %97, %cst_59 {dimension_numbers = #tpu.dot_dimension_numbers<[1], [0], [0], [1], [0, 0, 1, 1], [], []>} : vector<16x16xbf16>, vector<16x256xbf16>, vector<16x256xf32> -> vector<16x256xf32>
      %99 = vector.broadcast %66 : vector<16x1xf32> to vector<16x256xf32>
      %100 = arith.addf %98, %99 : vector<16x256xf32>
      %cst_60 = arith.constant 0.000000e+00 : f32
      %101 = vector.broadcast %cst_60 : f32 to vector<16x256xf32>
      %102 = arith.maximumf %100, %101 : vector<16x256xf32>
      %103 = arith.index_cast %48 : i32 to index
      %c0_61 = arith.constant 0 : index
      %c512_62 = arith.constant 512 : index
      %104 = vector.load %arg11[%103, %c0_61, %c512_62] : memref<2x16x1280xf32, #tpu.memory_space<vmem>>, vector<1x16x256xf32>
      %105 = vector.shape_cast %104 : vector<1x16x256xf32> to vector<16x256xf32>
      %106 = vector.shape_cast %102 : vector<16x256xf32> to vector<1x16x256xf32>
      tpu.vector_store %arg11[%103, %c0_61, %c512_62], %106 {strides = array<i32>} : memref<2x16x1280xf32, #tpu.memory_space<vmem>>, vector<1x16x256xf32>,
      %c1_i32_63 = arith.constant 1 : i32
      %107 = arith.subi %c1_i32_63, %45 : i32
      %c11_i32_64 = arith.constant 11 : i32
      %108 = arith.muli %arg13, %c11_i32_64 : i32
      %c1_i32_65 = arith.constant 1 : i32
      %109 = arith.addi %108, %c1_i32_65 : i32
      %c1_i32_66 = arith.constant 1 : i32
      %110 = arith.subi %c1_i32_66, %107 : i32
      %111 = arith.index_cast %109 : i32 to index
      %c0_67 = arith.constant 0 : index
      %c0_68 = arith.constant 0 : index
      %112 = vector.load %arg6[%111, %c0_67, %c0_68] : memref<33x64x32xbf16, #tpu.memory_space<vmem>>, vector<1x64x32xbf16>
      %113 = vector.shape_cast %112 : vector<1x64x32xbf16> to vector<64x32xbf16>
      %114 = arith.index_cast %109 : i32 to index
      %c0_69 = arith.constant 0 : index
      %c0_70 = arith.constant 0 : index
      %115 = vector.load %arg7[%114, %c0_69, %c0_70] : memref<33x64x1xf32, #tpu.memory_space<vmem>>, vector<1x64x1xf32>
      %116 = vector.shape_cast %115 : vector<1x64x1xf32> to vector<64x1xf32>
      %117 = arith.index_cast %109 : i32 to index
      %c0_71 = arith.constant 0 : index
      %c0_72 = arith.constant 0 : index
      %118 = vector.load %arg8[%117, %c0_71, %c0_72] : memref<33x16x32xbf16, #tpu.memory_space<vmem>>, vector<1x16x32xbf16>
      %119 = vector.shape_cast %118 : vector<1x16x32xbf16> to vector<16x32xbf16>
      %120 = arith.index_cast %109 : i32 to index
      %c0_73 = arith.constant 0 : index
      %c0_74 = arith.constant 0 : index
      %121 = vector.load %arg9[%120, %c0_73, %c0_74] : memref<33x16x1xf32, #tpu.memory_space<vmem>>, vector<1x16x1xf32>
      %122 = vector.shape_cast %121 : vector<1x16x1xf32> to vector<16x1xf32>
      %123 = arith.index_cast %109 : i32 to index
      %c0_75 = arith.constant 0 : index
      %c0_76 = arith.constant 0 : index
      %124 = vector.load %arg4[%123, %c0_75, %c0_76] : memref<33x16x16xbf16, #tpu.memory_space<vmem>>, vector<1x16x16xbf16>
      %125 = vector.shape_cast %124 : vector<1x16x16xbf16> to vector<16x16xbf16>
      %126 = arith.index_cast %109 : i32 to index
      %c0_77 = arith.constant 0 : index
      %c0_78 = arith.constant 0 : index
      %127 = vector.load %arg5[%126, %c0_77, %c0_78] : memref<33x16x1xf32, #tpu.memory_space<vmem>>, vector<1x16x1xf32>
      %128 = vector.shape_cast %127 : vector<1x16x1xf32> to vector<16x1xf32>
      %129 = arith.index_cast %107 : i32 to index
      %c0_79 = arith.constant 0 : index
      %c511 = arith.constant 511 : index
      %130 = vector.load %arg11[%129, %c0_79, %c511] : memref<2x16x1280xf32, #tpu.memory_space<vmem>>, vector<1x16x256xf32>
      %131 = vector.shape_cast %130 : vector<1x16x256xf32> to vector<16x256xf32>
      %132 = arith.index_cast %107 : i32 to index
      %c0_80 = arith.constant 0 : index
      %c513_81 = arith.constant 513 : index
      %133 = vector.load %arg11[%132, %c0_80, %c513_81] : memref<2x16x1280xf32, #tpu.memory_space<vmem>>, vector<1x16x256xf32>
      %134 = vector.shape_cast %133 : vector<1x16x256xf32> to vector<16x256xf32>
      %135 = tpu.concatenate %131, %134 in 0 : vector<16x256xf32>, vector<16x256xf32> -> vector<32x256xf32>
      %136 = arith.truncf %135 : vector<32x256xf32> to vector<32x256xbf16>
      %cst_82 = arith.constant dense<0.000000e+00> : vector<64x256xf32>
      %137 = tpu.matmul %113, %136, %cst_82 {dimension_numbers = #tpu.dot_dimension_numbers<[1], [0], [0], [1], [0, 0, 1, 1], [], []>} : vector<64x32xbf16>, vector<32x256xbf16>, vector<64x256xf32> -> vector<64x256xf32>
      %138 = vector.broadcast %116 : vector<64x1xf32> to vector<64x256xf32>
      %139 = arith.addf %137, %138 : vector<64x256xf32>
      %140 = vector.extract_strided_slice %139 {offsets = [0, 0], sizes = [32, 256], strides = [1, 1]} : vector<64x256xf32> to vector<32x256xf32>
      %141 = math.tanh %140 : vector<32x256xf32>
      %142 = vector.extract_strided_slice %139 {offsets = [32, 0], sizes = [32, 256], strides = [1, 1]} : vector<64x256xf32> to vector<32x256xf32>
      %143 = arith.negf %142 : vector<32x256xf32>
      %144 = math.exp %143 : vector<32x256xf32>
      %cst_83 = arith.constant 1.000000e+00 : f32
      %145 = vector.broadcast %cst_83 : f32 to vector<32x256xf32>
      %146 = arith.addf %145, %144 : vector<32x256xf32>
      %147 = arith.divf %145, %146 : vector<32x256xf32>
      %148 = arith.mulf %141, %147 : vector<32x256xf32>
      %149 = arith.truncf %148 : vector<32x256xf32> to vector<32x256xbf16>
      %cst_84 = arith.constant dense<0.000000e+00> : vector<16x256xf32>
      %150 = tpu.matmul %119, %149, %cst_84 {dimension_numbers = #tpu.dot_dimension_numbers<[1], [0], [0], [1], [0, 0, 1, 1], [], []>} : vector<16x32xbf16>, vector<32x256xbf16>, vector<16x256xf32> -> vector<16x256xf32>
      %151 = vector.broadcast %122 : vector<16x1xf32> to vector<16x256xf32>
      %152 = arith.addf %150, %151 : vector<16x256xf32>
      %cst_85 = arith.constant 0.000000e+00 : f32
      %153 = vector.broadcast %cst_85 : f32 to vector<16x256xf32>
      %154 = arith.maximumf %152, %153 : vector<16x256xf32>
      %c0_86 = arith.constant 0 : index
      %c0_87 = arith.constant 0 : index
      %155 = vector.load %arg12[%c0_86, %c0_87] : memref<16x256xf32, #tpu.memory_space<vmem>>, vector<16x256xf32>
      %156 = arith.addf %155, %154 : vector<16x256xf32>
      %c0_88 = arith.constant 0 : index
      %c0_89 = arith.constant 0 : index
      %157 = vector.load %arg12[%c0_88, %c0_89] : memref<16x256xf32, #tpu.memory_space<vmem>>, vector<16x256xf32>
      tpu.vector_store %arg12[%c0_88, %c0_89], %156 {strides = array<i32>} : memref<16x256xf32, #tpu.memory_space<vmem>>, vector<16x256xf32>,
      %158 = arith.index_cast %107 : i32 to index
      %c0_90 = arith.constant 0 : index
      %c512_91 = arith.constant 512 : index
      %159 = vector.load %arg11[%158, %c0_90, %c512_91] : memref<2x16x1280xf32, #tpu.memory_space<vmem>>, vector<1x16x256xf32>
      %160 = vector.shape_cast %159 : vector<1x16x256xf32> to vector<16x256xf32>
      %161 = arith.addf %160, %154 : vector<16x256xf32>
      %162 = arith.truncf %161 : vector<16x256xf32> to vector<16x256xbf16>
      %cst_92 = arith.constant dense<0.000000e+00> : vector<16x256xf32>
      %163 = tpu.matmul %125, %162, %cst_92 {dimension_numbers = #tpu.dot_dimension_numbers<[1], [0], [0], [1], [0, 0, 1, 1], [], []>} : vector<16x16xbf16>, vector<16x256xbf16>, vector<16x256xf32> -> vector<16x256xf32>
      %164 = vector.broadcast %128 : vector<16x1xf32> to vector<16x256xf32>
      %165 = arith.addf %163, %164 : vector<16x256xf32>
      %cst_93 = arith.constant 0.000000e+00 : f32
      %166 = vector.broadcast %cst_93 : f32 to vector<16x256xf32>
      %167 = arith.maximumf %165, %166 : vector<16x256xf32>
      %168 = arith.index_cast %110 : i32 to index
      %c0_94 = arith.constant 0 : index
      %c512_95 = arith.constant 512 : index
      %169 = vector.load %arg11[%168, %c0_94, %c512_95] : memref<2x16x1280xf32, #tpu.memory_space<vmem>>, vector<1x16x256xf32>
      %170 = vector.shape_cast %169 : vector<1x16x256xf32> to vector<16x256xf32>
      %171 = vector.shape_cast %167 : vector<16x256xf32> to vector<1x16x256xf32>
      tpu.vector_store %arg11[%168, %c0_94, %c512_95], %171 {strides = array<i32>} : memref<2x16x1280xf32, #tpu.memory_space<vmem>>, vector<1x16x256xf32>,
      %c11_i32_96 = arith.constant 11 : i32
      %172 = arith.muli %arg13, %c11_i32_96 : i32
      %c2_i32_97 = arith.constant 2 : i32
      %173 = arith.addi %172, %c2_i32_97 : i32
      %c1_i32_98 = arith.constant 1 : i32
      %174 = arith.subi %c1_i32_98, %45 : i32
      %175 = arith.index_cast %173 : i32 to index
      %c0_99 = arith.constant 0 : index
      %c0_100 = arith.constant 0 : index
      %176 = vector.load %arg6[%175, %c0_99, %c0_100] : memref<33x64x32xbf16, #tpu.memory_space<vmem>>, vector<1x64x32xbf16>
      %177 = vector.shape_cast %176 : vector<1x64x32xbf16> to vector<64x32xbf16>
      %178 = arith.index_cast %173 : i32 to index
      %c0_101 = arith.constant 0 : index
      %c0_102 = arith.constant 0 : index
      %179 = vector.load %arg7[%178, %c0_101, %c0_102] : memref<33x64x1xf32, #tpu.memory_space<vmem>>, vector<1x64x1xf32>
      %180 = vector.shape_cast %179 : vector<1x64x1xf32> to vector<64x1xf32>
      %181 = arith.index_cast %173 : i32 to index
      %c0_103 = arith.constant 0 : index
      %c0_104 = arith.constant 0 : index
      %182 = vector.load %arg8[%181, %c0_103, %c0_104] : memref<33x16x32xbf16, #tpu.memory_space<vmem>>, vector<1x16x32xbf16>
      %183 = vector.shape_cast %182 : vector<1x16x32xbf16> to vector<16x32xbf16>
      %184 = arith.index_cast %173 : i32 to index
      %c0_105 = arith.constant 0 : index
      %c0_106 = arith.constant 0 : index
      %185 = vector.load %arg9[%184, %c0_105, %c0_106] : memref<33x16x1xf32, #tpu.memory_space<vmem>>, vector<1x16x1xf32>
      %186 = vector.shape_cast %185 : vector<1x16x1xf32> to vector<16x1xf32>
      %187 = arith.index_cast %173 : i32 to index
      %c0_107 = arith.constant 0 : index
      %c0_108 = arith.constant 0 : index
      %188 = vector.load %arg4[%187, %c0_107, %c0_108] : memref<33x16x16xbf16, #tpu.memory_space<vmem>>, vector<1x16x16xbf16>
      %189 = vector.shape_cast %188 : vector<1x16x16xbf16> to vector<16x16xbf16>
      %190 = arith.index_cast %173 : i32 to index
      %c0_109 = arith.constant 0 : index
      %c0_110 = arith.constant 0 : index
      %191 = vector.load %arg5[%190, %c0_109, %c0_110] : memref<33x16x1xf32, #tpu.memory_space<vmem>>, vector<1x16x1xf32>
      %192 = vector.shape_cast %191 : vector<1x16x1xf32> to vector<16x1xf32>
      %193 = arith.index_cast %45 : i32 to index
      %c0_111 = arith.constant 0 : index
      %c510 = arith.constant 510 : index
      %194 = vector.load %arg11[%193, %c0_111, %c510] : memref<2x16x1280xf32, #tpu.memory_space<vmem>>, vector<1x16x256xf32>
      %195 = vector.shape_cast %194 : vector<1x16x256xf32> to vector<16x256xf32>
      %196 = arith.index_cast %45 : i32 to index
      %c0_112 = arith.constant 0 : index
      %c514 = arith.constant 514 : index
      %197 = vector.load %arg11[%196, %c0_112, %c514] : memref<2x16x1280xf32, #tpu.memory_space<vmem>>, vector<1x16x256xf32>
      %198 = vector.shape_cast %197 : vector<1x16x256xf32> to vector<16x256xf32>
      %199 = tpu.concatenate %195, %198 in 0 : vector<16x256xf32>, vector<16x256xf32> -> vector<32x256xf32>
      %200 = arith.truncf %199 : vector<32x256xf32> to vector<32x256xbf16>
      %cst_113 = arith.constant dense<0.000000e+00> : vector<64x256xf32>
      %201 = tpu.matmul %177, %200, %cst_113 {dimension_numbers = #tpu.dot_dimension_numbers<[1], [0], [0], [1], [0, 0, 1, 1], [], []>} : vector<64x32xbf16>, vector<32x256xbf16>, vector<64x256xf32> -> vector<64x256xf32>
      %202 = vector.broadcast %180 : vector<64x1xf32> to vector<64x256xf32>
      %203 = arith.addf %201, %202 : vector<64x256xf32>
      %204 = vector.extract_strided_slice %203 {offsets = [0, 0], sizes = [32, 256], strides = [1, 1]} : vector<64x256xf32> to vector<32x256xf32>
      %205 = math.tanh %204 : vector<32x256xf32>
      %206 = vector.extract_strided_slice %203 {offsets = [32, 0], sizes = [32, 256], strides = [1, 1]} : vector<64x256xf32> to vector<32x256xf32>
      %207 = arith.negf %206 : vector<32x256xf32>
      %208 = math.exp %207 : vector<32x256xf32>
      %cst_114 = arith.constant 1.000000e+00 : f32
      %209 = vector.broadcast %cst_114 : f32 to vector<32x256xf32>
      %210 = arith.addf %209, %208 : vector<32x256xf32>
      %211 = arith.divf %209, %210 : vector<32x256xf32>
      %212 = arith.mulf %205, %211 : vector<32x256xf32>
      %213 = arith.truncf %212 : vector<32x256xf32> to vector<32x256xbf16>
      %cst_115 = arith.constant dense<0.000000e+00> : vector<16x256xf32>
      %214 = tpu.matmul %183, %213, %cst_115 {dimension_numbers = #tpu.dot_dimension_numbers<[1], [0], [0], [1], [0, 0, 1, 1], [], []>} : vector<16x32xbf16>, vector<32x256xbf16>, vector<16x256xf32> -> vector<16x256xf32>
      %215 = vector.broadcast %186 : vector<16x1xf32> to vector<16x256xf32>
      %216 = arith.addf %214, %215 : vector<16x256xf32>
      %cst_116 = arith.constant 0.000000e+00 : f32
      %217 = vector.broadcast %cst_116 : f32 to vector<16x256xf32>
      %218 = arith.maximumf %216, %217 : vector<16x256xf32>
      %c0_117 = arith.constant 0 : index
      %c0_118 = arith.constant 0 : index
      %219 = vector.load %arg12[%c0_117, %c0_118] : memref<16x256xf32, #tpu.memory_space<vmem>>, vector<16x256xf32>
      %220 = arith.addf %219, %218 : vector<16x256xf32>
      %c0_119 = arith.constant 0 : index
      %c0_120 = arith.constant 0 : index
      %221 = vector.load %arg12[%c0_119, %c0_120] : memref<16x256xf32, #tpu.memory_space<vmem>>, vector<16x256xf32>
      tpu.vector_store %arg12[%c0_119, %c0_120], %220 {strides = array<i32>} : memref<16x256xf32, #tpu.memory_space<vmem>>, vector<16x256xf32>,
      %222 = arith.index_cast %45 : i32 to index
      %c0_121 = arith.constant 0 : index
      %c512_122 = arith.constant 512 : index
      %223 = vector.load %arg11[%222, %c0_121, %c512_122] : memref<2x16x1280xf32, #tpu.memory_space<vmem>>, vector<1x16x256xf32>
      %224 = vector.shape_cast %223 : vector<1x16x256xf32> to vector<16x256xf32>
      %225 = arith.addf %224, %218 : vector<16x256xf32>
      %226 = arith.truncf %225 : vector<16x256xf32> to vector<16x256xbf16>
      %cst_123 = arith.constant dense<0.000000e+00> : vector<16x256xf32>
      %227 = tpu.matmul %189, %226, %cst_123 {dimension_numbers = #tpu.dot_dimension_numbers<[1], [0], [0], [1], [0, 0, 1, 1], [], []>} : vector<16x16xbf16>, vector<16x256xbf16>, vector<16x256xf32> -> vector<16x256xf32>
      %228 = vector.broadcast %192 : vector<16x1xf32> to vector<16x256xf32>
      %229 = arith.addf %227, %228 : vector<16x256xf32>
      %cst_124 = arith.constant 0.000000e+00 : f32
      %230 = vector.broadcast %cst_124 : f32 to vector<16x256xf32>
      %231 = arith.maximumf %229, %230 : vector<16x256xf32>
      %232 = arith.index_cast %174 : i32 to index
      %c0_125 = arith.constant 0 : index
      %c512_126 = arith.constant 512 : index
      %233 = vector.load %arg11[%232, %c0_125, %c512_126] : memref<2x16x1280xf32, #tpu.memory_space<vmem>>, vector<1x16x256xf32>
      %234 = vector.shape_cast %233 : vector<1x16x256xf32> to vector<16x256xf32>
      %235 = vector.shape_cast %231 : vector<16x256xf32> to vector<1x16x256xf32>
      tpu.vector_store %arg11[%232, %c0_125, %c512_126], %235 {strides = array<i32>} : memref<2x16x1280xf32, #tpu.memory_space<vmem>>, vector<1x16x256xf32>,
      %c1_i32_127 = arith.constant 1 : i32
      %236 = arith.subi %c1_i32_127, %45 : i32
      %c11_i32_128 = arith.constant 11 : i32
      %237 = arith.muli %arg13, %c11_i32_128 : i32
      %c3_i32_129 = arith.constant 3 : i32
      %238 = arith.addi %237, %c3_i32_129 : i32
      %c1_i32_130 = arith.constant 1 : i32
      %239 = arith.subi %c1_i32_130, %236 : i32
      %240 = arith.index_cast %238 : i32 to index
      %c0_131 = arith.constant 0 : index
      %c0_132 = arith.constant 0 : index
      %241 = vector.load %arg6[%240, %c0_131, %c0_132] : memref<33x64x32xbf16, #tpu.memory_space<vmem>>, vector<1x64x32xbf16>
      %242 = vector.shape_cast %241 : vector<1x64x32xbf16> to vector<64x32xbf16>
      %243 = arith.index_cast %238 : i32 to index
      %c0_133 = arith.constant 0 : index
      %c0_134 = arith.constant 0 : index
      %244 = vector.load %arg7[%243, %c0_133, %c0_134] : memref<33x64x1xf32, #tpu.memory_space<vmem>>, vector<1x64x1xf32>
      %245 = vector.shape_cast %244 : vector<1x64x1xf32> to vector<64x1xf32>
      %246 = arith.index_cast %238 : i32 to index
      %c0_135 = arith.constant 0 : index
      %c0_136 = arith.constant 0 : index
      %247 = vector.load %arg8[%246, %c0_135, %c0_136] : memref<33x16x32xbf16, #tpu.memory_space<vmem>>, vector<1x16x32xbf16>
      %248 = vector.shape_cast %247 : vector<1x16x32xbf16> to vector<16x32xbf16>
      %249 = arith.index_cast %238 : i32 to index
      %c0_137 = arith.constant 0 : index
      %c0_138 = arith.constant 0 : index
      %250 = vector.load %arg9[%249, %c0_137, %c0_138] : memref<33x16x1xf32, #tpu.memory_space<vmem>>, vector<1x16x1xf32>
      %251 = vector.shape_cast %250 : vector<1x16x1xf32> to vector<16x1xf32>
      %252 = arith.index_cast %238 : i32 to index
      %c0_139 = arith.constant 0 : index
      %c0_140 = arith.constant 0 : index
      %253 = vector.load %arg4[%252, %c0_139, %c0_140] : memref<33x16x16xbf16, #tpu.memory_space<vmem>>, vector<1x16x16xbf16>
      %254 = vector.shape_cast %253 : vector<1x16x16xbf16> to vector<16x16xbf16>
      %255 = arith.index_cast %238 : i32 to index
      %c0_141 = arith.constant 0 : index
      %c0_142 = arith.constant 0 : index
      %256 = vector.load %arg5[%255, %c0_141, %c0_142] : memref<33x16x1xf32, #tpu.memory_space<vmem>>, vector<1x16x1xf32>
      %257 = vector.shape_cast %256 : vector<1x16x1xf32> to vector<16x1xf32>
      %258 = arith.index_cast %236 : i32 to index
      %c0_143 = arith.constant 0 : index
      %c508 = arith.constant 508 : index
      %259 = vector.load %arg11[%258, %c0_143, %c508] : memref<2x16x1280xf32, #tpu.memory_space<vmem>>, vector<1x16x256xf32>
      %260 = vector.shape_cast %259 : vector<1x16x256xf32> to vector<16x256xf32>
      %261 = arith.index_cast %236 : i32 to index
      %c0_144 = arith.constant 0 : index
      %c516 = arith.constant 516 : index
      %262 = vector.load %arg11[%261, %c0_144, %c516] : memref<2x16x1280xf32, #tpu.memory_space<vmem>>, vector<1x16x256xf32>
      %263 = vector.shape_cast %262 : vector<1x16x256xf32> to vector<16x256xf32>
      %264 = tpu.concatenate %260, %263 in 0 : vector<16x256xf32>, vector<16x256xf32> -> vector<32x256xf32>
      %265 = arith.truncf %264 : vector<32x256xf32> to vector<32x256xbf16>
      %cst_145 = arith.constant dense<0.000000e+00> : vector<64x256xf32>
      %266 = tpu.matmul %242, %265, %cst_145 {dimension_numbers = #tpu.dot_dimension_numbers<[1], [0], [0], [1], [0, 0, 1, 1], [], []>} : vector<64x32xbf16>, vector<32x256xbf16>, vector<64x256xf32> -> vector<64x256xf32>
      %267 = vector.broadcast %245 : vector<64x1xf32> to vector<64x256xf32>
      %268 = arith.addf %266, %267 : vector<64x256xf32>
      %269 = vector.extract_strided_slice %268 {offsets = [0, 0], sizes = [32, 256], strides = [1, 1]} : vector<64x256xf32> to vector<32x256xf32>
      %270 = math.tanh %269 : vector<32x256xf32>
      %271 = vector.extract_strided_slice %268 {offsets = [32, 0], sizes = [32, 256], strides = [1, 1]} : vector<64x256xf32> to vector<32x256xf32>
      %272 = arith.negf %271 : vector<32x256xf32>
      %273 = math.exp %272 : vector<32x256xf32>
      %cst_146 = arith.constant 1.000000e+00 : f32
      %274 = vector.broadcast %cst_146 : f32 to vector<32x256xf32>
      %275 = arith.addf %274, %273 : vector<32x256xf32>
      %276 = arith.divf %274, %275 : vector<32x256xf32>
      %277 = arith.mulf %270, %276 : vector<32x256xf32>
      %278 = arith.truncf %277 : vector<32x256xf32> to vector<32x256xbf16>
      %cst_147 = arith.constant dense<0.000000e+00> : vector<16x256xf32>
      %279 = tpu.matmul %248, %278, %cst_147 {dimension_numbers = #tpu.dot_dimension_numbers<[1], [0], [0], [1], [0, 0, 1, 1], [], []>} : vector<16x32xbf16>, vector<32x256xbf16>, vector<16x256xf32> -> vector<16x256xf32>
      %280 = vector.broadcast %251 : vector<16x1xf32> to vector<16x256xf32>
      %281 = arith.addf %279, %280 : vector<16x256xf32>
      %cst_148 = arith.constant 0.000000e+00 : f32
      %282 = vector.broadcast %cst_148 : f32 to vector<16x256xf32>
      %283 = arith.maximumf %281, %282 : vector<16x256xf32>
      %c0_149 = arith.constant 0 : index
      %c0_150 = arith.constant 0 : index
      %284 = vector.load %arg12[%c0_149, %c0_150] : memref<16x256xf32, #tpu.memory_space<vmem>>, vector<16x256xf32>
      %285 = arith.addf %284, %283 : vector<16x256xf32>
      %c0_151 = arith.constant 0 : index
      %c0_152 = arith.constant 0 : index
      %286 = vector.load %arg12[%c0_151, %c0_152] : memref<16x256xf32, #tpu.memory_space<vmem>>, vector<16x256xf32>
      tpu.vector_store %arg12[%c0_151, %c0_152], %285 {strides = array<i32>} : memref<16x256xf32, #tpu.memory_space<vmem>>, vector<16x256xf32>,
      %287 = arith.index_cast %236 : i32 to index
      %c0_153 = arith.constant 0 : index
      %c512_154 = arith.constant 512 : index
      %288 = vector.load %arg11[%287, %c0_153, %c512_154] : memref<2x16x1280xf32, #tpu.memory_space<vmem>>, vector<1x16x256xf32>
      %289 = vector.shape_cast %288 : vector<1x16x256xf32> to vector<16x256xf32>
      %290 = arith.addf %289, %283 : vector<16x256xf32>
      %291 = arith.truncf %290 : vector<16x256xf32> to vector<16x256xbf16>
      %cst_155 = arith.constant dense<0.000000e+00> : vector<16x256xf32>
      %292 = tpu.matmul %254, %291, %cst_155 {dimension_numbers = #tpu.dot_dimension_numbers<[1], [0], [0], [1], [0, 0, 1, 1], [], []>} : vector<16x16xbf16>, vector<16x256xbf16>, vector<16x256xf32> -> vector<16x256xf32>
      %293 = vector.broadcast %257 : vector<16x1xf32> to vector<16x256xf32>
      %294 = arith.addf %292, %293 : vector<16x256xf32>
      %cst_156 = arith.constant 0.000000e+00 : f32
      %295 = vector.broadcast %cst_156 : f32 to vector<16x256xf32>
      %296 = arith.maximumf %294, %295 : vector<16x256xf32>
      %297 = arith.index_cast %239 : i32 to index
      %c0_157 = arith.constant 0 : index
      %c512_158 = arith.constant 512 : index
      %298 = vector.load %arg11[%297, %c0_157, %c512_158] : memref<2x16x1280xf32, #tpu.memory_space<vmem>>, vector<1x16x256xf32>
      %299 = vector.shape_cast %298 : vector<1x16x256xf32> to vector<16x256xf32>
      %300 = vector.shape_cast %296 : vector<16x256xf32> to vector<1x16x256xf32>
      tpu.vector_store %arg11[%297, %c0_157, %c512_158], %300 {strides = array<i32>} : memref<2x16x1280xf32, #tpu.memory_space<vmem>>, vector<1x16x256xf32>,
      %c11_i32_159 = arith.constant 11 : i32
      %301 = arith.muli %arg13, %c11_i32_159 : i32
      %c4_i32 = arith.constant 4 : i32
      %302 = arith.addi %301, %c4_i32 : i32
      %c1_i32_160 = arith.constant 1 : i32
      %303 = arith.subi %c1_i32_160, %45 : i32
      %304 = arith.index_cast %302 : i32 to index
      %c0_161 = arith.constant 0 : index
      %c0_162 = arith.constant 0 : index
      %305 = vector.load %arg6[%304, %c0_161, %c0_162] : memref<33x64x32xbf16, #tpu.memory_space<vmem>>, vector<1x64x32xbf16>
      %306 = vector.shape_cast %305 : vector<1x64x32xbf16> to vector<64x32xbf16>
      %307 = arith.index_cast %302 : i32 to index
      %c0_163 = arith.constant 0 : index
      %c0_164 = arith.constant 0 : index
      %308 = vector.load %arg7[%307, %c0_163, %c0_164] : memref<33x64x1xf32, #tpu.memory_space<vmem>>, vector<1x64x1xf32>
      %309 = vector.shape_cast %308 : vector<1x64x1xf32> to vector<64x1xf32>
      %310 = arith.index_cast %302 : i32 to index
      %c0_165 = arith.constant 0 : index
      %c0_166 = arith.constant 0 : index
      %311 = vector.load %arg8[%310, %c0_165, %c0_166] : memref<33x16x32xbf16, #tpu.memory_space<vmem>>, vector<1x16x32xbf16>
      %312 = vector.shape_cast %311 : vector<1x16x32xbf16> to vector<16x32xbf16>
      %313 = arith.index_cast %302 : i32 to index
      %c0_167 = arith.constant 0 : index
      %c0_168 = arith.constant 0 : index
      %314 = vector.load %arg9[%313, %c0_167, %c0_168] : memref<33x16x1xf32, #tpu.memory_space<vmem>>, vector<1x16x1xf32>
      %315 = vector.shape_cast %314 : vector<1x16x1xf32> to vector<16x1xf32>
      %316 = arith.index_cast %302 : i32 to index
      %c0_169 = arith.constant 0 : index
      %c0_170 = arith.constant 0 : index
      %317 = vector.load %arg4[%316, %c0_169, %c0_170] : memref<33x16x16xbf16, #tpu.memory_space<vmem>>, vector<1x16x16xbf16>
      %318 = vector.shape_cast %317 : vector<1x16x16xbf16> to vector<16x16xbf16>
      %319 = arith.index_cast %302 : i32 to index
      %c0_171 = arith.constant 0 : index
      %c0_172 = arith.constant 0 : index
      %320 = vector.load %arg5[%319, %c0_171, %c0_172] : memref<33x16x1xf32, #tpu.memory_space<vmem>>, vector<1x16x1xf32>
      %321 = vector.shape_cast %320 : vector<1x16x1xf32> to vector<16x1xf32>
      %322 = arith.index_cast %45 : i32 to index
      %c0_173 = arith.constant 0 : index
      %c504 = arith.constant 504 : index
      %323 = vector.load %arg11[%322, %c0_173, %c504] : memref<2x16x1280xf32, #tpu.memory_space<vmem>>, vector<1x16x256xf32>
      %324 = vector.shape_cast %323 : vector<1x16x256xf32> to vector<16x256xf32>
      %325 = arith.index_cast %45 : i32 to index
      %c0_174 = arith.constant 0 : index
      %c520 = arith.constant 520 : index
      %326 = vector.load %arg11[%325, %c0_174, %c520] : memref<2x16x1280xf32, #tpu.memory_space<vmem>>, vector<1x16x256xf32>
      %327 = vector.shape_cast %326 : vector<1x16x256xf32> to vector<16x256xf32>
      %328 = tpu.concatenate %324, %327 in 0 : vector<16x256xf32>, vector<16x256xf32> -> vector<32x256xf32>
      %329 = arith.truncf %328 : vector<32x256xf32> to vector<32x256xbf16>
      %cst_175 = arith.constant dense<0.000000e+00> : vector<64x256xf32>
      %330 = tpu.matmul %306, %329, %cst_175 {dimension_numbers = #tpu.dot_dimension_numbers<[1], [0], [0], [1], [0, 0, 1, 1], [], []>} : vector<64x32xbf16>, vector<32x256xbf16>, vector<64x256xf32> -> vector<64x256xf32>
      %331 = vector.broadcast %309 : vector<64x1xf32> to vector<64x256xf32>
      %332 = arith.addf %330, %331 : vector<64x256xf32>
      %333 = vector.extract_strided_slice %332 {offsets = [0, 0], sizes = [32, 256], strides = [1, 1]} : vector<64x256xf32> to vector<32x256xf32>
      %334 = math.tanh %333 : vector<32x256xf32>
      %335 = vector.extract_strided_slice %332 {offsets = [32, 0], sizes = [32, 256], strides = [1, 1]} : vector<64x256xf32> to vector<32x256xf32>
      %336 = arith.negf %335 : vector<32x256xf32>
      %337 = math.exp %336 : vector<32x256xf32>
      %cst_176 = arith.constant 1.000000e+00 : f32
      %338 = vector.broadcast %cst_176 : f32 to vector<32x256xf32>
      %339 = arith.addf %338, %337 : vector<32x256xf32>
      %340 = arith.divf %338, %339 : vector<32x256xf32>
      %341 = arith.mulf %334, %340 : vector<32x256xf32>
      %342 = arith.truncf %341 : vector<32x256xf32> to vector<32x256xbf16>
      %cst_177 = arith.constant dense<0.000000e+00> : vector<16x256xf32>
      %343 = tpu.matmul %312, %342, %cst_177 {dimension_numbers = #tpu.dot_dimension_numbers<[1], [0], [0], [1], [0, 0, 1, 1], [], []>} : vector<16x32xbf16>, vector<32x256xbf16>, vector<16x256xf32> -> vector<16x256xf32>
      %344 = vector.broadcast %315 : vector<16x1xf32> to vector<16x256xf32>
      %345 = arith.addf %343, %344 : vector<16x256xf32>
      %cst_178 = arith.constant 0.000000e+00 : f32
      %346 = vector.broadcast %cst_178 : f32 to vector<16x256xf32>
      %347 = arith.maximumf %345, %346 : vector<16x256xf32>
      %c0_179 = arith.constant 0 : index
      %c0_180 = arith.constant 0 : index
      %348 = vector.load %arg12[%c0_179, %c0_180] : memref<16x256xf32, #tpu.memory_space<vmem>>, vector<16x256xf32>
      %349 = arith.addf %348, %347 : vector<16x256xf32>
      %c0_181 = arith.constant 0 : index
      %c0_182 = arith.constant 0 : index
      %350 = vector.load %arg12[%c0_181, %c0_182] : memref<16x256xf32, #tpu.memory_space<vmem>>, vector<16x256xf32>
      tpu.vector_store %arg12[%c0_181, %c0_182], %349 {strides = array<i32>} : memref<16x256xf32, #tpu.memory_space<vmem>>, vector<16x256xf32>,
      %351 = arith.index_cast %45 : i32 to index
      %c0_183 = arith.constant 0 : index
      %c512_184 = arith.constant 512 : index
      %352 = vector.load %arg11[%351, %c0_183, %c512_184] : memref<2x16x1280xf32, #tpu.memory_space<vmem>>, vector<1x16x256xf32>
      %353 = vector.shape_cast %352 : vector<1x16x256xf32> to vector<16x256xf32>
      %354 = arith.addf %353, %347 : vector<16x256xf32>
      %355 = arith.truncf %354 : vector<16x256xf32> to vector<16x256xbf16>
      %cst_185 = arith.constant dense<0.000000e+00> : vector<16x256xf32>
      %356 = tpu.matmul %318, %355, %cst_185 {dimension_numbers = #tpu.dot_dimension_numbers<[1], [0], [0], [1], [0, 0, 1, 1], [], []>} : vector<16x16xbf16>, vector<16x256xbf16>, vector<16x256xf32> -> vector<16x256xf32>
      %357 = vector.broadcast %321 : vector<16x1xf32> to vector<16x256xf32>
      %358 = arith.addf %356, %357 : vector<16x256xf32>
      %cst_186 = arith.constant 0.000000e+00 : f32
      %359 = vector.broadcast %cst_186 : f32 to vector<16x256xf32>
      %360 = arith.maximumf %358, %359 : vector<16x256xf32>
      %361 = arith.index_cast %303 : i32 to index
      %c0_187 = arith.constant 0 : index
      %c512_188 = arith.constant 512 : index
      %362 = vector.load %arg11[%361, %c0_187, %c512_188] : memref<2x16x1280xf32, #tpu.memory_space<vmem>>, vector<1x16x256xf32>
      %363 = vector.shape_cast %362 : vector<1x16x256xf32> to vector<16x256xf32>
      %364 = vector.shape_cast %360 : vector<16x256xf32> to vector<1x16x256xf32>
      tpu.vector_store %arg11[%361, %c0_187, %c512_188], %364 {strides = array<i32>} : memref<2x16x1280xf32, #tpu.memory_space<vmem>>, vector<1x16x256xf32>,
      %c1_i32_189 = arith.constant 1 : i32
      %365 = arith.subi %c1_i32_189, %45 : i32
      %c11_i32_190 = arith.constant 11 : i32
      %366 = arith.muli %arg13, %c11_i32_190 : i32
      %c5_i32 = arith.constant 5 : i32
      %367 = arith.addi %366, %c5_i32 : i32
      %c1_i32_191 = arith.constant 1 : i32
      %368 = arith.subi %c1_i32_191, %365 : i32
      %369 = arith.index_cast %367 : i32 to index
      %c0_192 = arith.constant 0 : index
      %c0_193 = arith.constant 0 : index
      %370 = vector.load %arg6[%369, %c0_192, %c0_193] : memref<33x64x32xbf16, #tpu.memory_space<vmem>>, vector<1x64x32xbf16>
      %371 = vector.shape_cast %370 : vector<1x64x32xbf16> to vector<64x32xbf16>
      %372 = arith.index_cast %367 : i32 to index
      %c0_194 = arith.constant 0 : index
      %c0_195 = arith.constant 0 : index
      %373 = vector.load %arg7[%372, %c0_194, %c0_195] : memref<33x64x1xf32, #tpu.memory_space<vmem>>, vector<1x64x1xf32>
      %374 = vector.shape_cast %373 : vector<1x64x1xf32> to vector<64x1xf32>
      %375 = arith.index_cast %367 : i32 to index
      %c0_196 = arith.constant 0 : index
      %c0_197 = arith.constant 0 : index
      %376 = vector.load %arg8[%375, %c0_196, %c0_197] : memref<33x16x32xbf16, #tpu.memory_space<vmem>>, vector<1x16x32xbf16>
      %377 = vector.shape_cast %376 : vector<1x16x32xbf16> to vector<16x32xbf16>
      %378 = arith.index_cast %367 : i32 to index
      %c0_198 = arith.constant 0 : index
      %c0_199 = arith.constant 0 : index
      %379 = vector.load %arg9[%378, %c0_198, %c0_199] : memref<33x16x1xf32, #tpu.memory_space<vmem>>, vector<1x16x1xf32>
      %380 = vector.shape_cast %379 : vector<1x16x1xf32> to vector<16x1xf32>
      %381 = arith.index_cast %367 : i32 to index
      %c0_200 = arith.constant 0 : index
      %c0_201 = arith.constant 0 : index
      %382 = vector.load %arg4[%381, %c0_200, %c0_201] : memref<33x16x16xbf16, #tpu.memory_space<vmem>>, vector<1x16x16xbf16>
      %383 = vector.shape_cast %382 : vector<1x16x16xbf16> to vector<16x16xbf16>
      %384 = arith.index_cast %367 : i32 to index
      %c0_202 = arith.constant 0 : index
      %c0_203 = arith.constant 0 : index
      %385 = vector.load %arg5[%384, %c0_202, %c0_203] : memref<33x16x1xf32, #tpu.memory_space<vmem>>, vector<1x16x1xf32>
      %386 = vector.shape_cast %385 : vector<1x16x1xf32> to vector<16x1xf32>
      %387 = arith.index_cast %365 : i32 to index
      %c0_204 = arith.constant 0 : index
      %c496 = arith.constant 496 : index
      %388 = vector.load %arg11[%387, %c0_204, %c496] : memref<2x16x1280xf32, #tpu.memory_space<vmem>>, vector<1x16x256xf32>
      %389 = vector.shape_cast %388 : vector<1x16x256xf32> to vector<16x256xf32>
      %390 = arith.index_cast %365 : i32 to index
      %c0_205 = arith.constant 0 : index
      %c528 = arith.constant 528 : index
      %391 = vector.load %arg11[%390, %c0_205, %c528] : memref<2x16x1280xf32, #tpu.memory_space<vmem>>, vector<1x16x256xf32>
      %392 = vector.shape_cast %391 : vector<1x16x256xf32> to vector<16x256xf32>
      %393 = tpu.concatenate %389, %392 in 0 : vector<16x256xf32>, vector<16x256xf32> -> vector<32x256xf32>
      %394 = arith.truncf %393 : vector<32x256xf32> to vector<32x256xbf16>
      %cst_206 = arith.constant dense<0.000000e+00> : vector<64x256xf32>
      %395 = tpu.matmul %371, %394, %cst_206 {dimension_numbers = #tpu.dot_dimension_numbers<[1], [0], [0], [1], [0, 0, 1, 1], [], []>} : vector<64x32xbf16>, vector<32x256xbf16>, vector<64x256xf32> -> vector<64x256xf32>
      %396 = vector.broadcast %374 : vector<64x1xf32> to vector<64x256xf32>
      %397 = arith.addf %395, %396 : vector<64x256xf32>
      %398 = vector.extract_strided_slice %397 {offsets = [0, 0], sizes = [32, 256], strides = [1, 1]} : vector<64x256xf32> to vector<32x256xf32>
      %399 = math.tanh %398 : vector<32x256xf32>
      %400 = vector.extract_strided_slice %397 {offsets = [32, 0], sizes = [32, 256], strides = [1, 1]} : vector<64x256xf32> to vector<32x256xf32>
      %401 = arith.negf %400 : vector<32x256xf32>
      %402 = math.exp %401 : vector<32x256xf32>
      %cst_207 = arith.constant 1.000000e+00 : f32
      %403 = vector.broadcast %cst_207 : f32 to vector<32x256xf32>
      %404 = arith.addf %403, %402 : vector<32x256xf32>
      %405 = arith.divf %403, %404 : vector<32x256xf32>
      %406 = arith.mulf %399, %405 : vector<32x256xf32>
      %407 = arith.truncf %406 : vector<32x256xf32> to vector<32x256xbf16>
      %cst_208 = arith.constant dense<0.000000e+00> : vector<16x256xf32>
      %408 = tpu.matmul %377, %407, %cst_208 {dimension_numbers = #tpu.dot_dimension_numbers<[1], [0], [0], [1], [0, 0, 1, 1], [], []>} : vector<16x32xbf16>, vector<32x256xbf16>, vector<16x256xf32> -> vector<16x256xf32>
      %409 = vector.broadcast %380 : vector<16x1xf32> to vector<16x256xf32>
      %410 = arith.addf %408, %409 : vector<16x256xf32>
      %cst_209 = arith.constant 0.000000e+00 : f32
      %411 = vector.broadcast %cst_209 : f32 to vector<16x256xf32>
      %412 = arith.maximumf %410, %411 : vector<16x256xf32>
      %c0_210 = arith.constant 0 : index
      %c0_211 = arith.constant 0 : index
      %413 = vector.load %arg12[%c0_210, %c0_211] : memref<16x256xf32, #tpu.memory_space<vmem>>, vector<16x256xf32>
      %414 = arith.addf %413, %412 : vector<16x256xf32>
      %c0_212 = arith.constant 0 : index
      %c0_213 = arith.constant 0 : index
      %415 = vector.load %arg12[%c0_212, %c0_213] : memref<16x256xf32, #tpu.memory_space<vmem>>, vector<16x256xf32>
      tpu.vector_store %arg12[%c0_212, %c0_213], %414 {strides = array<i32>} : memref<16x256xf32, #tpu.memory_space<vmem>>, vector<16x256xf32>,
      %416 = arith.index_cast %365 : i32 to index
      %c0_214 = arith.constant 0 : index
      %c512_215 = arith.constant 512 : index
      %417 = vector.load %arg11[%416, %c0_214, %c512_215] : memref<2x16x1280xf32, #tpu.memory_space<vmem>>, vector<1x16x256xf32>
      %418 = vector.shape_cast %417 : vector<1x16x256xf32> to vector<16x256xf32>
      %419 = arith.addf %418, %412 : vector<16x256xf32>
      %420 = arith.truncf %419 : vector<16x256xf32> to vector<16x256xbf16>
      %cst_216 = arith.constant dense<0.000000e+00> : vector<16x256xf32>
      %421 = tpu.matmul %383, %420, %cst_216 {dimension_numbers = #tpu.dot_dimension_numbers<[1], [0], [0], [1], [0, 0, 1, 1], [], []>} : vector<16x16xbf16>, vector<16x256xbf16>, vector<16x256xf32> -> vector<16x256xf32>
      %422 = vector.broadcast %386 : vector<16x1xf32> to vector<16x256xf32>
      %423 = arith.addf %421, %422 : vector<16x256xf32>
      %cst_217 = arith.constant 0.000000e+00 : f32
      %424 = vector.broadcast %cst_217 : f32 to vector<16x256xf32>
      %425 = arith.maximumf %423, %424 : vector<16x256xf32>
      %426 = arith.index_cast %368 : i32 to index
      %c0_218 = arith.constant 0 : index
      %c512_219 = arith.constant 512 : index
      %427 = vector.load %arg11[%426, %c0_218, %c512_219] : memref<2x16x1280xf32, #tpu.memory_space<vmem>>, vector<1x16x256xf32>
      %428 = vector.shape_cast %427 : vector<1x16x256xf32> to vector<16x256xf32>
      %429 = vector.shape_cast %425 : vector<16x256xf32> to vector<1x16x256xf32>
      tpu.vector_store %arg11[%426, %c0_218, %c512_219], %429 {strides = array<i32>} : memref<2x16x1280xf32, #tpu.memory_space<vmem>>, vector<1x16x256xf32>,
      %c11_i32_220 = arith.constant 11 : i32
      %430 = arith.muli %arg13, %c11_i32_220 : i32
      %c6_i32 = arith.constant 6 : i32
      %431 = arith.addi %430, %c6_i32 : i32
      %c1_i32_221 = arith.constant 1 : i32
      %432 = arith.subi %c1_i32_221, %45 : i32
      %433 = arith.index_cast %431 : i32 to index
      %c0_222 = arith.constant 0 : index
      %c0_223 = arith.constant 0 : index
      %434 = vector.load %arg6[%433, %c0_222, %c0_223] : memref<33x64x32xbf16, #tpu.memory_space<vmem>>, vector<1x64x32xbf16>
      %435 = vector.shape_cast %434 : vector<1x64x32xbf16> to vector<64x32xbf16>
      %436 = arith.index_cast %431 : i32 to index
      %c0_224 = arith.constant 0 : index
      %c0_225 = arith.constant 0 : index
      %437 = vector.load %arg7[%436, %c0_224, %c0_225] : memref<33x64x1xf32, #tpu.memory_space<vmem>>, vector<1x64x1xf32>
      %438 = vector.shape_cast %437 : vector<1x64x1xf32> to vector<64x1xf32>
      %439 = arith.index_cast %431 : i32 to index
      %c0_226 = arith.constant 0 : index
      %c0_227 = arith.constant 0 : index
      %440 = vector.load %arg8[%439, %c0_226, %c0_227] : memref<33x16x32xbf16, #tpu.memory_space<vmem>>, vector<1x16x32xbf16>
      %441 = vector.shape_cast %440 : vector<1x16x32xbf16> to vector<16x32xbf16>
      %442 = arith.index_cast %431 : i32 to index
      %c0_228 = arith.constant 0 : index
      %c0_229 = arith.constant 0 : index
      %443 = vector.load %arg9[%442, %c0_228, %c0_229] : memref<33x16x1xf32, #tpu.memory_space<vmem>>, vector<1x16x1xf32>
      %444 = vector.shape_cast %443 : vector<1x16x1xf32> to vector<16x1xf32>
      %445 = arith.index_cast %431 : i32 to index
      %c0_230 = arith.constant 0 : index
      %c0_231 = arith.constant 0 : index
      %446 = vector.load %arg4[%445, %c0_230, %c0_231] : memref<33x16x16xbf16, #tpu.memory_space<vmem>>, vector<1x16x16xbf16>
      %447 = vector.shape_cast %446 : vector<1x16x16xbf16> to vector<16x16xbf16>
      %448 = arith.index_cast %431 : i32 to index
      %c0_232 = arith.constant 0 : index
      %c0_233 = arith.constant 0 : index
      %449 = vector.load %arg5[%448, %c0_232, %c0_233] : memref<33x16x1xf32, #tpu.memory_space<vmem>>, vector<1x16x1xf32>
      %450 = vector.shape_cast %449 : vector<1x16x1xf32> to vector<16x1xf32>
      %451 = arith.index_cast %45 : i32 to index
      %c0_234 = arith.constant 0 : index
      %c480 = arith.constant 480 : index
      %452 = vector.load %arg11[%451, %c0_234, %c480] : memref<2x16x1280xf32, #tpu.memory_space<vmem>>, vector<1x16x256xf32>
      %453 = vector.shape_cast %452 : vector<1x16x256xf32> to vector<16x256xf32>
      %454 = arith.index_cast %45 : i32 to index
      %c0_235 = arith.constant 0 : index
      %c544 = arith.constant 544 : index
      %455 = vector.load %arg11[%454, %c0_235, %c544] : memref<2x16x1280xf32, #tpu.memory_space<vmem>>, vector<1x16x256xf32>
      %456 = vector.shape_cast %455 : vector<1x16x256xf32> to vector<16x256xf32>
      %457 = tpu.concatenate %453, %456 in 0 : vector<16x256xf32>, vector<16x256xf32> -> vector<32x256xf32>
      %458 = arith.truncf %457 : vector<32x256xf32> to vector<32x256xbf16>
      %cst_236 = arith.constant dense<0.000000e+00> : vector<64x256xf32>
      %459 = tpu.matmul %435, %458, %cst_236 {dimension_numbers = #tpu.dot_dimension_numbers<[1], [0], [0], [1], [0, 0, 1, 1], [], []>} : vector<64x32xbf16>, vector<32x256xbf16>, vector<64x256xf32> -> vector<64x256xf32>
      %460 = vector.broadcast %438 : vector<64x1xf32> to vector<64x256xf32>
      %461 = arith.addf %459, %460 : vector<64x256xf32>
      %462 = vector.extract_strided_slice %461 {offsets = [0, 0], sizes = [32, 256], strides = [1, 1]} : vector<64x256xf32> to vector<32x256xf32>
      %463 = math.tanh %462 : vector<32x256xf32>
      %464 = vector.extract_strided_slice %461 {offsets = [32, 0], sizes = [32, 256], strides = [1, 1]} : vector<64x256xf32> to vector<32x256xf32>
      %465 = arith.negf %464 : vector<32x256xf32>
      %466 = math.exp %465 : vector<32x256xf32>
      %cst_237 = arith.constant 1.000000e+00 : f32
      %467 = vector.broadcast %cst_237 : f32 to vector<32x256xf32>
      %468 = arith.addf %467, %466 : vector<32x256xf32>
      %469 = arith.divf %467, %468 : vector<32x256xf32>
      %470 = arith.mulf %463, %469 : vector<32x256xf32>
      %471 = arith.truncf %470 : vector<32x256xf32> to vector<32x256xbf16>
      %cst_238 = arith.constant dense<0.000000e+00> : vector<16x256xf32>
      %472 = tpu.matmul %441, %471, %cst_238 {dimension_numbers = #tpu.dot_dimension_numbers<[1], [0], [0], [1], [0, 0, 1, 1], [], []>} : vector<16x32xbf16>, vector<32x256xbf16>, vector<16x256xf32> -> vector<16x256xf32>
      %473 = vector.broadcast %444 : vector<16x1xf32> to vector<16x256xf32>
      %474 = arith.addf %472, %473 : vector<16x256xf32>
      %cst_239 = arith.constant 0.000000e+00 : f32
      %475 = vector.broadcast %cst_239 : f32 to vector<16x256xf32>
      %476 = arith.maximumf %474, %475 : vector<16x256xf32>
      %c0_240 = arith.constant 0 : index
      %c0_241 = arith.constant 0 : index
      %477 = vector.load %arg12[%c0_240, %c0_241] : memref<16x256xf32, #tpu.memory_space<vmem>>, vector<16x256xf32>
      %478 = arith.addf %477, %476 : vector<16x256xf32>
      %c0_242 = arith.constant 0 : index
      %c0_243 = arith.constant 0 : index
      %479 = vector.load %arg12[%c0_242, %c0_243] : memref<16x256xf32, #tpu.memory_space<vmem>>, vector<16x256xf32>
      tpu.vector_store %arg12[%c0_242, %c0_243], %478 {strides = array<i32>} : memref<16x256xf32, #tpu.memory_space<vmem>>, vector<16x256xf32>,
      %480 = arith.index_cast %45 : i32 to index
      %c0_244 = arith.constant 0 : index
      %c512_245 = arith.constant 512 : index
      %481 = vector.load %arg11[%480, %c0_244, %c512_245] : memref<2x16x1280xf32, #tpu.memory_space<vmem>>, vector<1x16x256xf32>
      %482 = vector.shape_cast %481 : vector<1x16x256xf32> to vector<16x256xf32>
      %483 = arith.addf %482, %476 : vector<16x256xf32>
      %484 = arith.truncf %483 : vector<16x256xf32> to vector<16x256xbf16>
      %cst_246 = arith.constant dense<0.000000e+00> : vector<16x256xf32>
      %485 = tpu.matmul %447, %484, %cst_246 {dimension_numbers = #tpu.dot_dimension_numbers<[1], [0], [0], [1], [0, 0, 1, 1], [], []>} : vector<16x16xbf16>, vector<16x256xbf16>, vector<16x256xf32> -> vector<16x256xf32>
      %486 = vector.broadcast %450 : vector<16x1xf32> to vector<16x256xf32>
      %487 = arith.addf %485, %486 : vector<16x256xf32>
      %cst_247 = arith.constant 0.000000e+00 : f32
      %488 = vector.broadcast %cst_247 : f32 to vector<16x256xf32>
      %489 = arith.maximumf %487, %488 : vector<16x256xf32>
      %490 = arith.index_cast %432 : i32 to index
      %c0_248 = arith.constant 0 : index
      %c512_249 = arith.constant 512 : index
      %491 = vector.load %arg11[%490, %c0_248, %c512_249] : memref<2x16x1280xf32, #tpu.memory_space<vmem>>, vector<1x16x256xf32>
      %492 = vector.shape_cast %491 : vector<1x16x256xf32> to vector<16x256xf32>
      %493 = vector.shape_cast %489 : vector<16x256xf32> to vector<1x16x256xf32>
      tpu.vector_store %arg11[%490, %c0_248, %c512_249], %493 {strides = array<i32>} : memref<2x16x1280xf32, #tpu.memory_space<vmem>>, vector<1x16x256xf32>,
      %c1_i32_250 = arith.constant 1 : i32
      %494 = arith.subi %c1_i32_250, %45 : i32
      %c11_i32_251 = arith.constant 11 : i32
      %495 = arith.muli %arg13, %c11_i32_251 : i32
      %c7_i32 = arith.constant 7 : i32
      %496 = arith.addi %495, %c7_i32 : i32
      %c1_i32_252 = arith.constant 1 : i32
      %497 = arith.subi %c1_i32_252, %494 : i32
      %498 = arith.index_cast %496 : i32 to index
      %c0_253 = arith.constant 0 : index
      %c0_254 = arith.constant 0 : index
      %499 = vector.load %arg6[%498, %c0_253, %c0_254] : memref<33x64x32xbf16, #tpu.memory_space<vmem>>, vector<1x64x32xbf16>
      %500 = vector.shape_cast %499 : vector<1x64x32xbf16> to vector<64x32xbf16>
      %501 = arith.index_cast %496 : i32 to index
      %c0_255 = arith.constant 0 : index
      %c0_256 = arith.constant 0 : index
      %502 = vector.load %arg7[%501, %c0_255, %c0_256] : memref<33x64x1xf32, #tpu.memory_space<vmem>>, vector<1x64x1xf32>
      %503 = vector.shape_cast %502 : vector<1x64x1xf32> to vector<64x1xf32>
      %504 = arith.index_cast %496 : i32 to index
      %c0_257 = arith.constant 0 : index
      %c0_258 = arith.constant 0 : index
      %505 = vector.load %arg8[%504, %c0_257, %c0_258] : memref<33x16x32xbf16, #tpu.memory_space<vmem>>, vector<1x16x32xbf16>
      %506 = vector.shape_cast %505 : vector<1x16x32xbf16> to vector<16x32xbf16>
      %507 = arith.index_cast %496 : i32 to index
      %c0_259 = arith.constant 0 : index
      %c0_260 = arith.constant 0 : index
      %508 = vector.load %arg9[%507, %c0_259, %c0_260] : memref<33x16x1xf32, #tpu.memory_space<vmem>>, vector<1x16x1xf32>
      %509 = vector.shape_cast %508 : vector<1x16x1xf32> to vector<16x1xf32>
      %510 = arith.index_cast %496 : i32 to index
      %c0_261 = arith.constant 0 : index
      %c0_262 = arith.constant 0 : index
      %511 = vector.load %arg4[%510, %c0_261, %c0_262] : memref<33x16x16xbf16, #tpu.memory_space<vmem>>, vector<1x16x16xbf16>
      %512 = vector.shape_cast %511 : vector<1x16x16xbf16> to vector<16x16xbf16>
      %513 = arith.index_cast %496 : i32 to index
      %c0_263 = arith.constant 0 : index
      %c0_264 = arith.constant 0 : index
      %514 = vector.load %arg5[%513, %c0_263, %c0_264] : memref<33x16x1xf32, #tpu.memory_space<vmem>>, vector<1x16x1xf32>
      %515 = vector.shape_cast %514 : vector<1x16x1xf32> to vector<16x1xf32>
      %516 = arith.index_cast %494 : i32 to index
      %c0_265 = arith.constant 0 : index
      %c448 = arith.constant 448 : index
      %517 = vector.load %arg11[%516, %c0_265, %c448] : memref<2x16x1280xf32, #tpu.memory_space<vmem>>, vector<1x16x256xf32>
      %518 = vector.shape_cast %517 : vector<1x16x256xf32> to vector<16x256xf32>
      %519 = arith.index_cast %494 : i32 to index
      %c0_266 = arith.constant 0 : index
      %c576 = arith.constant 576 : index
      %520 = vector.load %arg11[%519, %c0_266, %c576] : memref<2x16x1280xf32, #tpu.memory_space<vmem>>, vector<1x16x256xf32>
      %521 = vector.shape_cast %520 : vector<1x16x256xf32> to vector<16x256xf32>
      %522 = tpu.concatenate %518, %521 in 0 : vector<16x256xf32>, vector<16x256xf32> -> vector<32x256xf32>
      %523 = arith.truncf %522 : vector<32x256xf32> to vector<32x256xbf16>
      %cst_267 = arith.constant dense<0.000000e+00> : vector<64x256xf32>
      %524 = tpu.matmul %500, %523, %cst_267 {dimension_numbers = #tpu.dot_dimension_numbers<[1], [0], [0], [1], [0, 0, 1, 1], [], []>} : vector<64x32xbf16>, vector<32x256xbf16>, vector<64x256xf32> -> vector<64x256xf32>
      %525 = vector.broadcast %503 : vector<64x1xf32> to vector<64x256xf32>
      %526 = arith.addf %524, %525 : vector<64x256xf32>
      %527 = vector.extract_strided_slice %526 {offsets = [0, 0], sizes = [32, 256], strides = [1, 1]} : vector<64x256xf32> to vector<32x256xf32>
      %528 = math.tanh %527 : vector<32x256xf32>
      %529 = vector.extract_strided_slice %526 {offsets = [32, 0], sizes = [32, 256], strides = [1, 1]} : vector<64x256xf32> to vector<32x256xf32>
      %530 = arith.negf %529 : vector<32x256xf32>
      %531 = math.exp %530 : vector<32x256xf32>
      %cst_268 = arith.constant 1.000000e+00 : f32
      %532 = vector.broadcast %cst_268 : f32 to vector<32x256xf32>
      %533 = arith.addf %532, %531 : vector<32x256xf32>
      %534 = arith.divf %532, %533 : vector<32x256xf32>
      %535 = arith.mulf %528, %534 : vector<32x256xf32>
      %536 = arith.truncf %535 : vector<32x256xf32> to vector<32x256xbf16>
      %cst_269 = arith.constant dense<0.000000e+00> : vector<16x256xf32>
      %537 = tpu.matmul %506, %536, %cst_269 {dimension_numbers = #tpu.dot_dimension_numbers<[1], [0], [0], [1], [0, 0, 1, 1], [], []>} : vector<16x32xbf16>, vector<32x256xbf16>, vector<16x256xf32> -> vector<16x256xf32>
      %538 = vector.broadcast %509 : vector<16x1xf32> to vector<16x256xf32>
      %539 = arith.addf %537, %538 : vector<16x256xf32>
      %cst_270 = arith.constant 0.000000e+00 : f32
      %540 = vector.broadcast %cst_270 : f32 to vector<16x256xf32>
      %541 = arith.maximumf %539, %540 : vector<16x256xf32>
      %c0_271 = arith.constant 0 : index
      %c0_272 = arith.constant 0 : index
      %542 = vector.load %arg12[%c0_271, %c0_272] : memref<16x256xf32, #tpu.memory_space<vmem>>, vector<16x256xf32>
      %543 = arith.addf %542, %541 : vector<16x256xf32>
      %c0_273 = arith.constant 0 : index
      %c0_274 = arith.constant 0 : index
      %544 = vector.load %arg12[%c0_273, %c0_274] : memref<16x256xf32, #tpu.memory_space<vmem>>, vector<16x256xf32>
      tpu.vector_store %arg12[%c0_273, %c0_274], %543 {strides = array<i32>} : memref<16x256xf32, #tpu.memory_space<vmem>>, vector<16x256xf32>,
      %545 = arith.index_cast %494 : i32 to index
      %c0_275 = arith.constant 0 : index
      %c512_276 = arith.constant 512 : index
      %546 = vector.load %arg11[%545, %c0_275, %c512_276] : memref<2x16x1280xf32, #tpu.memory_space<vmem>>, vector<1x16x256xf32>
      %547 = vector.shape_cast %546 : vector<1x16x256xf32> to vector<16x256xf32>
      %548 = arith.addf %547, %541 : vector<16x256xf32>
      %549 = arith.truncf %548 : vector<16x256xf32> to vector<16x256xbf16>
      %cst_277 = arith.constant dense<0.000000e+00> : vector<16x256xf32>
      %550 = tpu.matmul %512, %549, %cst_277 {dimension_numbers = #tpu.dot_dimension_numbers<[1], [0], [0], [1], [0, 0, 1, 1], [], []>} : vector<16x16xbf16>, vector<16x256xbf16>, vector<16x256xf32> -> vector<16x256xf32>
      %551 = vector.broadcast %515 : vector<16x1xf32> to vector<16x256xf32>
      %552 = arith.addf %550, %551 : vector<16x256xf32>
      %cst_278 = arith.constant 0.000000e+00 : f32
      %553 = vector.broadcast %cst_278 : f32 to vector<16x256xf32>
      %554 = arith.maximumf %552, %553 : vector<16x256xf32>
      %555 = arith.index_cast %497 : i32 to index
      %c0_279 = arith.constant 0 : index
      %c512_280 = arith.constant 512 : index
      %556 = vector.load %arg11[%555, %c0_279, %c512_280] : memref<2x16x1280xf32, #tpu.memory_space<vmem>>, vector<1x16x256xf32>
      %557 = vector.shape_cast %556 : vector<1x16x256xf32> to vector<16x256xf32>
      %558 = vector.shape_cast %554 : vector<16x256xf32> to vector<1x16x256xf32>
      tpu.vector_store %arg11[%555, %c0_279, %c512_280], %558 {strides = array<i32>} : memref<2x16x1280xf32, #tpu.memory_space<vmem>>, vector<1x16x256xf32>,
      %c11_i32_281 = arith.constant 11 : i32
      %559 = arith.muli %arg13, %c11_i32_281 : i32
      %c8_i32 = arith.constant 8 : i32
      %560 = arith.addi %559, %c8_i32 : i32
      %c1_i32_282 = arith.constant 1 : i32
      %561 = arith.subi %c1_i32_282, %45 : i32
      %562 = arith.index_cast %560 : i32 to index
      %c0_283 = arith.constant 0 : index
      %c0_284 = arith.constant 0 : index
      %563 = vector.load %arg6[%562, %c0_283, %c0_284] : memref<33x64x32xbf16, #tpu.memory_space<vmem>>, vector<1x64x32xbf16>
      %564 = vector.shape_cast %563 : vector<1x64x32xbf16> to vector<64x32xbf16>
      %565 = arith.index_cast %560 : i32 to index
      %c0_285 = arith.constant 0 : index
      %c0_286 = arith.constant 0 : index
      %566 = vector.load %arg7[%565, %c0_285, %c0_286] : memref<33x64x1xf32, #tpu.memory_space<vmem>>, vector<1x64x1xf32>
      %567 = vector.shape_cast %566 : vector<1x64x1xf32> to vector<64x1xf32>
      %568 = arith.index_cast %560 : i32 to index
      %c0_287 = arith.constant 0 : index
      %c0_288 = arith.constant 0 : index
      %569 = vector.load %arg8[%568, %c0_287, %c0_288] : memref<33x16x32xbf16, #tpu.memory_space<vmem>>, vector<1x16x32xbf16>
      %570 = vector.shape_cast %569 : vector<1x16x32xbf16> to vector<16x32xbf16>
      %571 = arith.index_cast %560 : i32 to index
      %c0_289 = arith.constant 0 : index
      %c0_290 = arith.constant 0 : index
      %572 = vector.load %arg9[%571, %c0_289, %c0_290] : memref<33x16x1xf32, #tpu.memory_space<vmem>>, vector<1x16x1xf32>
      %573 = vector.shape_cast %572 : vector<1x16x1xf32> to vector<16x1xf32>
      %574 = arith.index_cast %560 : i32 to index
      %c0_291 = arith.constant 0 : index
      %c0_292 = arith.constant 0 : index
      %575 = vector.load %arg4[%574, %c0_291, %c0_292] : memref<33x16x16xbf16, #tpu.memory_space<vmem>>, vector<1x16x16xbf16>
      %576 = vector.shape_cast %575 : vector<1x16x16xbf16> to vector<16x16xbf16>
      %577 = arith.index_cast %560 : i32 to index
      %c0_293 = arith.constant 0 : index
      %c0_294 = arith.constant 0 : index
      %578 = vector.load %arg5[%577, %c0_293, %c0_294] : memref<33x16x1xf32, #tpu.memory_space<vmem>>, vector<1x16x1xf32>
      %579 = vector.shape_cast %578 : vector<1x16x1xf32> to vector<16x1xf32>
      %580 = arith.index_cast %45 : i32 to index
      %c0_295 = arith.constant 0 : index
      %c384 = arith.constant 384 : index
      %581 = vector.load %arg11[%580, %c0_295, %c384] : memref<2x16x1280xf32, #tpu.memory_space<vmem>>, vector<1x16x256xf32>
      %582 = vector.shape_cast %581 : vector<1x16x256xf32> to vector<16x256xf32>
      %583 = arith.index_cast %45 : i32 to index
      %c0_296 = arith.constant 0 : index
      %c640 = arith.constant 640 : index
      %584 = vector.load %arg11[%583, %c0_296, %c640] : memref<2x16x1280xf32, #tpu.memory_space<vmem>>, vector<1x16x256xf32>
      %585 = vector.shape_cast %584 : vector<1x16x256xf32> to vector<16x256xf32>
      %586 = tpu.concatenate %582, %585 in 0 : vector<16x256xf32>, vector<16x256xf32> -> vector<32x256xf32>
      %587 = arith.truncf %586 : vector<32x256xf32> to vector<32x256xbf16>
      %cst_297 = arith.constant dense<0.000000e+00> : vector<64x256xf32>
      %588 = tpu.matmul %564, %587, %cst_297 {dimension_numbers = #tpu.dot_dimension_numbers<[1], [0], [0], [1], [0, 0, 1, 1], [], []>} : vector<64x32xbf16>, vector<32x256xbf16>, vector<64x256xf32> -> vector<64x256xf32>
      %589 = vector.broadcast %567 : vector<64x1xf32> to vector<64x256xf32>
      %590 = arith.addf %588, %589 : vector<64x256xf32>
      %591 = vector.extract_strided_slice %590 {offsets = [0, 0], sizes = [32, 256], strides = [1, 1]} : vector<64x256xf32> to vector<32x256xf32>
      %592 = math.tanh %591 : vector<32x256xf32>
      %593 = vector.extract_strided_slice %590 {offsets = [32, 0], sizes = [32, 256], strides = [1, 1]} : vector<64x256xf32> to vector<32x256xf32>
      %594 = arith.negf %593 : vector<32x256xf32>
      %595 = math.exp %594 : vector<32x256xf32>
      %cst_298 = arith.constant 1.000000e+00 : f32
      %596 = vector.broadcast %cst_298 : f32 to vector<32x256xf32>
      %597 = arith.addf %596, %595 : vector<32x256xf32>
      %598 = arith.divf %596, %597 : vector<32x256xf32>
      %599 = arith.mulf %592, %598 : vector<32x256xf32>
      %600 = arith.truncf %599 : vector<32x256xf32> to vector<32x256xbf16>
      %cst_299 = arith.constant dense<0.000000e+00> : vector<16x256xf32>
      %601 = tpu.matmul %570, %600, %cst_299 {dimension_numbers = #tpu.dot_dimension_numbers<[1], [0], [0], [1], [0, 0, 1, 1], [], []>} : vector<16x32xbf16>, vector<32x256xbf16>, vector<16x256xf32> -> vector<16x256xf32>
      %602 = vector.broadcast %573 : vector<16x1xf32> to vector<16x256xf32>
      %603 = arith.addf %601, %602 : vector<16x256xf32>
      %cst_300 = arith.constant 0.000000e+00 : f32
      %604 = vector.broadcast %cst_300 : f32 to vector<16x256xf32>
      %605 = arith.maximumf %603, %604 : vector<16x256xf32>
      %c0_301 = arith.constant 0 : index
      %c0_302 = arith.constant 0 : index
      %606 = vector.load %arg12[%c0_301, %c0_302] : memref<16x256xf32, #tpu.memory_space<vmem>>, vector<16x256xf32>
      %607 = arith.addf %606, %605 : vector<16x256xf32>
      %c0_303 = arith.constant 0 : index
      %c0_304 = arith.constant 0 : index
      %608 = vector.load %arg12[%c0_303, %c0_304] : memref<16x256xf32, #tpu.memory_space<vmem>>, vector<16x256xf32>
      tpu.vector_store %arg12[%c0_303, %c0_304], %607 {strides = array<i32>} : memref<16x256xf32, #tpu.memory_space<vmem>>, vector<16x256xf32>,
      %609 = arith.index_cast %45 : i32 to index
      %c0_305 = arith.constant 0 : index
      %c512_306 = arith.constant 512 : index
      %610 = vector.load %arg11[%609, %c0_305, %c512_306] : memref<2x16x1280xf32, #tpu.memory_space<vmem>>, vector<1x16x256xf32>
      %611 = vector.shape_cast %610 : vector<1x16x256xf32> to vector<16x256xf32>
      %612 = arith.addf %611, %605 : vector<16x256xf32>
      %613 = arith.truncf %612 : vector<16x256xf32> to vector<16x256xbf16>
      %cst_307 = arith.constant dense<0.000000e+00> : vector<16x256xf32>
      %614 = tpu.matmul %576, %613, %cst_307 {dimension_numbers = #tpu.dot_dimension_numbers<[1], [0], [0], [1], [0, 0, 1, 1], [], []>} : vector<16x16xbf16>, vector<16x256xbf16>, vector<16x256xf32> -> vector<16x256xf32>
      %615 = vector.broadcast %579 : vector<16x1xf32> to vector<16x256xf32>
      %616 = arith.addf %614, %615 : vector<16x256xf32>
      %cst_308 = arith.constant 0.000000e+00 : f32
      %617 = vector.broadcast %cst_308 : f32 to vector<16x256xf32>
      %618 = arith.maximumf %616, %617 : vector<16x256xf32>
      %619 = arith.index_cast %561 : i32 to index
      %c0_309 = arith.constant 0 : index
      %c512_310 = arith.constant 512 : index
      %620 = vector.load %arg11[%619, %c0_309, %c512_310] : memref<2x16x1280xf32, #tpu.memory_space<vmem>>, vector<1x16x256xf32>
      %621 = vector.shape_cast %620 : vector<1x16x256xf32> to vector<16x256xf32>
      %622 = vector.shape_cast %618 : vector<16x256xf32> to vector<1x16x256xf32>
      tpu.vector_store %arg11[%619, %c0_309, %c512_310], %622 {strides = array<i32>} : memref<2x16x1280xf32, #tpu.memory_space<vmem>>, vector<1x16x256xf32>,
      %c1_i32_311 = arith.constant 1 : i32
      %623 = arith.subi %c1_i32_311, %45 : i32
      %c11_i32_312 = arith.constant 11 : i32
      %624 = arith.muli %arg13, %c11_i32_312 : i32
      %c9_i32 = arith.constant 9 : i32
      %625 = arith.addi %624, %c9_i32 : i32
      %c1_i32_313 = arith.constant 1 : i32
      %626 = arith.subi %c1_i32_313, %623 : i32
      %627 = arith.index_cast %625 : i32 to index
      %c0_314 = arith.constant 0 : index
      %c0_315 = arith.constant 0 : index
      %628 = vector.load %arg6[%627, %c0_314, %c0_315] : memref<33x64x32xbf16, #tpu.memory_space<vmem>>, vector<1x64x32xbf16>
      %629 = vector.shape_cast %628 : vector<1x64x32xbf16> to vector<64x32xbf16>
      %630 = arith.index_cast %625 : i32 to index
      %c0_316 = arith.constant 0 : index
      %c0_317 = arith.constant 0 : index
      %631 = vector.load %arg7[%630, %c0_316, %c0_317] : memref<33x64x1xf32, #tpu.memory_space<vmem>>, vector<1x64x1xf32>
      %632 = vector.shape_cast %631 : vector<1x64x1xf32> to vector<64x1xf32>
      %633 = arith.index_cast %625 : i32 to index
      %c0_318 = arith.constant 0 : index
      %c0_319 = arith.constant 0 : index
      %634 = vector.load %arg8[%633, %c0_318, %c0_319] : memref<33x16x32xbf16, #tpu.memory_space<vmem>>, vector<1x16x32xbf16>
      %635 = vector.shape_cast %634 : vector<1x16x32xbf16> to vector<16x32xbf16>
      %636 = arith.index_cast %625 : i32 to index
      %c0_320 = arith.constant 0 : index
      %c0_321 = arith.constant 0 : index
      %637 = vector.load %arg9[%636, %c0_320, %c0_321] : memref<33x16x1xf32, #tpu.memory_space<vmem>>, vector<1x16x1xf32>
      %638 = vector.shape_cast %637 : vector<1x16x1xf32> to vector<16x1xf32>
      %639 = arith.index_cast %625 : i32 to index
      %c0_322 = arith.constant 0 : index
      %c0_323 = arith.constant 0 : index
      %640 = vector.load %arg4[%639, %c0_322, %c0_323] : memref<33x16x16xbf16, #tpu.memory_space<vmem>>, vector<1x16x16xbf16>
      %641 = vector.shape_cast %640 : vector<1x16x16xbf16> to vector<16x16xbf16>
      %642 = arith.index_cast %625 : i32 to index
      %c0_324 = arith.constant 0 : index
      %c0_325 = arith.constant 0 : index
      %643 = vector.load %arg5[%642, %c0_324, %c0_325] : memref<33x16x1xf32, #tpu.memory_space<vmem>>, vector<1x16x1xf32>
      %644 = vector.shape_cast %643 : vector<1x16x1xf32> to vector<16x1xf32>
      %645 = arith.index_cast %623 : i32 to index
      %c0_326 = arith.constant 0 : index
      %c256 = arith.constant 256 : index
      %646 = vector.load %arg11[%645, %c0_326, %c256] : memref<2x16x1280xf32, #tpu.memory_space<vmem>>, vector<1x16x256xf32>
      %647 = vector.shape_cast %646 : vector<1x16x256xf32> to vector<16x256xf32>
      %648 = arith.index_cast %623 : i32 to index
      %c0_327 = arith.constant 0 : index
      %c768_328 = arith.constant 768 : index
      %649 = vector.load %arg11[%648, %c0_327, %c768_328] : memref<2x16x1280xf32, #tpu.memory_space<vmem>>, vector<1x16x256xf32>
      %650 = vector.shape_cast %649 : vector<1x16x256xf32> to vector<16x256xf32>
      %651 = tpu.concatenate %647, %650 in 0 : vector<16x256xf32>, vector<16x256xf32> -> vector<32x256xf32>
      %652 = arith.truncf %651 : vector<32x256xf32> to vector<32x256xbf16>
      %cst_329 = arith.constant dense<0.000000e+00> : vector<64x256xf32>
      %653 = tpu.matmul %629, %652, %cst_329 {dimension_numbers = #tpu.dot_dimension_numbers<[1], [0], [0], [1], [0, 0, 1, 1], [], []>} : vector<64x32xbf16>, vector<32x256xbf16>, vector<64x256xf32> -> vector<64x256xf32>
      %654 = vector.broadcast %632 : vector<64x1xf32> to vector<64x256xf32>
      %655 = arith.addf %653, %654 : vector<64x256xf32>
      %656 = vector.extract_strided_slice %655 {offsets = [0, 0], sizes = [32, 256], strides = [1, 1]} : vector<64x256xf32> to vector<32x256xf32>
      %657 = math.tanh %656 : vector<32x256xf32>
      %658 = vector.extract_strided_slice %655 {offsets = [32, 0], sizes = [32, 256], strides = [1, 1]} : vector<64x256xf32> to vector<32x256xf32>
      %659 = arith.negf %658 : vector<32x256xf32>
      %660 = math.exp %659 : vector<32x256xf32>
      %cst_330 = arith.constant 1.000000e+00 : f32
      %661 = vector.broadcast %cst_330 : f32 to vector<32x256xf32>
      %662 = arith.addf %661, %660 : vector<32x256xf32>
      %663 = arith.divf %661, %662 : vector<32x256xf32>
      %664 = arith.mulf %657, %663 : vector<32x256xf32>
      %665 = arith.truncf %664 : vector<32x256xf32> to vector<32x256xbf16>
      %cst_331 = arith.constant dense<0.000000e+00> : vector<16x256xf32>
      %666 = tpu.matmul %635, %665, %cst_331 {dimension_numbers = #tpu.dot_dimension_numbers<[1], [0], [0], [1], [0, 0, 1, 1], [], []>} : vector<16x32xbf16>, vector<32x256xbf16>, vector<16x256xf32> -> vector<16x256xf32>
      %667 = vector.broadcast %638 : vector<16x1xf32> to vector<16x256xf32>
      %668 = arith.addf %666, %667 : vector<16x256xf32>
      %cst_332 = arith.constant 0.000000e+00 : f32
      %669 = vector.broadcast %cst_332 : f32 to vector<16x256xf32>
      %670 = arith.maximumf %668, %669 : vector<16x256xf32>
      %c0_333 = arith.constant 0 : index
      %c0_334 = arith.constant 0 : index
      %671 = vector.load %arg12[%c0_333, %c0_334] : memref<16x256xf32, #tpu.memory_space<vmem>>, vector<16x256xf32>
      %672 = arith.addf %671, %670 : vector<16x256xf32>
      %c0_335 = arith.constant 0 : index
      %c0_336 = arith.constant 0 : index
      %673 = vector.load %arg12[%c0_335, %c0_336] : memref<16x256xf32, #tpu.memory_space<vmem>>, vector<16x256xf32>
      tpu.vector_store %arg12[%c0_335, %c0_336], %672 {strides = array<i32>} : memref<16x256xf32, #tpu.memory_space<vmem>>, vector<16x256xf32>,
      %674 = arith.index_cast %623 : i32 to index
      %c0_337 = arith.constant 0 : index
      %c512_338 = arith.constant 512 : index
      %675 = vector.load %arg11[%674, %c0_337, %c512_338] : memref<2x16x1280xf32, #tpu.memory_space<vmem>>, vector<1x16x256xf32>
      %676 = vector.shape_cast %675 : vector<1x16x256xf32> to vector<16x256xf32>
      %677 = arith.addf %676, %670 : vector<16x256xf32>
      %678 = arith.truncf %677 : vector<16x256xf32> to vector<16x256xbf16>
      %cst_339 = arith.constant dense<0.000000e+00> : vector<16x256xf32>
      %679 = tpu.matmul %641, %678, %cst_339 {dimension_numbers = #tpu.dot_dimension_numbers<[1], [0], [0], [1], [0, 0, 1, 1], [], []>} : vector<16x16xbf16>, vector<16x256xbf16>, vector<16x256xf32> -> vector<16x256xf32>
      %680 = vector.broadcast %644 : vector<16x1xf32> to vector<16x256xf32>
      %681 = arith.addf %679, %680 : vector<16x256xf32>
      %cst_340 = arith.constant 0.000000e+00 : f32
      %682 = vector.broadcast %cst_340 : f32 to vector<16x256xf32>
      %683 = arith.maximumf %681, %682 : vector<16x256xf32>
      %684 = arith.index_cast %626 : i32 to index
      %c0_341 = arith.constant 0 : index
      %c512_342 = arith.constant 512 : index
      %685 = vector.load %arg11[%684, %c0_341, %c512_342] : memref<2x16x1280xf32, #tpu.memory_space<vmem>>, vector<1x16x256xf32>
      %686 = vector.shape_cast %685 : vector<1x16x256xf32> to vector<16x256xf32>
      %687 = vector.shape_cast %683 : vector<16x256xf32> to vector<1x16x256xf32>
      tpu.vector_store %arg11[%684, %c0_341, %c512_342], %687 {strides = array<i32>} : memref<2x16x1280xf32, #tpu.memory_space<vmem>>, vector<1x16x256xf32>,
      %c11_i32_343 = arith.constant 11 : i32
      %688 = arith.muli %arg13, %c11_i32_343 : i32
      %c10_i32 = arith.constant 10 : i32
      %689 = arith.addi %688, %c10_i32 : i32
      %c1_i32_344 = arith.constant 1 : i32
      %690 = arith.subi %c1_i32_344, %45 : i32
      %691 = arith.index_cast %689 : i32 to index
      %c0_345 = arith.constant 0 : index
      %c0_346 = arith.constant 0 : index
      %692 = vector.load %arg6[%691, %c0_345, %c0_346] : memref<33x64x32xbf16, #tpu.memory_space<vmem>>, vector<1x64x32xbf16>
      %693 = vector.shape_cast %692 : vector<1x64x32xbf16> to vector<64x32xbf16>
      %694 = arith.index_cast %689 : i32 to index
      %c0_347 = arith.constant 0 : index
      %c0_348 = arith.constant 0 : index
      %695 = vector.load %arg7[%694, %c0_347, %c0_348] : memref<33x64x1xf32, #tpu.memory_space<vmem>>, vector<1x64x1xf32>
      %696 = vector.shape_cast %695 : vector<1x64x1xf32> to vector<64x1xf32>
      %697 = arith.index_cast %689 : i32 to index
      %c0_349 = arith.constant 0 : index
      %c0_350 = arith.constant 0 : index
      %698 = vector.load %arg8[%697, %c0_349, %c0_350] : memref<33x16x32xbf16, #tpu.memory_space<vmem>>, vector<1x16x32xbf16>
      %699 = vector.shape_cast %698 : vector<1x16x32xbf16> to vector<16x32xbf16>
      %700 = arith.index_cast %689 : i32 to index
      %c0_351 = arith.constant 0 : index
      %c0_352 = arith.constant 0 : index
      %701 = vector.load %arg9[%700, %c0_351, %c0_352] : memref<33x16x1xf32, #tpu.memory_space<vmem>>, vector<1x16x1xf32>
      %702 = vector.shape_cast %701 : vector<1x16x1xf32> to vector<16x1xf32>
      %703 = arith.index_cast %689 : i32 to index
      %c0_353 = arith.constant 0 : index
      %c0_354 = arith.constant 0 : index
      %704 = vector.load %arg4[%703, %c0_353, %c0_354] : memref<33x16x16xbf16, #tpu.memory_space<vmem>>, vector<1x16x16xbf16>
      %705 = vector.shape_cast %704 : vector<1x16x16xbf16> to vector<16x16xbf16>
      %706 = arith.index_cast %689 : i32 to index
      %c0_355 = arith.constant 0 : index
      %c0_356 = arith.constant 0 : index
      %707 = vector.load %arg5[%706, %c0_355, %c0_356] : memref<33x16x1xf32, #tpu.memory_space<vmem>>, vector<1x16x1xf32>
      %708 = vector.shape_cast %707 : vector<1x16x1xf32> to vector<16x1xf32>
      %709 = arith.index_cast %45 : i32 to index
      %c0_357 = arith.constant 0 : index
      %c0_358 = arith.constant 0 : index
      %710 = vector.load %arg11[%709, %c0_357, %c0_358] : memref<2x16x1280xf32, #tpu.memory_space<vmem>>, vector<1x16x256xf32>
      %711 = vector.shape_cast %710 : vector<1x16x256xf32> to vector<16x256xf32>
      %712 = arith.index_cast %45 : i32 to index
      %c0_359 = arith.constant 0 : index
      %c1024 = arith.constant 1024 : index
      %713 = vector.load %arg11[%712, %c0_359, %c1024] : memref<2x16x1280xf32, #tpu.memory_space<vmem>>, vector<1x16x256xf32>
      %714 = vector.shape_cast %713 : vector<1x16x256xf32> to vector<16x256xf32>
      %715 = tpu.concatenate %711, %714 in 0 : vector<16x256xf32>, vector<16x256xf32> -> vector<32x256xf32>
      %716 = arith.truncf %715 : vector<32x256xf32> to vector<32x256xbf16>
      %cst_360 = arith.constant dense<0.000000e+00> : vector<64x256xf32>
      %717 = tpu.matmul %693, %716, %cst_360 {dimension_numbers = #tpu.dot_dimension_numbers<[1], [0], [0], [1], [0, 0, 1, 1], [], []>} : vector<64x32xbf16>, vector<32x256xbf16>, vector<64x256xf32> -> vector<64x256xf32>
      %718 = vector.broadcast %696 : vector<64x1xf32> to vector<64x256xf32>
      %719 = arith.addf %717, %718 : vector<64x256xf32>
      %720 = vector.extract_strided_slice %719 {offsets = [0, 0], sizes = [32, 256], strides = [1, 1]} : vector<64x256xf32> to vector<32x256xf32>
      %721 = math.tanh %720 : vector<32x256xf32>
      %722 = vector.extract_strided_slice %719 {offsets = [32, 0], sizes = [32, 256], strides = [1, 1]} : vector<64x256xf32> to vector<32x256xf32>
      %723 = arith.negf %722 : vector<32x256xf32>
      %724 = math.exp %723 : vector<32x256xf32>
      %cst_361 = arith.constant 1.000000e+00 : f32
      %725 = vector.broadcast %cst_361 : f32 to vector<32x256xf32>
      %726 = arith.addf %725, %724 : vector<32x256xf32>
      %727 = arith.divf %725, %726 : vector<32x256xf32>
      %728 = arith.mulf %721, %727 : vector<32x256xf32>
      %729 = arith.truncf %728 : vector<32x256xf32> to vector<32x256xbf16>
      %cst_362 = arith.constant dense<0.000000e+00> : vector<16x256xf32>
      %730 = tpu.matmul %699, %729, %cst_362 {dimension_numbers = #tpu.dot_dimension_numbers<[1], [0], [0], [1], [0, 0, 1, 1], [], []>} : vector<16x32xbf16>, vector<32x256xbf16>, vector<16x256xf32> -> vector<16x256xf32>
      %731 = vector.broadcast %702 : vector<16x1xf32> to vector<16x256xf32>
      %732 = arith.addf %730, %731 : vector<16x256xf32>
      %cst_363 = arith.constant 0.000000e+00 : f32
      %733 = vector.broadcast %cst_363 : f32 to vector<16x256xf32>
      %734 = arith.maximumf %732, %733 : vector<16x256xf32>
      %c0_364 = arith.constant 0 : index
      %c0_365 = arith.constant 0 : index
      %735 = vector.load %arg12[%c0_364, %c0_365] : memref<16x256xf32, #tpu.memory_space<vmem>>, vector<16x256xf32>
      %736 = arith.addf %735, %734 : vector<16x256xf32>
      %c0_366 = arith.constant 0 : index
      %c0_367 = arith.constant 0 : index
      %737 = vector.load %arg12[%c0_366, %c0_367] : memref<16x256xf32, #tpu.memory_space<vmem>>, vector<16x256xf32>
      tpu.vector_store %arg12[%c0_366, %c0_367], %736 {strides = array<i32>} : memref<16x256xf32, #tpu.memory_space<vmem>>, vector<16x256xf32>,
      %738 = arith.index_cast %45 : i32 to index
      %c0_368 = arith.constant 0 : index
      %c512_369 = arith.constant 512 : index
      %739 = vector.load %arg11[%738, %c0_368, %c512_369] : memref<2x16x1280xf32, #tpu.memory_space<vmem>>, vector<1x16x256xf32>
      %740 = vector.shape_cast %739 : vector<1x16x256xf32> to vector<16x256xf32>
      %741 = arith.addf %740, %734 : vector<16x256xf32>
      %742 = arith.truncf %741 : vector<16x256xf32> to vector<16x256xbf16>
      %cst_370 = arith.constant dense<0.000000e+00> : vector<16x256xf32>
      %743 = tpu.matmul %705, %742, %cst_370 {dimension_numbers = #tpu.dot_dimension_numbers<[1], [0], [0], [1], [0, 0, 1, 1], [], []>} : vector<16x16xbf16>, vector<16x256xbf16>, vector<16x256xf32> -> vector<16x256xf32>
      %744 = vector.broadcast %708 : vector<16x1xf32> to vector<16x256xf32>
      %745 = arith.addf %743, %744 : vector<16x256xf32>
      %cst_371 = arith.constant 0.000000e+00 : f32
      %746 = vector.broadcast %cst_371 : f32 to vector<16x256xf32>
      %747 = arith.maximumf %745, %746 : vector<16x256xf32>
      %748 = arith.index_cast %690 : i32 to index
      %c0_372 = arith.constant 0 : index
      %c512_373 = arith.constant 512 : index
      %749 = vector.load %arg11[%748, %c0_372, %c512_373] : memref<2x16x1280xf32, #tpu.memory_space<vmem>>, vector<1x16x256xf32>
      %750 = vector.shape_cast %749 : vector<1x16x256xf32> to vector<16x256xf32>
      %751 = vector.shape_cast %747 : vector<16x256xf32> to vector<1x16x256xf32>
      tpu.vector_store %arg11[%748, %c0_372, %c512_373], %751 {strides = array<i32>} : memref<2x16x1280xf32, #tpu.memory_space<vmem>>, vector<1x16x256xf32>,
    }
    %c3_i32_22 = arith.constant 3 : i32
    %c0_23 = arith.constant 0 : index
    %c0_24 = arith.constant 0 : index
    %30 = vector.load %arg12[%c0_23, %c0_24] : memref<16x256xf32, #tpu.memory_space<vmem>>, vector<16x256xf32>
    %cst_25 = arith.constant 0.000000e+00 : f32
    %31 = vector.broadcast %cst_25 : f32 to vector<16x256xf32>
    %32 = arith.maximumf %30, %31 : vector<16x256xf32>
    %c0_26 = arith.constant 0 : index
    %c0_27 = arith.constant 0 : index
    %c0_28 = arith.constant 0 : index
    %33 = vector.load %arg10[%c0_26, %c0_27, %c0_28] : memref<1x16x256xf32, #tpu.memory_space<vmem>>, vector<1x16x256xf32>
    %34 = vector.shape_cast %33 : vector<1x16x256xf32> to vector<16x256xf32>
    %35 = vector.shape_cast %32 : vector<16x256xf32> to vector<1x16x256xf32>
    tpu.vector_store %arg10[%c0_26, %c0_27, %c0_28], %35 {strides = array<i32>} : memref<1x16x256xf32, #tpu.memory_space<vmem>>, vector<1x16x256xf32>,
    return
  }
  func.func @transform_0(%arg0: i32) -> (i32, i32, i32) {
    %c0_i32 = arith.constant 0 : i32
    %c0_i32_0 = arith.constant 0 : i32
    %c0_i32_1 = arith.constant 0 : i32
    return %arg0, %c0_i32, %c0_i32_0 : i32, i32, i32
  }
  func.func @transform_1(%arg0: i32) -> (i32, i32) {
    %c0_i32 = arith.constant 0 : i32
    %c0_i32_0 = arith.constant 0 : i32
    %c0_i32_1 = arith.constant 0 : i32
    return %c0_i32, %c0_i32_0 : i32, i32
  }
  func.func @transform_2(%arg0: i32) -> (i32, i32) {
    %c0_i32 = arith.constant 0 : i32
    %c0_i32_0 = arith.constant 0 : i32
    %c0_i32_1 = arith.constant 0 : i32
    return %c0_i32, %c0_i32_0 : i32, i32
  }
  func.func @transform_3(%arg0: i32) -> (i32, i32, i32) {
    %c0_i32 = arith.constant 0 : i32
    %c0_i32_0 = arith.constant 0 : i32
    %c0_i32_1 = arith.constant 0 : i32
    %c0_i32_2 = arith.constant 0 : i32
    return %c0_i32, %c0_i32_0, %c0_i32_1 : i32, i32, i32
  }
  func.func @transform_4(%arg0: i32) -> (i32, i32, i32) {
    %c0_i32 = arith.constant 0 : i32
    %c0_i32_0 = arith.constant 0 : i32
    %c0_i32_1 = arith.constant 0 : i32
    %c0_i32_2 = arith.constant 0 : i32
    return %c0_i32, %c0_i32_0, %c0_i32_1 : i32, i32, i32
  }
  func.func @transform_5(%arg0: i32) -> (i32, i32, i32) {
    %c0_i32 = arith.constant 0 : i32
    %c0_i32_0 = arith.constant 0 : i32
    %c0_i32_1 = arith.constant 0 : i32
    %c0_i32_2 = arith.constant 0 : i32
    return %c0_i32, %c0_i32_0, %c0_i32_1 : i32, i32, i32
  }
  func.func @transform_6(%arg0: i32) -> (i32, i32, i32) {
    %c0_i32 = arith.constant 0 : i32
    %c0_i32_0 = arith.constant 0 : i32
    %c0_i32_1 = arith.constant 0 : i32
    %c0_i32_2 = arith.constant 0 : i32
    return %c0_i32, %c0_i32_0, %c0_i32_1 : i32, i32, i32
  }
  func.func @transform_7(%arg0: i32) -> (i32, i32, i32) {
    %c0_i32 = arith.constant 0 : i32
    %c0_i32_0 = arith.constant 0 : i32
    %c0_i32_1 = arith.constant 0 : i32
    %c0_i32_2 = arith.constant 0 : i32
    return %c0_i32, %c0_i32_0, %c0_i32_1 : i32, i32, i32
  }
  func.func @transform_8(%arg0: i32) -> (i32, i32, i32) {
    %c0_i32 = arith.constant 0 : i32
    %c0_i32_0 = arith.constant 0 : i32
    %c0_i32_1 = arith.constant 0 : i32
    %c0_i32_2 = arith.constant 0 : i32
    return %c0_i32, %c0_i32_0, %c0_i32_1 : i32, i32, i32
  }
  func.func @transform_9(%arg0: i32) -> (i32, i32, i32) {
    %c0_i32 = arith.constant 0 : i32
    %c0_i32_0 = arith.constant 0 : i32
    %c0_i32_1 = arith.constant 0 : i32
    return %arg0, %c0_i32, %c0_i32_0 : i32, i32, i32
  }
}

</mosaic_0001>

<llo_original>
// kernel: tpu_custom_call.1
$region0: #{tpu_custom_call.1}
  #allocation0 [shape = 'u32[]', space=smem, size = 0x4, offset = 0x4, fixed_abs, tag = 'smem constant byte address 0x4 - core index']
  #allocation1 [shape = 'u32[72,128]{1,0:T(1,128)}', space=vmem, size = 0x9000, scoped, tag = 'internal scratch']
  #allocation2 [shape = 'f32[2,16,1280]{2,1,0:T(8,128)}', space=vmem, size = 0x28000, scoped, tag = 'scratch operand']
  #allocation3 [shape = 'f32[16,256]{1,0:T(8,128)}', space=vmem, size = 0x4000, scoped, tag = 'scratch operand']
  %s0 = inlined_call_operand.vmem [shape: f32[2,1,256], index: 0, kind: input, shape index: {}]
  %s1 = inlined_call_operand.vmem [shape: f32[16,1], index: 1, kind: input, shape index: {}]
  %s2 = inlined_call_operand.vmem [shape: f32[16,1], index: 2, kind: input, shape index: {}]
  %s3 = inlined_call_operand.vmem [shape: bf16[33,16,16], index: 3, kind: input, shape index: {}]
  %s4 = inlined_call_operand.vmem [shape: f32[33,16,1], index: 4, kind: input, shape index: {}]
  %s5 = inlined_call_operand.vmem [shape: bf16[33,64,32], index: 5, kind: input, shape index: {}]
  %s6 = inlined_call_operand.vmem [shape: f32[33,64,1], index: 6, kind: input, shape index: {}]
  %s7 = inlined_call_operand.vmem [shape: bf16[33,16,32], index: 7, kind: input, shape index: {}]
  %s8 = inlined_call_operand.vmem [shape: f32[33,16,1], index: 8, kind: input, shape index: {}]
  %s9 = inlined_call_operand.hbm [shape: f32[2,16,256], index: 9, kind: output, shape index: {}]
  %s10 = sld [smem:[#allocation0]]
  $region76: #{tpu_custom_call.1} parent=0
    _
  %s12 = ssub.s32 1, %s10
  %s13 = scalar_select 0, %s12, %s10
  $region1: #{tpu_custom_call.1} parent=0
    #allocation4 [shape = 'u8[32768]{0}', space=vmem, size = 0x8000, scoped, tag = 'output window, operand 0']
    #allocation5 [shape = 's32[2]{0}', space=sflag, size = 0x8, scoped, tag = 'scoped memory for tpu_custom_call.1']
    %14 = vsyncpa [#allocation5], 0
    %s15 = scalar_lea.sflag [#allocation5], 1
    %16 = vsyncpa %s15, 0
    loop: start=0, step=1, limit=4
    $region2: #{tpu_custom_call.1} parent=1 // loop_pre_header
      _
    $region3: #{tpu_custom_call.1} parent=1 // loop_header
      %s18 = sphi 0, %s22
      %p19 = scmp.ge.s32.totalorder %s18, 4
      %s28 = sphi 0, %s30
      %s31 = sphi 0, %s28
      %s32 = sphi 0, %s31
      %s48 = sphi 0, %s32
      %s52 = sphi 0, %s52
      %s54 = sphi 0, %s52
      %s55 = sphi 0, %s54
      %s69 = sphi 0, %s55
      %s73 = sphi 0, %s73
      %s75 = sphi 0, %s73
      %s76 = sphi 0, %s75
      %s90 = sphi 0, %s76
      %s94 = sphi 0, %s94
      %s96 = sphi 0, %s94
      %s97 = sphi 0, %s96
      %s111 = sphi 0, %s97
      %s115 = sphi 0, %s115
      %s117 = sphi 0, %s115
      %s118 = sphi 0, %s117
      %s132 = sphi 0, %s118
      %s136 = sphi 0, %s136
      %s138 = sphi 0, %s136
      %s139 = sphi 0, %s138
      %s153 = sphi 0, %s139
      %s157 = sphi 0, %s157
      %s159 = sphi 0, %s157
      %s160 = sphi 0, %s159
      %s174 = sphi 0, %s160
      %s178 = sphi 0, %s178
      %s180 = sphi 0, %s178
      %s181 = sphi 0, %s180
      %s195 = sphi 0, %s181
      %s199 = sphi 0, %s199
      %s201 = sphi 0, %s199
      %s202 = sphi 0, %s201
      %s216 = sphi 0, %s202
      %s222 = sphi 0, %s224
      %s225 = sphi 0, %s222
      %s226 = sphi 0, %s225
      %s242 = sphi 0, %s226
    $region4: #{tpu_custom_call.1} parent=1 // loop_header_branch
      %21 = sbr.rel (%p19) target = $region8
    $region5: #{tpu_custom_call.1} parent=1 // loop_body
      %s23 = ssub.s32 %s18, 1
      %s24 = ssub.s32 %s18, 2
      %s25 = sadd.s32 %s18, 1
      %s26 = ssub.s32 %s18, %s25
      %p27 = scmp.eq.s32.totalorder %s26, 0
      %s29 = sadd.s32 %s28, 1
      %s30 = scalar_select %p27, %s28, %s29
      %p33 = pneg %p27
      %p34 = scmp.eq.s32.totalorder %s18, 1
      %p35 = por %p33, %p34
      %p36 = scmp.ne.s32.totalorder %s28, %s31
      %p37 = scmp.eq.s32.totalorder %s18, 0
      %p38 = por %p36, %p37
      %p39 = scmp.ne.s32.totalorder %s28, %s31
      %p40 = scmp.eq.s32.totalorder %s23, 1
      %p41 = por %p39, %p40
      %p42 = scmp.ne.s32.totalorder %s31, %s32
      %p43 = scmp.eq.s32.totalorder %s23, 0
      %p44 = por %p42, %p43
      %p45 = scmp.ne.s32.totalorder %s31, %s32
      %p46 = scmp.eq.s32.totalorder %s24, 1
      %p47 = por %p45, %p46
      %p49 = scmp.ne.s32.totalorder %s32, %s48
      %p50 = scmp.eq.s32.totalorder %s24, 0
      %p51 = por %p49, %p50
      %s53 = sadd.s32 %s52, 1
      %p56 = scmp.eq.s32.totalorder %s18, 1
      %p57 = scmp.ne.s32.totalorder %s52, %s54
      %p58 = scmp.eq.s32.totalorder %s18, 0
      %p59 = por %p57, %p58
      %p60 = scmp.ne.s32.totalorder %s52, %s54
      %p61 = scmp.eq.s32.totalorder %s23, 1
      %p62 = por %p60, %p61
      %p63 = scmp.ne.s32.totalorder %s54, %s55
      %p64 = scmp.eq.s32.totalorder %s23, 0
      %p65 = por %p63, %p64
      %p66 = scmp.ne.s32.totalorder %s54, %s55
      %p67 = scmp.eq.s32.totalorder %s24, 1
      %p68 = por %p66, %p67
      %p70 = scmp.ne.s32.totalorder %s55, %s69
      %p71 = scmp.eq.s32.totalorder %s24, 0
      %p72 = por %p70, %p71
      %s74 = sadd.s32 %s73, 1
      %p77 = scmp.eq.s32.totalorder %s18, 1
      %p78 = scmp.ne.s32.totalorder %s73, %s75
      %p79 = scmp.eq.s32.totalorder %s18, 0
      %p80 = por %p78, %p79
      %p81 = scmp.ne.s32.totalorder %s73, %s75
      %p82 = scmp.eq.s32.totalorder %s23, 1
      %p83 = por %p81, %p82
      %p84 = scmp.ne.s32.totalorder %s75, %s76
      %p85 = scmp.eq.s32.totalorder %s23, 0
      %p86 = por %p84, %p85
      %p87 = scmp.ne.s32.totalorder %s75, %s76
      %p88 = scmp.eq.s32.totalorder %s24, 1
      %p89 = por %p87, %p88
      %p91 = scmp.ne.s32.totalorder %s76, %s90
      %p92 = scmp.eq.s32.totalorder %s24, 0
      %p93 = por %p91, %p92
      %s95 = sadd.s32 %s94, 1
      %p98 = scmp.eq.s32.totalorder %s18, 1
      %p99 = scmp.ne.s32.totalorder %s94, %s96
      %p100 = scmp.eq.s32.totalorder %s18, 0
      %p101 = por %p99, %p100
      %p102 = scmp.ne.s32.totalorder %s94, %s96
      %p103 = scmp.eq.s32.totalorder %s23, 1
      %p104 = por %p102, %p103
      %p105 = scmp.ne.s32.totalorder %s96, %s97
      %p106 = scmp.eq.s32.totalorder %s23, 0
      %p107 = por %p105, %p106
      %p108 = scmp.ne.s32.totalorder %s96, %s97
      %p109 = scmp.eq.s32.totalorder %s24, 1
      %p110 = por %p108, %p109
      %p112 = scmp.ne.s32.totalorder %s97, %s111
      %p113 = scmp.eq.s32.totalorder %s24, 0
      %p114 = por %p112, %p113
      %s116 = sadd.s32 %s115, 1
      %p119 = scmp.eq.s32.totalorder %s18, 1
      %p120 = scmp.ne.s32.totalorder %s115, %s117
      %p121 = scmp.eq.s32.totalorder %s18, 0
      %p122 = por %p120, %p121
      %p123 = scmp.ne.s32.totalorder %s115, %s117
      %p124 = scmp.eq.s32.totalorder %s23, 1
      %p125 = por %p123, %p124
      %p126 = scmp.ne.s32.totalorder %s117, %s118
      %p127 = scmp.eq.s32.totalorder %s23, 0
      %p128 = por %p126, %p127
      %p129 = scmp.ne.s32.totalorder %s117, %s118
      %p130 = scmp.eq.s32.totalorder %s24, 1
      %p131 = por %p129, %p130
      %p133 = scmp.ne.s32.totalorder %s118, %s132
      %p134 = scmp.eq.s32.totalorder %s24, 0
      %p135 = por %p133, %p134
      %s137 = sadd.s32 %s136, 1
      %p140 = scmp.eq.s32.totalorder %s18, 1
      %p141 = scmp.ne.s32.totalorder %s136, %s138
      %p142 = scmp.eq.s32.totalorder %s18, 0
      %p143 = por %p141, %p142
      %p144 = scmp.ne.s32.totalorder %s136, %s138
      %p145 = scmp.eq.s32.totalorder %s23, 1
      %p146 = por %p144, %p145
      %p147 = scmp.ne.s32.totalorder %s138, %s139
      %p148 = scmp.eq.s32.totalorder %s23, 0
      %p149 = por %p147, %p148
      %p150 = scmp.ne.s32.totalorder %s138, %s139
      %p151 = scmp.eq.s32.totalorder %s24, 1
      %p152 = por %p150, %p151
      %p154 = scmp.ne.s32.totalorder %s139, %s153
      %p155 = scmp.eq.s32.totalorder %s24, 0
      %p156 = por %p154, %p155
      %s158 = sadd.s32 %s157, 1
      %p161 = scmp.eq.s32.totalorder %s18, 1
      %p162 = scmp.ne.s32.totalorder %s157, %s159
      %p163 = scmp.eq.s32.totalorder %s18, 0
      %p164 = por %p162, %p163
      %p165 = scmp.ne.s32.totalorder %s157, %s159
      %p166 = scmp.eq.s32.totalorder %s23, 1
      %p167 = por %p165, %p166
      %p168 = scmp.ne.s32.totalorder %s159, %s160
      %p169 = scmp.eq.s32.totalorder %s23, 0
      %p170 = por %p168, %p169
      %p171 = scmp.ne.s32.totalorder %s159, %s160
      %p172 = scmp.eq.s32.totalorder %s24, 1
      %p173 = por %p171, %p172
      %p175 = scmp.ne.s32.totalorder %s160, %s174
      %p176 = scmp.eq.s32.totalorder %s24, 0
      %p177 = por %p175, %p176
      %s179 = sadd.s32 %s178, 1
      %p182 = scmp.eq.s32.totalorder %s18, 1
      %p183 = scmp.ne.s32.totalorder %s178, %s180
      %p184 = scmp.eq.s32.totalorder %s18, 0
      %p185 = por %p183, %p184
      %p186 = scmp.ne.s32.totalorder %s178, %s180
      %p187 = scmp.eq.s32.totalorder %s23, 1
      %p188 = por %p186, %p187
      %p189 = scmp.ne.s32.totalorder %s180, %s181
      %p190 = scmp.eq.s32.totalorder %s23, 0
      %p191 = por %p189, %p190
      %p192 = scmp.ne.s32.totalorder %s180, %s181
      %p193 = scmp.eq.s32.totalorder %s24, 1
      %p194 = por %p192, %p193
      %p196 = scmp.ne.s32.totalorder %s181, %s195
      %p197 = scmp.eq.s32.totalorder %s24, 0
      %p198 = por %p196, %p197
      %s200 = sadd.s32 %s199, 1
      %p203 = scmp.eq.s32.totalorder %s18, 1
      %p204 = scmp.ne.s32.totalorder %s199, %s201
      %p205 = scmp.eq.s32.totalorder %s18, 0
      %p206 = por %p204, %p205
      %p207 = scmp.ne.s32.totalorder %s199, %s201
      %p208 = scmp.eq.s32.totalorder %s23, 1
      %p209 = por %p207, %p208
      %p210 = scmp.ne.s32.totalorder %s201, %s202
      %p211 = scmp.eq.s32.totalorder %s23, 0
      %p212 = por %p210, %p211
      %p213 = scmp.ne.s32.totalorder %s201, %s202
      %p214 = scmp.eq.s32.totalorder %s24, 1
      %p215 = por %p213, %p214
      %p217 = scmp.ne.s32.totalorder %s202, %s216
      %p218 = scmp.eq.s32.totalorder %s24, 0
      %p219 = por %p217, %p218
      %s220 = ssub.s32 %s18, %s25
      %p221 = scmp.eq.s32.totalorder %s220, 0
      %s223 = sadd.s32 %s222, 1
      %s224 = scalar_select %p221, %s222, %s223
      %p227 = pneg %p221
      %p228 = scmp.eq.s32.totalorder %s18, 1
      %p229 = por %p227, %p228
      %p230 = scmp.ne.s32.totalorder %s222, %s225
      %p231 = scmp.eq.s32.totalorder %s18, 0
      %p232 = por %p230, %p231
      %p233 = scmp.ne.s32.totalorder %s222, %s225
      %p234 = scmp.eq.s32.totalorder %s23, 1
      %p235 = por %p233, %p234
      %p236 = scmp.ne.s32.totalorder %s225, %s226
      %p237 = scmp.eq.s32.totalorder %s23, 0
      %p238 = por %p236, %p237
      %p239 = scmp.ne.s32.totalorder %s225, %s226
      %p240 = scmp.eq.s32.totalorder %s24, 1
      %p241 = por %p239, %p240
      %p243 = scmp.ne.s32.totalorder %s226, %s242
      %p244 = scmp.eq.s32.totalorder %s24, 0
      %p245 = por %p243, %p244
      %p246 = scmp.le.s32.totalorder 1, %s18
      %p247 = scmp.lt.s32.totalorder %s18, 3
      %p248 = pnand %p246, %p247
      %p249 = pneg %p248
      // Predicated region
      $region9: #{tpu_custom_call.1} parent=5 // pred_check
        _
      $region10: #{tpu_custom_call.1} parent=5 // pred_check_branch
        %251 = sbr.rel (%p248) target = $region12
      $region11: #{tpu_custom_call.1} parent=5 // pred_region
        %s252 = ssub.s32 %s18, 1
        // Predicated region
        $region13: #{tpu_custom_call.1} parent=11 // pred_check
          %p253 = pneg %p65
        $region14: #{tpu_custom_call.1} parent=11 // pred_check_branch
          %255 = sbr.rel (%p253) target = $region16
        $region15: #{tpu_custom_call.1} parent=11 // pred_region
          _
        $region16: #{tpu_custom_call.1} parent=11 // pred_fallthru
          _
        // Predicated region
        $region17: #{tpu_custom_call.1} parent=11 // pred_check
          %p256 = pneg %p86
        $region18: #{tpu_custom_call.1} parent=11 // pred_check_branch
          %258 = sbr.rel (%p256) target = $region20
        $region19: #{tpu_custom_call.1} parent=11 // pred_region
          _
        $region20: #{tpu_custom_call.1} parent=11 // pred_fallthru
          _
        // Predicated region
        $region21: #{tpu_custom_call.1} parent=11 // pred_check
          %p259 = pneg %p107
        $region22: #{tpu_custom_call.1} parent=11 // pred_check_branch
          %261 = sbr.rel (%p259) target = $region24
        $region23: #{tpu_custom_call.1} parent=11 // pred_region
          _
        $region24: #{tpu_custom_call.1} parent=11 // pred_fallthru
          _
        // Predicated region
        $region25: #{tpu_custom_call.1} parent=11 // pred_check
          %p262 = pneg %p128
        $region26: #{tpu_custom_call.1} parent=11 // pred_check_branch
          %264 = sbr.rel (%p262) target = $region28
        $region27: #{tpu_custom_call.1} parent=11 // pred_region
          _
        $region28: #{tpu_custom_call.1} parent=11 // pred_fallthru
          _
        // Predicated region
        $region29: #{tpu_custom_call.1} parent=11 // pred_check
          %p265 = pneg %p149
        $region30: #{tpu_custom_call.1} parent=11 // pred_check_branch
          %267 = sbr.rel (%p265) target = $region32
        $region31: #{tpu_custom_call.1} parent=11 // pred_region
          _
        $region32: #{tpu_custom_call.1} parent=11 // pred_fallthru
          _
        // Predicated region
        $region33: #{tpu_custom_call.1} parent=11 // pred_check
          %p268 = pneg %p170
        $region34: #{tpu_custom_call.1} parent=11 // pred_check_branch
          %270 = sbr.rel (%p268) target = $region36
        $region35: #{tpu_custom_call.1} parent=11 // pred_region
          _
        $region36: #{tpu_custom_call.1} parent=11 // pred_fallthru
          _
        // Predicated region
        $region37: #{tpu_custom_call.1} parent=11 // pred_check
          %p271 = pneg %p191
        $region38: #{tpu_custom_call.1} parent=11 // pred_check_branch
          %273 = sbr.rel (%p271) target = $region40
        $region39: #{tpu_custom_call.1} parent=11 // pred_region
          _
        $region40: #{tpu_custom_call.1} parent=11 // pred_fallthru
          _
        // Predicated region
        $region41: #{tpu_custom_call.1} parent=11 // pred_check
          %p274 = pneg %p212
        $region42: #{tpu_custom_call.1} parent=11 // pred_check_branch
          %276 = sbr.rel (%p274) target = $region44
        $region43: #{tpu_custom_call.1} parent=11 // pred_region
          _
        $region44: #{tpu_custom_call.1} parent=11 // pred_fallthru
          _
      $region12: #{tpu_custom_call.1} parent=5 // pred_fallthru
        _
      %p277 = scmp.lt.s32.totalorder %s18, 2
      // Predicated region
      $region45: #{tpu_custom_call.1} parent=5 // pred_check
        %p278 = pneg %p277
      $region46: #{tpu_custom_call.1} parent=5 // pred_check_branch
        %280 = sbr.rel (%p278) target = $region48
      $region47: #{tpu_custom_call.1} parent=5 // pred_region
        // Predicated region
        $region49: #{tpu_custom_call.1} parent=47 // pred_check
          %p281 = pneg %p38
        $region50: #{tpu_custom_call.1} parent=47 // pred_check_branch
          %283 = sbr.rel (%p281) target = $region52
        $region51: #{tpu_custom_call.1} parent=47 // pred_region
          %p284 = scmp.lt.s32.totalorder %s18, 1
          %s285 = scalar_select %p284, %s18, 1
          %s286 = smul.addr %s285, 2
          %s287 = scalar_lea.vmem %s0, %s286
        $region52: #{tpu_custom_call.1} parent=47 // pred_fallthru
          _
      $region48: #{tpu_custom_call.1} parent=5 // pred_fallthru
        _
      %p288 = scmp.le.s32.totalorder 1, %s18
      %p289 = scmp.lt.s32.totalorder %s18, 3
      %p290 = pnand %p288, %p289
      %p291 = pneg %p290
      // Predicated region
      $region53: #{tpu_custom_call.1} parent=5 // pred_check
        _
      $region54: #{tpu_custom_call.1} parent=5 // pred_check_branch
        %293 = sbr.rel (%p290) target = $region56
      $region55: #{tpu_custom_call.1} parent=5 // pred_region
        %s294 = ssub.s32 %s18, 1
        %p295 = scmp.lt.s32.totalorder %s23, 1
        %s296 = scalar_select %p295, %s23, 1
        %s297 = smul.addr %s296, 2
        %s298 = scalar_lea.vmem %s0, %s297
        %p299 = pneg %p44
        %p300 = pneg %p41
        %p301 = pneg %p65
        %p302 = pneg %p62
        %p303 = pneg %p86
        %p304 = pneg %p83
        %p305 = pneg %p107
        %p306 = pneg %p104
        %p307 = pneg %p128
        %p308 = pneg %p125
        %p309 = pneg %p149
        %p310 = pneg %p146
        %p311 = pneg %p170
        %p312 = pneg %p167
        %p313 = pneg %p191
        %p314 = pneg %p188
        %p315 = pneg %p212
        %p316 = pneg %p209
        %p317 = pneg %p238
        %p318 = pneg %p235
        %s319 = sand.u32 %s225, 1
        %s320 = scalar_lea.sflag [#allocation5], %s319
        %s321 = sand.u32 %s225, 1
        %s322 = smul.addr %s321, 32
        %s323 = scalar_lea.vmem [#allocation4], %s322
        %p324 = scmp.lt.s32.totalorder %s23, 1
        %s325 = scalar_select %p324, %s23, 1
        %s326 = smul.addr %s325, 2
        %s327 = scalar_lea.vmem %s0, %s326
        %329 = vst [vmem:[#allocation2] sm:$0xff] 0.0
        %330 = vst [vmem:[#allocation2 + $0x8] sm:$0xff] 0.0
        %331 = vst [vmem:[#allocation2 + $0x10] sm:$0xff] 0.0
        %332 = vst [vmem:[#allocation2 + $0x18] sm:$0xff] 0.0
        %333 = vst [vmem:[#allocation2 + $0x50] sm:$0xff] 0.0
        %334 = vst [vmem:[#allocation2 + $0x58] sm:$0xff] 0.0
        %335 = vst [vmem:[#allocation2 + $0x60] sm:$0xff] 0.0
        %336 = vst [vmem:[#allocation2 + $0x68] sm:$0xff] 0.0
        %337 = vst [vmem:[#allocation2 + $0x30] sm:$0xff] 0.0
        %338 = vst [vmem:[#allocation2 + $0x38] sm:$0xff] 0.0
        %339 = vst [vmem:[#allocation2 + $0x40] sm:$0xff] 0.0
        %340 = vst [vmem:[#allocation2 + $0x48] sm:$0xff] 0.0
        %341 = vst [vmem:[#allocation2 + $0x80] sm:$0xff] 0.0
        %342 = vst [vmem:[#allocation2 + $0x88] sm:$0xff] 0.0
        %343 = vst [vmem:[#allocation2 + $0x90] sm:$0xff] 0.0
        %344 = vst [vmem:[#allocation2 + $0x98] sm:$0xff] 0.0
        %s345 = scalar_lea.vmem [#allocation2], 160
        %346 = vst [vmem:[%s345] sm:$0xff] 0.0
        %347 = vst [vmem:[%s345 + $0x8] sm:$0xff] 0.0
        %348 = vst [vmem:[%s345 + $0x10] sm:$0xff] 0.0
        %349 = vst [vmem:[%s345 + $0x18] sm:$0xff] 0.0
        %350 = vst [vmem:[%s345 + $0x50] sm:$0xff] 0.0
        %351 = vst [vmem:[%s345 + $0x58] sm:$0xff] 0.0
        %352 = vst [vmem:[%s345 + $0x60] sm:$0xff] 0.0
        %353 = vst [vmem:[%s345 + $0x68] sm:$0xff] 0.0
        %354 = vst [vmem:[%s345 + $0x30] sm:$0xff] 0.0
        %355 = vst [vmem:[%s345 + $0x38] sm:$0xff] 0.0
        %356 = vst [vmem:[%s345 + $0x40] sm:$0xff] 0.0
        %357 = vst [vmem:[%s345 + $0x48] sm:$0xff] 0.0
        %358 = vst [vmem:[%s345 + $0x80] sm:$0xff] 0.0
        %359 = vst [vmem:[%s345 + $0x88] sm:$0xff] 0.0
        %360 = vst [vmem:[%s345 + $0x90] sm:$0xff] 0.0
        %361 = vst [vmem:[%s345 + $0x98] sm:$0xff] 0.0
        %362 = vst [vmem:[#allocation3] sm:$0xff] 0.0
        %363 = vst [vmem:[#allocation3 + $0x8] sm:$0xff] 0.0
        %364 = vst [vmem:[#allocation3 + $0x10] sm:$0xff] 0.0
        %365 = vst [vmem:[#allocation3 + $0x18] sm:$0xff] 0.0
        %v366 = vld [vmem:[%s1] sm:$0xff]
        %v367 = vld [vmem:[%s1 + $0x8] sm:$0xff]
        %v368 = vld [vmem:[%s2] sm:$0xff]
        %v369 = vld [vmem:[%s2 + $0x8] sm:$0xff]
        %v370 = vld [vmem:[%s327] sm:$0x3]
        %372 = vset.pattern.permute.xlu0 0
        %373 = vperm.xlu0 %372, %v366
        %v374 = vpop.permute.xlu0 %373
        %377 = vset.pattern.permute.xlu0 0
        %378 = vperm.xlu0 %377, %v367
        %v379 = vpop.permute.xlu0 %378
        %v382 = vperm.slane %v370, 0
        %v383 = vperm.slane %v370, 1
        %v386 = vmul.f32 %v374, %v382
        %v387 = vmul.f32 %v374, %v383
        %v388 = vmul.f32 %v379, %v382
        %v389 = vmul.f32 %v379, %v383
        %391 = vset.pattern.permute.xlu0 0
        %392 = vperm.xlu0 %391, %v368
        %v393 = vpop.permute.xlu0 %392
        %396 = vset.pattern.permute.xlu0 0
        %397 = vperm.xlu0 %396, %v369
        %v398 = vpop.permute.xlu0 %397
        %v400 = vadd.f32 %v386, %v393
        %v401 = vadd.f32 %v387, %v393
        %v402 = vadd.f32 %v388, %v398
        %v403 = vadd.f32 %v389, %v398
        %v404 = vmax.f32 %v400, 0.0
        %v405 = vmax.f32 %v401, 0.0
        %v406 = vmax.f32 %v402, 0.0
        %v407 = vmax.f32 %v403, 0.0
        %408 = vst [vmem:[#allocation2 + $0x20] sm:$0xff] %v404
        %409 = vst [vmem:[#allocation2 + $0x28] sm:$0xff] %v405
        %410 = vst [vmem:[#allocation2 + $0x70] sm:$0xff] %v406
        %411 = vst [vmem:[#allocation2 + $0x78] sm:$0xff] %v407
        loop: start=0, step=1, limit=3
        $region57: #{tpu_custom_call.1} parent=55 // loop_pre_header
          _
        $region58: #{tpu_custom_call.1} parent=55 // loop_header
          %s413 = sphi 0, %s417
          %p414 = scmp.ge.s32.totalorder %s413, 3
        $region59: #{tpu_custom_call.1} parent=55 // loop_header_branch
          %416 = sbr.rel (%p414) target = $region63
        $region60: #{tpu_custom_call.1} parent=55 // loop_body
          %p418 = scmp.lt.s32.totalorder %s413, 0
          %s419 = ssub.s32 0, %s413
          %s420 = scalar_select %p418, %s419, %s413
          %s421 = sand.u32 %s420, 1
          %s422 = ssub.s32 0, %s421
          %s423 = scalar_select %p418, %s422, %s421
          %p424 = scmp.ne.s32.totalorder %s423, 0
          %p425 = scmp.lt.s32.totalorder %s423, 0
          %p426 = pnand %p425, %p424
          %p427 = pneg %p426
          %s428 = sadd.s32 %s423, 2
          %s429 = scalar_select %p427, %s428, %s423
          %s430 = smul.u32 %s413, 11
          %s431 = ssub.s32 1, %s429
          %s432 = smul.u32 %s430, 8
          %s433 = smul.addr %s432, 4
          %s434 = scalar_lea.vmem %s5, %s433
          %v435 = vld [vmem:[%s434] sm:$0xf]
          %v436 = vld [vmem:[%s434 + $0x4] sm:$0xf]
          %v437 = vld [vmem:[%s434 + $0x8] sm:$0xf]
          %v438 = vld [vmem:[%s434 + $0xc] sm:$0xf]
          %v439 = vld [vmem:[%s434 + $0x10] sm:$0xf]
          %v440 = vld [vmem:[%s434 + $0x14] sm:$0xf]
          %v441 = vld [vmem:[%s434 + $0x18] sm:$0xf]
          %v442 = vld [vmem:[%s434 + $0x1c] sm:$0xf]
          %s443 = smul.u32 %s430, 64
          %s444 = scalar_lea.vmem %s6, %s443
          %v445 = vld [vmem:[%s444] sm:$0xff]
          %v446 = vld [vmem:[%s444 + $0x8] sm:$0xff]
          %v447 = vld [vmem:[%s444 + $0x10] sm:$0xff]
          %v448 = vld [vmem:[%s444 + $0x18] sm:$0xff]
          %v449 = vld [vmem:[%s444 + $0x20] sm:$0xff]
          %v450 = vld [vmem:[%s444 + $0x28] sm:$0xff]
          %v451 = vld [vmem:[%s444 + $0x30] sm:$0xff]
          %v452 = vld [vmem:[%s444 + $0x38] sm:$0xff]
          %s453 = smul.u32 %s430, 2
          %s454 = smul.addr %s453, 4
          %s455 = scalar_lea.vmem %s7, %s454
          %v456 = vld [vmem:[%s455] sm:$0xf]
          %v457 = vld [vmem:[%s455 + $0x4] sm:$0xf]
          %s458 = smul.u32 %s430, 16
          %s459 = scalar_lea.vmem %s8, %s458
          %v460 = vld [vmem:[%s459] sm:$0xff]
          %v461 = vld [vmem:[%s459 + $0x8] sm:$0xff]
          %s462 = smul.addr %s453, 4
          %s463 = scalar_lea.vmem %s3, %s462
          %v464 = vld [vmem:[%s463] sm:$0xf]
          %v465 = vld [vmem:[%s463 + $0x4] sm:$0xf]
          %s466 = scalar_lea.vmem %s4, %s458
          %v467 = vld [vmem:[%s466] sm:$0xff]
          %v468 = vld [vmem:[%s466 + $0x8] sm:$0xff]
          %s469 = smul.u32 %s429, 20
          %s470 = smul.addr %s469, 8
          %s471 = scalar_lea.vmem [#allocation2], %s470
          %v472 = vld [vmem:[%s471 + $0x20] sm:$0xff]
          %v473 = vld [vmem:[%s471 + $0x28] sm:$0xff]
          %v474 = vld [vmem:[%s471 + $0x70] sm:$0xff]
          %v475 = vld [vmem:[%s471 + $0x78] sm:$0xff]
          %v476 = vld [vmem:[%s471 + $0x30] sm:$0xff]
          %v477 = vld [vmem:[%s471 + $0x80] sm:$0xff]
          %484 = vrot.lane.b32.xlu0 %v472, 127
          %v485 = vpop.permute.xlu0 %484
          %486 = vrot.lane.b32.xlu0 %v473, 127
          %v487 = vpop.permute.xlu0 %486
          %488 = vrot.lane.b32.xlu0 %v476, 127
          %v489 = vpop.permute.xlu0 %488
          %490 = vrot.lane.b32.xlu0 %v474, 127
          %v491 = vpop.permute.xlu0 %490
          %492 = vrot.lane.b32.xlu0 %v475, 127
          %v493 = vpop.permute.xlu0 %492
          %494 = vrot.lane.b32.xlu0 %v477, 127
          %v495 = vpop.permute.xlu0 %494
          %vm496 = vcmask 1039360
          %v497 = vsel %vm496, %v485, %v487
          %v498 = vsel %vm496, %v487, %v489
          %v499 = vsel %vm496, %v491, %v493
          %v500 = vsel %vm496, %v493, %v495
          %v505 = vpack.c.bf16 %v474, %v472
          %v506 = vpack.c.bf16 %v475, %v473
          %v507 = vpack.c.bf16 %v499, %v497
          %v508 = vpack.c.bf16 %v500, %v498
          %510 = vset.pattern.permute.xlu0 0
          %511 = vperm.xlu0 %510, %v445
          %v512 = vpop.permute.xlu0 %511
          %515 = vset.pattern.permute.xlu0 0
          %516 = vperm.xlu0 %515, %v446
          %v517 = vpop.permute.xlu0 %516
          %520 = vset.pattern.permute.xlu0 0
          %521 = vperm.xlu0 %520, %v447
          %v522 = vpop.permute.xlu0 %521
          %525 = vset.pattern.permute.xlu0 0
          %526 = vperm.xlu0 %525, %v448
          %v527 = vpop.permute.xlu0 %526
          %530 = vset.pattern.permute.xlu0 0
          %531 = vperm.xlu0 %530, %v449
          %v532 = vpop.permute.xlu0 %531
          %535 = vset.pattern.permute.xlu0 0
          %536 = vperm.xlu0 %535, %v450
          %v537 = vpop.permute.xlu0 %536
          %540 = vset.pattern.permute.xlu0 0
          %541 = vperm.xlu0 %540, %v451
          %v542 = vpop.permute.xlu0 %541
          %545 = vset.pattern.permute.xlu0 0
          %546 = vperm.xlu0 %545, %v452
          %v547 = vpop.permute.xlu0 %546
          %v557 = vunpack.c.l.b16 %v435
          %v558 = vunpack.c.l.b16 %v436
          %v559 = vunpack.c.l.b16 %v437
          %v560 = vunpack.c.l.b16 %v438
          %v561 = vunpack.c.l.b16 %v439
          %v562 = vunpack.c.l.b16 %v440
          %v563 = vunpack.c.l.b16 %v441
          %v564 = vunpack.c.l.b16 %v442
          %v565 = vpack.c.b16 %v558, %v557
          %v566 = vpack.c.b16 %v560, %v559
          %v567 = vpack.c.b16 %v562, %v561
          %v568 = vpack.c.b16 %v564, %v563
          %vm569 = vcmask 261120
          %v571 = vsel %vm569, %v565, 0
          %v574 = vsel %vm569, %v566, 0
          %v577 = vsel %vm569, %v567, 0
          %v580 = vsel %vm569, %v568, 0
          %582 = vmatpush.bf16.msra.mxu0 0
          %583 = vmatpush.bf16.msra.mxu0 0
          %584 = vmatpush.bf16.msra.mxu0 0
          %585 = vmatpush.bf16.msra.mxu0 0
          %586 = vmatpush.bf16.msra.mxu0 0
          %587 = vmatpush.bf16.msra.mxu0 0
          %588 = vmatpush.bf16.msra.mxu0 %v507
          %589 = vmatpush.bf16.msra.mxu0 %v505
          %590 = vmatmul.bf16.gmra.mxu0 %v571
          %v591 = vpop.f32.mrf.mxu0
          %v592 = vadd.f32 %v512, %v591
          %v593 = vpop.f32.mrf.mxu0
          %v594 = vadd.f32 %v517, %v593
          %595 = vmatmul.bf16.gmra.mxu0 %v574
          %v596 = vpop.f32.mrf.mxu0
          %v597 = vadd.f32 %v522, %v596
          %v598 = vpop.f32.mrf.mxu0
          %v599 = vadd.f32 %v527, %v598
          %600 = vmatmul.bf16.gmra.mxu0 %v577
          %v601 = vpop.f32.mrf.mxu0
          %v602 = vadd.f32 %v532, %v601
          %v603 = vpop.f32.mrf.mxu0
          %v604 = vadd.f32 %v537, %v603
          %605 = vmatmul.bf16.gmra.mxu0 %v580
          %v606 = vpop.f32.mrf.mxu0
          %v607 = vadd.f32 %v542, %v606
          %v608 = vpop.f32.mrf.mxu0
          %v609 = vadd.f32 %v547, %v608
          %610 = vdwg.mxu0
          %611 = vmatpush.bf16.msra.mxu0 0
          %612 = vmatpush.bf16.msra.mxu0 0
          %613 = vmatpush.bf16.msra.mxu0 0
          %614 = vmatpush.bf16.msra.mxu0 0
          %615 = vmatpush.bf16.msra.mxu0 0
          %616 = vmatpush.bf16.msra.mxu0 0
          %617 = vmatpush.bf16.msra.mxu0 %v508
          %618 = vmatpush.bf16.msra.mxu0 %v506
          %619 = vmatmul.bf16.gmra.mxu0 %v571
          %v620 = vpop.f32.mrf.mxu0
          %v621 = vadd.f32 %v512, %v620
          %v622 = vpop.f32.mrf.mxu0
          %v623 = vadd.f32 %v517, %v622
          %624 = vmatmul.bf16.gmra.mxu0 %v574
          %v625 = vpop.f32.mrf.mxu0
          %v626 = vadd.f32 %v522, %v625
          %v627 = vpop.f32.mrf.mxu0
          %v628 = vadd.f32 %v527, %v627
          %629 = vmatmul.bf16.gmra.mxu0 %v577
          %v630 = vpop.f32.mrf.mxu0
          %v631 = vadd.f32 %v532, %v630
          %v632 = vpop.f32.mrf.mxu0
          %v633 = vadd.f32 %v537, %v632
          %634 = vmatmul.bf16.gmra.mxu0 %v580
          %v635 = vpop.f32.mrf.mxu0
          %v636 = vadd.f32 %v542, %v635
          %v637 = vpop.f32.mrf.mxu0
          %v638 = vadd.f32 %v547, %v637
          %639 = vdwg.mxu0
          %v640 = vtanh.pop %v592
          %v641 = vtanh.pop %v621
          %v642 = vtanh.pop %v594
          %v643 = vtanh.pop %v623
          %v644 = vtanh.pop %v597
          %v645 = vtanh.pop %v626
          %v646 = vtanh.pop %v599
          %v647 = vtanh.pop %v628
          %v648 = vxor.u32 %v602, 2147483648
          %v649 = vxor.u32 %v631, 2147483648
          %v650 = vxor.u32 %v604, 2147483648
          %v651 = vxor.u32 %v633, 2147483648
          %v652 = vxor.u32 %v607, 2147483648
          %v653 = vxor.u32 %v636, 2147483648
          %v654 = vxor.u32 %v609, 2147483648
          %v655 = vxor.u32 %v638, 2147483648
          %v656 = vmul.f32 %v648, 1.442695
          %v657 = vpow.pop %v656
          %v658 = vmul.f32 %v649, 1.442695
          %v659 = vpow.pop %v658
          %v660 = vmul.f32 %v650, 1.442695
          %v661 = vpow.pop %v660
          %v662 = vmul.f32 %v651, 1.442695
          %v663 = vpow.pop %v662
          %v664 = vmul.f32 %v652, 1.442695
          %v665 = vpow.pop %v664
          %v666 = vmul.f32 %v653, 1.442695
          %v667 = vpow.pop %v666
          %v668 = vmul.f32 %v654, 1.442695
          %v669 = vpow.pop %v668
          %v670 = vmul.f32 %v655, 1.442695
          %v671 = vpow.pop %v670
          %v672 = vadd.f32 %v657, 1.0
          %v673 = vadd.f32 %v659, 1.0
          %v674 = vadd.f32 %v661, 1.0
          %v675 = vadd.f32 %v663, 1.0
          %v676 = vadd.f32 %v665, 1.0
          %v677 = vadd.f32 %v667, 1.0
          %v678 = vadd.f32 %v669, 1.0
          %v679 = vadd.f32 %v671, 1.0
          %v680 = vrcp.pop %v672
          %v681 = vmul.f32 %v672, %v680
          %v682 = vsub.f32 1.0, %v681
          %v683 = vmul.f32 %v680, %v682
          %v684 = vadd.f32 %v680, %v683
          %vm685 = vweird.f32 %v672
          %vm686 = vweird.f32 %v680
          %vm687 = vmor %vm685, %vm686
          %v688 = vsel %vm687, %v680, %v684
          %v689 = vand.u32 2147483647, %v672
          %vm690 = vcmp.eq.f32.partialorder %v689, 8.507059e+37
          %v691 = vand.u32 %v672, 2147483648
          %v692 = vor.u32 1.1754944e-38, %v691
          %v693 = vsel %vm690, %v692, %v688
          %v694 = vmul.f32 1.0, %v693
          %v695 = vrcp.pop %v673
          %v696 = vmul.f32 %v673, %v695
          %v697 = vsub.f32 1.0, %v696
          %v698 = vmul.f32 %v695, %v697
          %v699 = vadd.f32 %v695, %v698
          %vm700 = vweird.f32 %v673
          %vm701 = vweird.f32 %v695
          %vm702 = vmor %vm700, %vm701
          %v703 = vsel %vm702, %v695, %v699
          %v704 = vand.u32 2147483647, %v673
          %vm705 = vcmp.eq.f32.partialorder %v704, 8.507059e+37
          %v706 = vand.u32 %v673, 2147483648
          %v707 = vor.u32 1.1754944e-38, %v706
          %v708 = vsel %vm705, %v707, %v703
          %v709 = vmul.f32 1.0, %v708
          %v710 = vrcp.pop %v674
          %v711 = vmul.f32 %v674, %v710
          %v712 = vsub.f32 1.0, %v711
          %v713 = vmul.f32 %v710, %v712
          %v714 = vadd.f32 %v710, %v713
          %vm715 = vweird.f32 %v674
          %vm716 = vweird.f32 %v710
          %vm717 = vmor %vm715, %vm716
          %v718 = vsel %vm717, %v710, %v714
          %v719 = vand.u32 2147483647, %v674
          %vm720 = vcmp.eq.f32.partialorder %v719, 8.507059e+37
          %v721 = vand.u32 %v674, 2147483648
          %v722 = vor.u32 1.1754944e-38, %v721
          %v723 = vsel %vm720, %v722, %v718
          %v724 = vmul.f32 1.0, %v723
          %v725 = vrcp.pop %v675
          %v726 = vmul.f32 %v675, %v725
          %v727 = vsub.f32 1.0, %v726
          %v728 = vmul.f32 %v725, %v727
          %v729 = vadd.f32 %v725, %v728
          %vm730 = vweird.f32 %v675
          %vm731 = vweird.f32 %v725
          %vm732 = vmor %vm730, %vm731
          %v733 = vsel %vm732, %v725, %v729
          %v734 = vand.u32 2147483647, %v675
          %vm735 = vcmp.eq.f32.partialorder %v734, 8.507059e+37
          %v736 = vand.u32 %v675, 2147483648
          %v737 = vor.u32 1.1754944e-38, %v736
          %v738 = vsel %vm735, %v737, %v733
          %v739 = vmul.f32 1.0, %v738
          %v740 = vrcp.pop %v676
          %v741 = vmul.f32 %v676, %v740
          %v742 = vsub.f32 1.0, %v741
          %v743 = vmul.f32 %v740, %v742
          %v744 = vadd.f32 %v740, %v743
          %vm745 = vweird.f32 %v676
          %vm746 = vweird.f32 %v740
          %vm747 = vmor %vm745, %vm746
          %v748 = vsel %vm747, %v740, %v744
          %v749 = vand.u32 2147483647, %v676
          %vm750 = vcmp.eq.f32.partialorder %v749, 8.507059e+37
          %v751 = vand.u32 %v676, 2147483648
          %v752 = vor.u32 1.1754944e-38, %v751
          %v753 = vsel %vm750, %v752, %v748
          %v754 = vmul.f32 1.0, %v753
          %v755 = vrcp.pop %v677
          %v756 = vmul.f32 %v677, %v755
          %v757 = vsub.f32 1.0, %v756
          %v758 = vmul.f32 %v755, %v757
          %v759 = vadd.f32 %v755, %v758
          %vm760 = vweird.f32 %v677
          %vm761 = vweird.f32 %v755
          %vm762 = vmor %vm760, %vm761
          %v763 = vsel %vm762, %v755, %v759
          %v764 = vand.u32 2147483647, %v677
          %vm765 = vcmp.eq.f32.partialorder %v764, 8.507059e+37
          %v766 = vand.u32 %v677, 2147483648
          %v767 = vor.u32 1.1754944e-38, %v766
          %v768 = vsel %vm765, %v767, %v763
          %v769 = vmul.f32 1.0, %v768
          %v770 = vrcp.pop %v678
          %v771 = vmul.f32 %v678, %v770
          %v772 = vsub.f32 1.0, %v771
          %v773 = vmul.f32 %v770, %v772
          %v774 = vadd.f32 %v770, %v773
          %vm775 = vweird.f32 %v678
          %vm776 = vweird.f32 %v770
          %vm777 = vmor %vm775, %vm776
          %v778 = vsel %vm777, %v770, %v774
          %v779 = vand.u32 2147483647, %v678
          %vm780 = vcmp.eq.f32.partialorder %v779, 8.507059e+37
          %v781 = vand.u32 %v678, 2147483648
          %v782 = vor.u32 1.1754944e-38, %v781
          %v783 = vsel %vm780, %v782, %v778
          %v784 = vmul.f32 1.0, %v783
          %v785 = vrcp.pop %v679
          %v786 = vmul.f32 %v679, %v785
          %v787 = vsub.f32 1.0, %v786
          %v788 = vmul.f32 %v785, %v787
          %v789 = vadd.f32 %v785, %v788
          %vm790 = vweird.f32 %v679
          %vm791 = vweird.f32 %v785
          %vm792 = vmor %vm790, %vm791
          %v793 = vsel %vm792, %v785, %v789
          %v794 = vand.u32 2147483647, %v679
          %vm795 = vcmp.eq.f32.partialorder %v794, 8.507059e+37
          %v796 = vand.u32 %v679, 2147483648
          %v797 = vor.u32 1.1754944e-38, %v796
          %v798 = vsel %vm795, %v797, %v793
          %v799 = vmul.f32 1.0, %v798
          %v800 = vmul.f32 %v640, %v694
          %v801 = vmul.f32 %v641, %v709
          %v802 = vmul.f32 %v642, %v724
          %v803 = vmul.f32 %v643, %v739
          %v804 = vmul.f32 %v644, %v754
          %v805 = vmul.f32 %v645, %v769
          %v806 = vmul.f32 %v646, %v784
          %v807 = vmul.f32 %v647, %v799
          %v808 = vpack.c.bf16 %v802, %v800
          %v809 = vpack.c.bf16 %v803, %v801
          %v810 = vpack.c.bf16 %v806, %v804
          %v811 = vpack.c.bf16 %v807, %v805
          %813 = vset.pattern.permute.xlu0 0
          %814 = vperm.xlu0 %813, %v460
          %v815 = vpop.permute.xlu0 %814
          %818 = vset.pattern.permute.xlu0 0
          %819 = vperm.xlu0 %818, %v461
          %v820 = vpop.permute.xlu0 %819
          %v824 = vunpack.c.l.b16 %v456
          %v825 = vunpack.c.l.b16 %v457
          %v826 = vpack.c.b16 %v825, %v824
          %v828 = vsel %vm569, %v826, 0
          %830 = vmatpush.bf16.msra.mxu0 0
          %831 = vmatpush.bf16.msra.mxu0 0
          %832 = vmatpush.bf16.msra.mxu0 0
          %833 = vmatpush.bf16.msra.mxu0 0
          %834 = vmatpush.bf16.msra.mxu0 0
          %835 = vmatpush.bf16.msra.mxu0 0
          %836 = vmatpush.bf16.msra.mxu0 %v810
          %837 = vmatpush.bf16.msra.mxu0 %v808
          %838 = vmatmul.bf16.gmra.mxu0 %v828
          %v839 = vpop.f32.mrf.mxu0
          %v840 = vadd.f32 %v815, %v839
          %v841 = vpop.f32.mrf.mxu0
          %v842 = vadd.f32 %v820, %v841
          %843 = vdwg.mxu0
          %844 = vmatpush.bf16.msra.mxu0 0
          %845 = vmatpush.bf16.msra.mxu0 0
          %846 = vmatpush.bf16.msra.mxu0 0
          %847 = vmatpush.bf16.msra.mxu0 0
          %848 = vmatpush.bf16.msra.mxu0 0
          %849 = vmatpush.bf16.msra.mxu0 0
          %850 = vmatpush.bf16.msra.mxu0 %v811
          %851 = vmatpush.bf16.msra.mxu0 %v809
          %852 = vmatmul.bf16.gmra.mxu0 %v828
          %v853 = vpop.f32.mrf.mxu0
          %v854 = vadd.f32 %v815, %v853
          %v855 = vpop.f32.mrf.mxu0
          %v856 = vadd.f32 %v820, %v855
          %857 = vdwg.mxu0
          %v858 = vmax.f32 %v840, 0.0
          %v859 = vmax.f32 %v854, 0.0
          %v860 = vmax.f32 %v842, 0.0
          %v861 = vmax.f32 %v856, 0.0
          %v862 = vld [vmem:[#allocation3] sm:$0xff]
          %v863 = vld [vmem:[#allocation3 + $0x8] sm:$0xff]
          %v864 = vld [vmem:[#allocation3 + $0x10] sm:$0xff]
          %v865 = vld [vmem:[#allocation3 + $0x18] sm:$0xff]
          %v866 = vadd.f32 %v862, %v858
          %v867 = vadd.f32 %v863, %v859
          %v868 = vadd.f32 %v864, %v860
          %v869 = vadd.f32 %v865, %v861
          %870 = vst [vmem:[#allocation3] sm:$0xff] %v866
          %871 = vst [vmem:[#allocation3 + $0x8] sm:$0xff] %v867
          %872 = vst [vmem:[#allocation3 + $0x10] sm:$0xff] %v868
          %873 = vst [vmem:[#allocation3 + $0x18] sm:$0xff] %v869
          %v874 = vadd.f32 %v472, %v858
          %v875 = vadd.f32 %v473, %v859
          %v876 = vadd.f32 %v474, %v860
          %v877 = vadd.f32 %v475, %v861
          %v878 = vpack.c.bf16 %v876, %v874
          %v879 = vpack.c.bf16 %v877, %v875
          %881 = vset.pattern.permute.xlu0 0
          %882 = vperm.xlu0 %881, %v467
          %v883 = vpop.permute.xlu0 %882
          %886 = vset.pattern.permute.xlu0 0
          %887 = vperm.xlu0 %886, %v468
          %v888 = vpop.permute.xlu0 %887
          %v892 = vunpack.c.l.b16 %v464
          %v893 = vunpack.c.l.b16 %v465
          %v894 = vpack.c.b16 %v893, %v892
          %vm895 = vcmask 130048
          %v897 = vsel %vm895, %v894, 0
          %899 = vmatpush.bf16.msra.mxu0 0
          %900 = vmatpush.bf16.msra.mxu0 0
          %901 = vmatpush.bf16.msra.mxu0 0
          %902 = vmatpush.bf16.msra.mxu0 0
          %903 = vmatpush.bf16.msra.mxu0 0
          %904 = vmatpush.bf16.msra.mxu0 0
          %905 = vmatpush.bf16.msra.mxu0 0
          %906 = vmatpush.bf16.msra.mxu0 %v878
          %907 = vmatmul.bf16.gmra.mxu0 %v897
          %v908 = vpop.f32.mrf.mxu0
          %v909 = vadd.f32 %v883, %v908
          %v910 = vpop.f32.mrf.mxu0
          %v911 = vadd.f32 %v888, %v910
          %912 = vdwg.mxu0
          %913 = vmatpush.bf16.msra.mxu0 0
          %914 = vmatpush.bf16.msra.mxu0 0
          %915 = vmatpush.bf16.msra.mxu0 0
          %916 = vmatpush.bf16.msra.mxu0 0
          %917 = vmatpush.bf16.msra.mxu0 0
          %918 = vmatpush.bf16.msra.mxu0 0
          %919 = vmatpush.bf16.msra.mxu0 0
          %920 = vmatpush.bf16.msra.mxu0 %v879
          %921 = vmatmul.bf16.gmra.mxu0 %v897
          %v922 = vpop.f32.mrf.mxu0
          %v923 = vadd.f32 %v883, %v922
          %v924 = vpop.f32.mrf.mxu0
          %v925 = vadd.f32 %v888, %v924
          %926 = vdwg.mxu0
          %v927 = vmax.f32 %v909, 0.0
          %v928 = vmax.f32 %v923, 0.0
          %v929 = vmax.f32 %v911, 0.0
          %v930 = vmax.f32 %v925, 0.0
          %s931 = smul.u32 %s431, 20
          %s932 = smul.addr %s931, 8
          %s933 = scalar_lea.vmem [#allocation2], %s932
          %934 = vst [vmem:[%s933 + $0x20] sm:$0xff] %v927
          %935 = vst [vmem:[%s933 + $0x28] sm:$0xff] %v928
          %936 = vst [vmem:[%s933 + $0x70] sm:$0xff] %v929
          %937 = vst [vmem:[%s933 + $0x78] sm:$0xff] %v930
          %s938 = sadd.s32 %s430, 1
          %s939 = smul.u32 %s938, 8
          %s940 = smul.addr %s939, 4
          %s941 = scalar_lea.vmem %s5, %s940
          %v942 = vld [vmem:[%s941] sm:$0xf]
          %v943 = vld [vmem:[%s941 + $0x4] sm:$0xf]
          %v944 = vld [vmem:[%s941 + $0x8] sm:$0xf]
          %v945 = vld [vmem:[%s941 + $0xc] sm:$0xf]
          %v946 = vld [vmem:[%s941 + $0x10] sm:$0xf]
          %v947 = vld [vmem:[%s941 + $0x14] sm:$0xf]
          %v948 = vld [vmem:[%s941 + $0x18] sm:$0xf]
          %v949 = vld [vmem:[%s941 + $0x1c] sm:$0xf]
          %s950 = smul.u32 %s938, 64
          %s951 = scalar_lea.vmem %s6, %s950
          %v952 = vld [vmem:[%s951] sm:$0xff]
          %v953 = vld [vmem:[%s951 + $0x8] sm:$0xff]
          %v954 = vld [vmem:[%s951 + $0x10] sm:$0xff]
          %v955 = vld [vmem:[%s951 + $0x18] sm:$0xff]
          %v956 = vld [vmem:[%s951 + $0x20] sm:$0xff]
          %v957 = vld [vmem:[%s951 + $0x28] sm:$0xff]
          %v958 = vld [vmem:[%s951 + $0x30] sm:$0xff]
          %v959 = vld [vmem:[%s951 + $0x38] sm:$0xff]
          %s960 = smul.u32 %s938, 2
          %s961 = smul.addr %s960, 4
          %s962 = scalar_lea.vmem %s7, %s961
          %v963 = vld [vmem:[%s962] sm:$0xf]
          %v964 = vld [vmem:[%s962 + $0x4] sm:$0xf]
          %s965 = smul.u32 %s938, 16
          %s966 = scalar_lea.vmem %s8, %s965
          %v967 = vld [vmem:[%s966] sm:$0xff]
          %v968 = vld [vmem:[%s966 + $0x8] sm:$0xff]
          %s969 = smul.addr %s960, 4
          %s970 = scalar_lea.vmem %s3, %s969
          %v971 = vld [vmem:[%s970] sm:$0xf]
          %v972 = vld [vmem:[%s970 + $0x4] sm:$0xf]
          %s973 = scalar_lea.vmem %s4, %s965
          %v974 = vld [vmem:[%s973] sm:$0xff]
          %v975 = vld [vmem:[%s973 + $0x8] sm:$0xff]
          %v976 = vld [vmem:[%s933 + $0x18] sm:$0xff]
          %v977 = vld [vmem:[%s933 + $0x20] sm:$0xff]
          %v978 = vld [vmem:[%s933 + $0x28] sm:$0xff]
          %v979 = vld [vmem:[%s933 + $0x68] sm:$0xff]
          %v980 = vld [vmem:[%s933 + $0x70] sm:$0xff]
          %v981 = vld [vmem:[%s933 + $0x78] sm:$0xff]
          %v982 = vld [vmem:[%s933 + $0x30] sm:$0xff]
          %v983 = vld [vmem:[%s933 + $0x80] sm:$0xff]
          %990 = vrot.lane.b32.xlu0 %v977, 126
          %v991 = vpop.permute.xlu0 %990
          %992 = vrot.lane.b32.xlu0 %v978, 126
          %v993 = vpop.permute.xlu0 %992
          %994 = vrot.lane.b32.xlu0 %v982, 126
          %v995 = vpop.permute.xlu0 %994
          %996 = vrot.lane.b32.xlu0 %v980, 126
          %v997 = vpop.permute.xlu0 %996
          %998 = vrot.lane.b32.xlu0 %v981, 126
          %v999 = vpop.permute.xlu0 %998
          %1000 = vrot.lane.b32.xlu0 %v983, 126
          %v1001 = vpop.permute.xlu0 %1000
          %vm1002 = vcmask 1031168
          %v1003 = vsel %vm1002, %v991, %v993
          %v1004 = vsel %vm1002, %v993, %v995
          %v1005 = vsel %vm1002, %v997, %v999
          %v1006 = vsel %vm1002, %v999, %v1001
          %v1013 = vpack.c.bf16 %v979, %v976
          %v1014 = vpack.c.bf16 %v980, %v977
          %v1015 = vpack.c.bf16 %v981, %v978
          %v1016 = vpack.c.bf16 %v997, %v991
          %v1017 = vpack.c.bf16 %v1005, %v1003
          %v1018 = vpack.c.bf16 %v1006, %v1004
          %1020 = vset.pattern.permute.xlu0 0
          %1021 = vperm.xlu0 %1020, %v952
          %v1022 = vpop.permute.xlu0 %1021
          %1025 = vset.pattern.permute.xlu0 0
          %1026 = vperm.xlu0 %1025, %v953
          %v1027 = vpop.permute.xlu0 %1026
          %1030 = vset.pattern.permute.xlu0 0
          %1031 = vperm.xlu0 %1030, %v954
          %v1032 = vpop.permute.xlu0 %1031
          %1035 = vset.pattern.permute.xlu0 0
          %1036 = vperm.xlu0 %1035, %v955
          %v1037 = vpop.permute.xlu0 %1036
          %1040 = vset.pattern.permute.xlu0 0
          %1041 = vperm.xlu0 %1040, %v956
          %v1042 = vpop.permute.xlu0 %1041
          %1045 = vset.pattern.permute.xlu0 0
          %1046 = vperm.xlu0 %1045, %v957
          %v1047 = vpop.permute.xlu0 %1046
          %1050 = vset.pattern.permute.xlu0 0
          %1051 = vperm.xlu0 %1050, %v958
          %v1052 = vpop.permute.xlu0 %1051
          %1055 = vset.pattern.permute.xlu0 0
          %1056 = vperm.xlu0 %1055, %v959
          %v1057 = vpop.permute.xlu0 %1056
          %v1067 = vunpack.c.l.b16 %v942
          %v1068 = vunpack.c.l.b16 %v943
          %v1069 = vunpack.c.l.b16 %v944
          %v1070 = vunpack.c.l.b16 %v945
          %v1071 = vunpack.c.l.b16 %v946
          %v1072 = vunpack.c.l.b16 %v947
          %v1073 = vunpack.c.l.b16 %v948
          %v1074 = vunpack.c.l.b16 %v949
          %v1075 = vpack.c.b16 %v1068, %v1067
          %v1076 = vpack.c.b16 %v1070, %v1069
          %v1077 = vpack.c.b16 %v1072, %v1071
          %v1078 = vpack.c.b16 %v1074, %v1073
          %1085 = vrot.lane.b32.xlu0 %v1013, 1
          %v1086 = vpop.permute.xlu0 %1085
          %1087 = vrot.lane.b32.xlu0 %v1014, 1
          %v1088 = vpop.permute.xlu0 %1087
          %1089 = vrot.lane.b32.xlu0 %v1015, 1
          %v1090 = vpop.permute.xlu0 %1089
          %1091 = vrot.lane.b32.xlu0 %v1016, 1
          %v1092 = vpop.permute.xlu0 %1091
          %1093 = vrot.lane.b32.xlu0 %v1017, 1
          %v1094 = vpop.permute.xlu0 %1093
          %1095 = vrot.lane.b32.xlu0 %v1018, 1
          %v1096 = vpop.permute.xlu0 %1095
          %vm1097 = vcmask 7168
          %v1098 = vsel %vm1097, %v1086, %v1088
          %v1099 = vsel %vm1097, %v1088, %v1090
          %v1100 = vsel %vm1097, %v1092, %v1094
          %v1101 = vsel %vm1097, %v1094, %v1096
          %v1107 = vsel %vm569, %v1075, 0
          %v1110 = vsel %vm569, %v1076, 0
          %v1113 = vsel %vm569, %v1077, 0
          %v1116 = vsel %vm569, %v1078, 0
          %1118 = vmatpush.bf16.msra.mxu0 0
          %1119 = vmatpush.bf16.msra.mxu0 0
          %1120 = vmatpush.bf16.msra.mxu0 0
          %1121 = vmatpush.bf16.msra.mxu0 0
          %1122 = vmatpush.bf16.msra.mxu0 0
          %1123 = vmatpush.bf16.msra.mxu0 0
          %1124 = vmatpush.bf16.msra.mxu0 %v1100
          %1125 = vmatpush.bf16.msra.mxu0 %v1098
          %1126 = vmatmul.bf16.gmra.mxu0 %v1107
          %v1127 = vpop.f32.mrf.mxu0
          %v1128 = vadd.f32 %v1022, %v1127
          %v1129 = vpop.f32.mrf.mxu0
          %v1130 = vadd.f32 %v1027, %v1129
          %1131 = vmatmul.bf16.gmra.mxu0 %v1110
          %v1132 = vpop.f32.mrf.mxu0
          %v1133 = vadd.f32 %v1032, %v1132
          %v1134 = vpop.f32.mrf.mxu0
          %v1135 = vadd.f32 %v1037, %v1134
          %1136 = vmatmul.bf16.gmra.mxu0 %v1113
          %v1137 = vpop.f32.mrf.mxu0
          %v1138 = vadd.f32 %v1042, %v1137
          %v1139 = vpop.f32.mrf.mxu0
          %v1140 = vadd.f32 %v1047, %v1139
          %1141 = vmatmul.bf16.gmra.mxu0 %v1116
          %v1142 = vpop.f32.mrf.mxu0
          %v1143 = vadd.f32 %v1052, %v1142
          %v1144 = vpop.f32.mrf.mxu0
          %v1145 = vadd.f32 %v1057, %v1144
          %1146 = vdwg.mxu0
          %1147 = vmatpush.bf16.msra.mxu0 0
          %1148 = vmatpush.bf16.msra.mxu0 0
          %1149 = vmatpush.bf16.msra.mxu0 0
          %1150 = vmatpush.bf16.msra.mxu0 0
          %1151 = vmatpush.bf16.msra.mxu0 0
          %1152 = vmatpush.bf16.msra.mxu0 0
          %1153 = vmatpush.bf16.msra.mxu0 %v1101
          %1154 = vmatpush.bf16.msra.mxu0 %v1099
          %1155 = vmatmul.bf16.gmra.mxu0 %v1107
          %v1156 = vpop.f32.mrf.mxu0
          %v1157 = vadd.f32 %v1022, %v1156
          %v1158 = vpop.f32.mrf.mxu0
          %v1159 = vadd.f32 %v1027, %v1158
          %1160 = vmatmul.bf16.gmra.mxu0 %v1110
          %v1161 = vpop.f32.mrf.mxu0
          %v1162 = vadd.f32 %v1032, %v1161
          %v1163 = vpop.f32.mrf.mxu0
          %v1164 = vadd.f32 %v1037, %v1163
          %1165 = vmatmul.bf16.gmra.mxu0 %v1113
          %v1166 = vpop.f32.mrf.mxu0
          %v1167 = vadd.f32 %v1042, %v1166
          %v1168 = vpop.f32.mrf.mxu0
          %v1169 = vadd.f32 %v1047, %v1168
          %1170 = vmatmul.bf16.gmra.mxu0 %v1116
          %v1171 = vpop.f32.mrf.mxu0
          %v1172 = vadd.f32 %v1052, %v1171
          %v1173 = vpop.f32.mrf.mxu0
          %v1174 = vadd.f32 %v1057, %v1173
          %1175 = vdwg.mxu0
          %v1176 = vtanh.pop %v1128
          %v1177 = vtanh.pop %v1157
          %v1178 = vtanh.pop %v1130
          %v1179 = vtanh.pop %v1159
          %v1180 = vtanh.pop %v1133
          %v1181 = vtanh.pop %v1162
          %v1182 = vtanh.pop %v1135
          %v1183 = vtanh.pop %v1164
          %v1184 = vxor.u32 %v1138, 2147483648
          %v1185 = vxor.u32 %v1167, 2147483648
          %v1186 = vxor.u32 %v1140, 2147483648
          %v1187 = vxor.u32 %v1169, 2147483648
          %v1188 = vxor.u32 %v1143, 2147483648
          %v1189 = vxor.u32 %v1172, 2147483648
          %v1190 = vxor.u32 %v1145, 2147483648
          %v1191 = vxor.u32 %v1174, 2147483648
          %v1192 = vmul.f32 %v1184, 1.442695
          %v1193 = vpow.pop %v1192
          %v1194 = vmul.f32 %v1185, 1.442695
          %v1195 = vpow.pop %v1194
          %v1196 = vmul.f32 %v1186, 1.442695
          %v1197 = vpow.pop %v1196
          %v1198 = vmul.f32 %v1187, 1.442695
          %v1199 = vpow.pop %v1198
          %v1200 = vmul.f32 %v1188, 1.442695
          %v1201 = vpow.pop %v1200
          %v1202 = vmul.f32 %v1189, 1.442695
          %v1203 = vpow.pop %v1202
          %v1204 = vmul.f32 %v1190, 1.442695
          %v1205 = vpow.pop %v1204
          %v1206 = vmul.f32 %v1191, 1.442695
          %v1207 = vpow.pop %v1206
          %v1208 = vadd.f32 %v1193, 1.0
          %v1209 = vadd.f32 %v1195, 1.0
          %v1210 = vadd.f32 %v1197, 1.0
          %v1211 = vadd.f32 %v1199, 1.0
          %v1212 = vadd.f32 %v1201, 1.0
          %v1213 = vadd.f32 %v1203, 1.0
          %v1214 = vadd.f32 %v1205, 1.0
          %v1215 = vadd.f32 %v1207, 1.0
          %v1216 = vrcp.pop %v1208
          %v1217 = vmul.f32 %v1208, %v1216
          %v1218 = vsub.f32 1.0, %v1217
          %v1219 = vmul.f32 %v1216, %v1218
          %v1220 = vadd.f32 %v1216, %v1219
          %vm1221 = vweird.f32 %v1208
          %vm1222 = vweird.f32 %v1216
          %vm1223 = vmor %vm1221, %vm1222
          %v1224 = vsel %vm1223, %v1216, %v1220
          %v1225 = vand.u32 2147483647, %v1208
          %vm1226 = vcmp.eq.f32.partialorder %v1225, 8.507059e+37
          %v1227 = vand.u32 %v1208, 2147483648
          %v1228 = vor.u32 1.1754944e-38, %v1227
          %v1229 = vsel %vm1226, %v1228, %v1224
          %v1230 = vmul.f32 1.0, %v1229
          %v1231 = vrcp.pop %v1209
          %v1232 = vmul.f32 %v1209, %v1231
          %v1233 = vsub.f32 1.0, %v1232
          %v1234 = vmul.f32 %v1231, %v1233
          %v1235 = vadd.f32 %v1231, %v1234
          %vm1236 = vweird.f32 %v1209
          %vm1237 = vweird.f32 %v1231
          %vm1238 = vmor %vm1236, %vm1237
          %v1239 = vsel %vm1238, %v1231, %v1235
          %v1240 = vand.u32 2147483647, %v1209
          %vm1241 = vcmp.eq.f32.partialorder %v1240, 8.507059e+37
          %v1242 = vand.u32 %v1209, 2147483648
          %v1243 = vor.u32 1.1754944e-38, %v1242
          %v1244 = vsel %vm1241, %v1243, %v1239
          %v1245 = vmul.f32 1.0, %v1244
          %v1246 = vrcp.pop %v1210
          %v1247 = vmul.f32 %v1210, %v1246
          %v1248 = vsub.f32 1.0, %v1247
          %v1249 = vmul.f32 %v1246, %v1248
          %v1250 = vadd.f32 %v1246, %v1249
          %vm1251 = vweird.f32 %v1210
          %vm1252 = vweird.f32 %v1246
          %vm1253 = vmor %vm1251, %vm1252
          %v1254 = vsel %vm1253, %v1246, %v1250
          %v1255 = vand.u32 2147483647, %v1210
          %vm1256 = vcmp.eq.f32.partialorder %v1255, 8.507059e+37
          %v1257 = vand.u32 %v1210, 2147483648
          %v1258 = vor.u32 1.1754944e-38, %v1257
          %v1259 = vsel %vm1256, %v1258, %v1254
          %v1260 = vmul.f32 1.0, %v1259
          %v1261 = vrcp.pop %v1211
          %v1262 = vmul.f32 %v1211, %v1261
          %v1263 = vsub.f32 1.0, %v1262
          %v1264 = vmul.f32 %v1261, %v1263
          %v1265 = vadd.f32 %v1261, %v1264
          %vm1266 = vweird.f32 %v1211
          %vm1267 = vweird.f32 %v1261
          %vm1268 = vmor %vm1266, %vm1267
          %v1269 = vsel %vm1268, %v1261, %v1265
          %v1270 = vand.u32 2147483647, %v1211
          %vm1271 = vcmp.eq.f32.partialorder %v1270, 8.507059e+37
          %v1272 = vand.u32 %v1211, 2147483648
          %v1273 = vor.u32 1.1754944e-38, %v1272
          %v1274 = vsel %vm1271, %v1273, %v1269
          %v1275 = vmul.f32 1.0, %v1274
          %v1276 = vrcp.pop %v1212
          %v1277 = vmul.f32 %v1212, %v1276
          %v1278 = vsub.f32 1.0, %v1277
          %v1279 = vmul.f32 %v1276, %v1278
          %v1280 = vadd.f32 %v1276, %v1279
          %vm1281 = vweird.f32 %v1212
          %vm1282 = vweird.f32 %v1276
          %vm1283 = vmor %vm1281, %vm1282
          %v1284 = vsel %vm1283, %v1276, %v1280
          %v1285 = vand.u32 2147483647, %v1212
          %vm1286 = vcmp.eq.f32.partialorder %v1285, 8.507059e+37
          %v1287 = vand.u32 %v1212, 2147483648
          %v1288 = vor.u32 1.1754944e-38, %v1287
          %v1289 = vsel %vm1286, %v1288, %v1284
          %v1290 = vmul.f32 1.0, %v1289
          %v1291 = vrcp.pop %v1213
          %v1292 = vmul.f32 %v1213, %v1291
          %v1293 = vsub.f32 1.0, %v1292
          %v1294 = vmul.f32 %v1291, %v1293
          %v1295 = vadd.f32 %v1291, %v1294
          %vm1296 = vweird.f32 %v1213
          %vm1297 = vweird.f32 %v1291
          %vm1298 = vmor %vm1296, %vm1297
          %v1299 = vsel %vm1298, %v1291, %v1295
          %v1300 = vand.u32 2147483647, %v1213
          %vm1301 = vcmp.eq.f32.partialorder %v1300, 8.507059e+37
          %v1302 = vand.u32 %v1213, 2147483648
          %v1303 = vor.u32 1.1754944e-38, %v1302
          %v1304 = vsel %vm1301, %v1303, %v1299
          %v1305 = vmul.f32 1.0, %v1304
          %v1306 = vrcp.pop %v1214
          %v1307 = vmul.f32 %v1214, %v1306
          %v1308 = vsub.f32 1.0, %v1307
          %v1309 = vmul.f32 %v1306, %v1308
          %v1310 = vadd.f32 %v1306, %v1309
          %vm1311 = vweird.f32 %v1214
          %vm1312 = vweird.f32 %v1306
          %vm1313 = vmor %vm1311, %vm1312
          %v1314 = vsel %vm1313, %v1306, %v1310
          %v1315 = vand.u32 2147483647, %v1214
          %vm1316 = vcmp.eq.f32.partialorder %v1315, 8.507059e+37
          %v1317 = vand.u32 %v1214, 2147483648
          %v1318 = vor.u32 1.1754944e-38, %v1317
          %v1319 = vsel %vm1316, %v1318, %v1314
          %v1320 = vmul.f32 1.0, %v1319
          %v1321 = vrcp.pop %v1215
          %v1322 = vmul.f32 %v1215, %v1321
          %v1323 = vsub.f32 1.0, %v1322
          %v1324 = vmul.f32 %v1321, %v1323
          %v1325 = vadd.f32 %v1321, %v1324
          %vm1326 = vweird.f32 %v1215
          %vm1327 = vweird.f32 %v1321
          %vm1328 = vmor %vm1326, %vm1327
          %v1329 = vsel %vm1328, %v1321, %v1325
          %v1330 = vand.u32 2147483647, %v1215
          %vm1331 = vcmp.eq.f32.partialorder %v1330, 8.507059e+37
          %v1332 = vand.u32 %v1215, 2147483648
          %v1333 = vor.u32 1.1754944e-38, %v1332
          %v1334 = vsel %vm1331, %v1333, %v1329
          %v1335 = vmul.f32 1.0, %v1334
          %v1336 = vmul.f32 %v1176, %v1230
          %v1337 = vmul.f32 %v1177, %v1245
          %v1338 = vmul.f32 %v1178, %v1260
          %v1339 = vmul.f32 %v1179, %v1275
          %v1340 = vmul.f32 %v1180, %v1290
          %v1341 = vmul.f32 %v1181, %v1305
          %v1342 = vmul.f32 %v1182, %v1320
          %v1343 = vmul.f32 %v1183, %v1335
          %v1344 = vpack.c.bf16 %v1338, %v1336
          %v1345 = vpack.c.bf16 %v1339, %v1337
          %v1346 = vpack.c.bf16 %v1342, %v1340
          %v1347 = vpack.c.bf16 %v1343, %v1341
          %1349 = vset.pattern.permute.xlu0 0
          %1350 = vperm.xlu0 %1349, %v967
          %v1351 = vpop.permute.xlu0 %1350
          %1354 = vset.pattern.permute.xlu0 0
          %1355 = vperm.xlu0 %1354, %v968
          %v1356 = vpop.permute.xlu0 %1355
          %v1360 = vunpack.c.l.b16 %v963
          %v1361 = vunpack.c.l.b16 %v964
          %v1362 = vpack.c.b16 %v1361, %v1360
          %v1364 = vsel %vm569, %v1362, 0
          %1366 = vmatpush.bf16.msra.mxu0 0
          %1367 = vmatpush.bf16.msra.mxu0 0
          %1368 = vmatpush.bf16.msra.mxu0 0
          %1369 = vmatpush.bf16.msra.mxu0 0
          %1370 = vmatpush.bf16.msra.mxu0 0
          %1371 = vmatpush.bf16.msra.mxu0 0
          %1372 = vmatpush.bf16.msra.mxu0 %v1346
          %1373 = vmatpush.bf16.msra.mxu0 %v1344
          %1374 = vmatmul.bf16.gmra.mxu0 %v1364
          %v1375 = vpop.f32.mrf.mxu0
          %v1376 = vadd.f32 %v1351, %v1375
          %v1377 = vpop.f32.mrf.mxu0
          %v1378 = vadd.f32 %v1356, %v1377
          %1379 = vdwg.mxu0
          %1380 = vmatpush.bf16.msra.mxu0 0
          %1381 = vmatpush.bf16.msra.mxu0 0
          %1382 = vmatpush.bf16.msra.mxu0 0
          %1383 = vmatpush.bf16.msra.mxu0 0
          %1384 = vmatpush.bf16.msra.mxu0 0
          %1385 = vmatpush.bf16.msra.mxu0 0
          %1386 = vmatpush.bf16.msra.mxu0 %v1347
          %1387 = vmatpush.bf16.msra.mxu0 %v1345
          %1388 = vmatmul.bf16.gmra.mxu0 %v1364
          %v1389 = vpop.f32.mrf.mxu0
          %v1390 = vadd.f32 %v1351, %v1389
          %v1391 = vpop.f32.mrf.mxu0
          %v1392 = vadd.f32 %v1356, %v1391
          %1393 = vdwg.mxu0
          %v1394 = vmax.f32 %v1376, 0.0
          %v1395 = vmax.f32 %v1390, 0.0
          %v1396 = vmax.f32 %v1378, 0.0
          %v1397 = vmax.f32 %v1392, 0.0
          %v1398 = vld [vmem:[#allocation3] sm:$0xff]
          %v1399 = vld [vmem:[#allocation3 + $0x8] sm:$0xff]
          %v1400 = vld [vmem:[#allocation3 + $0x10] sm:$0xff]
          %v1401 = vld [vmem:[#allocation3 + $0x18] sm:$0xff]
          %v1402 = vadd.f32 %v1398, %v1394
          %v1403 = vadd.f32 %v1399, %v1395
          %v1404 = vadd.f32 %v1400, %v1396
          %v1405 = vadd.f32 %v1401, %v1397
          %1406 = vst [vmem:[#allocation3] sm:$0xff] %v1402
          %1407 = vst [vmem:[#allocation3 + $0x8] sm:$0xff] %v1403
          %1408 = vst [vmem:[#allocation3 + $0x10] sm:$0xff] %v1404
          %1409 = vst [vmem:[#allocation3 + $0x18] sm:$0xff] %v1405
          %v1410 = vld [vmem:[%s933 + $0x20] sm:$0xff]
          %v1411 = vld [vmem:[%s933 + $0x28] sm:$0xff]
          %v1412 = vld [vmem:[%s933 + $0x70] sm:$0xff]
          %v1413 = vld [vmem:[%s933 + $0x78] sm:$0xff]
          %v1414 = vadd.f32 %v1410, %v1394
          %v1415 = vadd.f32 %v1411, %v1395
          %v1416 = vadd.f32 %v1412, %v1396
          %v1417 = vadd.f32 %v1413, %v1397
          %v1418 = vpack.c.bf16 %v1416, %v1414
          %v1419 = vpack.c.bf16 %v1417, %v1415
          %1421 = vset.pattern.permute.xlu0 0
          %1422 = vperm.xlu0 %1421, %v974
          %v1423 = vpop.permute.xlu0 %1422
          %1426 = vset.pattern.permute.xlu0 0
          %1427 = vperm.xlu0 %1426, %v975
          %v1428 = vpop.permute.xlu0 %1427
          %v1432 = vunpack.c.l.b16 %v971
          %v1433 = vunpack.c.l.b16 %v972
          %v1434 = vpack.c.b16 %v1433, %v1432
          %v1436 = vsel %vm895, %v1434, 0
          %1438 = vmatpush.bf16.msra.mxu0 0
          %1439 = vmatpush.bf16.msra.mxu0 0
          %1440 = vmatpush.bf16.msra.mxu0 0
          %1441 = vmatpush.bf16.msra.mxu0 0
          %1442 = vmatpush.bf16.msra.mxu0 0
          %1443 = vmatpush.bf16.msra.mxu0 0
          %1444 = vmatpush.bf16.msra.mxu0 0
          %1445 = vmatpush.bf16.msra.mxu0 %v1418
          %1446 = vmatmul.bf16.gmra.mxu0 %v1436
          %v1447 = vpop.f32.mrf.mxu0
          %v1448 = vadd.f32 %v1423, %v1447
          %v1449 = vpop.f32.mrf.mxu0
          %v1450 = vadd.f32 %v1428, %v1449
          %1451 = vdwg.mxu0
          %1452 = vmatpush.bf16.msra.mxu0 0
          %1453 = vmatpush.bf16.msra.mxu0 0
          %1454 = vmatpush.bf16.msra.mxu0 0
          %1455 = vmatpush.bf16.msra.mxu0 0
          %1456 = vmatpush.bf16.msra.mxu0 0
          %1457 = vmatpush.bf16.msra.mxu0 0
          %1458 = vmatpush.bf16.msra.mxu0 0
          %1459 = vmatpush.bf16.msra.mxu0 %v1419
          %1460 = vmatmul.bf16.gmra.mxu0 %v1436
          %v1461 = vpop.f32.mrf.mxu0
          %v1462 = vadd.f32 %v1423, %v1461
          %v1463 = vpop.f32.mrf.mxu0
          %v1464 = vadd.f32 %v1428, %v1463
          %1465 = vdwg.mxu0
          %v1466 = vmax.f32 %v1448, 0.0
          %v1467 = vmax.f32 %v1462, 0.0
          %v1468 = vmax.f32 %v1450, 0.0
          %v1469 = vmax.f32 %v1464, 0.0
          %1470 = vst [vmem:[%s471 + $0x20] sm:$0xff] %v1466
          %1471 = vst [vmem:[%s471 + $0x28] sm:$0xff] %v1467
          %1472 = vst [vmem:[%s471 + $0x70] sm:$0xff] %v1468
          %1473 = vst [vmem:[%s471 + $0x78] sm:$0xff] %v1469
          %s1474 = sadd.s32 %s430, 2
          %s1475 = smul.u32 %s1474, 8
          %s1476 = smul.addr %s1475, 4
          %s1477 = scalar_lea.vmem %s5, %s1476
          %v1478 = vld [vmem:[%s1477] sm:$0xf]
          %v1479 = vld [vmem:[%s1477 + $0x4] sm:$0xf]
          %v1480 = vld [vmem:[%s1477 + $0x8] sm:$0xf]
          %v1481 = vld [vmem:[%s1477 + $0xc] sm:$0xf]
          %v1482 = vld [vmem:[%s1477 + $0x10] sm:$0xf]
          %v1483 = vld [vmem:[%s1477 + $0x14] sm:$0xf]
          %v1484 = vld [vmem:[%s1477 + $0x18] sm:$0xf]
          %v1485 = vld [vmem:[%s1477 + $0x1c] sm:$0xf]
          %s1486 = smul.u32 %s1474, 64
          %s1487 = scalar_lea.vmem %s6, %s1486
          %v1488 = vld [vmem:[%s1487] sm:$0xff]
          %v1489 = vld [vmem:[%s1487 + $0x8] sm:$0xff]
          %v1490 = vld [vmem:[%s1487 + $0x10] sm:$0xff]
          %v1491 = vld [vmem:[%s1487 + $0x18] sm:$0xff]
          %v1492 = vld [vmem:[%s1487 + $0x20] sm:$0xff]
          %v1493 = vld [vmem:[%s1487 + $0x28] sm:$0xff]
          %v1494 = vld [vmem:[%s1487 + $0x30] sm:$0xff]
          %v1495 = vld [vmem:[%s1487 + $0x38] sm:$0xff]
          %s1496 = smul.u32 %s1474, 2
          %s1497 = smul.addr %s1496, 4
          %s1498 = scalar_lea.vmem %s7, %s1497
          %v1499 = vld [vmem:[%s1498] sm:$0xf]
          %v1500 = vld [vmem:[%s1498 + $0x4] sm:$0xf]
          %s1501 = smul.u32 %s1474, 16
          %s1502 = scalar_lea.vmem %s8, %s1501
          %v1503 = vld [vmem:[%s1502] sm:$0xff]
          %v1504 = vld [vmem:[%s1502 + $0x8] sm:$0xff]
          %s1505 = smul.addr %s1496, 4
          %s1506 = scalar_lea.vmem %s3, %s1505
          %v1507 = vld [vmem:[%s1506] sm:$0xf]
          %v1508 = vld [vmem:[%s1506 + $0x4] sm:$0xf]
          %s1509 = scalar_lea.vmem %s4, %s1501
          %v1510 = vld [vmem:[%s1509] sm:$0xff]
          %v1511 = vld [vmem:[%s1509 + $0x8] sm:$0xff]
          %v1512 = vld [vmem:[%s471 + $0x18] sm:$0xff]
          %v1513 = vld [vmem:[%s471 + $0x20] sm:$0xff]
          %v1514 = vld [vmem:[%s471 + $0x28] sm:$0xff]
          %v1515 = vld [vmem:[%s471 + $0x68] sm:$0xff]
          %v1516 = vld [vmem:[%s471 + $0x70] sm:$0xff]
          %v1517 = vld [vmem:[%s471 + $0x78] sm:$0xff]
          %v1518 = vld [vmem:[%s471 + $0x30] sm:$0xff]
          %v1519 = vld [vmem:[%s471 + $0x80] sm:$0xff]
          %1526 = vrot.lane.b32.xlu0 %v1513, 124
          %v1527 = vpop.permute.xlu0 %1526
          %1528 = vrot.lane.b32.xlu0 %v1514, 124
          %v1529 = vpop.permute.xlu0 %1528
          %1530 = vrot.lane.b32.xlu0 %v1518, 124
          %v1531 = vpop.permute.xlu0 %1530
          %1532 = vrot.lane.b32.xlu0 %v1516, 124
          %v1533 = vpop.permute.xlu0 %1532
          %1534 = vrot.lane.b32.xlu0 %v1517, 124
          %v1535 = vpop.permute.xlu0 %1534
          %1536 = vrot.lane.b32.xlu0 %v1519, 124
          %v1537 = vpop.permute.xlu0 %1536
          %vm1538 = vcmask 1014784
          %v1539 = vsel %vm1538, %v1527, %v1529
          %v1540 = vsel %vm1538, %v1529, %v1531
          %v1541 = vsel %vm1538, %v1533, %v1535
          %v1542 = vsel %vm1538, %v1535, %v1537
          %v1549 = vpack.c.bf16 %v1515, %v1512
          %v1550 = vpack.c.bf16 %v1516, %v1513
          %v1551 = vpack.c.bf16 %v1517, %v1514
          %v1552 = vpack.c.bf16 %v1533, %v1527
          %v1553 = vpack.c.bf16 %v1541, %v1539
          %v1554 = vpack.c.bf16 %v1542, %v1540
          %1556 = vset.pattern.permute.xlu0 0
          %1557 = vperm.xlu0 %1556, %v1488
          %v1558 = vpop.permute.xlu0 %1557
          %1561 = vset.pattern.permute.xlu0 0
          %1562 = vperm.xlu0 %1561, %v1489
          %v1563 = vpop.permute.xlu0 %1562
          %1566 = vset.pattern.permute.xlu0 0
          %1567 = vperm.xlu0 %1566, %v1490
          %v1568 = vpop.permute.xlu0 %1567
          %1571 = vset.pattern.permute.xlu0 0
          %1572 = vperm.xlu0 %1571, %v1491
          %v1573 = vpop.permute.xlu0 %1572
          %1576 = vset.pattern.permute.xlu0 0
          %1577 = vperm.xlu0 %1576, %v1492
          %v1578 = vpop.permute.xlu0 %1577
          %1581 = vset.pattern.permute.xlu0 0
          %1582 = vperm.xlu0 %1581, %v1493
          %v1583 = vpop.permute.xlu0 %1582
          %1586 = vset.pattern.permute.xlu0 0
          %1587 = vperm.xlu0 %1586, %v1494
          %v1588 = vpop.permute.xlu0 %1587
          %1591 = vset.pattern.permute.xlu0 0
          %1592 = vperm.xlu0 %1591, %v1495
          %v1593 = vpop.permute.xlu0 %1592
          %v1603 = vunpack.c.l.b16 %v1478
          %v1604 = vunpack.c.l.b16 %v1479
          %v1605 = vunpack.c.l.b16 %v1480
          %v1606 = vunpack.c.l.b16 %v1481
          %v1607 = vunpack.c.l.b16 %v1482
          %v1608 = vunpack.c.l.b16 %v1483
          %v1609 = vunpack.c.l.b16 %v1484
          %v1610 = vunpack.c.l.b16 %v1485
          %v1611 = vpack.c.b16 %v1604, %v1603
          %v1612 = vpack.c.b16 %v1606, %v1605
          %v1613 = vpack.c.b16 %v1608, %v1607
          %v1614 = vpack.c.b16 %v1610, %v1609
          %1621 = vrot.lane.b32.xlu0 %v1549, 2
          %v1622 = vpop.permute.xlu0 %1621
          %1623 = vrot.lane.b32.xlu0 %v1550, 2
          %v1624 = vpop.permute.xlu0 %1623
          %1625 = vrot.lane.b32.xlu0 %v1551, 2
          %v1626 = vpop.permute.xlu0 %1625
          %1627 = vrot.lane.b32.xlu0 %v1552, 2
          %v1628 = vpop.permute.xlu0 %1627
          %1629 = vrot.lane.b32.xlu0 %v1553, 2
          %v1630 = vpop.permute.xlu0 %1629
          %1631 = vrot.lane.b32.xlu0 %v1554, 2
          %v1632 = vpop.permute.xlu0 %1631
          %vm1633 = vcmask 15360
          %v1634 = vsel %vm1633, %v1622, %v1624
          %v1635 = vsel %vm1633, %v1624, %v1626
          %v1636 = vsel %vm1633, %v1628, %v1630
          %v1637 = vsel %vm1633, %v1630, %v1632
          %v1643 = vsel %vm569, %v1611, 0
          %v1646 = vsel %vm569, %v1612, 0
          %v1649 = vsel %vm569, %v1613, 0
          %v1652 = vsel %vm569, %v1614, 0
          %1654 = vmatpush.bf16.msra.mxu0 0
          %1655 = vmatpush.bf16.msra.mxu0 0
          %1656 = vmatpush.bf16.msra.mxu0 0
          %1657 = vmatpush.bf16.msra.mxu0 0
          %1658 = vmatpush.bf16.msra.mxu0 0
          %1659 = vmatpush.bf16.msra.mxu0 0
          %1660 = vmatpush.bf16.msra.mxu0 %v1636
          %1661 = vmatpush.bf16.msra.mxu0 %v1634
          %1662 = vmatmul.bf16.gmra.mxu0 %v1643
          %v1663 = vpop.f32.mrf.mxu0
          %v1664 = vadd.f32 %v1558, %v1663
          %v1665 = vpop.f32.mrf.mxu0
          %v1666 = vadd.f32 %v1563, %v1665
          %1667 = vmatmul.bf16.gmra.mxu0 %v1646
          %v1668 = vpop.f32.mrf.mxu0
          %v1669 = vadd.f32 %v1568, %v1668
          %v1670 = vpop.f32.mrf.mxu0
          %v1671 = vadd.f32 %v1573, %v1670
          %1672 = vmatmul.bf16.gmra.mxu0 %v1649
          %v1673 = vpop.f32.mrf.mxu0
          %v1674 = vadd.f32 %v1578, %v1673
          %v1675 = vpop.f32.mrf.mxu0
          %v1676 = vadd.f32 %v1583, %v1675
          %1677 = vmatmul.bf16.gmra.mxu0 %v1652
          %v1678 = vpop.f32.mrf.mxu0
          %v1679 = vadd.f32 %v1588, %v1678
          %v1680 = vpop.f32.mrf.mxu0
          %v1681 = vadd.f32 %v1593, %v1680
          %1682 = vdwg.mxu0
          %1683 = vmatpush.bf16.msra.mxu0 0
          %1684 = vmatpush.bf16.msra.mxu0 0
          %1685 = vmatpush.bf16.msra.mxu0 0
          %1686 = vmatpush.bf16.msra.mxu0 0
          %1687 = vmatpush.bf16.msra.mxu0 0
          %1688 = vmatpush.bf16.msra.mxu0 0
          %1689 = vmatpush.bf16.msra.mxu0 %v1637
          %1690 = vmatpush.bf16.msra.mxu0 %v1635
          %1691 = vmatmul.bf16.gmra.mxu0 %v1643
          %v1692 = vpop.f32.mrf.mxu0
          %v1693 = vadd.f32 %v1558, %v1692
          %v1694 = vpop.f32.mrf.mxu0
          %v1695 = vadd.f32 %v1563, %v1694
          %1696 = vmatmul.bf16.gmra.mxu0 %v1646
          %v1697 = vpop.f32.mrf.mxu0
          %v1698 = vadd.f32 %v1568, %v1697
          %v1699 = vpop.f32.mrf.mxu0
          %v1700 = vadd.f32 %v1573, %v1699
          %1701 = vmatmul.bf16.gmra.mxu0 %v1649
          %v1702 = vpop.f32.mrf.mxu0
          %v1703 = vadd.f32 %v1578, %v1702
          %v1704 = vpop.f32.mrf.mxu0
          %v1705 = vadd.f32 %v1583, %v1704
          %1706 = vmatmul.bf16.gmra.mxu0 %v1652
          %v1707 = vpop.f32.mrf.mxu0
          %v1708 = vadd.f32 %v1588, %v1707
          %v1709 = vpop.f32.mrf.mxu0
          %v1710 = vadd.f32 %v1593, %v1709
          %1711 = vdwg.mxu0
          %v1712 = vtanh.pop %v1664
          %v1713 = vtanh.pop %v1693
          %v1714 = vtanh.pop %v1666
          %v1715 = vtanh.pop %v1695
          %v1716 = vtanh.pop %v1669
          %v1717 = vtanh.pop %v1698
          %v1718 = vtanh.pop %v1671
          %v1719 = vtanh.pop %v1700
          %v1720 = vxor.u32 %v1674, 2147483648
          %v1721 = vxor.u32 %v1703, 2147483648
          %v1722 = vxor.u32 %v1676, 2147483648
          %v1723 = vxor.u32 %v1705, 2147483648
          %v1724 = vxor.u32 %v1679, 2147483648
          %v1725 = vxor.u32 %v1708, 2147483648
          %v1726 = vxor.u32 %v1681, 2147483648
          %v1727 = vxor.u32 %v1710, 2147483648
          %v1728 = vmul.f32 %v1720, 1.442695
          %v1729 = vpow.pop %v1728
          %v1730 = vmul.f32 %v1721, 1.442695
          %v1731 = vpow.pop %v1730
          %v1732 = vmul.f32 %v1722, 1.442695
          %v1733 = vpow.pop %v1732
          %v1734 = vmul.f32 %v1723, 1.442695
          %v1735 = vpow.pop %v1734
          %v1736 = vmul.f32 %v1724, 1.442695
          %v1737 = vpow.pop %v1736
          %v1738 = vmul.f32 %v1725, 1.442695
          %v1739 = vpow.pop %v1738
          %v1740 = vmul.f32 %v1726, 1.442695
          %v1741 = vpow.pop %v1740
          %v1742 = vmul.f32 %v1727, 1.442695
          %v1743 = vpow.pop %v1742
          %v1744 = vadd.f32 %v1729, 1.0
          %v1745 = vadd.f32 %v1731, 1.0
          %v1746 = vadd.f32 %v1733, 1.0
          %v1747 = vadd.f32 %v1735, 1.0
          %v1748 = vadd.f32 %v1737, 1.0
          %v1749 = vadd.f32 %v1739, 1.0
          %v1750 = vadd.f32 %v1741, 1.0
          %v1751 = vadd.f32 %v1743, 1.0
          %v1752 = vrcp.pop %v1744
          %v1753 = vmul.f32 %v1744, %v1752
          %v1754 = vsub.f32 1.0, %v1753
          %v1755 = vmul.f32 %v1752, %v1754
          %v1756 = vadd.f32 %v1752, %v1755
          %vm1757 = vweird.f32 %v1744
          %vm1758 = vweird.f32 %v1752
          %vm1759 = vmor %vm1757, %vm1758
          %v1760 = vsel %vm1759, %v1752, %v1756
          %v1761 = vand.u32 2147483647, %v1744
          %vm1762 = vcmp.eq.f32.partialorder %v1761, 8.507059e+37
          %v1763 = vand.u32 %v1744, 2147483648
          %v1764 = vor.u32 1.1754944e-38, %v1763
          %v1765 = vsel %vm1762, %v1764, %v1760
          %v1766 = vmul.f32 1.0, %v1765
          %v1767 = vrcp.pop %v1745
          %v1768 = vmul.f32 %v1745, %v1767
          %v1769 = vsub.f32 1.0, %v1768
          %v1770 = vmul.f32 %v1767, %v1769
          %v1771 = vadd.f32 %v1767, %v1770
          %vm1772 = vweird.f32 %v1745
          %vm1773 = vweird.f32 %v1767
          %vm1774 = vmor %vm1772, %vm1773
          %v1775 = vsel %vm1774, %v1767, %v1771
          %v1776 = vand.u32 2147483647, %v1745
          %vm1777 = vcmp.eq.f32.partialorder %v1776, 8.507059e+37
          %v1778 = vand.u32 %v1745, 2147483648
          %v1779 = vor.u32 1.1754944e-38, %v1778
          %v1780 = vsel %vm1777, %v1779, %v1775
          %v1781 = vmul.f32 1.0, %v1780
          %v1782 = vrcp.pop %v1746
          %v1783 = vmul.f32 %v1746, %v1782
          %v1784 = vsub.f32 1.0, %v1783
          %v1785 = vmul.f32 %v1782, %v1784
          %v1786 = vadd.f32 %v1782, %v1785
          %vm1787 = vweird.f32 %v1746
          %vm1788 = vweird.f32 %v1782
          %vm1789 = vmor %vm1787, %vm1788
          %v1790 = vsel %vm1789, %v1782, %v1786
          %v1791 = vand.u32 2147483647, %v1746
          %vm1792 = vcmp.eq.f32.partialorder %v1791, 8.507059e+37
          %v1793 = vand.u32 %v1746, 2147483648
          %v1794 = vor.u32 1.1754944e-38, %v1793
          %v1795 = vsel %vm1792, %v1794, %v1790
          %v1796 = vmul.f32 1.0, %v1795
          %v1797 = vrcp.pop %v1747
          %v1798 = vmul.f32 %v1747, %v1797
          %v1799 = vsub.f32 1.0, %v1798
          %v1800 = vmul.f32 %v1797, %v1799
          %v1801 = vadd.f32 %v1797, %v1800
          %vm1802 = vweird.f32 %v1747
          %vm1803 = vweird.f32 %v1797
          %vm1804 = vmor %vm1802, %vm1803
          %v1805 = vsel %vm1804, %v1797, %v1801
          %v1806 = vand.u32 2147483647, %v1747
          %vm1807 = vcmp.eq.f32.partialorder %v1806, 8.507059e+37
          %v1808 = vand.u32 %v1747, 2147483648
          %v1809 = vor.u32 1.1754944e-38, %v1808
          %v1810 = vsel %vm1807, %v1809, %v1805
          %v1811 = vmul.f32 1.0, %v1810
          %v1812 = vrcp.pop %v1748
          %v1813 = vmul.f32 %v1748, %v1812
          %v1814 = vsub.f32 1.0, %v1813
          %v1815 = vmul.f32 %v1812, %v1814
          %v1816 = vadd.f32 %v1812, %v1815
          %vm1817 = vweird.f32 %v1748
          %vm1818 = vweird.f32 %v1812
          %vm1819 = vmor %vm1817, %vm1818
          %v1820 = vsel %vm1819, %v1812, %v1816
          %v1821 = vand.u32 2147483647, %v1748
          %vm1822 = vcmp.eq.f32.partialorder %v1821, 8.507059e+37
          %v1823 = vand.u32 %v1748, 2147483648
          %v1824 = vor.u32 1.1754944e-38, %v1823
          %v1825 = vsel %vm1822, %v1824, %v1820
          %v1826 = vmul.f32 1.0, %v1825
          %v1827 = vrcp.pop %v1749
          %v1828 = vmul.f32 %v1749, %v1827
          %v1829 = vsub.f32 1.0, %v1828
          %v1830 = vmul.f32 %v1827, %v1829
          %v1831 = vadd.f32 %v1827, %v1830
          %vm1832 = vweird.f32 %v1749
          %vm1833 = vweird.f32 %v1827
          %vm1834 = vmor %vm1832, %vm1833
          %v1835 = vsel %vm1834, %v1827, %v1831
          %v1836 = vand.u32 2147483647, %v1749
          %vm1837 = vcmp.eq.f32.partialorder %v1836, 8.507059e+37
          %v1838 = vand.u32 %v1749, 2147483648
          %v1839 = vor.u32 1.1754944e-38, %v1838
          %v1840 = vsel %vm1837, %v1839, %v1835
          %v1841 = vmul.f32 1.0, %v1840
          %v1842 = vrcp.pop %v1750
          %v1843 = vmul.f32 %v1750, %v1842
          %v1844 = vsub.f32 1.0, %v1843
          %v1845 = vmul.f32 %v1842, %v1844
          %v1846 = vadd.f32 %v1842, %v1845
          %vm1847 = vweird.f32 %v1750
          %vm1848 = vweird.f32 %v1842
          %vm1849 = vmor %vm1847, %vm1848
          %v1850 = vsel %vm1849, %v1842, %v1846
          %v1851 = vand.u32 2147483647, %v1750
          %vm1852 = vcmp.eq.f32.partialorder %v1851, 8.507059e+37
          %v1853 = vand.u32 %v1750, 2147483648
          %v1854 = vor.u32 1.1754944e-38, %v1853
          %v1855 = vsel %vm1852, %v1854, %v1850
          %v1856 = vmul.f32 1.0, %v1855
          %v1857 = vrcp.pop %v1751
          %v1858 = vmul.f32 %v1751, %v1857
          %v1859 = vsub.f32 1.0, %v1858
          %v1860 = vmul.f32 %v1857, %v1859
          %v1861 = vadd.f32 %v1857, %v1860
          %vm1862 = vweird.f32 %v1751
          %vm1863 = vweird.f32 %v1857
          %vm1864 = vmor %vm1862, %vm1863
          %v1865 = vsel %vm1864, %v1857, %v1861
          %v1866 = vand.u32 2147483647, %v1751
          %vm1867 = vcmp.eq.f32.partialorder %v1866, 8.507059e+37
          %v1868 = vand.u32 %v1751, 2147483648
          %v1869 = vor.u32 1.1754944e-38, %v1868
          %v1870 = vsel %vm1867, %v1869, %v1865
          %v1871 = vmul.f32 1.0, %v1870
          %v1872 = vmul.f32 %v1712, %v1766
          %v1873 = vmul.f32 %v1713, %v1781
          %v1874 = vmul.f32 %v1714, %v1796
          %v1875 = vmul.f32 %v1715, %v1811
          %v1876 = vmul.f32 %v1716, %v1826
          %v1877 = vmul.f32 %v1717, %v1841
          %v1878 = vmul.f32 %v1718, %v1856
          %v1879 = vmul.f32 %v1719, %v1871
          %v1880 = vpack.c.bf16 %v1874, %v1872
          %v1881 = vpack.c.bf16 %v1875, %v1873
          %v1882 = vpack.c.bf16 %v1878, %v1876
          %v1883 = vpack.c.bf16 %v1879, %v1877
          %1885 = vset.pattern.permute.xlu0 0
          %1886 = vperm.xlu0 %1885, %v1503
          %v1887 = vpop.permute.xlu0 %1886
          %1890 = vset.pattern.permute.xlu0 0
          %1891 = vperm.xlu0 %1890, %v1504
          %v1892 = vpop.permute.xlu0 %1891
          %v1896 = vunpack.c.l.b16 %v1499
          %v1897 = vunpack.c.l.b16 %v1500
          %v1898 = vpack.c.b16 %v1897, %v1896
          %v1900 = vsel %vm569, %v1898, 0
          %1902 = vmatpush.bf16.msra.mxu0 0
          %1903 = vmatpush.bf16.msra.mxu0 0
          %1904 = vmatpush.bf16.msra.mxu0 0
          %1905 = vmatpush.bf16.msra.mxu0 0
          %1906 = vmatpush.bf16.msra.mxu0 0
          %1907 = vmatpush.bf16.msra.mxu0 0
          %1908 = vmatpush.bf16.msra.mxu0 %v1882
          %1909 = vmatpush.bf16.msra.mxu0 %v1880
          %1910 = vmatmul.bf16.gmra.mxu0 %v1900
          %v1911 = vpop.f32.mrf.mxu0
          %v1912 = vadd.f32 %v1887, %v1911
          %v1913 = vpop.f32.mrf.mxu0
          %v1914 = vadd.f32 %v1892, %v1913
          %1915 = vdwg.mxu0
          %1916 = vmatpush.bf16.msra.mxu0 0
          %1917 = vmatpush.bf16.msra.mxu0 0
          %1918 = vmatpush.bf16.msra.mxu0 0
          %1919 = vmatpush.bf16.msra.mxu0 0
          %1920 = vmatpush.bf16.msra.mxu0 0
          %1921 = vmatpush.bf16.msra.mxu0 0
          %1922 = vmatpush.bf16.msra.mxu0 %v1883
          %1923 = vmatpush.bf16.msra.mxu0 %v1881
          %1924 = vmatmul.bf16.gmra.mxu0 %v1900
          %v1925 = vpop.f32.mrf.mxu0
          %v1926 = vadd.f32 %v1887, %v1925
          %v1927 = vpop.f32.mrf.mxu0
          %v1928 = vadd.f32 %v1892, %v1927
          %1929 = vdwg.mxu0
          %v1930 = vmax.f32 %v1912, 0.0
          %v1931 = vmax.f32 %v1926, 0.0
          %v1932 = vmax.f32 %v1914, 0.0
          %v1933 = vmax.f32 %v1928, 0.0
          %v1934 = vld [vmem:[#allocation3] sm:$0xff]
          %v1935 = vld [vmem:[#allocation3 + $0x8] sm:$0xff]
          %v1936 = vld [vmem:[#allocation3 + $0x10] sm:$0xff]
          %v1937 = vld [vmem:[#allocation3 + $0x18] sm:$0xff]
          %v1938 = vadd.f32 %v1934, %v1930
          %v1939 = vadd.f32 %v1935, %v1931
          %v1940 = vadd.f32 %v1936, %v1932
          %v1941 = vadd.f32 %v1937, %v1933
          %1942 = vst [vmem:[#allocation3] sm:$0xff] %v1938
          %1943 = vst [vmem:[#allocation3 + $0x8] sm:$0xff] %v1939
          %1944 = vst [vmem:[#allocation3 + $0x10] sm:$0xff] %v1940
          %1945 = vst [vmem:[#allocation3 + $0x18] sm:$0xff] %v1941
          %v1946 = vld [vmem:[%s471 + $0x20] sm:$0xff]
          %v1947 = vld [vmem:[%s471 + $0x28] sm:$0xff]
          %v1948 = vld [vmem:[%s471 + $0x70] sm:$0xff]
          %v1949 = vld [vmem:[%s471 + $0x78] sm:$0xff]
          %v1950 = vadd.f32 %v1946, %v1930
          %v1951 = vadd.f32 %v1947, %v1931
          %v1952 = vadd.f32 %v1948, %v1932
          %v1953 = vadd.f32 %v1949, %v1933
          %v1954 = vpack.c.bf16 %v1952, %v1950
          %v1955 = vpack.c.bf16 %v1953, %v1951
          %1957 = vset.pattern.permute.xlu0 0
          %1958 = vperm.xlu0 %1957, %v1510
          %v1959 = vpop.permute.xlu0 %1958
          %1962 = vset.pattern.permute.xlu0 0
          %1963 = vperm.xlu0 %1962, %v1511
          %v1964 = vpop.permute.xlu0 %1963
          %v1968 = vunpack.c.l.b16 %v1507
          %v1969 = vunpack.c.l.b16 %v1508
          %v1970 = vpack.c.b16 %v1969, %v1968
          %v1972 = vsel %vm895, %v1970, 0
          %1974 = vmatpush.bf16.msra.mxu0 0
          %1975 = vmatpush.bf16.msra.mxu0 0
          %1976 = vmatpush.bf16.msra.mxu0 0
          %1977 = vmatpush.bf16.msra.mxu0 0
          %1978 = vmatpush.bf16.msra.mxu0 0
          %1979 = vmatpush.bf16.msra.mxu0 0
          %1980 = vmatpush.bf16.msra.mxu0 0
          %1981 = vmatpush.bf16.msra.mxu0 %v1954
          %1982 = vmatmul.bf16.gmra.mxu0 %v1972
          %v1983 = vpop.f32.mrf.mxu0
          %v1984 = vadd.f32 %v1959, %v1983
          %v1985 = vpop.f32.mrf.mxu0
          %v1986 = vadd.f32 %v1964, %v1985
          %1987 = vdwg.mxu0
          %1988 = vmatpush.bf16.msra.mxu0 0
          %1989 = vmatpush.bf16.msra.mxu0 0
          %1990 = vmatpush.bf16.msra.mxu0 0
          %1991 = vmatpush.bf16.msra.mxu0 0
          %1992 = vmatpush.bf16.msra.mxu0 0
          %1993 = vmatpush.bf16.msra.mxu0 0
          %1994 = vmatpush.bf16.msra.mxu0 0
          %1995 = vmatpush.bf16.msra.mxu0 %v1955
          %1996 = vmatmul.bf16.gmra.mxu0 %v1972
          %v1997 = vpop.f32.mrf.mxu0
          %v1998 = vadd.f32 %v1959, %v1997
          %v1999 = vpop.f32.mrf.mxu0
          %v2000 = vadd.f32 %v1964, %v1999
          %2001 = vdwg.mxu0
          %v2002 = vmax.f32 %v1984, 0.0
          %v2003 = vmax.f32 %v1998, 0.0
          %v2004 = vmax.f32 %v1986, 0.0
          %v2005 = vmax.f32 %v2000, 0.0
          %2006 = vst [vmem:[%s933 + $0x20] sm:$0xff] %v2002
          %2007 = vst [vmem:[%s933 + $0x28] sm:$0xff] %v2003
          %2008 = vst [vmem:[%s933 + $0x70] sm:$0xff] %v2004
          %2009 = vst [vmem:[%s933 + $0x78] sm:$0xff] %v2005
          %s2010 = sadd.s32 %s430, 3
          %s2011 = smul.u32 %s2010, 8
          %s2012 = smul.addr %s2011, 4
          %s2013 = scalar_lea.vmem %s5, %s2012
          %v2014 = vld [vmem:[%s2013] sm:$0xf]
          %v2015 = vld [vmem:[%s2013 + $0x4] sm:$0xf]
          %v2016 = vld [vmem:[%s2013 + $0x8] sm:$0xf]
          %v2017 = vld [vmem:[%s2013 + $0xc] sm:$0xf]
          %v2018 = vld [vmem:[%s2013 + $0x10] sm:$0xf]
          %v2019 = vld [vmem:[%s2013 + $0x14] sm:$0xf]
          %v2020 = vld [vmem:[%s2013 + $0x18] sm:$0xf]
          %v2021 = vld [vmem:[%s2013 + $0x1c] sm:$0xf]
          %s2022 = smul.u32 %s2010, 64
          %s2023 = scalar_lea.vmem %s6, %s2022
          %v2024 = vld [vmem:[%s2023] sm:$0xff]
          %v2025 = vld [vmem:[%s2023 + $0x8] sm:$0xff]
          %v2026 = vld [vmem:[%s2023 + $0x10] sm:$0xff]
          %v2027 = vld [vmem:[%s2023 + $0x18] sm:$0xff]
          %v2028 = vld [vmem:[%s2023 + $0x20] sm:$0xff]
          %v2029 = vld [vmem:[%s2023 + $0x28] sm:$0xff]
          %v2030 = vld [vmem:[%s2023 + $0x30] sm:$0xff]
          %v2031 = vld [vmem:[%s2023 + $0x38] sm:$0xff]
          %s2032 = smul.u32 %s2010, 2
          %s2033 = smul.addr %s2032, 4
          %s2034 = scalar_lea.vmem %s7, %s2033
          %v2035 = vld [vmem:[%s2034] sm:$0xf]
          %v2036 = vld [vmem:[%s2034 + $0x4] sm:$0xf]
          %s2037 = smul.u32 %s2010, 16
          %s2038 = scalar_lea.vmem %s8, %s2037
          %v2039 = vld [vmem:[%s2038] sm:$0xff]
          %v2040 = vld [vmem:[%s2038 + $0x8] sm:$0xff]
          %s2041 = smul.addr %s2032, 4
          %s2042 = scalar_lea.vmem %s3, %s2041
          %v2043 = vld [vmem:[%s2042] sm:$0xf]
          %v2044 = vld [vmem:[%s2042 + $0x4] sm:$0xf]
          %s2045 = scalar_lea.vmem %s4, %s2037
          %v2046 = vld [vmem:[%s2045] sm:$0xff]
          %v2047 = vld [vmem:[%s2045 + $0x8] sm:$0xff]
          %v2048 = vld [vmem:[%s933 + $0x18] sm:$0xff]
          %v2049 = vld [vmem:[%s933 + $0x20] sm:$0xff]
          %v2050 = vld [vmem:[%s933 + $0x28] sm:$0xff]
          %v2051 = vld [vmem:[%s933 + $0x68] sm:$0xff]
          %v2052 = vld [vmem:[%s933 + $0x70] sm:$0xff]
          %v2053 = vld [vmem:[%s933 + $0x78] sm:$0xff]
          %v2054 = vld [vmem:[%s933 + $0x30] sm:$0xff]
          %v2055 = vld [vmem:[%s933 + $0x80] sm:$0xff]
          %2062 = vrot.lane.b32.xlu0 %v2049, 120
          %v2063 = vpop.permute.xlu0 %2062
          %2064 = vrot.lane.b32.xlu0 %v2050, 120
          %v2065 = vpop.permute.xlu0 %2064
          %2066 = vrot.lane.b32.xlu0 %v2054, 120
          %v2067 = vpop.permute.xlu0 %2066
          %2068 = vrot.lane.b32.xlu0 %v2052, 120
          %v2069 = vpop.permute.xlu0 %2068
          %2070 = vrot.lane.b32.xlu0 %v2053, 120
          %v2071 = vpop.permute.xlu0 %2070
          %2072 = vrot.lane.b32.xlu0 %v2055, 120
          %v2073 = vpop.permute.xlu0 %2072
          %vm2074 = vcmask 982016
          %v2075 = vsel %vm2074, %v2063, %v2065
          %v2076 = vsel %vm2074, %v2065, %v2067
          %v2077 = vsel %vm2074, %v2069, %v2071
          %v2078 = vsel %vm2074, %v2071, %v2073
          %v2085 = vpack.c.bf16 %v2051, %v2048
          %v2086 = vpack.c.bf16 %v2052, %v2049
          %v2087 = vpack.c.bf16 %v2053, %v2050
          %v2088 = vpack.c.bf16 %v2069, %v2063
          %v2089 = vpack.c.bf16 %v2077, %v2075
          %v2090 = vpack.c.bf16 %v2078, %v2076
          %2092 = vset.pattern.permute.xlu0 0
          %2093 = vperm.xlu0 %2092, %v2024
          %v2094 = vpop.permute.xlu0 %2093
          %2097 = vset.pattern.permute.xlu0 0
          %2098 = vperm.xlu0 %2097, %v2025
          %v2099 = vpop.permute.xlu0 %2098
          %2102 = vset.pattern.permute.xlu0 0
          %2103 = vperm.xlu0 %2102, %v2026
          %v2104 = vpop.permute.xlu0 %2103
          %2107 = vset.pattern.permute.xlu0 0
          %2108 = vperm.xlu0 %2107, %v2027
          %v2109 = vpop.permute.xlu0 %2108
          %2112 = vset.pattern.permute.xlu0 0
          %2113 = vperm.xlu0 %2112, %v2028
          %v2114 = vpop.permute.xlu0 %2113
          %2117 = vset.pattern.permute.xlu0 0
          %2118 = vperm.xlu0 %2117, %v2029
          %v2119 = vpop.permute.xlu0 %2118
          %2122 = vset.pattern.permute.xlu0 0
          %2123 = vperm.xlu0 %2122, %v2030
          %v2124 = vpop.permute.xlu0 %2123
          %2127 = vset.pattern.permute.xlu0 0
          %2128 = vperm.xlu0 %2127, %v2031
          %v2129 = vpop.permute.xlu0 %2128
          %v2139 = vunpack.c.l.b16 %v2014
          %v2140 = vunpack.c.l.b16 %v2015
          %v2141 = vunpack.c.l.b16 %v2016
          %v2142 = vunpack.c.l.b16 %v2017
          %v2143 = vunpack.c.l.b16 %v2018
          %v2144 = vunpack.c.l.b16 %v2019
          %v2145 = vunpack.c.l.b16 %v2020
          %v2146 = vunpack.c.l.b16 %v2021
          %v2147 = vpack.c.b16 %v2140, %v2139
          %v2148 = vpack.c.b16 %v2142, %v2141
          %v2149 = vpack.c.b16 %v2144, %v2143
          %v2150 = vpack.c.b16 %v2146, %v2145
          %2157 = vrot.lane.b32.xlu0 %v2085, 4
          %v2158 = vpop.permute.xlu0 %2157
          %2159 = vrot.lane.b32.xlu0 %v2086, 4
          %v2160 = vpop.permute.xlu0 %2159
          %2161 = vrot.lane.b32.xlu0 %v2087, 4
          %v2162 = vpop.permute.xlu0 %2161
          %2163 = vrot.lane.b32.xlu0 %v2088, 4
          %v2164 = vpop.permute.xlu0 %2163
          %2165 = vrot.lane.b32.xlu0 %v2089, 4
          %v2166 = vpop.permute.xlu0 %2165
          %2167 = vrot.lane.b32.xlu0 %v2090, 4
          %v2168 = vpop.permute.xlu0 %2167
          %vm2169 = vcmask 31744
          %v2170 = vsel %vm2169, %v2158, %v2160
          %v2171 = vsel %vm2169, %v2160, %v2162
          %v2172 = vsel %vm2169, %v2164, %v2166
          %v2173 = vsel %vm2169, %v2166, %v2168
          %v2179 = vsel %vm569, %v2147, 0
          %v2182 = vsel %vm569, %v2148, 0
          %v2185 = vsel %vm569, %v2149, 0
          %v2188 = vsel %vm569, %v2150, 0
          %2190 = vmatpush.bf16.msra.mxu0 0
          %2191 = vmatpush.bf16.msra.mxu0 0
          %2192 = vmatpush.bf16.msra.mxu0 0
          %2193 = vmatpush.bf16.msra.mxu0 0
          %2194 = vmatpush.bf16.msra.mxu0 0
          %2195 = vmatpush.bf16.msra.mxu0 0
          %2196 = vmatpush.bf16.msra.mxu0 %v2172
          %2197 = vmatpush.bf16.msra.mxu0 %v2170
          %2198 = vmatmul.bf16.gmra.mxu0 %v2179
          %v2199 = vpop.f32.mrf.mxu0
          %v2200 = vadd.f32 %v2094, %v2199
          %v2201 = vpop.f32.mrf.mxu0
          %v2202 = vadd.f32 %v2099, %v2201
          %2203 = vmatmul.bf16.gmra.mxu0 %v2182
          %v2204 = vpop.f32.mrf.mxu0
          %v2205 = vadd.f32 %v2104, %v2204
          %v2206 = vpop.f32.mrf.mxu0
          %v2207 = vadd.f32 %v2109, %v2206
          %2208 = vmatmul.bf16.gmra.mxu0 %v2185
          %v2209 = vpop.f32.mrf.mxu0
          %v2210 = vadd.f32 %v2114, %v2209
          %v2211 = vpop.f32.mrf.mxu0
          %v2212 = vadd.f32 %v2119, %v2211
          %2213 = vmatmul.bf16.gmra.mxu0 %v2188
          %v2214 = vpop.f32.mrf.mxu0
          %v2215 = vadd.f32 %v2124, %v2214
          %v2216 = vpop.f32.mrf.mxu0
          %v2217 = vadd.f32 %v2129, %v2216
          %2218 = vdwg.mxu0
          %2219 = vmatpush.bf16.msra.mxu0 0
          %2220 = vmatpush.bf16.msra.mxu0 0
          %2221 = vmatpush.bf16.msra.mxu0 0
          %2222 = vmatpush.bf16.msra.mxu0 0
          %2223 = vmatpush.bf16.msra.mxu0 0
          %2224 = vmatpush.bf16.msra.mxu0 0
          %2225 = vmatpush.bf16.msra.mxu0 %v2173
          %2226 = vmatpush.bf16.msra.mxu0 %v2171
          %2227 = vmatmul.bf16.gmra.mxu0 %v2179
          %v2228 = vpop.f32.mrf.mxu0
          %v2229 = vadd.f32 %v2094, %v2228
          %v2230 = vpop.f32.mrf.mxu0
          %v2231 = vadd.f32 %v2099, %v2230
          %2232 = vmatmul.bf16.gmra.mxu0 %v2182
          %v2233 = vpop.f32.mrf.mxu0
          %v2234 = vadd.f32 %v2104, %v2233
          %v2235 = vpop.f32.mrf.mxu0
          %v2236 = vadd.f32 %v2109, %v2235
          %2237 = vmatmul.bf16.gmra.mxu0 %v2185
          %v2238 = vpop.f32.mrf.mxu0
          %v2239 = vadd.f32 %v2114, %v2238
          %v2240 = vpop.f32.mrf.mxu0
          %v2241 = vadd.f32 %v2119, %v2240
          %2242 = vmatmul.bf16.gmra.mxu0 %v2188
          %v2243 = vpop.f32.mrf.mxu0
          %v2244 = vadd.f32 %v2124, %v2243
          %v2245 = vpop.f32.mrf.mxu0
          %v2246 = vadd.f32 %v2129, %v2245
          %2247 = vdwg.mxu0
          %v2248 = vtanh.pop %v2200
          %v2249 = vtanh.pop %v2229
          %v2250 = vtanh.pop %v2202
          %v2251 = vtanh.pop %v2231
          %v2252 = vtanh.pop %v2205
          %v2253 = vtanh.pop %v2234
          %v2254 = vtanh.pop %v2207
          %v2255 = vtanh.pop %v2236
          %v2256 = vxor.u32 %v2210, 2147483648
          %v2257 = vxor.u32 %v2239, 2147483648
          %v2258 = vxor.u32 %v2212, 2147483648
          %v2259 = vxor.u32 %v2241, 2147483648
          %v2260 = vxor.u32 %v2215, 2147483648
          %v2261 = vxor.u32 %v2244, 2147483648
          %v2262 = vxor.u32 %v2217, 2147483648
          %v2263 = vxor.u32 %v2246, 2147483648
          %v2264 = vmul.f32 %v2256, 1.442695
          %v2265 = vpow.pop %v2264
          %v2266 = vmul.f32 %v2257, 1.442695
          %v2267 = vpow.pop %v2266
          %v2268 = vmul.f32 %v2258, 1.442695
          %v2269 = vpow.pop %v2268
          %v2270 = vmul.f32 %v2259, 1.442695
          %v2271 = vpow.pop %v2270
          %v2272 = vmul.f32 %v2260, 1.442695
          %v2273 = vpow.pop %v2272
          %v2274 = vmul.f32 %v2261, 1.442695
          %v2275 = vpow.pop %v2274
          %v2276 = vmul.f32 %v2262, 1.442695
          %v2277 = vpow.pop %v2276
          %v2278 = vmul.f32 %v2263, 1.442695
          %v2279 = vpow.pop %v2278
          %v2280 = vadd.f32 %v2265, 1.0
          %v2281 = vadd.f32 %v2267, 1.0
          %v2282 = vadd.f32 %v2269, 1.0
          %v2283 = vadd.f32 %v2271, 1.0
          %v2284 = vadd.f32 %v2273, 1.0
          %v2285 = vadd.f32 %v2275, 1.0
          %v2286 = vadd.f32 %v2277, 1.0
          %v2287 = vadd.f32 %v2279, 1.0
          %v2288 = vrcp.pop %v2280
          %v2289 = vmul.f32 %v2280, %v2288
          %v2290 = vsub.f32 1.0, %v2289
          %v2291 = vmul.f32 %v2288, %v2290
          %v2292 = vadd.f32 %v2288, %v2291
          %vm2293 = vweird.f32 %v2280
          %vm2294 = vweird.f32 %v2288
          %vm2295 = vmor %vm2293, %vm2294
          %v2296 = vsel %vm2295, %v2288, %v2292
          %v2297 = vand.u32 2147483647, %v2280
          %vm2298 = vcmp.eq.f32.partialorder %v2297, 8.507059e+37
          %v2299 = vand.u32 %v2280, 2147483648
          %v2300 = vor.u32 1.1754944e-38, %v2299
          %v2301 = vsel %vm2298, %v2300, %v2296
          %v2302 = vmul.f32 1.0, %v2301
          %v2303 = vrcp.pop %v2281
          %v2304 = vmul.f32 %v2281, %v2303
          %v2305 = vsub.f32 1.0, %v2304
          %v2306 = vmul.f32 %v2303, %v2305
          %v2307 = vadd.f32 %v2303, %v2306
          %vm2308 = vweird.f32 %v2281
          %vm2309 = vweird.f32 %v2303
          %vm2310 = vmor %vm2308, %vm2309
          %v2311 = vsel %vm2310, %v2303, %v2307
          %v2312 = vand.u32 2147483647, %v2281
          %vm2313 = vcmp.eq.f32.partialorder %v2312, 8.507059e+37
          %v2314 = vand.u32 %v2281, 2147483648
          %v2315 = vor.u32 1.1754944e-38, %v2314
          %v2316 = vsel %vm2313, %v2315, %v2311
          %v2317 = vmul.f32 1.0, %v2316
          %v2318 = vrcp.pop %v2282
          %v2319 = vmul.f32 %v2282, %v2318
          %v2320 = vsub.f32 1.0, %v2319
          %v2321 = vmul.f32 %v2318, %v2320
          %v2322 = vadd.f32 %v2318, %v2321
          %vm2323 = vweird.f32 %v2282
          %vm2324 = vweird.f32 %v2318
          %vm2325 = vmor %vm2323, %vm2324
          %v2326 = vsel %vm2325, %v2318, %v2322
          %v2327 = vand.u32 2147483647, %v2282
          %vm2328 = vcmp.eq.f32.partialorder %v2327, 8.507059e+37
          %v2329 = vand.u32 %v2282, 2147483648
          %v2330 = vor.u32 1.1754944e-38, %v2329
          %v2331 = vsel %vm2328, %v2330, %v2326
          %v2332 = vmul.f32 1.0, %v2331
          %v2333 = vrcp.pop %v2283
          %v2334 = vmul.f32 %v2283, %v2333
          %v2335 = vsub.f32 1.0, %v2334
          %v2336 = vmul.f32 %v2333, %v2335
          %v2337 = vadd.f32 %v2333, %v2336
          %vm2338 = vweird.f32 %v2283
          %vm2339 = vweird.f32 %v2333
          %vm2340 = vmor %vm2338, %vm2339
          %v2341 = vsel %vm2340, %v2333, %v2337
          %v2342 = vand.u32 2147483647, %v2283
          %vm2343 = vcmp.eq.f32.partialorder %v2342, 8.507059e+37
          %v2344 = vand.u32 %v2283, 2147483648
          %v2345 = vor.u32 1.1754944e-38, %v2344
          %v2346 = vsel %vm2343, %v2345, %v2341
          %v2347 = vmul.f32 1.0, %v2346
          %v2348 = vrcp.pop %v2284
          %v2349 = vmul.f32 %v2284, %v2348
          %v2350 = vsub.f32 1.0, %v2349
          %v2351 = vmul.f32 %v2348, %v2350
          %v2352 = vadd.f32 %v2348, %v2351
          %vm2353 = vweird.f32 %v2284
          %vm2354 = vweird.f32 %v2348
          %vm2355 = vmor %vm2353, %vm2354
          %v2356 = vsel %vm2355, %v2348, %v2352
          %v2357 = vand.u32 2147483647, %v2284
          %vm2358 = vcmp.eq.f32.partialorder %v2357, 8.507059e+37
          %v2359 = vand.u32 %v2284, 2147483648
          %v2360 = vor.u32 1.1754944e-38, %v2359
          %v2361 = vsel %vm2358, %v2360, %v2356
          %v2362 = vmul.f32 1.0, %v2361
          %v2363 = vrcp.pop %v2285
          %v2364 = vmul.f32 %v2285, %v2363
          %v2365 = vsub.f32 1.0, %v2364
          %v2366 = vmul.f32 %v2363, %v2365
          %v2367 = vadd.f32 %v2363, %v2366
          %vm2368 = vweird.f32 %v2285
          %vm2369 = vweird.f32 %v2363
          %vm2370 = vmor %vm2368, %vm2369
          %v2371 = vsel %vm2370, %v2363, %v2367
          %v2372 = vand.u32 2147483647, %v2285
          %vm2373 = vcmp.eq.f32.partialorder %v2372, 8.507059e+37
          %v2374 = vand.u32 %v2285, 2147483648
          %v2375 = vor.u32 1.1754944e-38, %v2374
          %v2376 = vsel %vm2373, %v2375, %v2371
          %v2377 = vmul.f32 1.0, %v2376
          %v2378 = vrcp.pop %v2286
          %v2379 = vmul.f32 %v2286, %v2378
          %v2380 = vsub.f32 1.0, %v2379
          %v2381 = vmul.f32 %v2378, %v2380
          %v2382 = vadd.f32 %v2378, %v2381
          %vm2383 = vweird.f32 %v2286
          %vm2384 = vweird.f32 %v2378
          %vm2385 = vmor %vm2383, %vm2384
          %v2386 = vsel %vm2385, %v2378, %v2382
          %v2387 = vand.u32 2147483647, %v2286
          %vm2388 = vcmp.eq.f32.partialorder %v2387, 8.507059e+37
          %v2389 = vand.u32 %v2286, 2147483648
          %v2390 = vor.u32 1.1754944e-38, %v2389
          %v2391 = vsel %vm2388, %v2390, %v2386
          %v2392 = vmul.f32 1.0, %v2391
          %v2393 = vrcp.pop %v2287
          %v2394 = vmul.f32 %v2287, %v2393
          %v2395 = vsub.f32 1.0, %v2394
          %v2396 = vmul.f32 %v2393, %v2395
          %v2397 = vadd.f32 %v2393, %v2396
          %vm2398 = vweird.f32 %v2287
          %vm2399 = vweird.f32 %v2393
          %vm2400 = vmor %vm2398, %vm2399
          %v2401 = vsel %vm2400, %v2393, %v2397
          %v2402 = vand.u32 2147483647, %v2287
          %vm2403 = vcmp.eq.f32.partialorder %v2402, 8.507059e+37
          %v2404 = vand.u32 %v2287, 2147483648
          %v2405 = vor.u32 1.1754944e-38, %v2404
          %v2406 = vsel %vm2403, %v2405, %v2401
          %v2407 = vmul.f32 1.0, %v2406
          %v2408 = vmul.f32 %v2248, %v2302
          %v2409 = vmul.f32 %v2249, %v2317
          %v2410 = vmul.f32 %v2250, %v2332
          %v2411 = vmul.f32 %v2251, %v2347
          %v2412 = vmul.f32 %v2252, %v2362
          %v2413 = vmul.f32 %v2253, %v2377
          %v2414 = vmul.f32 %v2254, %v2392
          %v2415 = vmul.f32 %v2255, %v2407
          %v2416 = vpack.c.bf16 %v2410, %v2408
          %v2417 = vpack.c.bf16 %v2411, %v2409
          %v2418 = vpack.c.bf16 %v2414, %v2412
          %v2419 = vpack.c.bf16 %v2415, %v2413
          %2421 = vset.pattern.permute.xlu0 0
          %2422 = vperm.xlu0 %2421, %v2039
          %v2423 = vpop.permute.xlu0 %2422
          %2426 = vset.pattern.permute.xlu0 0
          %2427 = vperm.xlu0 %2426, %v2040
          %v2428 = vpop.permute.xlu0 %2427
          %v2432 = vunpack.c.l.b16 %v2035
          %v2433 = vunpack.c.l.b16 %v2036
          %v2434 = vpack.c.b16 %v2433, %v2432
          %v2436 = vsel %vm569, %v2434, 0
          %2438 = vmatpush.bf16.msra.mxu0 0
          %2439 = vmatpush.bf16.msra.mxu0 0
          %2440 = vmatpush.bf16.msra.mxu0 0
          %2441 = vmatpush.bf16.msra.mxu0 0
          %2442 = vmatpush.bf16.msra.mxu0 0
          %2443 = vmatpush.bf16.msra.mxu0 0
          %2444 = vmatpush.bf16.msra.mxu0 %v2418
          %2445 = vmatpush.bf16.msra.mxu0 %v2416
          %2446 = vmatmul.bf16.gmra.mxu0 %v2436
          %v2447 = vpop.f32.mrf.mxu0
          %v2448 = vadd.f32 %v2423, %v2447
          %v2449 = vpop.f32.mrf.mxu0
          %v2450 = vadd.f32 %v2428, %v2449
          %2451 = vdwg.mxu0
          %2452 = vmatpush.bf16.msra.mxu0 0
          %2453 = vmatpush.bf16.msra.mxu0 0
          %2454 = vmatpush.bf16.msra.mxu0 0
          %2455 = vmatpush.bf16.msra.mxu0 0
          %2456 = vmatpush.bf16.msra.mxu0 0
          %2457 = vmatpush.bf16.msra.mxu0 0
          %2458 = vmatpush.bf16.msra.mxu0 %v2419
          %2459 = vmatpush.bf16.msra.mxu0 %v2417
          %2460 = vmatmul.bf16.gmra.mxu0 %v2436
          %v2461 = vpop.f32.mrf.mxu0
          %v2462 = vadd.f32 %v2423, %v2461
          %v2463 = vpop.f32.mrf.mxu0
          %v2464 = vadd.f32 %v2428, %v2463
          %2465 = vdwg.mxu0
          %v2466 = vmax.f32 %v2448, 0.0
          %v2467 = vmax.f32 %v2462, 0.0
          %v2468 = vmax.f32 %v2450, 0.0
          %v2469 = vmax.f32 %v2464, 0.0
          %v2470 = vld [vmem:[#allocation3] sm:$0xff]
          %v2471 = vld [vmem:[#allocation3 + $0x8] sm:$0xff]
          %v2472 = vld [vmem:[#allocation3 + $0x10] sm:$0xff]
          %v2473 = vld [vmem:[#allocation3 + $0x18] sm:$0xff]
          %v2474 = vadd.f32 %v2470, %v2466
          %v2475 = vadd.f32 %v2471, %v2467
          %v2476 = vadd.f32 %v2472, %v2468
          %v2477 = vadd.f32 %v2473, %v2469
          %2478 = vst [vmem:[#allocation3] sm:$0xff] %v2474
          %2479 = vst [vmem:[#allocation3 + $0x8] sm:$0xff] %v2475
          %2480 = vst [vmem:[#allocation3 + $0x10] sm:$0xff] %v2476
          %2481 = vst [vmem:[#allocation3 + $0x18] sm:$0xff] %v2477
          %v2482 = vld [vmem:[%s933 + $0x20] sm:$0xff]
          %v2483 = vld [vmem:[%s933 + $0x28] sm:$0xff]
          %v2484 = vld [vmem:[%s933 + $0x70] sm:$0xff]
          %v2485 = vld [vmem:[%s933 + $0x78] sm:$0xff]
          %v2486 = vadd.f32 %v2482, %v2466
          %v2487 = vadd.f32 %v2483, %v2467
          %v2488 = vadd.f32 %v2484, %v2468
          %v2489 = vadd.f32 %v2485, %v2469
          %v2490 = vpack.c.bf16 %v2488, %v2486
          %v2491 = vpack.c.bf16 %v2489, %v2487
          %2493 = vset.pattern.permute.xlu0 0
          %2494 = vperm.xlu0 %2493, %v2046
          %v2495 = vpop.permute.xlu0 %2494
          %2498 = vset.pattern.permute.xlu0 0
          %2499 = vperm.xlu0 %2498, %v2047
          %v2500 = vpop.permute.xlu0 %2499
          %v2504 = vunpack.c.l.b16 %v2043
          %v2505 = vunpack.c.l.b16 %v2044
          %v2506 = vpack.c.b16 %v2505, %v2504
          %v2508 = vsel %vm895, %v2506, 0
          %2510 = vmatpush.bf16.msra.mxu0 0
          %2511 = vmatpush.bf16.msra.mxu0 0
          %2512 = vmatpush.bf16.msra.mxu0 0
          %2513 = vmatpush.bf16.msra.mxu0 0
          %2514 = vmatpush.bf16.msra.mxu0 0
          %2515 = vmatpush.bf16.msra.mxu0 0
          %2516 = vmatpush.bf16.msra.mxu0 0
          %2517 = vmatpush.bf16.msra.mxu0 %v2490
          %2518 = vmatmul.bf16.gmra.mxu0 %v2508
          %v2519 = vpop.f32.mrf.mxu0
          %v2520 = vadd.f32 %v2495, %v2519
          %v2521 = vpop.f32.mrf.mxu0
          %v2522 = vadd.f32 %v2500, %v2521
          %2523 = vdwg.mxu0
          %2524 = vmatpush.bf16.msra.mxu0 0
          %2525 = vmatpush.bf16.msra.mxu0 0
          %2526 = vmatpush.bf16.msra.mxu0 0
          %2527 = vmatpush.bf16.msra.mxu0 0
          %2528 = vmatpush.bf16.msra.mxu0 0
          %2529 = vmatpush.bf16.msra.mxu0 0
          %2530 = vmatpush.bf16.msra.mxu0 0
          %2531 = vmatpush.bf16.msra.mxu0 %v2491
          %2532 = vmatmul.bf16.gmra.mxu0 %v2508
          %v2533 = vpop.f32.mrf.mxu0
          %v2534 = vadd.f32 %v2495, %v2533
          %v2535 = vpop.f32.mrf.mxu0
          %v2536 = vadd.f32 %v2500, %v2535
          %2537 = vdwg.mxu0
          %v2538 = vmax.f32 %v2520, 0.0
          %v2539 = vmax.f32 %v2534, 0.0
          %v2540 = vmax.f32 %v2522, 0.0
          %v2541 = vmax.f32 %v2536, 0.0
          %2542 = vst [vmem:[%s471 + $0x20] sm:$0xff] %v2538
          %2543 = vst [vmem:[%s471 + $0x28] sm:$0xff] %v2539
          %2544 = vst [vmem:[%s471 + $0x70] sm:$0xff] %v2540
          %2545 = vst [vmem:[%s471 + $0x78] sm:$0xff] %v2541
          %s2546 = sadd.s32 %s430, 4
          %s2547 = smul.u32 %s2546, 8
          %s2548 = smul.addr %s2547, 4
          %s2549 = scalar_lea.vmem %s5, %s2548
          %v2550 = vld [vmem:[%s2549] sm:$0xf]
          %v2551 = vld [vmem:[%s2549 + $0x4] sm:$0xf]
          %v2552 = vld [vmem:[%s2549 + $0x8] sm:$0xf]
          %v2553 = vld [vmem:[%s2549 + $0xc] sm:$0xf]
          %v2554 = vld [vmem:[%s2549 + $0x10] sm:$0xf]
          %v2555 = vld [vmem:[%s2549 + $0x14] sm:$0xf]
          %v2556 = vld [vmem:[%s2549 + $0x18] sm:$0xf]
          %v2557 = vld [vmem:[%s2549 + $0x1c] sm:$0xf]
          %s2558 = smul.u32 %s2546, 64
          %s2559 = scalar_lea.vmem %s6, %s2558
          %v2560 = vld [vmem:[%s2559] sm:$0xff]
          %v2561 = vld [vmem:[%s2559 + $0x8] sm:$0xff]
          %v2562 = vld [vmem:[%s2559 + $0x10] sm:$0xff]
          %v2563 = vld [vmem:[%s2559 + $0x18] sm:$0xff]
          %v2564 = vld [vmem:[%s2559 + $0x20] sm:$0xff]
          %v2565 = vld [vmem:[%s2559 + $0x28] sm:$0xff]
          %v2566 = vld [vmem:[%s2559 + $0x30] sm:$0xff]
          %v2567 = vld [vmem:[%s2559 + $0x38] sm:$0xff]
          %s2568 = smul.u32 %s2546, 2
          %s2569 = smul.addr %s2568, 4
          %s2570 = scalar_lea.vmem %s7, %s2569
          %v2571 = vld [vmem:[%s2570] sm:$0xf]
          %v2572 = vld [vmem:[%s2570 + $0x4] sm:$0xf]
          %s2573 = smul.u32 %s2546, 16
          %s2574 = scalar_lea.vmem %s8, %s2573
          %v2575 = vld [vmem:[%s2574] sm:$0xff]
          %v2576 = vld [vmem:[%s2574 + $0x8] sm:$0xff]
          %s2577 = smul.addr %s2568, 4
          %s2578 = scalar_lea.vmem %s3, %s2577
          %v2579 = vld [vmem:[%s2578] sm:$0xf]
          %v2580 = vld [vmem:[%s2578 + $0x4] sm:$0xf]
          %s2581 = scalar_lea.vmem %s4, %s2573
          %v2582 = vld [vmem:[%s2581] sm:$0xff]
          %v2583 = vld [vmem:[%s2581 + $0x8] sm:$0xff]
          %v2584 = vld [vmem:[%s471 + $0x18] sm:$0xff]
          %v2585 = vld [vmem:[%s471 + $0x20] sm:$0xff]
          %v2586 = vld [vmem:[%s471 + $0x28] sm:$0xff]
          %v2587 = vld [vmem:[%s471 + $0x68] sm:$0xff]
          %v2588 = vld [vmem:[%s471 + $0x70] sm:$0xff]
          %v2589 = vld [vmem:[%s471 + $0x78] sm:$0xff]
          %v2590 = vld [vmem:[%s471 + $0x30] sm:$0xff]
          %v2591 = vld [vmem:[%s471 + $0x80] sm:$0xff]
          %2598 = vrot.lane.b32.xlu0 %v2585, 112
          %v2599 = vpop.permute.xlu0 %2598
          %2600 = vrot.lane.b32.xlu0 %v2586, 112
          %v2601 = vpop.permute.xlu0 %2600
          %2602 = vrot.lane.b32.xlu0 %v2590, 112
          %v2603 = vpop.permute.xlu0 %2602
          %2604 = vrot.lane.b32.xlu0 %v2588, 112
          %v2605 = vpop.permute.xlu0 %2604
          %2606 = vrot.lane.b32.xlu0 %v2589, 112
          %v2607 = vpop.permute.xlu0 %2606
          %2608 = vrot.lane.b32.xlu0 %v2591, 112
          %v2609 = vpop.permute.xlu0 %2608
          %vm2610 = vcmask 916480
          %v2611 = vsel %vm2610, %v2599, %v2601
          %v2612 = vsel %vm2610, %v2601, %v2603
          %v2613 = vsel %vm2610, %v2605, %v2607
          %v2614 = vsel %vm2610, %v2607, %v2609
          %v2621 = vpack.c.bf16 %v2587, %v2584
          %v2622 = vpack.c.bf16 %v2588, %v2585
          %v2623 = vpack.c.bf16 %v2589, %v2586
          %v2624 = vpack.c.bf16 %v2605, %v2599
          %v2625 = vpack.c.bf16 %v2613, %v2611
          %v2626 = vpack.c.bf16 %v2614, %v2612
          %2628 = vset.pattern.permute.xlu0 0
          %2629 = vperm.xlu0 %2628, %v2560
          %v2630 = vpop.permute.xlu0 %2629
          %2633 = vset.pattern.permute.xlu0 0
          %2634 = vperm.xlu0 %2633, %v2561
          %v2635 = vpop.permute.xlu0 %2634
          %2638 = vset.pattern.permute.xlu0 0
          %2639 = vperm.xlu0 %2638, %v2562
          %v2640 = vpop.permute.xlu0 %2639
          %2643 = vset.pattern.permute.xlu0 0
          %2644 = vperm.xlu0 %2643, %v2563
          %v2645 = vpop.permute.xlu0 %2644
          %2648 = vset.pattern.permute.xlu0 0
          %2649 = vperm.xlu0 %2648, %v2564
          %v2650 = vpop.permute.xlu0 %2649
          %2653 = vset.pattern.permute.xlu0 0
          %2654 = vperm.xlu0 %2653, %v2565
          %v2655 = vpop.permute.xlu0 %2654
          %2658 = vset.pattern.permute.xlu0 0
          %2659 = vperm.xlu0 %2658, %v2566
          %v2660 = vpop.permute.xlu0 %2659
          %2663 = vset.pattern.permute.xlu0 0
          %2664 = vperm.xlu0 %2663, %v2567
          %v2665 = vpop.permute.xlu0 %2664
          %v2675 = vunpack.c.l.b16 %v2550
          %v2676 = vunpack.c.l.b16 %v2551
          %v2677 = vunpack.c.l.b16 %v2552
          %v2678 = vunpack.c.l.b16 %v2553
          %v2679 = vunpack.c.l.b16 %v2554
          %v2680 = vunpack.c.l.b16 %v2555
          %v2681 = vunpack.c.l.b16 %v2556
          %v2682 = vunpack.c.l.b16 %v2557
          %v2683 = vpack.c.b16 %v2676, %v2675
          %v2684 = vpack.c.b16 %v2678, %v2677
          %v2685 = vpack.c.b16 %v2680, %v2679
          %v2686 = vpack.c.b16 %v2682, %v2681
          %2693 = vrot.lane.b32.xlu0 %v2621, 8
          %v2694 = vpop.permute.xlu0 %2693
          %2695 = vrot.lane.b32.xlu0 %v2622, 8
          %v2696 = vpop.permute.xlu0 %2695
          %2697 = vrot.lane.b32.xlu0 %v2623, 8
          %v2698 = vpop.permute.xlu0 %2697
          %2699 = vrot.lane.b32.xlu0 %v2624, 8
          %v2700 = vpop.permute.xlu0 %2699
          %2701 = vrot.lane.b32.xlu0 %v2625, 8
          %v2702 = vpop.permute.xlu0 %2701
          %2703 = vrot.lane.b32.xlu0 %v2626, 8
          %v2704 = vpop.permute.xlu0 %2703
          %vm2705 = vcmask 64512
          %v2706 = vsel %vm2705, %v2694, %v2696
          %v2707 = vsel %vm2705, %v2696, %v2698
          %v2708 = vsel %vm2705, %v2700, %v2702
          %v2709 = vsel %vm2705, %v2702, %v2704
          %v2715 = vsel %vm569, %v2683, 0
          %v2718 = vsel %vm569, %v2684, 0
          %v2721 = vsel %vm569, %v2685, 0
          %v2724 = vsel %vm569, %v2686, 0
          %2726 = vmatpush.bf16.msra.mxu0 0
          %2727 = vmatpush.bf16.msra.mxu0 0
          %2728 = vmatpush.bf16.msra.mxu0 0
          %2729 = vmatpush.bf16.msra.mxu0 0
          %2730 = vmatpush.bf16.msra.mxu0 0
          %2731 = vmatpush.bf16.msra.mxu0 0
          %2732 = vmatpush.bf16.msra.mxu0 %v2708
          %2733 = vmatpush.bf16.msra.mxu0 %v2706
          %2734 = vmatmul.bf16.gmra.mxu0 %v2715
          %v2735 = vpop.f32.mrf.mxu0
          %v2736 = vadd.f32 %v2630, %v2735
          %v2737 = vpop.f32.mrf.mxu0
          %v2738 = vadd.f32 %v2635, %v2737
          %2739 = vmatmul.bf16.gmra.mxu0 %v2718
          %v2740 = vpop.f32.mrf.mxu0
          %v2741 = vadd.f32 %v2640, %v2740
          %v2742 = vpop.f32.mrf.mxu0
          %v2743 = vadd.f32 %v2645, %v2742
          %2744 = vmatmul.bf16.gmra.mxu0 %v2721
          %v2745 = vpop.f32.mrf.mxu0
          %v2746 = vadd.f32 %v2650, %v2745
          %v2747 = vpop.f32.mrf.mxu0
          %v2748 = vadd.f32 %v2655, %v2747
          %2749 = vmatmul.bf16.gmra.mxu0 %v2724
          %v2750 = vpop.f32.mrf.mxu0
          %v2751 = vadd.f32 %v2660, %v2750
          %v2752 = vpop.f32.mrf.mxu0
          %v2753 = vadd.f32 %v2665, %v2752
          %2754 = vdwg.mxu0
          %2755 = vmatpush.bf16.msra.mxu0 0
          %2756 = vmatpush.bf16.msra.mxu0 0
          %2757 = vmatpush.bf16.msra.mxu0 0
          %2758 = vmatpush.bf16.msra.mxu0 0
          %2759 = vmatpush.bf16.msra.mxu0 0
          %2760 = vmatpush.bf16.msra.mxu0 0
          %2761 = vmatpush.bf16.msra.mxu0 %v2709
          %2762 = vmatpush.bf16.msra.mxu0 %v2707
          %2763 = vmatmul.bf16.gmra.mxu0 %v2715
          %v2764 = vpop.f32.mrf.mxu0
          %v2765 = vadd.f32 %v2630, %v2764
          %v2766 = vpop.f32.mrf.mxu0
          %v2767 = vadd.f32 %v2635, %v2766
          %2768 = vmatmul.bf16.gmra.mxu0 %v2718
          %v2769 = vpop.f32.mrf.mxu0
          %v2770 = vadd.f32 %v2640, %v2769
          %v2771 = vpop.f32.mrf.mxu0
          %v2772 = vadd.f32 %v2645, %v2771
          %2773 = vmatmul.bf16.gmra.mxu0 %v2721
          %v2774 = vpop.f32.mrf.mxu0
          %v2775 = vadd.f32 %v2650, %v2774
          %v2776 = vpop.f32.mrf.mxu0
          %v2777 = vadd.f32 %v2655, %v2776
          %2778 = vmatmul.bf16.gmra.mxu0 %v2724
          %v2779 = vpop.f32.mrf.mxu0
          %v2780 = vadd.f32 %v2660, %v2779
          %v2781 = vpop.f32.mrf.mxu0
          %v2782 = vadd.f32 %v2665, %v2781
          %2783 = vdwg.mxu0
          %v2784 = vtanh.pop %v2736
          %v2785 = vtanh.pop %v2765
          %v2786 = vtanh.pop %v2738
          %v2787 = vtanh.pop %v2767
          %v2788 = vtanh.pop %v2741
          %v2789 = vtanh.pop %v2770
          %v2790 = vtanh.pop %v2743
          %v2791 = vtanh.pop %v2772
          %v2792 = vxor.u32 %v2746, 2147483648
          %v2793 = vxor.u32 %v2775, 2147483648
          %v2794 = vxor.u32 %v2748, 2147483648
          %v2795 = vxor.u32 %v2777, 2147483648
          %v2796 = vxor.u32 %v2751, 2147483648
          %v2797 = vxor.u32 %v2780, 2147483648
          %v2798 = vxor.u32 %v2753, 2147483648
          %v2799 = vxor.u32 %v2782, 2147483648
          %v2800 = vmul.f32 %v2792, 1.442695
          %v2801 = vpow.pop %v2800
          %v2802 = vmul.f32 %v2793, 1.442695
          %v2803 = vpow.pop %v2802
          %v2804 = vmul.f32 %v2794, 1.442695
          %v2805 = vpow.pop %v2804
          %v2806 = vmul.f32 %v2795, 1.442695
          %v2807 = vpow.pop %v2806
          %v2808 = vmul.f32 %v2796, 1.442695
          %v2809 = vpow.pop %v2808
          %v2810 = vmul.f32 %v2797, 1.442695
          %v2811 = vpow.pop %v2810
          %v2812 = vmul.f32 %v2798, 1.442695
          %v2813 = vpow.pop %v2812
          %v2814 = vmul.f32 %v2799, 1.442695
          %v2815 = vpow.pop %v2814
          %v2816 = vadd.f32 %v2801, 1.0
          %v2817 = vadd.f32 %v2803, 1.0
          %v2818 = vadd.f32 %v2805, 1.0
          %v2819 = vadd.f32 %v2807, 1.0
          %v2820 = vadd.f32 %v2809, 1.0
          %v2821 = vadd.f32 %v2811, 1.0
          %v2822 = vadd.f32 %v2813, 1.0
          %v2823 = vadd.f32 %v2815, 1.0
          %v2824 = vrcp.pop %v2816
          %v2825 = vmul.f32 %v2816, %v2824
          %v2826 = vsub.f32 1.0, %v2825
          %v2827 = vmul.f32 %v2824, %v2826
          %v2828 = vadd.f32 %v2824, %v2827
          %vm2829 = vweird.f32 %v2816
          %vm2830 = vweird.f32 %v2824
          %vm2831 = vmor %vm2829, %vm2830
          %v2832 = vsel %vm2831, %v2824, %v2828
          %v2833 = vand.u32 2147483647, %v2816
          %vm2834 = vcmp.eq.f32.partialorder %v2833, 8.507059e+37
          %v2835 = vand.u32 %v2816, 2147483648
          %v2836 = vor.u32 1.1754944e-38, %v2835
          %v2837 = vsel %vm2834, %v2836, %v2832
          %v2838 = vmul.f32 1.0, %v2837
          %v2839 = vrcp.pop %v2817
          %v2840 = vmul.f32 %v2817, %v2839
          %v2841 = vsub.f32 1.0, %v2840
          %v2842 = vmul.f32 %v2839, %v2841
          %v2843 = vadd.f32 %v2839, %v2842
          %vm2844 = vweird.f32 %v2817
          %vm2845 = vweird.f32 %v2839
          %vm2846 = vmor %vm2844, %vm2845
          %v2847 = vsel %vm2846, %v2839, %v2843
          %v2848 = vand.u32 2147483647, %v2817
          %vm2849 = vcmp.eq.f32.partialorder %v2848, 8.507059e+37
          %v2850 = vand.u32 %v2817, 2147483648
          %v2851 = vor.u32 1.1754944e-38, %v2850
          %v2852 = vsel %vm2849, %v2851, %v2847
          %v2853 = vmul.f32 1.0, %v2852
          %v2854 = vrcp.pop %v2818
          %v2855 = vmul.f32 %v2818, %v2854
          %v2856 = vsub.f32 1.0, %v2855
          %v2857 = vmul.f32 %v2854, %v2856
          %v2858 = vadd.f32 %v2854, %v2857
          %vm2859 = vweird.f32 %v2818
          %vm2860 = vweird.f32 %v2854
          %vm2861 = vmor %vm2859, %vm2860
          %v2862 = vsel %vm2861, %v2854, %v2858
          %v2863 = vand.u32 2147483647, %v2818
          %vm2864 = vcmp.eq.f32.partialorder %v2863, 8.507059e+37
          %v2865 = vand.u32 %v2818, 2147483648
          %v2866 = vor.u32 1.1754944e-38, %v2865
          %v2867 = vsel %vm2864, %v2866, %v2862
          %v2868 = vmul.f32 1.0, %v2867
          %v2869 = vrcp.pop %v2819
          %v2870 = vmul.f32 %v2819, %v2869
          %v2871 = vsub.f32 1.0, %v2870
          %v2872 = vmul.f32 %v2869, %v2871
          %v2873 = vadd.f32 %v2869, %v2872
          %vm2874 = vweird.f32 %v2819
          %vm2875 = vweird.f32 %v2869
          %vm2876 = vmor %vm2874, %vm2875
          %v2877 = vsel %vm2876, %v2869, %v2873
          %v2878 = vand.u32 2147483647, %v2819
          %vm2879 = vcmp.eq.f32.partialorder %v2878, 8.507059e+37
          %v2880 = vand.u32 %v2819, 2147483648
          %v2881 = vor.u32 1.1754944e-38, %v2880
          %v2882 = vsel %vm2879, %v2881, %v2877
          %v2883 = vmul.f32 1.0, %v2882
          %v2884 = vrcp.pop %v2820
          %v2885 = vmul.f32 %v2820, %v2884
          %v2886 = vsub.f32 1.0, %v2885
          %v2887 = vmul.f32 %v2884, %v2886
          %v2888 = vadd.f32 %v2884, %v2887
          %vm2889 = vweird.f32 %v2820
          %vm2890 = vweird.f32 %v2884
          %vm2891 = vmor %vm2889, %vm2890
          %v2892 = vsel %vm2891, %v2884, %v2888
          %v2893 = vand.u32 2147483647, %v2820
          %vm2894 = vcmp.eq.f32.partialorder %v2893, 8.507059e+37
          %v2895 = vand.u32 %v2820, 2147483648
          %v2896 = vor.u32 1.1754944e-38, %v2895
          %v2897 = vsel %vm2894, %v2896, %v2892
          %v2898 = vmul.f32 1.0, %v2897
          %v2899 = vrcp.pop %v2821
          %v2900 = vmul.f32 %v2821, %v2899
          %v2901 = vsub.f32 1.0, %v2900
          %v2902 = vmul.f32 %v2899, %v2901
          %v2903 = vadd.f32 %v2899, %v2902
          %vm2904 = vweird.f32 %v2821
          %vm2905 = vweird.f32 %v2899
          %vm2906 = vmor %vm2904, %vm2905
          %v2907 = vsel %vm2906, %v2899, %v2903
          %v2908 = vand.u32 2147483647, %v2821
          %vm2909 = vcmp.eq.f32.partialorder %v2908, 8.507059e+37
          %v2910 = vand.u32 %v2821, 2147483648
          %v2911 = vor.u32 1.1754944e-38, %v2910
          %v2912 = vsel %vm2909, %v2911, %v2907
          %v2913 = vmul.f32 1.0, %v2912
          %v2914 = vrcp.pop %v2822
          %v2915 = vmul.f32 %v2822, %v2914
          %v2916 = vsub.f32 1.0, %v2915
          %v2917 = vmul.f32 %v2914, %v2916
          %v2918 = vadd.f32 %v2914, %v2917
          %vm2919 = vweird.f32 %v2822
          %vm2920 = vweird.f32 %v2914
          %vm2921 = vmor %vm2919, %vm2920
          %v2922 = vsel %vm2921, %v2914, %v2918
          %v2923 = vand.u32 2147483647, %v2822
          %vm2924 = vcmp.eq.f32.partialorder %v2923, 8.507059e+37
          %v2925 = vand.u32 %v2822, 2147483648
          %v2926 = vor.u32 1.1754944e-38, %v2925
          %v2927 = vsel %vm2924, %v2926, %v2922
          %v2928 = vmul.f32 1.0, %v2927
          %v2929 = vrcp.pop %v2823
          %v2930 = vmul.f32 %v2823, %v2929
          %v2931 = vsub.f32 1.0, %v2930
          %v2932 = vmul.f32 %v2929, %v2931
          %v2933 = vadd.f32 %v2929, %v2932
          %vm2934 = vweird.f32 %v2823
          %vm2935 = vweird.f32 %v2929
          %vm2936 = vmor %vm2934, %vm2935
          %v2937 = vsel %vm2936, %v2929, %v2933
          %v2938 = vand.u32 2147483647, %v2823
          %vm2939 = vcmp.eq.f32.partialorder %v2938, 8.507059e+37
          %v2940 = vand.u32 %v2823, 2147483648
          %v2941 = vor.u32 1.1754944e-38, %v2940
          %v2942 = vsel %vm2939, %v2941, %v2937
          %v2943 = vmul.f32 1.0, %v2942
          %v2944 = vmul.f32 %v2784, %v2838
          %v2945 = vmul.f32 %v2785, %v2853
          %v2946 = vmul.f32 %v2786, %v2868
          %v2947 = vmul.f32 %v2787, %v2883
          %v2948 = vmul.f32 %v2788, %v2898
          %v2949 = vmul.f32 %v2789, %v2913
          %v2950 = vmul.f32 %v2790, %v2928
          %v2951 = vmul.f32 %v2791, %v2943
          %v2952 = vpack.c.bf16 %v2946, %v2944
          %v2953 = vpack.c.bf16 %v2947, %v2945
          %v2954 = vpack.c.bf16 %v2950, %v2948
          %v2955 = vpack.c.bf16 %v2951, %v2949
          %2957 = vset.pattern.permute.xlu0 0
          %2958 = vperm.xlu0 %2957, %v2575
          %v2959 = vpop.permute.xlu0 %2958
          %2962 = vset.pattern.permute.xlu0 0
          %2963 = vperm.xlu0 %2962, %v2576
          %v2964 = vpop.permute.xlu0 %2963
          %v2968 = vunpack.c.l.b16 %v2571
          %v2969 = vunpack.c.l.b16 %v2572
          %v2970 = vpack.c.b16 %v2969, %v2968
          %v2972 = vsel %vm569, %v2970, 0
          %2974 = vmatpush.bf16.msra.mxu0 0
          %2975 = vmatpush.bf16.msra.mxu0 0
          %2976 = vmatpush.bf16.msra.mxu0 0
          %2977 = vmatpush.bf16.msra.mxu0 0
          %2978 = vmatpush.bf16.msra.mxu0 0
          %2979 = vmatpush.bf16.msra.mxu0 0
          %2980 = vmatpush.bf16.msra.mxu0 %v2954
          %2981 = vmatpush.bf16.msra.mxu0 %v2952
          %2982 = vmatmul.bf16.gmra.mxu0 %v2972
          %v2983 = vpop.f32.mrf.mxu0
          %v2984 = vadd.f32 %v2959, %v2983
          %v2985 = vpop.f32.mrf.mxu0
          %v2986 = vadd.f32 %v2964, %v2985
          %2987 = vdwg.mxu0
          %2988 = vmatpush.bf16.msra.mxu0 0
          %2989 = vmatpush.bf16.msra.mxu0 0
          %2990 = vmatpush.bf16.msra.mxu0 0
          %2991 = vmatpush.bf16.msra.mxu0 0
          %2992 = vmatpush.bf16.msra.mxu0 0
          %2993 = vmatpush.bf16.msra.mxu0 0
          %2994 = vmatpush.bf16.msra.mxu0 %v2955
          %2995 = vmatpush.bf16.msra.mxu0 %v2953
          %2996 = vmatmul.bf16.gmra.mxu0 %v2972
          %v2997 = vpop.f32.mrf.mxu0
          %v2998 = vadd.f32 %v2959, %v2997
          %v2999 = vpop.f32.mrf.mxu0
          %v3000 = vadd.f32 %v2964, %v2999
          %3001 = vdwg.mxu0
          %v3002 = vmax.f32 %v2984, 0.0
          %v3003 = vmax.f32 %v2998, 0.0
          %v3004 = vmax.f32 %v2986, 0.0
          %v3005 = vmax.f32 %v3000, 0.0
          %v3006 = vld [vmem:[#allocation3] sm:$0xff]
          %v3007 = vld [vmem:[#allocation3 + $0x8] sm:$0xff]
          %v3008 = vld [vmem:[#allocation3 + $0x10] sm:$0xff]
          %v3009 = vld [vmem:[#allocation3 + $0x18] sm:$0xff]
          %v3010 = vadd.f32 %v3006, %v3002
          %v3011 = vadd.f32 %v3007, %v3003
          %v3012 = vadd.f32 %v3008, %v3004
          %v3013 = vadd.f32 %v3009, %v3005
          %3014 = vst [vmem:[#allocation3] sm:$0xff] %v3010
          %3015 = vst [vmem:[#allocation3 + $0x8] sm:$0xff] %v3011
          %3016 = vst [vmem:[#allocation3 + $0x10] sm:$0xff] %v3012
          %3017 = vst [vmem:[#allocation3 + $0x18] sm:$0xff] %v3013
          %v3018 = vld [vmem:[%s471 + $0x20] sm:$0xff]
          %v3019 = vld [vmem:[%s471 + $0x28] sm:$0xff]
          %v3020 = vld [vmem:[%s471 + $0x70] sm:$0xff]
          %v3021 = vld [vmem:[%s471 + $0x78] sm:$0xff]
          %v3022 = vadd.f32 %v3018, %v3002
          %v3023 = vadd.f32 %v3019, %v3003
          %v3024 = vadd.f32 %v3020, %v3004
          %v3025 = vadd.f32 %v3021, %v3005
          %v3026 = vpack.c.bf16 %v3024, %v3022
          %v3027 = vpack.c.bf16 %v3025, %v3023
          %3029 = vset.pattern.permute.xlu0 0
          %3030 = vperm.xlu0 %3029, %v2582
          %v3031 = vpop.permute.xlu0 %3030
          %3034 = vset.pattern.permute.xlu0 0
          %3035 = vperm.xlu0 %3034, %v2583
          %v3036 = vpop.permute.xlu0 %3035
          %v3040 = vunpack.c.l.b16 %v2579
          %v3041 = vunpack.c.l.b16 %v2580
          %v3042 = vpack.c.b16 %v3041, %v3040
          %v3044 = vsel %vm895, %v3042, 0
          %3046 = vmatpush.bf16.msra.mxu0 0
          %3047 = vmatpush.bf16.msra.mxu0 0
          %3048 = vmatpush.bf16.msra.mxu0 0
          %3049 = vmatpush.bf16.msra.mxu0 0
          %3050 = vmatpush.bf16.msra.mxu0 0
          %3051 = vmatpush.bf16.msra.mxu0 0
          %3052 = vmatpush.bf16.msra.mxu0 0
          %3053 = vmatpush.bf16.msra.mxu0 %v3026
          %3054 = vmatmul.bf16.gmra.mxu0 %v3044
          %v3055 = vpop.f32.mrf.mxu0
          %v3056 = vadd.f32 %v3031, %v3055
          %v3057 = vpop.f32.mrf.mxu0
          %v3058 = vadd.f32 %v3036, %v3057
          %3059 = vdwg.mxu0
          %3060 = vmatpush.bf16.msra.mxu0 0
          %3061 = vmatpush.bf16.msra.mxu0 0
          %3062 = vmatpush.bf16.msra.mxu0 0
          %3063 = vmatpush.bf16.msra.mxu0 0
          %3064 = vmatpush.bf16.msra.mxu0 0
          %3065 = vmatpush.bf16.msra.mxu0 0
          %3066 = vmatpush.bf16.msra.mxu0 0
          %3067 = vmatpush.bf16.msra.mxu0 %v3027
          %3068 = vmatmul.bf16.gmra.mxu0 %v3044
          %v3069 = vpop.f32.mrf.mxu0
          %v3070 = vadd.f32 %v3031, %v3069
          %v3071 = vpop.f32.mrf.mxu0
          %v3072 = vadd.f32 %v3036, %v3071
          %3073 = vdwg.mxu0
          %v3074 = vmax.f32 %v3056, 0.0
          %v3075 = vmax.f32 %v3070, 0.0
          %v3076 = vmax.f32 %v3058, 0.0
          %v3077 = vmax.f32 %v3072, 0.0
          %3078 = vst [vmem:[%s933 + $0x20] sm:$0xff] %v3074
          %3079 = vst [vmem:[%s933 + $0x28] sm:$0xff] %v3075
          %3080 = vst [vmem:[%s933 + $0x70] sm:$0xff] %v3076
          %3081 = vst [vmem:[%s933 + $0x78] sm:$0xff] %v3077
          %s3082 = sadd.s32 %s430, 5
          %s3083 = smul.u32 %s3082, 8
          %s3084 = smul.addr %s3083, 4
          %s3085 = scalar_lea.vmem %s5, %s3084
          %v3086 = vld [vmem:[%s3085] sm:$0xf]
          %v3087 = vld [vmem:[%s3085 + $0x4] sm:$0xf]
          %v3088 = vld [vmem:[%s3085 + $0x8] sm:$0xf]
          %v3089 = vld [vmem:[%s3085 + $0xc] sm:$0xf]
          %v3090 = vld [vmem:[%s3085 + $0x10] sm:$0xf]
          %v3091 = vld [vmem:[%s3085 + $0x14] sm:$0xf]
          %v3092 = vld [vmem:[%s3085 + $0x18] sm:$0xf]
          %v3093 = vld [vmem:[%s3085 + $0x1c] sm:$0xf]
          %s3094 = smul.u32 %s3082, 64
          %s3095 = scalar_lea.vmem %s6, %s3094
          %v3096 = vld [vmem:[%s3095] sm:$0xff]
          %v3097 = vld [vmem:[%s3095 + $0x8] sm:$0xff]
          %v3098 = vld [vmem:[%s3095 + $0x10] sm:$0xff]
          %v3099 = vld [vmem:[%s3095 + $0x18] sm:$0xff]
          %v3100 = vld [vmem:[%s3095 + $0x20] sm:$0xff]
          %v3101 = vld [vmem:[%s3095 + $0x28] sm:$0xff]
          %v3102 = vld [vmem:[%s3095 + $0x30] sm:$0xff]
          %v3103 = vld [vmem:[%s3095 + $0x38] sm:$0xff]
          %s3104 = smul.u32 %s3082, 2
          %s3105 = smul.addr %s3104, 4
          %s3106 = scalar_lea.vmem %s7, %s3105
          %v3107 = vld [vmem:[%s3106] sm:$0xf]
          %v3108 = vld [vmem:[%s3106 + $0x4] sm:$0xf]
          %s3109 = smul.u32 %s3082, 16
          %s3110 = scalar_lea.vmem %s8, %s3109
          %v3111 = vld [vmem:[%s3110] sm:$0xff]
          %v3112 = vld [vmem:[%s3110 + $0x8] sm:$0xff]
          %s3113 = smul.addr %s3104, 4
          %s3114 = scalar_lea.vmem %s3, %s3113
          %v3115 = vld [vmem:[%s3114] sm:$0xf]
          %v3116 = vld [vmem:[%s3114 + $0x4] sm:$0xf]
          %s3117 = scalar_lea.vmem %s4, %s3109
          %v3118 = vld [vmem:[%s3117] sm:$0xff]
          %v3119 = vld [vmem:[%s3117 + $0x8] sm:$0xff]
          %v3120 = vld [vmem:[%s933 + $0x18] sm:$0xff]
          %v3121 = vld [vmem:[%s933 + $0x20] sm:$0xff]
          %v3122 = vld [vmem:[%s933 + $0x28] sm:$0xff]
          %v3123 = vld [vmem:[%s933 + $0x68] sm:$0xff]
          %v3124 = vld [vmem:[%s933 + $0x70] sm:$0xff]
          %v3125 = vld [vmem:[%s933 + $0x78] sm:$0xff]
          %v3126 = vld [vmem:[%s933 + $0x30] sm:$0xff]
          %v3127 = vld [vmem:[%s933 + $0x80] sm:$0xff]
          %3134 = vrot.lane.b32.xlu0 %v3121, 96
          %v3135 = vpop.permute.xlu0 %3134
          %3136 = vrot.lane.b32.xlu0 %v3122, 96
          %v3137 = vpop.permute.xlu0 %3136
          %3138 = vrot.lane.b32.xlu0 %v3126, 96
          %v3139 = vpop.permute.xlu0 %3138
          %3140 = vrot.lane.b32.xlu0 %v3124, 96
          %v3141 = vpop.permute.xlu0 %3140
          %3142 = vrot.lane.b32.xlu0 %v3125, 96
          %v3143 = vpop.permute.xlu0 %3142
          %3144 = vrot.lane.b32.xlu0 %v3127, 96
          %v3145 = vpop.permute.xlu0 %3144
          %vm3146 = vcmask 785408
          %v3147 = vsel %vm3146, %v3135, %v3137
          %v3148 = vsel %vm3146, %v3137, %v3139
          %v3149 = vsel %vm3146, %v3141, %v3143
          %v3150 = vsel %vm3146, %v3143, %v3145
          %v3157 = vpack.c.bf16 %v3123, %v3120
          %v3158 = vpack.c.bf16 %v3124, %v3121
          %v3159 = vpack.c.bf16 %v3125, %v3122
          %v3160 = vpack.c.bf16 %v3141, %v3135
          %v3161 = vpack.c.bf16 %v3149, %v3147
          %v3162 = vpack.c.bf16 %v3150, %v3148
          %3164 = vset.pattern.permute.xlu0 0
          %3165 = vperm.xlu0 %3164, %v3096
          %v3166 = vpop.permute.xlu0 %3165
          %3169 = vset.pattern.permute.xlu0 0
          %3170 = vperm.xlu0 %3169, %v3097
          %v3171 = vpop.permute.xlu0 %3170
          %3174 = vset.pattern.permute.xlu0 0
          %3175 = vperm.xlu0 %3174, %v3098
          %v3176 = vpop.permute.xlu0 %3175
          %3179 = vset.pattern.permute.xlu0 0
          %3180 = vperm.xlu0 %3179, %v3099
          %v3181 = vpop.permute.xlu0 %3180
          %3184 = vset.pattern.permute.xlu0 0
          %3185 = vperm.xlu0 %3184, %v3100
          %v3186 = vpop.permute.xlu0 %3185
          %3189 = vset.pattern.permute.xlu0 0
          %3190 = vperm.xlu0 %3189, %v3101
          %v3191 = vpop.permute.xlu0 %3190
          %3194 = vset.pattern.permute.xlu0 0
          %3195 = vperm.xlu0 %3194, %v3102
          %v3196 = vpop.permute.xlu0 %3195
          %3199 = vset.pattern.permute.xlu0 0
          %3200 = vperm.xlu0 %3199, %v3103
          %v3201 = vpop.permute.xlu0 %3200
          %v3211 = vunpack.c.l.b16 %v3086
          %v3212 = vunpack.c.l.b16 %v3087
          %v3213 = vunpack.c.l.b16 %v3088
          %v3214 = vunpack.c.l.b16 %v3089
          %v3215 = vunpack.c.l.b16 %v3090
          %v3216 = vunpack.c.l.b16 %v3091
          %v3217 = vunpack.c.l.b16 %v3092
          %v3218 = vunpack.c.l.b16 %v3093
          %v3219 = vpack.c.b16 %v3212, %v3211
          %v3220 = vpack.c.b16 %v3214, %v3213
          %v3221 = vpack.c.b16 %v3216, %v3215
          %v3222 = vpack.c.b16 %v3218, %v3217
          %3229 = vrot.lane.b32.xlu0 %v3157, 16
          %v3230 = vpop.permute.xlu0 %3229
          %3231 = vrot.lane.b32.xlu0 %v3158, 16
          %v3232 = vpop.permute.xlu0 %3231
          %3233 = vrot.lane.b32.xlu0 %v3159, 16
          %v3234 = vpop.permute.xlu0 %3233
          %3235 = vrot.lane.b32.xlu0 %v3160, 16
          %v3236 = vpop.permute.xlu0 %3235
          %3237 = vrot.lane.b32.xlu0 %v3161, 16
          %v3238 = vpop.permute.xlu0 %3237
          %3239 = vrot.lane.b32.xlu0 %v3162, 16
          %v3240 = vpop.permute.xlu0 %3239
          %vm3241 = vcmask 130048
          %v3242 = vsel %vm3241, %v3230, %v3232
          %v3243 = vsel %vm3241, %v3232, %v3234
          %v3244 = vsel %vm3241, %v3236, %v3238
          %v3245 = vsel %vm3241, %v3238, %v3240
          %v3251 = vsel %vm569, %v3219, 0
          %v3254 = vsel %vm569, %v3220, 0
          %v3257 = vsel %vm569, %v3221, 0
          %v3260 = vsel %vm569, %v3222, 0
          %3262 = vmatpush.bf16.msra.mxu0 0
          %3263 = vmatpush.bf16.msra.mxu0 0
          %3264 = vmatpush.bf16.msra.mxu0 0
          %3265 = vmatpush.bf16.msra.mxu0 0
          %3266 = vmatpush.bf16.msra.mxu0 0
          %3267 = vmatpush.bf16.msra.mxu0 0
          %3268 = vmatpush.bf16.msra.mxu0 %v3244
          %3269 = vmatpush.bf16.msra.mxu0 %v3242
          %3270 = vmatmul.bf16.gmra.mxu0 %v3251
          %v3271 = vpop.f32.mrf.mxu0
          %v3272 = vadd.f32 %v3166, %v3271
          %v3273 = vpop.f32.mrf.mxu0
          %v3274 = vadd.f32 %v3171, %v3273
          %3275 = vmatmul.bf16.gmra.mxu0 %v3254
          %v3276 = vpop.f32.mrf.mxu0
          %v3277 = vadd.f32 %v3176, %v3276
          %v3278 = vpop.f32.mrf.mxu0
          %v3279 = vadd.f32 %v3181, %v3278
          %3280 = vmatmul.bf16.gmra.mxu0 %v3257
          %v3281 = vpop.f32.mrf.mxu0
          %v3282 = vadd.f32 %v3186, %v3281
          %v3283 = vpop.f32.mrf.mxu0
          %v3284 = vadd.f32 %v3191, %v3283
          %3285 = vmatmul.bf16.gmra.mxu0 %v3260
          %v3286 = vpop.f32.mrf.mxu0
          %v3287 = vadd.f32 %v3196, %v3286
          %v3288 = vpop.f32.mrf.mxu0
          %v3289 = vadd.f32 %v3201, %v3288
          %3290 = vdwg.mxu0
          %3291 = vmatpush.bf16.msra.mxu0 0
          %3292 = vmatpush.bf16.msra.mxu0 0
          %3293 = vmatpush.bf16.msra.mxu0 0
          %3294 = vmatpush.bf16.msra.mxu0 0
          %3295 = vmatpush.bf16.msra.mxu0 0
          %3296 = vmatpush.bf16.msra.mxu0 0
          %3297 = vmatpush.bf16.msra.mxu0 %v3245
          %3298 = vmatpush.bf16.msra.mxu0 %v3243
          %3299 = vmatmul.bf16.gmra.mxu0 %v3251
          %v3300 = vpop.f32.mrf.mxu0
          %v3301 = vadd.f32 %v3166, %v3300
          %v3302 = vpop.f32.mrf.mxu0
          %v3303 = vadd.f32 %v3171, %v3302
          %3304 = vmatmul.bf16.gmra.mxu0 %v3254
          %v3305 = vpop.f32.mrf.mxu0
          %v3306 = vadd.f32 %v3176, %v3305
          %v3307 = vpop.f32.mrf.mxu0
          %v3308 = vadd.f32 %v3181, %v3307
          %3309 = vmatmul.bf16.gmra.mxu0 %v3257
          %v3310 = vpop.f32.mrf.mxu0
          %v3311 = vadd.f32 %v3186, %v3310
          %v3312 = vpop.f32.mrf.mxu0
          %v3313 = vadd.f32 %v3191, %v3312
          %3314 = vmatmul.bf16.gmra.mxu0 %v3260
          %v3315 = vpop.f32.mrf.mxu0
          %v3316 = vadd.f32 %v3196, %v3315
          %v3317 = vpop.f32.mrf.mxu0
          %v3318 = vadd.f32 %v3201, %v3317
          %3319 = vdwg.mxu0
          %v3320 = vtanh.pop %v3272
          %v3321 = vtanh.pop %v3301
          %v3322 = vtanh.pop %v3274
          %v3323 = vtanh.pop %v3303
          %v3324 = vtanh.pop %v3277
          %v3325 = vtanh.pop %v3306
          %v3326 = vtanh.pop %v3279
          %v3327 = vtanh.pop %v3308
          %v3328 = vxor.u32 %v3282, 2147483648
          %v3329 = vxor.u32 %v3311, 2147483648
          %v3330 = vxor.u32 %v3284, 2147483648
          %v3331 = vxor.u32 %v3313, 2147483648
          %v3332 = vxor.u32 %v3287, 2147483648
          %v3333 = vxor.u32 %v3316, 2147483648
          %v3334 = vxor.u32 %v3289, 2147483648
          %v3335 = vxor.u32 %v3318, 2147483648
          %v3336 = vmul.f32 %v3328, 1.442695
          %v3337 = vpow.pop %v3336
          %v3338 = vmul.f32 %v3329, 1.442695
          %v3339 = vpow.pop %v3338
          %v3340 = vmul.f32 %v3330, 1.442695
          %v3341 = vpow.pop %v3340
          %v3342 = vmul.f32 %v3331, 1.442695
          %v3343 = vpow.pop %v3342
          %v3344 = vmul.f32 %v3332, 1.442695
          %v3345 = vpow.pop %v3344
          %v3346 = vmul.f32 %v3333, 1.442695
          %v3347 = vpow.pop %v3346
          %v3348 = vmul.f32 %v3334, 1.442695
          %v3349 = vpow.pop %v3348
          %v3350 = vmul.f32 %v3335, 1.442695
          %v3351 = vpow.pop %v3350
          %v3352 = vadd.f32 %v3337, 1.0
          %v3353 = vadd.f32 %v3339, 1.0
          %v3354 = vadd.f32 %v3341, 1.0
          %v3355 = vadd.f32 %v3343, 1.0
          %v3356 = vadd.f32 %v3345, 1.0
          %v3357 = vadd.f32 %v3347, 1.0
          %v3358 = vadd.f32 %v3349, 1.0
          %v3359 = vadd.f32 %v3351, 1.0
          %v3360 = vrcp.pop %v3352
          %v3361 = vmul.f32 %v3352, %v3360
          %v3362 = vsub.f32 1.0, %v3361
          %v3363 = vmul.f32 %v3360, %v3362
          %v3364 = vadd.f32 %v3360, %v3363
          %vm3365 = vweird.f32 %v3352
          %vm3366 = vweird.f32 %v3360
          %vm3367 = vmor %vm3365, %vm3366
          %v3368 = vsel %vm3367, %v3360, %v3364
          %v3369 = vand.u32 2147483647, %v3352
          %vm3370 = vcmp.eq.f32.partialorder %v3369, 8.507059e+37
          %v3371 = vand.u32 %v3352, 2147483648
          %v3372 = vor.u32 1.1754944e-38, %v3371
          %v3373 = vsel %vm3370, %v3372, %v3368
          %v3374 = vmul.f32 1.0, %v3373
          %v3375 = vrcp.pop %v3353
          %v3376 = vmul.f32 %v3353, %v3375
          %v3377 = vsub.f32 1.0, %v3376
          %v3378 = vmul.f32 %v3375, %v3377
          %v3379 = vadd.f32 %v3375, %v3378
          %vm3380 = vweird.f32 %v3353
          %vm3381 = vweird.f32 %v3375
          %vm3382 = vmor %vm3380, %vm3381
          %v3383 = vsel %vm3382, %v3375, %v3379
          %v3384 = vand.u32 2147483647, %v3353
          %vm3385 = vcmp.eq.f32.partialorder %v3384, 8.507059e+37
          %v3386 = vand.u32 %v3353, 2147483648
          %v3387 = vor.u32 1.1754944e-38, %v3386
          %v3388 = vsel %vm3385, %v3387, %v3383
          %v3389 = vmul.f32 1.0, %v3388
          %v3390 = vrcp.pop %v3354
          %v3391 = vmul.f32 %v3354, %v3390
          %v3392 = vsub.f32 1.0, %v3391
          %v3393 = vmul.f32 %v3390, %v3392
          %v3394 = vadd.f32 %v3390, %v3393
          %vm3395 = vweird.f32 %v3354
          %vm3396 = vweird.f32 %v3390
          %vm3397 = vmor %vm3395, %vm3396
          %v3398 = vsel %vm3397, %v3390, %v3394
          %v3399 = vand.u32 2147483647, %v3354
          %vm3400 = vcmp.eq.f32.partialorder %v3399, 8.507059e+37
          %v3401 = vand.u32 %v3354, 2147483648
          %v3402 = vor.u32 1.1754944e-38, %v3401
          %v3403 = vsel %vm3400, %v3402, %v3398
          %v3404 = vmul.f32 1.0, %v3403
          %v3405 = vrcp.pop %v3355
          %v3406 = vmul.f32 %v3355, %v3405
          %v3407 = vsub.f32 1.0, %v3406
          %v3408 = vmul.f32 %v3405, %v3407
          %v3409 = vadd.f32 %v3405, %v3408
          %vm3410 = vweird.f32 %v3355
          %vm3411 = vweird.f32 %v3405
          %vm3412 = vmor %vm3410, %vm3411
          %v3413 = vsel %vm3412, %v3405, %v3409
          %v3414 = vand.u32 2147483647, %v3355
          %vm3415 = vcmp.eq.f32.partialorder %v3414, 8.507059e+37
          %v3416 = vand.u32 %v3355, 2147483648
          %v3417 = vor.u32 1.1754944e-38, %v3416
          %v3418 = vsel %vm3415, %v3417, %v3413
          %v3419 = vmul.f32 1.0, %v3418
          %v3420 = vrcp.pop %v3356
          %v3421 = vmul.f32 %v3356, %v3420
          %v3422 = vsub.f32 1.0, %v3421
          %v3423 = vmul.f32 %v3420, %v3422
          %v3424 = vadd.f32 %v3420, %v3423
          %vm3425 = vweird.f32 %v3356
          %vm3426 = vweird.f32 %v3420
          %vm3427 = vmor %vm3425, %vm3426
          %v3428 = vsel %vm3427, %v3420, %v3424
          %v3429 = vand.u32 2147483647, %v3356
          %vm3430 = vcmp.eq.f32.partialorder %v3429, 8.507059e+37
          %v3431 = vand.u32 %v3356, 2147483648
          %v3432 = vor.u32 1.1754944e-38, %v3431
          %v3433 = vsel %vm3430, %v3432, %v3428
          %v3434 = vmul.f32 1.0, %v3433
          %v3435 = vrcp.pop %v3357
          %v3436 = vmul.f32 %v3357, %v3435
          %v3437 = vsub.f32 1.0, %v3436
          %v3438 = vmul.f32 %v3435, %v3437
          %v3439 = vadd.f32 %v3435, %v3438
          %vm3440 = vweird.f32 %v3357
          %vm3441 = vweird.f32 %v3435
          %vm3442 = vmor %vm3440, %vm3441
          %v3443 = vsel %vm3442, %v3435, %v3439
          %v3444 = vand.u32 2147483647, %v3357
          %vm3445 = vcmp.eq.f32.partialorder %v3444, 8.507059e+37
          %v3446 = vand.u32 %v3357, 2147483648
          %v3447 = vor.u32 1.1754944e-38, %v3446
          %v3448 = vsel %vm3445, %v3447, %v3443
          %v3449 = vmul.f32 1.0, %v3448
          %v3450 = vrcp.pop %v3358
          %v3451 = vmul.f32 %v3358, %v3450
          %v3452 = vsub.f32 1.0, %v3451
          %v3453 = vmul.f32 %v3450, %v3452
          %v3454 = vadd.f32 %v3450, %v3453
          %vm3455 = vweird.f32 %v3358
          %vm3456 = vweird.f32 %v3450
          %vm3457 = vmor %vm3455, %vm3456
          %v3458 = vsel %vm3457, %v3450, %v3454
          %v3459 = vand.u32 2147483647, %v3358
          %vm3460 = vcmp.eq.f32.partialorder %v3459, 8.507059e+37
          %v3461 = vand.u32 %v3358, 2147483648
          %v3462 = vor.u32 1.1754944e-38, %v3461
          %v3463 = vsel %vm3460, %v3462, %v3458
          %v3464 = vmul.f32 1.0, %v3463
          %v3465 = vrcp.pop %v3359
          %v3466 = vmul.f32 %v3359, %v3465
          %v3467 = vsub.f32 1.0, %v3466
          %v3468 = vmul.f32 %v3465, %v3467
          %v3469 = vadd.f32 %v3465, %v3468
          %vm3470 = vweird.f32 %v3359
          %vm3471 = vweird.f32 %v3465
          %vm3472 = vmor %vm3470, %vm3471
          %v3473 = vsel %vm3472, %v3465, %v3469
          %v3474 = vand.u32 2147483647, %v3359
          %vm3475 = vcmp.eq.f32.partialorder %v3474, 8.507059e+37
          %v3476 = vand.u32 %v3359, 2147483648
          %v3477 = vor.u32 1.1754944e-38, %v3476
          %v3478 = vsel %vm3475, %v3477, %v3473
          %v3479 = vmul.f32 1.0, %v3478
          %v3480 = vmul.f32 %v3320, %v3374
          %v3481 = vmul.f32 %v3321, %v3389
          %v3482 = vmul.f32 %v3322, %v3404
          %v3483 = vmul.f32 %v3323, %v3419
          %v3484 = vmul.f32 %v3324, %v3434
          %v3485 = vmul.f32 %v3325, %v3449
          %v3486 = vmul.f32 %v3326, %v3464
          %v3487 = vmul.f32 %v3327, %v3479
          %v3488 = vpack.c.bf16 %v3482, %v3480
          %v3489 = vpack.c.bf16 %v3483, %v3481
          %v3490 = vpack.c.bf16 %v3486, %v3484
          %v3491 = vpack.c.bf16 %v3487, %v3485
          %3493 = vset.pattern.permute.xlu0 0
          %3494 = vperm.xlu0 %3493, %v3111
          %v3495 = vpop.permute.xlu0 %3494
          %3498 = vset.pattern.permute.xlu0 0
          %3499 = vperm.xlu0 %3498, %v3112
          %v3500 = vpop.permute.xlu0 %3499
          %v3504 = vunpack.c.l.b16 %v3107
          %v3505 = vunpack.c.l.b16 %v3108
          %v3506 = vpack.c.b16 %v3505, %v3504
          %v3508 = vsel %vm569, %v3506, 0
          %3510 = vmatpush.bf16.msra.mxu0 0
          %3511 = vmatpush.bf16.msra.mxu0 0
          %3512 = vmatpush.bf16.msra.mxu0 0
          %3513 = vmatpush.bf16.msra.mxu0 0
          %3514 = vmatpush.bf16.msra.mxu0 0
          %3515 = vmatpush.bf16.msra.mxu0 0
          %3516 = vmatpush.bf16.msra.mxu0 %v3490
          %3517 = vmatpush.bf16.msra.mxu0 %v3488
          %3518 = vmatmul.bf16.gmra.mxu0 %v3508
          %v3519 = vpop.f32.mrf.mxu0
          %v3520 = vadd.f32 %v3495, %v3519
          %v3521 = vpop.f32.mrf.mxu0
          %v3522 = vadd.f32 %v3500, %v3521
          %3523 = vdwg.mxu0
          %3524 = vmatpush.bf16.msra.mxu0 0
          %3525 = vmatpush.bf16.msra.mxu0 0
          %3526 = vmatpush.bf16.msra.mxu0 0
          %3527 = vmatpush.bf16.msra.mxu0 0
          %3528 = vmatpush.bf16.msra.mxu0 0
          %3529 = vmatpush.bf16.msra.mxu0 0
          %3530 = vmatpush.bf16.msra.mxu0 %v3491
          %3531 = vmatpush.bf16.msra.mxu0 %v3489
          %3532 = vmatmul.bf16.gmra.mxu0 %v3508
          %v3533 = vpop.f32.mrf.mxu0
          %v3534 = vadd.f32 %v3495, %v3533
          %v3535 = vpop.f32.mrf.mxu0
          %v3536 = vadd.f32 %v3500, %v3535
          %3537 = vdwg.mxu0
          %v3538 = vmax.f32 %v3520, 0.0
          %v3539 = vmax.f32 %v3534, 0.0
          %v3540 = vmax.f32 %v3522, 0.0
          %v3541 = vmax.f32 %v3536, 0.0
          %v3542 = vld [vmem:[#allocation3] sm:$0xff]
          %v3543 = vld [vmem:[#allocation3 + $0x8] sm:$0xff]
          %v3544 = vld [vmem:[#allocation3 + $0x10] sm:$0xff]
          %v3545 = vld [vmem:[#allocation3 + $0x18] sm:$0xff]
          %v3546 = vadd.f32 %v3542, %v3538
          %v3547 = vadd.f32 %v3543, %v3539
          %v3548 = vadd.f32 %v3544, %v3540
          %v3549 = vadd.f32 %v3545, %v3541
          %3550 = vst [vmem:[#allocation3] sm:$0xff] %v3546
          %3551 = vst [vmem:[#allocation3 + $0x8] sm:$0xff] %v3547
          %3552 = vst [vmem:[#allocation3 + $0x10] sm:$0xff] %v3548
          %3553 = vst [vmem:[#allocation3 + $0x18] sm:$0xff] %v3549
          %v3554 = vld [vmem:[%s933 + $0x20] sm:$0xff]
          %v3555 = vld [vmem:[%s933 + $0x28] sm:$0xff]
          %v3556 = vld [vmem:[%s933 + $0x70] sm:$0xff]
          %v3557 = vld [vmem:[%s933 + $0x78] sm:$0xff]
          %v3558 = vadd.f32 %v3554, %v3538
          %v3559 = vadd.f32 %v3555, %v3539
          %v3560 = vadd.f32 %v3556, %v3540
          %v3561 = vadd.f32 %v3557, %v3541
          %v3562 = vpack.c.bf16 %v3560, %v3558
          %v3563 = vpack.c.bf16 %v3561, %v3559
          %3565 = vset.pattern.permute.xlu0 0
          %3566 = vperm.xlu0 %3565, %v3118
          %v3567 = vpop.permute.xlu0 %3566
          %3570 = vset.pattern.permute.xlu0 0
          %3571 = vperm.xlu0 %3570, %v3119
          %v3572 = vpop.permute.xlu0 %3571
          %v3576 = vunpack.c.l.b16 %v3115
          %v3577 = vunpack.c.l.b16 %v3116
          %v3578 = vpack.c.b16 %v3577, %v3576
          %v3580 = vsel %vm895, %v3578, 0
          %3582 = vmatpush.bf16.msra.mxu0 0
          %3583 = vmatpush.bf16.msra.mxu0 0
          %3584 = vmatpush.bf16.msra.mxu0 0
          %3585 = vmatpush.bf16.msra.mxu0 0
          %3586 = vmatpush.bf16.msra.mxu0 0
          %3587 = vmatpush.bf16.msra.mxu0 0
          %3588 = vmatpush.bf16.msra.mxu0 0
          %3589 = vmatpush.bf16.msra.mxu0 %v3562
          %3590 = vmatmul.bf16.gmra.mxu0 %v3580
          %v3591 = vpop.f32.mrf.mxu0
          %v3592 = vadd.f32 %v3567, %v3591
          %v3593 = vpop.f32.mrf.mxu0
          %v3594 = vadd.f32 %v3572, %v3593
          %3595 = vdwg.mxu0
          %3596 = vmatpush.bf16.msra.mxu0 0
          %3597 = vmatpush.bf16.msra.mxu0 0
          %3598 = vmatpush.bf16.msra.mxu0 0
          %3599 = vmatpush.bf16.msra.mxu0 0
          %3600 = vmatpush.bf16.msra.mxu0 0
          %3601 = vmatpush.bf16.msra.mxu0 0
          %3602 = vmatpush.bf16.msra.mxu0 0
          %3603 = vmatpush.bf16.msra.mxu0 %v3563
          %3604 = vmatmul.bf16.gmra.mxu0 %v3580
          %v3605 = vpop.f32.mrf.mxu0
          %v3606 = vadd.f32 %v3567, %v3605
          %v3607 = vpop.f32.mrf.mxu0
          %v3608 = vadd.f32 %v3572, %v3607
          %3609 = vdwg.mxu0
          %v3610 = vmax.f32 %v3592, 0.0
          %v3611 = vmax.f32 %v3606, 0.0
          %v3612 = vmax.f32 %v3594, 0.0
          %v3613 = vmax.f32 %v3608, 0.0
          %3614 = vst [vmem:[%s471 + $0x20] sm:$0xff] %v3610
          %3615 = vst [vmem:[%s471 + $0x28] sm:$0xff] %v3611
          %3616 = vst [vmem:[%s471 + $0x70] sm:$0xff] %v3612
          %3617 = vst [vmem:[%s471 + $0x78] sm:$0xff] %v3613
          %s3618 = sadd.s32 %s430, 6
          %s3619 = smul.u32 %s3618, 8
          %s3620 = smul.addr %s3619, 4
          %s3621 = scalar_lea.vmem %s5, %s3620
          %v3622 = vld [vmem:[%s3621] sm:$0xf]
          %v3623 = vld [vmem:[%s3621 + $0x4] sm:$0xf]
          %v3624 = vld [vmem:[%s3621 + $0x8] sm:$0xf]
          %v3625 = vld [vmem:[%s3621 + $0xc] sm:$0xf]
          %v3626 = vld [vmem:[%s3621 + $0x10] sm:$0xf]
          %v3627 = vld [vmem:[%s3621 + $0x14] sm:$0xf]
          %v3628 = vld [vmem:[%s3621 + $0x18] sm:$0xf]
          %v3629 = vld [vmem:[%s3621 + $0x1c] sm:$0xf]
          %s3630 = smul.u32 %s3618, 64
          %s3631 = scalar_lea.vmem %s6, %s3630
          %v3632 = vld [vmem:[%s3631] sm:$0xff]
          %v3633 = vld [vmem:[%s3631 + $0x8] sm:$0xff]
          %v3634 = vld [vmem:[%s3631 + $0x10] sm:$0xff]
          %v3635 = vld [vmem:[%s3631 + $0x18] sm:$0xff]
          %v3636 = vld [vmem:[%s3631 + $0x20] sm:$0xff]
          %v3637 = vld [vmem:[%s3631 + $0x28] sm:$0xff]
          %v3638 = vld [vmem:[%s3631 + $0x30] sm:$0xff]
          %v3639 = vld [vmem:[%s3631 + $0x38] sm:$0xff]
          %s3640 = smul.u32 %s3618, 2
          %s3641 = smul.addr %s3640, 4
          %s3642 = scalar_lea.vmem %s7, %s3641
          %v3643 = vld [vmem:[%s3642] sm:$0xf]
          %v3644 = vld [vmem:[%s3642 + $0x4] sm:$0xf]
          %s3645 = smul.u32 %s3618, 16
          %s3646 = scalar_lea.vmem %s8, %s3645
          %v3647 = vld [vmem:[%s3646] sm:$0xff]
          %v3648 = vld [vmem:[%s3646 + $0x8] sm:$0xff]
          %s3649 = smul.addr %s3640, 4
          %s3650 = scalar_lea.vmem %s3, %s3649
          %v3651 = vld [vmem:[%s3650] sm:$0xf]
          %v3652 = vld [vmem:[%s3650 + $0x4] sm:$0xf]
          %s3653 = scalar_lea.vmem %s4, %s3645
          %v3654 = vld [vmem:[%s3653] sm:$0xff]
          %v3655 = vld [vmem:[%s3653 + $0x8] sm:$0xff]
          %v3656 = vld [vmem:[%s471 + $0x18] sm:$0xff]
          %v3657 = vld [vmem:[%s471 + $0x20] sm:$0xff]
          %v3658 = vld [vmem:[%s471 + $0x28] sm:$0xff]
          %v3659 = vld [vmem:[%s471 + $0x68] sm:$0xff]
          %v3660 = vld [vmem:[%s471 + $0x70] sm:$0xff]
          %v3661 = vld [vmem:[%s471 + $0x78] sm:$0xff]
          %v3662 = vld [vmem:[%s471 + $0x30] sm:$0xff]
          %v3663 = vld [vmem:[%s471 + $0x80] sm:$0xff]
          %3670 = vrot.lane.b32.xlu0 %v3657, 64
          %v3671 = vpop.permute.xlu0 %3670
          %3672 = vrot.lane.b32.xlu0 %v3658, 64
          %v3673 = vpop.permute.xlu0 %3672
          %3674 = vrot.lane.b32.xlu0 %v3662, 64
          %v3675 = vpop.permute.xlu0 %3674
          %3676 = vrot.lane.b32.xlu0 %v3660, 64
          %v3677 = vpop.permute.xlu0 %3676
          %3678 = vrot.lane.b32.xlu0 %v3661, 64
          %v3679 = vpop.permute.xlu0 %3678
          %3680 = vrot.lane.b32.xlu0 %v3663, 64
          %v3681 = vpop.permute.xlu0 %3680
          %vm3682 = vcmask 523264
          %v3683 = vsel %vm3682, %v3671, %v3673
          %v3684 = vsel %vm3682, %v3673, %v3675
          %v3685 = vsel %vm3682, %v3677, %v3679
          %v3686 = vsel %vm3682, %v3679, %v3681
          %v3693 = vpack.c.bf16 %v3659, %v3656
          %v3694 = vpack.c.bf16 %v3660, %v3657
          %v3695 = vpack.c.bf16 %v3661, %v3658
          %v3696 = vpack.c.bf16 %v3677, %v3671
          %v3697 = vpack.c.bf16 %v3685, %v3683
          %v3698 = vpack.c.bf16 %v3686, %v3684
          %3700 = vset.pattern.permute.xlu0 0
          %3701 = vperm.xlu0 %3700, %v3632
          %v3702 = vpop.permute.xlu0 %3701
          %3705 = vset.pattern.permute.xlu0 0
          %3706 = vperm.xlu0 %3705, %v3633
          %v3707 = vpop.permute.xlu0 %3706
          %3710 = vset.pattern.permute.xlu0 0
          %3711 = vperm.xlu0 %3710, %v3634
          %v3712 = vpop.permute.xlu0 %3711
          %3715 = vset.pattern.permute.xlu0 0
          %3716 = vperm.xlu0 %3715, %v3635
          %v3717 = vpop.permute.xlu0 %3716
          %3720 = vset.pattern.permute.xlu0 0
          %3721 = vperm.xlu0 %3720, %v3636
          %v3722 = vpop.permute.xlu0 %3721
          %3725 = vset.pattern.permute.xlu0 0
          %3726 = vperm.xlu0 %3725, %v3637
          %v3727 = vpop.permute.xlu0 %3726
          %3730 = vset.pattern.permute.xlu0 0
          %3731 = vperm.xlu0 %3730, %v3638
          %v3732 = vpop.permute.xlu0 %3731
          %3735 = vset.pattern.permute.xlu0 0
          %3736 = vperm.xlu0 %3735, %v3639
          %v3737 = vpop.permute.xlu0 %3736
          %v3747 = vunpack.c.l.b16 %v3622
          %v3748 = vunpack.c.l.b16 %v3623
          %v3749 = vunpack.c.l.b16 %v3624
          %v3750 = vunpack.c.l.b16 %v3625
          %v3751 = vunpack.c.l.b16 %v3626
          %v3752 = vunpack.c.l.b16 %v3627
          %v3753 = vunpack.c.l.b16 %v3628
          %v3754 = vunpack.c.l.b16 %v3629
          %v3755 = vpack.c.b16 %v3748, %v3747
          %v3756 = vpack.c.b16 %v3750, %v3749
          %v3757 = vpack.c.b16 %v3752, %v3751
          %v3758 = vpack.c.b16 %v3754, %v3753
          %3765 = vrot.lane.b32.xlu0 %v3693, 32
          %v3766 = vpop.permute.xlu0 %3765
          %3767 = vrot.lane.b32.xlu0 %v3694, 32
          %v3768 = vpop.permute.xlu0 %3767
          %3769 = vrot.lane.b32.xlu0 %v3695, 32
          %v3770 = vpop.permute.xlu0 %3769
          %3771 = vrot.lane.b32.xlu0 %v3696, 32
          %v3772 = vpop.permute.xlu0 %3771
          %3773 = vrot.lane.b32.xlu0 %v3697, 32
          %v3774 = vpop.permute.xlu0 %3773
          %3775 = vrot.lane.b32.xlu0 %v3698, 32
          %v3776 = vpop.permute.xlu0 %3775
          %vm3777 = vcmask 261120
          %v3778 = vsel %vm3777, %v3766, %v3768
          %v3779 = vsel %vm3777, %v3768, %v3770
          %v3780 = vsel %vm3777, %v3772, %v3774
          %v3781 = vsel %vm3777, %v3774, %v3776
          %v3787 = vsel %vm569, %v3755, 0
          %v3790 = vsel %vm569, %v3756, 0
          %v3793 = vsel %vm569, %v3757, 0
          %v3796 = vsel %vm569, %v3758, 0
          %3798 = vmatpush.bf16.msra.mxu0 0
          %3799 = vmatpush.bf16.msra.mxu0 0
          %3800 = vmatpush.bf16.msra.mxu0 0
          %3801 = vmatpush.bf16.msra.mxu0 0
          %3802 = vmatpush.bf16.msra.mxu0 0
          %3803 = vmatpush.bf16.msra.mxu0 0
          %3804 = vmatpush.bf16.msra.mxu0 %v3780
          %3805 = vmatpush.bf16.msra.mxu0 %v3778
          %3806 = vmatmul.bf16.gmra.mxu0 %v3787
          %v3807 = vpop.f32.mrf.mxu0
          %v3808 = vadd.f32 %v3702, %v3807
          %v3809 = vpop.f32.mrf.mxu0
          %v3810 = vadd.f32 %v3707, %v3809
          %3811 = vmatmul.bf16.gmra.mxu0 %v3790
          %v3812 = vpop.f32.mrf.mxu0
          %v3813 = vadd.f32 %v3712, %v3812
          %v3814 = vpop.f32.mrf.mxu0
          %v3815 = vadd.f32 %v3717, %v3814
          %3816 = vmatmul.bf16.gmra.mxu0 %v3793
          %v3817 = vpop.f32.mrf.mxu0
          %v3818 = vadd.f32 %v3722, %v3817
          %v3819 = vpop.f32.mrf.mxu0
          %v3820 = vadd.f32 %v3727, %v3819
          %3821 = vmatmul.bf16.gmra.mxu0 %v3796
          %v3822 = vpop.f32.mrf.mxu0
          %v3823 = vadd.f32 %v3732, %v3822
          %v3824 = vpop.f32.mrf.mxu0
          %v3825 = vadd.f32 %v3737, %v3824
          %3826 = vdwg.mxu0
          %3827 = vmatpush.bf16.msra.mxu0 0
          %3828 = vmatpush.bf16.msra.mxu0 0
          %3829 = vmatpush.bf16.msra.mxu0 0
          %3830 = vmatpush.bf16.msra.mxu0 0
          %3831 = vmatpush.bf16.msra.mxu0 0
          %3832 = vmatpush.bf16.msra.mxu0 0
          %3833 = vmatpush.bf16.msra.mxu0 %v3781
          %3834 = vmatpush.bf16.msra.mxu0 %v3779
          %3835 = vmatmul.bf16.gmra.mxu0 %v3787
          %v3836 = vpop.f32.mrf.mxu0
          %v3837 = vadd.f32 %v3702, %v3836
          %v3838 = vpop.f32.mrf.mxu0
          %v3839 = vadd.f32 %v3707, %v3838
          %3840 = vmatmul.bf16.gmra.mxu0 %v3790
          %v3841 = vpop.f32.mrf.mxu0
          %v3842 = vadd.f32 %v3712, %v3841
          %v3843 = vpop.f32.mrf.mxu0
          %v3844 = vadd.f32 %v3717, %v3843
          %3845 = vmatmul.bf16.gmra.mxu0 %v3793
          %v3846 = vpop.f32.mrf.mxu0
          %v3847 = vadd.f32 %v3722, %v3846
          %v3848 = vpop.f32.mrf.mxu0
          %v3849 = vadd.f32 %v3727, %v3848
          %3850 = vmatmul.bf16.gmra.mxu0 %v3796
          %v3851 = vpop.f32.mrf.mxu0
          %v3852 = vadd.f32 %v3732, %v3851
          %v3853 = vpop.f32.mrf.mxu0
          %v3854 = vadd.f32 %v3737, %v3853
          %3855 = vdwg.mxu0
          %v3856 = vtanh.pop %v3808
          %v3857 = vtanh.pop %v3837
          %v3858 = vtanh.pop %v3810
          %v3859 = vtanh.pop %v3839
          %v3860 = vtanh.pop %v3813
          %v3861 = vtanh.pop %v3842
          %v3862 = vtanh.pop %v3815
          %v3863 = vtanh.pop %v3844
          %v3864 = vxor.u32 %v3818, 2147483648
          %v3865 = vxor.u32 %v3847, 2147483648
          %v3866 = vxor.u32 %v3820, 2147483648
          %v3867 = vxor.u32 %v3849, 2147483648
          %v3868 = vxor.u32 %v3823, 2147483648
          %v3869 = vxor.u32 %v3852, 2147483648
          %v3870 = vxor.u32 %v3825, 2147483648
          %v3871 = vxor.u32 %v3854, 2147483648
          %v3872 = vmul.f32 %v3864, 1.442695
          %v3873 = vpow.pop %v3872
          %v3874 = vmul.f32 %v3865, 1.442695
          %v3875 = vpow.pop %v3874
          %v3876 = vmul.f32 %v3866, 1.442695
          %v3877 = vpow.pop %v3876
          %v3878 = vmul.f32 %v3867, 1.442695
          %v3879 = vpow.pop %v3878
          %v3880 = vmul.f32 %v3868, 1.442695
          %v3881 = vpow.pop %v3880
          %v3882 = vmul.f32 %v3869, 1.442695
          %v3883 = vpow.pop %v3882
          %v3884 = vmul.f32 %v3870, 1.442695
          %v3885 = vpow.pop %v3884
          %v3886 = vmul.f32 %v3871, 1.442695
          %v3887 = vpow.pop %v3886
          %v3888 = vadd.f32 %v3873, 1.0
          %v3889 = vadd.f32 %v3875, 1.0
          %v3890 = vadd.f32 %v3877, 1.0
          %v3891 = vadd.f32 %v3879, 1.0
          %v3892 = vadd.f32 %v3881, 1.0
          %v3893 = vadd.f32 %v3883, 1.0
          %v3894 = vadd.f32 %v3885, 1.0
          %v3895 = vadd.f32 %v3887, 1.0
          %v3896 = vrcp.pop %v3888
          %v3897 = vmul.f32 %v3888, %v3896
          %v3898 = vsub.f32 1.0, %v3897
          %v3899 = vmul.f32 %v3896, %v3898
          %v3900 = vadd.f32 %v3896, %v3899
          %vm3901 = vweird.f32 %v3888
          %vm3902 = vweird.f32 %v3896
          %vm3903 = vmor %vm3901, %vm3902
          %v3904 = vsel %vm3903, %v3896, %v3900
          %v3905 = vand.u32 2147483647, %v3888
          %vm3906 = vcmp.eq.f32.partialorder %v3905, 8.507059e+37
          %v3907 = vand.u32 %v3888, 2147483648
          %v3908 = vor.u32 1.1754944e-38, %v3907
          %v3909 = vsel %vm3906, %v3908, %v3904
          %v3910 = vmul.f32 1.0, %v3909
          %v3911 = vrcp.pop %v3889
          %v3912 = vmul.f32 %v3889, %v3911
          %v3913 = vsub.f32 1.0, %v3912
          %v3914 = vmul.f32 %v3911, %v3913
          %v3915 = vadd.f32 %v3911, %v3914
          %vm3916 = vweird.f32 %v3889
          %vm3917 = vweird.f32 %v3911
          %vm3918 = vmor %vm3916, %vm3917
          %v3919 = vsel %vm3918, %v3911, %v3915
          %v3920 = vand.u32 2147483647, %v3889
          %vm3921 = vcmp.eq.f32.partialorder %v3920, 8.507059e+37
          %v3922 = vand.u32 %v3889, 2147483648
          %v3923 = vor.u32 1.1754944e-38, %v3922
          %v3924 = vsel %vm3921, %v3923, %v3919
          %v3925 = vmul.f32 1.0, %v3924
          %v3926 = vrcp.pop %v3890
          %v3927 = vmul.f32 %v3890, %v3926
          %v3928 = vsub.f32 1.0, %v3927
          %v3929 = vmul.f32 %v3926, %v3928
          %v3930 = vadd.f32 %v3926, %v3929
          %vm3931 = vweird.f32 %v3890
          %vm3932 = vweird.f32 %v3926
          %vm3933 = vmor %vm3931, %vm3932
          %v3934 = vsel %vm3933, %v3926, %v3930
          %v3935 = vand.u32 2147483647, %v3890
          %vm3936 = vcmp.eq.f32.partialorder %v3935, 8.507059e+37
          %v3937 = vand.u32 %v3890, 2147483648
          %v3938 = vor.u32 1.1754944e-38, %v3937
          %v3939 = vsel %vm3936, %v3938, %v3934
          %v3940 = vmul.f32 1.0, %v3939
          %v3941 = vrcp.pop %v3891
          %v3942 = vmul.f32 %v3891, %v3941
          %v3943 = vsub.f32 1.0, %v3942
          %v3944 = vmul.f32 %v3941, %v3943
          %v3945 = vadd.f32 %v3941, %v3944
          %vm3946 = vweird.f32 %v3891
          %vm3947 = vweird.f32 %v3941
          %vm3948 = vmor %vm3946, %vm3947
          %v3949 = vsel %vm3948, %v3941, %v3945
          %v3950 = vand.u32 2147483647, %v3891
          %vm3951 = vcmp.eq.f32.partialorder %v3950, 8.507059e+37
          %v3952 = vand.u32 %v3891, 2147483648
          %v3953 = vor.u32 1.1754944e-38, %v3952
          %v3954 = vsel %vm3951, %v3953, %v3949
          %v3955 = vmul.f32 1.0, %v3954
          %v3956 = vrcp.pop %v3892
          %v3957 = vmul.f32 %v3892, %v3956
          %v3958 = vsub.f32 1.0, %v3957
          %v3959 = vmul.f32 %v3956, %v3958
          %v3960 = vadd.f32 %v3956, %v3959
          %vm3961 = vweird.f32 %v3892
          %vm3962 = vweird.f32 %v3956
          %vm3963 = vmor %vm3961, %vm3962
          %v3964 = vsel %vm3963, %v3956, %v3960
          %v3965 = vand.u32 2147483647, %v3892
          %vm3966 = vcmp.eq.f32.partialorder %v3965, 8.507059e+37
          %v3967 = vand.u32 %v3892, 2147483648
          %v3968 = vor.u32 1.1754944e-38, %v3967
          %v3969 = vsel %vm3966, %v3968, %v3964
          %v3970 = vmul.f32 1.0, %v3969
          %v3971 = vrcp.pop %v3893
          %v3972 = vmul.f32 %v3893, %v3971
          %v3973 = vsub.f32 1.0, %v3972
          %v3974 = vmul.f32 %v3971, %v3973
          %v3975 = vadd.f32 %v3971, %v3974
          %vm3976 = vweird.f32 %v3893
          %vm3977 = vweird.f32 %v3971
          %vm3978 = vmor %vm3976, %vm3977
          %v3979 = vsel %vm3978, %v3971, %v3975
          %v3980 = vand.u32 2147483647, %v3893
          %vm3981 = vcmp.eq.f32.partialorder %v3980, 8.507059e+37
          %v3982 = vand.u32 %v3893, 2147483648
          %v3983 = vor.u32 1.1754944e-38, %v3982
          %v3984 = vsel %vm3981, %v3983, %v3979
          %v3985 = vmul.f32 1.0, %v3984
          %v3986 = vrcp.pop %v3894
          %v3987 = vmul.f32 %v3894, %v3986
          %v3988 = vsub.f32 1.0, %v3987
          %v3989 = vmul.f32 %v3986, %v3988
          %v3990 = vadd.f32 %v3986, %v3989
          %vm3991 = vweird.f32 %v3894
          %vm3992 = vweird.f32 %v3986
          %vm3993 = vmor %vm3991, %vm3992
          %v3994 = vsel %vm3993, %v3986, %v3990
          %v3995 = vand.u32 2147483647, %v3894
          %vm3996 = vcmp.eq.f32.partialorder %v3995, 8.507059e+37
          %v3997 = vand.u32 %v3894, 2147483648
          %v3998 = vor.u32 1.1754944e-38, %v3997
          %v3999 = vsel %vm3996, %v3998, %v3994
          %v4000 = vmul.f32 1.0, %v3999
          %v4001 = vrcp.pop %v3895
          %v4002 = vmul.f32 %v3895, %v4001
          %v4003 = vsub.f32 1.0, %v4002
          %v4004 = vmul.f32 %v4001, %v4003
          %v4005 = vadd.f32 %v4001, %v4004
          %vm4006 = vweird.f32 %v3895
          %vm4007 = vweird.f32 %v4001
          %vm4008 = vmor %vm4006, %vm4007
          %v4009 = vsel %vm4008, %v4001, %v4005
          %v4010 = vand.u32 2147483647, %v3895
          %vm4011 = vcmp.eq.f32.partialorder %v4010, 8.507059e+37
          %v4012 = vand.u32 %v3895, 2147483648
          %v4013 = vor.u32 1.1754944e-38, %v4012
          %v4014 = vsel %vm4011, %v4013, %v4009
          %v4015 = vmul.f32 1.0, %v4014
          %v4016 = vmul.f32 %v3856, %v3910
          %v4017 = vmul.f32 %v3857, %v3925
          %v4018 = vmul.f32 %v3858, %v3940
          %v4019 = vmul.f32 %v3859, %v3955
          %v4020 = vmul.f32 %v3860, %v3970
          %v4021 = vmul.f32 %v3861, %v3985
          %v4022 = vmul.f32 %v3862, %v4000
          %v4023 = vmul.f32 %v3863, %v4015
          %v4024 = vpack.c.bf16 %v4018, %v4016
          %v4025 = vpack.c.bf16 %v4019, %v4017
          %v4026 = vpack.c.bf16 %v4022, %v4020
          %v4027 = vpack.c.bf16 %v4023, %v4021
          %4029 = vset.pattern.permute.xlu0 0
          %4030 = vperm.xlu0 %4029, %v3647
          %v4031 = vpop.permute.xlu0 %4030
          %4034 = vset.pattern.permute.xlu0 0
          %4035 = vperm.xlu0 %4034, %v3648
          %v4036 = vpop.permute.xlu0 %4035
          %v4040 = vunpack.c.l.b16 %v3643
          %v4041 = vunpack.c.l.b16 %v3644
          %v4042 = vpack.c.b16 %v4041, %v4040
          %v4044 = vsel %vm569, %v4042, 0
          %4046 = vmatpush.bf16.msra.mxu0 0
          %4047 = vmatpush.bf16.msra.mxu0 0
          %4048 = vmatpush.bf16.msra.mxu0 0
          %4049 = vmatpush.bf16.msra.mxu0 0
          %4050 = vmatpush.bf16.msra.mxu0 0
          %4051 = vmatpush.bf16.msra.mxu0 0
          %4052 = vmatpush.bf16.msra.mxu0 %v4026
          %4053 = vmatpush.bf16.msra.mxu0 %v4024
          %4054 = vmatmul.bf16.gmra.mxu0 %v4044
          %v4055 = vpop.f32.mrf.mxu0
          %v4056 = vadd.f32 %v4031, %v4055
          %v4057 = vpop.f32.mrf.mxu0
          %v4058 = vadd.f32 %v4036, %v4057
          %4059 = vdwg.mxu0
          %4060 = vmatpush.bf16.msra.mxu0 0
          %4061 = vmatpush.bf16.msra.mxu0 0
          %4062 = vmatpush.bf16.msra.mxu0 0
          %4063 = vmatpush.bf16.msra.mxu0 0
          %4064 = vmatpush.bf16.msra.mxu0 0
          %4065 = vmatpush.bf16.msra.mxu0 0
          %4066 = vmatpush.bf16.msra.mxu0 %v4027
          %4067 = vmatpush.bf16.msra.mxu0 %v4025
          %4068 = vmatmul.bf16.gmra.mxu0 %v4044
          %v4069 = vpop.f32.mrf.mxu0
          %v4070 = vadd.f32 %v4031, %v4069
          %v4071 = vpop.f32.mrf.mxu0
          %v4072 = vadd.f32 %v4036, %v4071
          %4073 = vdwg.mxu0
          %v4074 = vmax.f32 %v4056, 0.0
          %v4075 = vmax.f32 %v4070, 0.0
          %v4076 = vmax.f32 %v4058, 0.0
          %v4077 = vmax.f32 %v4072, 0.0
          %v4078 = vld [vmem:[#allocation3] sm:$0xff]
          %v4079 = vld [vmem:[#allocation3 + $0x8] sm:$0xff]
          %v4080 = vld [vmem:[#allocation3 + $0x10] sm:$0xff]
          %v4081 = vld [vmem:[#allocation3 + $0x18] sm:$0xff]
          %v4082 = vadd.f32 %v4078, %v4074
          %v4083 = vadd.f32 %v4079, %v4075
          %v4084 = vadd.f32 %v4080, %v4076
          %v4085 = vadd.f32 %v4081, %v4077
          %4086 = vst [vmem:[#allocation3] sm:$0xff] %v4082
          %4087 = vst [vmem:[#allocation3 + $0x8] sm:$0xff] %v4083
          %4088 = vst [vmem:[#allocation3 + $0x10] sm:$0xff] %v4084
          %4089 = vst [vmem:[#allocation3 + $0x18] sm:$0xff] %v4085
          %v4090 = vld [vmem:[%s471 + $0x20] sm:$0xff]
          %v4091 = vld [vmem:[%s471 + $0x28] sm:$0xff]
          %v4092 = vld [vmem:[%s471 + $0x70] sm:$0xff]
          %v4093 = vld [vmem:[%s471 + $0x78] sm:$0xff]
          %v4094 = vadd.f32 %v4090, %v4074
          %v4095 = vadd.f32 %v4091, %v4075
          %v4096 = vadd.f32 %v4092, %v4076
          %v4097 = vadd.f32 %v4093, %v4077
          %v4098 = vpack.c.bf16 %v4096, %v4094
          %v4099 = vpack.c.bf16 %v4097, %v4095
          %4101 = vset.pattern.permute.xlu0 0
          %4102 = vperm.xlu0 %4101, %v3654
          %v4103 = vpop.permute.xlu0 %4102
          %4106 = vset.pattern.permute.xlu0 0
          %4107 = vperm.xlu0 %4106, %v3655
          %v4108 = vpop.permute.xlu0 %4107
          %v4112 = vunpack.c.l.b16 %v3651
          %v4113 = vunpack.c.l.b16 %v3652
          %v4114 = vpack.c.b16 %v4113, %v4112
          %v4116 = vsel %vm895, %v4114, 0
          %4118 = vmatpush.bf16.msra.mxu0 0
          %4119 = vmatpush.bf16.msra.mxu0 0
          %4120 = vmatpush.bf16.msra.mxu0 0
          %4121 = vmatpush.bf16.msra.mxu0 0
          %4122 = vmatpush.bf16.msra.mxu0 0
          %4123 = vmatpush.bf16.msra.mxu0 0
          %4124 = vmatpush.bf16.msra.mxu0 0
          %4125 = vmatpush.bf16.msra.mxu0 %v4098
          %4126 = vmatmul.bf16.gmra.mxu0 %v4116
          %v4127 = vpop.f32.mrf.mxu0
          %v4128 = vadd.f32 %v4103, %v4127
          %v4129 = vpop.f32.mrf.mxu0
          %v4130 = vadd.f32 %v4108, %v4129
          %4131 = vdwg.mxu0
          %4132 = vmatpush.bf16.msra.mxu0 0
          %4133 = vmatpush.bf16.msra.mxu0 0
          %4134 = vmatpush.bf16.msra.mxu0 0
          %4135 = vmatpush.bf16.msra.mxu0 0
          %4136 = vmatpush.bf16.msra.mxu0 0
          %4137 = vmatpush.bf16.msra.mxu0 0
          %4138 = vmatpush.bf16.msra.mxu0 0
          %4139 = vmatpush.bf16.msra.mxu0 %v4099
          %4140 = vmatmul.bf16.gmra.mxu0 %v4116
          %v4141 = vpop.f32.mrf.mxu0
          %v4142 = vadd.f32 %v4103, %v4141
          %v4143 = vpop.f32.mrf.mxu0
          %v4144 = vadd.f32 %v4108, %v4143
          %4145 = vdwg.mxu0
          %v4146 = vmax.f32 %v4128, 0.0
          %v4147 = vmax.f32 %v4142, 0.0
          %v4148 = vmax.f32 %v4130, 0.0
          %v4149 = vmax.f32 %v4144, 0.0
          %4150 = vst [vmem:[%s933 + $0x20] sm:$0xff] %v4146
          %4151 = vst [vmem:[%s933 + $0x28] sm:$0xff] %v4147
          %4152 = vst [vmem:[%s933 + $0x70] sm:$0xff] %v4148
          %4153 = vst [vmem:[%s933 + $0x78] sm:$0xff] %v4149
          %s4154 = sadd.s32 %s430, 7
          %s4155 = smul.u32 %s4154, 8
          %s4156 = smul.addr %s4155, 4
          %s4157 = scalar_lea.vmem %s5, %s4156
          %v4158 = vld [vmem:[%s4157] sm:$0xf]
          %v4159 = vld [vmem:[%s4157 + $0x4] sm:$0xf]
          %v4160 = vld [vmem:[%s4157 + $0x8] sm:$0xf]
          %v4161 = vld [vmem:[%s4157 + $0xc] sm:$0xf]
          %v4162 = vld [vmem:[%s4157 + $0x10] sm:$0xf]
          %v4163 = vld [vmem:[%s4157 + $0x14] sm:$0xf]
          %v4164 = vld [vmem:[%s4157 + $0x18] sm:$0xf]
          %v4165 = vld [vmem:[%s4157 + $0x1c] sm:$0xf]
          %s4166 = smul.u32 %s4154, 64
          %s4167 = scalar_lea.vmem %s6, %s4166
          %v4168 = vld [vmem:[%s4167] sm:$0xff]
          %v4169 = vld [vmem:[%s4167 + $0x8] sm:$0xff]
          %v4170 = vld [vmem:[%s4167 + $0x10] sm:$0xff]
          %v4171 = vld [vmem:[%s4167 + $0x18] sm:$0xff]
          %v4172 = vld [vmem:[%s4167 + $0x20] sm:$0xff]
          %v4173 = vld [vmem:[%s4167 + $0x28] sm:$0xff]
          %v4174 = vld [vmem:[%s4167 + $0x30] sm:$0xff]
          %v4175 = vld [vmem:[%s4167 + $0x38] sm:$0xff]
          %s4176 = smul.u32 %s4154, 2
          %s4177 = smul.addr %s4176, 4
          %s4178 = scalar_lea.vmem %s7, %s4177
          %v4179 = vld [vmem:[%s4178] sm:$0xf]
          %v4180 = vld [vmem:[%s4178 + $0x4] sm:$0xf]
          %s4181 = smul.u32 %s4154, 16
          %s4182 = scalar_lea.vmem %s8, %s4181
          %v4183 = vld [vmem:[%s4182] sm:$0xff]
          %v4184 = vld [vmem:[%s4182 + $0x8] sm:$0xff]
          %s4185 = smul.addr %s4176, 4
          %s4186 = scalar_lea.vmem %s3, %s4185
          %v4187 = vld [vmem:[%s4186] sm:$0xf]
          %v4188 = vld [vmem:[%s4186 + $0x4] sm:$0xf]
          %s4189 = scalar_lea.vmem %s4, %s4181
          %v4190 = vld [vmem:[%s4189] sm:$0xff]
          %v4191 = vld [vmem:[%s4189 + $0x8] sm:$0xff]
          %v4192 = vld [vmem:[%s933 + $0x18] sm:$0xff]
          %v4193 = vld [vmem:[%s933 + $0x20] sm:$0xff]
          %v4194 = vld [vmem:[%s933 + $0x28] sm:$0xff]
          %v4195 = vld [vmem:[%s933 + $0x68] sm:$0xff]
          %v4196 = vld [vmem:[%s933 + $0x70] sm:$0xff]
          %v4197 = vld [vmem:[%s933 + $0x78] sm:$0xff]
          %v4198 = vld [vmem:[%s933 + $0x30] sm:$0xff]
          %v4199 = vld [vmem:[%s933 + $0x80] sm:$0xff]
          %v4200 = vpack.c.bf16 %v4195, %v4192
          %v4201 = vpack.c.bf16 %v4196, %v4193
          %v4202 = vpack.c.bf16 %v4197, %v4194
          %v4203 = vpack.c.bf16 %v4199, %v4198
          %4205 = vset.pattern.permute.xlu0 0
          %4206 = vperm.xlu0 %4205, %v4168
          %v4207 = vpop.permute.xlu0 %4206
          %4210 = vset.pattern.permute.xlu0 0
          %4211 = vperm.xlu0 %4210, %v4169
          %v4212 = vpop.permute.xlu0 %4211
          %4215 = vset.pattern.permute.xlu0 0
          %4216 = vperm.xlu0 %4215, %v4170
          %v4217 = vpop.permute.xlu0 %4216
          %4220 = vset.pattern.permute.xlu0 0
          %4221 = vperm.xlu0 %4220, %v4171
          %v4222 = vpop.permute.xlu0 %4221
          %4225 = vset.pattern.permute.xlu0 0
          %4226 = vperm.xlu0 %4225, %v4172
          %v4227 = vpop.permute.xlu0 %4226
          %4230 = vset.pattern.permute.xlu0 0
          %4231 = vperm.xlu0 %4230, %v4173
          %v4232 = vpop.permute.xlu0 %4231
          %4235 = vset.pattern.permute.xlu0 0
          %4236 = vperm.xlu0 %4235, %v4174
          %v4237 = vpop.permute.xlu0 %4236
          %4240 = vset.pattern.permute.xlu0 0
          %4241 = vperm.xlu0 %4240, %v4175
          %v4242 = vpop.permute.xlu0 %4241
          %v4252 = vunpack.c.l.b16 %v4158
          %v4253 = vunpack.c.l.b16 %v4159
          %v4254 = vunpack.c.l.b16 %v4160
          %v4255 = vunpack.c.l.b16 %v4161
          %v4256 = vunpack.c.l.b16 %v4162
          %v4257 = vunpack.c.l.b16 %v4163
          %v4258 = vunpack.c.l.b16 %v4164
          %v4259 = vunpack.c.l.b16 %v4165
          %v4260 = vpack.c.b16 %v4253, %v4252
          %v4261 = vpack.c.b16 %v4255, %v4254
          %v4262 = vpack.c.b16 %v4257, %v4256
          %v4263 = vpack.c.b16 %v4259, %v4258
          %4268 = vrot.lane.b32.xlu0 %v4200, 64
          %v4269 = vpop.permute.xlu0 %4268
          %4270 = vrot.lane.b32.xlu0 %v4201, 64
          %v4271 = vpop.permute.xlu0 %4270
          %4272 = vrot.lane.b32.xlu0 %v4202, 64
          %v4273 = vpop.permute.xlu0 %4272
          %4274 = vrot.lane.b32.xlu0 %v4203, 64
          %v4275 = vpop.permute.xlu0 %4274
          %vm4276 = vcmask 523264
          %v4277 = vsel %vm4276, %v4269, %v4271
          %v4278 = vsel %vm4276, %v4271, %v4273
          %v4279 = vsel %vm4276, %v4273, %v4275
          %v4284 = vsel %vm569, %v4260, 0
          %v4287 = vsel %vm569, %v4261, 0
          %v4290 = vsel %vm569, %v4262, 0
          %v4293 = vsel %vm569, %v4263, 0
          %4295 = vmatpush.bf16.msra.mxu0 0
          %4296 = vmatpush.bf16.msra.mxu0 0
          %4297 = vmatpush.bf16.msra.mxu0 0
          %4298 = vmatpush.bf16.msra.mxu0 0
          %4299 = vmatpush.bf16.msra.mxu0 0
          %4300 = vmatpush.bf16.msra.mxu0 0
          %4301 = vmatpush.bf16.msra.mxu0 %v4278
          %4302 = vmatpush.bf16.msra.mxu0 %v4277
          %4303 = vmatmul.bf16.gmra.mxu0 %v4284
          %v4304 = vpop.f32.mrf.mxu0
          %v4305 = vadd.f32 %v4207, %v4304
          %v4306 = vpop.f32.mrf.mxu0
          %v4307 = vadd.f32 %v4212, %v4306
          %4308 = vmatmul.bf16.gmra.mxu0 %v4287
          %v4309 = vpop.f32.mrf.mxu0
          %v4310 = vadd.f32 %v4217, %v4309
          %v4311 = vpop.f32.mrf.mxu0
          %v4312 = vadd.f32 %v4222, %v4311
          %4313 = vmatmul.bf16.gmra.mxu0 %v4290
          %v4314 = vpop.f32.mrf.mxu0
          %v4315 = vadd.f32 %v4227, %v4314
          %v4316 = vpop.f32.mrf.mxu0
          %v4317 = vadd.f32 %v4232, %v4316
          %4318 = vmatmul.bf16.gmra.mxu0 %v4293
          %v4319 = vpop.f32.mrf.mxu0
          %v4320 = vadd.f32 %v4237, %v4319
          %v4321 = vpop.f32.mrf.mxu0
          %v4322 = vadd.f32 %v4242, %v4321
          %4323 = vdwg.mxu0
          %4324 = vmatpush.bf16.msra.mxu0 0
          %4325 = vmatpush.bf16.msra.mxu0 0
          %4326 = vmatpush.bf16.msra.mxu0 0
          %4327 = vmatpush.bf16.msra.mxu0 0
          %4328 = vmatpush.bf16.msra.mxu0 0
          %4329 = vmatpush.bf16.msra.mxu0 0
          %4330 = vmatpush.bf16.msra.mxu0 %v4279
          %4331 = vmatpush.bf16.msra.mxu0 %v4278
          %4332 = vmatmul.bf16.gmra.mxu0 %v4284
          %v4333 = vpop.f32.mrf.mxu0
          %v4334 = vadd.f32 %v4207, %v4333
          %v4335 = vpop.f32.mrf.mxu0
          %v4336 = vadd.f32 %v4212, %v4335
          %4337 = vmatmul.bf16.gmra.mxu0 %v4287
          %v4338 = vpop.f32.mrf.mxu0
          %v4339 = vadd.f32 %v4217, %v4338
          %v4340 = vpop.f32.mrf.mxu0
          %v4341 = vadd.f32 %v4222, %v4340
          %4342 = vmatmul.bf16.gmra.mxu0 %v4290
          %v4343 = vpop.f32.mrf.mxu0
          %v4344 = vadd.f32 %v4227, %v4343
          %v4345 = vpop.f32.mrf.mxu0
          %v4346 = vadd.f32 %v4232, %v4345
          %4347 = vmatmul.bf16.gmra.mxu0 %v4293
          %v4348 = vpop.f32.mrf.mxu0
          %v4349 = vadd.f32 %v4237, %v4348
          %v4350 = vpop.f32.mrf.mxu0
          %v4351 = vadd.f32 %v4242, %v4350
          %4352 = vdwg.mxu0
          %v4353 = vtanh.pop %v4305
          %v4354 = vtanh.pop %v4334
          %v4355 = vtanh.pop %v4307
          %v4356 = vtanh.pop %v4336
          %v4357 = vtanh.pop %v4310
          %v4358 = vtanh.pop %v4339
          %v4359 = vtanh.pop %v4312
          %v4360 = vtanh.pop %v4341
          %v4361 = vxor.u32 %v4315, 2147483648
          %v4362 = vxor.u32 %v4344, 2147483648
          %v4363 = vxor.u32 %v4317, 2147483648
          %v4364 = vxor.u32 %v4346, 2147483648
          %v4365 = vxor.u32 %v4320, 2147483648
          %v4366 = vxor.u32 %v4349, 2147483648
          %v4367 = vxor.u32 %v4322, 2147483648
          %v4368 = vxor.u32 %v4351, 2147483648
          %v4369 = vmul.f32 %v4361, 1.442695
          %v4370 = vpow.pop %v4369
          %v4371 = vmul.f32 %v4362, 1.442695
          %v4372 = vpow.pop %v4371
          %v4373 = vmul.f32 %v4363, 1.442695
          %v4374 = vpow.pop %v4373
          %v4375 = vmul.f32 %v4364, 1.442695
          %v4376 = vpow.pop %v4375
          %v4377 = vmul.f32 %v4365, 1.442695
          %v4378 = vpow.pop %v4377
          %v4379 = vmul.f32 %v4366, 1.442695
          %v4380 = vpow.pop %v4379
          %v4381 = vmul.f32 %v4367, 1.442695
          %v4382 = vpow.pop %v4381
          %v4383 = vmul.f32 %v4368, 1.442695
          %v4384 = vpow.pop %v4383
          %v4385 = vadd.f32 %v4370, 1.0
          %v4386 = vadd.f32 %v4372, 1.0
          %v4387 = vadd.f32 %v4374, 1.0
          %v4388 = vadd.f32 %v4376, 1.0
          %v4389 = vadd.f32 %v4378, 1.0
          %v4390 = vadd.f32 %v4380, 1.0
          %v4391 = vadd.f32 %v4382, 1.0
          %v4392 = vadd.f32 %v4384, 1.0
          %v4393 = vrcp.pop %v4385
          %v4394 = vmul.f32 %v4385, %v4393
          %v4395 = vsub.f32 1.0, %v4394
          %v4396 = vmul.f32 %v4393, %v4395
          %v4397 = vadd.f32 %v4393, %v4396
          %vm4398 = vweird.f32 %v4385
          %vm4399 = vweird.f32 %v4393
          %vm4400 = vmor %vm4398, %vm4399
          %v4401 = vsel %vm4400, %v4393, %v4397
          %v4402 = vand.u32 2147483647, %v4385
          %vm4403 = vcmp.eq.f32.partialorder %v4402, 8.507059e+37
          %v4404 = vand.u32 %v4385, 2147483648
          %v4405 = vor.u32 1.1754944e-38, %v4404
          %v4406 = vsel %vm4403, %v4405, %v4401
          %v4407 = vmul.f32 1.0, %v4406
          %v4408 = vrcp.pop %v4386
          %v4409 = vmul.f32 %v4386, %v4408
          %v4410 = vsub.f32 1.0, %v4409
          %v4411 = vmul.f32 %v4408, %v4410
          %v4412 = vadd.f32 %v4408, %v4411
          %vm4413 = vweird.f32 %v4386
          %vm4414 = vweird.f32 %v4408
          %vm4415 = vmor %vm4413, %vm4414
          %v4416 = vsel %vm4415, %v4408, %v4412
          %v4417 = vand.u32 2147483647, %v4386
          %vm4418 = vcmp.eq.f32.partialorder %v4417, 8.507059e+37
          %v4419 = vand.u32 %v4386, 2147483648
          %v4420 = vor.u32 1.1754944e-38, %v4419
          %v4421 = vsel %vm4418, %v4420, %v4416
          %v4422 = vmul.f32 1.0, %v4421
          %v4423 = vrcp.pop %v4387
          %v4424 = vmul.f32 %v4387, %v4423
          %v4425 = vsub.f32 1.0, %v4424
          %v4426 = vmul.f32 %v4423, %v4425
          %v4427 = vadd.f32 %v4423, %v4426
          %vm4428 = vweird.f32 %v4387
          %vm4429 = vweird.f32 %v4423
          %vm4430 = vmor %vm4428, %vm4429
          %v4431 = vsel %vm4430, %v4423, %v4427
          %v4432 = vand.u32 2147483647, %v4387
          %vm4433 = vcmp.eq.f32.partialorder %v4432, 8.507059e+37
          %v4434 = vand.u32 %v4387, 2147483648
          %v4435 = vor.u32 1.1754944e-38, %v4434
          %v4436 = vsel %vm4433, %v4435, %v4431
          %v4437 = vmul.f32 1.0, %v4436
          %v4438 = vrcp.pop %v4388
          %v4439 = vmul.f32 %v4388, %v4438
          %v4440 = vsub.f32 1.0, %v4439
          %v4441 = vmul.f32 %v4438, %v4440
          %v4442 = vadd.f32 %v4438, %v4441
          %vm4443 = vweird.f32 %v4388
          %vm4444 = vweird.f32 %v4438
          %vm4445 = vmor %vm4443, %vm4444
          %v4446 = vsel %vm4445, %v4438, %v4442
          %v4447 = vand.u32 2147483647, %v4388
          %vm4448 = vcmp.eq.f32.partialorder %v4447, 8.507059e+37
          %v4449 = vand.u32 %v4388, 2147483648
          %v4450 = vor.u32 1.1754944e-38, %v4449
          %v4451 = vsel %vm4448, %v4450, %v4446
          %v4452 = vmul.f32 1.0, %v4451
          %v4453 = vrcp.pop %v4389
          %v4454 = vmul.f32 %v4389, %v4453
          %v4455 = vsub.f32 1.0, %v4454
          %v4456 = vmul.f32 %v4453, %v4455
          %v4457 = vadd.f32 %v4453, %v4456
          %vm4458 = vweird.f32 %v4389
          %vm4459 = vweird.f32 %v4453
          %vm4460 = vmor %vm4458, %vm4459
          %v4461 = vsel %vm4460, %v4453, %v4457
          %v4462 = vand.u32 2147483647, %v4389
          %vm4463 = vcmp.eq.f32.partialorder %v4462, 8.507059e+37
          %v4464 = vand.u32 %v4389, 2147483648
          %v4465 = vor.u32 1.1754944e-38, %v4464
          %v4466 = vsel %vm4463, %v4465, %v4461
          %v4467 = vmul.f32 1.0, %v4466
          %v4468 = vrcp.pop %v4390
          %v4469 = vmul.f32 %v4390, %v4468
          %v4470 = vsub.f32 1.0, %v4469
          %v4471 = vmul.f32 %v4468, %v4470
          %v4472 = vadd.f32 %v4468, %v4471
          %vm4473 = vweird.f32 %v4390
          %vm4474 = vweird.f32 %v4468
          %vm4475 = vmor %vm4473, %vm4474
          %v4476 = vsel %vm4475, %v4468, %v4472
          %v4477 = vand.u32 2147483647, %v4390
          %vm4478 = vcmp.eq.f32.partialorder %v4477, 8.507059e+37
          %v4479 = vand.u32 %v4390, 2147483648
          %v4480 = vor.u32 1.1754944e-38, %v4479
          %v4481 = vsel %vm4478, %v4480, %v4476
          %v4482 = vmul.f32 1.0, %v4481
          %v4483 = vrcp.pop %v4391
          %v4484 = vmul.f32 %v4391, %v4483
          %v4485 = vsub.f32 1.0, %v4484
          %v4486 = vmul.f32 %v4483, %v4485
          %v4487 = vadd.f32 %v4483, %v4486
          %vm4488 = vweird.f32 %v4391
          %vm4489 = vweird.f32 %v4483
          %vm4490 = vmor %vm4488, %vm4489
          %v4491 = vsel %vm4490, %v4483, %v4487
          %v4492 = vand.u32 2147483647, %v4391
          %vm4493 = vcmp.eq.f32.partialorder %v4492, 8.507059e+37
          %v4494 = vand.u32 %v4391, 2147483648
          %v4495 = vor.u32 1.1754944e-38, %v4494
          %v4496 = vsel %vm4493, %v4495, %v4491
          %v4497 = vmul.f32 1.0, %v4496
          %v4498 = vrcp.pop %v4392
          %v4499 = vmul.f32 %v4392, %v4498
          %v4500 = vsub.f32 1.0, %v4499
          %v4501 = vmul.f32 %v4498, %v4500
          %v4502 = vadd.f32 %v4498, %v4501
          %vm4503 = vweird.f32 %v4392
          %vm4504 = vweird.f32 %v4498
          %vm4505 = vmor %vm4503, %vm4504
          %v4506 = vsel %vm4505, %v4498, %v4502
          %v4507 = vand.u32 2147483647, %v4392
          %vm4508 = vcmp.eq.f32.partialorder %v4507, 8.507059e+37
          %v4509 = vand.u32 %v4392, 2147483648
          %v4510 = vor.u32 1.1754944e-38, %v4509
          %v4511 = vsel %vm4508, %v4510, %v4506
          %v4512 = vmul.f32 1.0, %v4511
          %v4513 = vmul.f32 %v4353, %v4407
          %v4514 = vmul.f32 %v4354, %v4422
          %v4515 = vmul.f32 %v4355, %v4437
          %v4516 = vmul.f32 %v4356, %v4452
          %v4517 = vmul.f32 %v4357, %v4467
          %v4518 = vmul.f32 %v4358, %v4482
          %v4519 = vmul.f32 %v4359, %v4497
          %v4520 = vmul.f32 %v4360, %v4512
          %v4521 = vpack.c.bf16 %v4515, %v4513
          %v4522 = vpack.c.bf16 %v4516, %v4514
          %v4523 = vpack.c.bf16 %v4519, %v4517
          %v4524 = vpack.c.bf16 %v4520, %v4518
          %4526 = vset.pattern.permute.xlu0 0
          %4527 = vperm.xlu0 %4526, %v4183
          %v4528 = vpop.permute.xlu0 %4527
          %4531 = vset.pattern.permute.xlu0 0
          %4532 = vperm.xlu0 %4531, %v4184
          %v4533 = vpop.permute.xlu0 %4532
          %v4537 = vunpack.c.l.b16 %v4179
          %v4538 = vunpack.c.l.b16 %v4180
          %v4539 = vpack.c.b16 %v4538, %v4537
          %v4541 = vsel %vm569, %v4539, 0
          %4543 = vmatpush.bf16.msra.mxu0 0
          %4544 = vmatpush.bf16.msra.mxu0 0
          %4545 = vmatpush.bf16.msra.mxu0 0
          %4546 = vmatpush.bf16.msra.mxu0 0
          %4547 = vmatpush.bf16.msra.mxu0 0
          %4548 = vmatpush.bf16.msra.mxu0 0
          %4549 = vmatpush.bf16.msra.mxu0 %v4523
          %4550 = vmatpush.bf16.msra.mxu0 %v4521
          %4551 = vmatmul.bf16.gmra.mxu0 %v4541
          %v4552 = vpop.f32.mrf.mxu0
          %v4553 = vadd.f32 %v4528, %v4552
          %v4554 = vpop.f32.mrf.mxu0
          %v4555 = vadd.f32 %v4533, %v4554
          %4556 = vdwg.mxu0
          %4557 = vmatpush.bf16.msra.mxu0 0
          %4558 = vmatpush.bf16.msra.mxu0 0
          %4559 = vmatpush.bf16.msra.mxu0 0
          %4560 = vmatpush.bf16.msra.mxu0 0
          %4561 = vmatpush.bf16.msra.mxu0 0
          %4562 = vmatpush.bf16.msra.mxu0 0
          %4563 = vmatpush.bf16.msra.mxu0 %v4524
          %4564 = vmatpush.bf16.msra.mxu0 %v4522
          %4565 = vmatmul.bf16.gmra.mxu0 %v4541
          %v4566 = vpop.f32.mrf.mxu0
          %v4567 = vadd.f32 %v4528, %v4566
          %v4568 = vpop.f32.mrf.mxu0
          %v4569 = vadd.f32 %v4533, %v4568
          %4570 = vdwg.mxu0
          %v4571 = vmax.f32 %v4553, 0.0
          %v4572 = vmax.f32 %v4567, 0.0
          %v4573 = vmax.f32 %v4555, 0.0
          %v4574 = vmax.f32 %v4569, 0.0
          %v4575 = vld [vmem:[#allocation3] sm:$0xff]
          %v4576 = vld [vmem:[#allocation3 + $0x8] sm:$0xff]
          %v4577 = vld [vmem:[#allocation3 + $0x10] sm:$0xff]
          %v4578 = vld [vmem:[#allocation3 + $0x18] sm:$0xff]
          %v4579 = vadd.f32 %v4575, %v4571
          %v4580 = vadd.f32 %v4576, %v4572
          %v4581 = vadd.f32 %v4577, %v4573
          %v4582 = vadd.f32 %v4578, %v4574
          %4583 = vst [vmem:[#allocation3] sm:$0xff] %v4579
          %4584 = vst [vmem:[#allocation3 + $0x8] sm:$0xff] %v4580
          %4585 = vst [vmem:[#allocation3 + $0x10] sm:$0xff] %v4581
          %4586 = vst [vmem:[#allocation3 + $0x18] sm:$0xff] %v4582
          %v4587 = vld [vmem:[%s933 + $0x20] sm:$0xff]
          %v4588 = vld [vmem:[%s933 + $0x28] sm:$0xff]
          %v4589 = vld [vmem:[%s933 + $0x70] sm:$0xff]
          %v4590 = vld [vmem:[%s933 + $0x78] sm:$0xff]
          %v4591 = vadd.f32 %v4587, %v4571
          %v4592 = vadd.f32 %v4588, %v4572
          %v4593 = vadd.f32 %v4589, %v4573
          %v4594 = vadd.f32 %v4590, %v4574
          %v4595 = vpack.c.bf16 %v4593, %v4591
          %v4596 = vpack.c.bf16 %v4594, %v4592
          %4598 = vset.pattern.permute.xlu0 0
          %4599 = vperm.xlu0 %4598, %v4190
          %v4600 = vpop.permute.xlu0 %4599
          %4603 = vset.pattern.permute.xlu0 0
          %4604 = vperm.xlu0 %4603, %v4191
          %v4605 = vpop.permute.xlu0 %4604
          %v4609 = vunpack.c.l.b16 %v4187
          %v4610 = vunpack.c.l.b16 %v4188
          %v4611 = vpack.c.b16 %v4610, %v4609
          %v4613 = vsel %vm895, %v4611, 0
          %4615 = vmatpush.bf16.msra.mxu0 0
          %4616 = vmatpush.bf16.msra.mxu0 0
          %4617 = vmatpush.bf16.msra.mxu0 0
          %4618 = vmatpush.bf16.msra.mxu0 0
          %4619 = vmatpush.bf16.msra.mxu0 0
          %4620 = vmatpush.bf16.msra.mxu0 0
          %4621 = vmatpush.bf16.msra.mxu0 0
          %4622 = vmatpush.bf16.msra.mxu0 %v4595
          %4623 = vmatmul.bf16.gmra.mxu0 %v4613
          %v4624 = vpop.f32.mrf.mxu0
          %v4625 = vadd.f32 %v4600, %v4624
          %v4626 = vpop.f32.mrf.mxu0
          %v4627 = vadd.f32 %v4605, %v4626
          %4628 = vdwg.mxu0
          %4629 = vmatpush.bf16.msra.mxu0 0
          %4630 = vmatpush.bf16.msra.mxu0 0
          %4631 = vmatpush.bf16.msra.mxu0 0
          %4632 = vmatpush.bf16.msra.mxu0 0
          %4633 = vmatpush.bf16.msra.mxu0 0
          %4634 = vmatpush.bf16.msra.mxu0 0
          %4635 = vmatpush.bf16.msra.mxu0 0
          %4636 = vmatpush.bf16.msra.mxu0 %v4596
          %4637 = vmatmul.bf16.gmra.mxu0 %v4613
          %v4638 = vpop.f32.mrf.mxu0
          %v4639 = vadd.f32 %v4600, %v4638
          %v4640 = vpop.f32.mrf.mxu0
          %v4641 = vadd.f32 %v4605, %v4640
          %4642 = vdwg.mxu0
          %v4643 = vmax.f32 %v4625, 0.0
          %v4644 = vmax.f32 %v4639, 0.0
          %v4645 = vmax.f32 %v4627, 0.0
          %v4646 = vmax.f32 %v4641, 0.0
          %4647 = vst [vmem:[%s471 + $0x20] sm:$0xff] %v4643
          %4648 = vst [vmem:[%s471 + $0x28] sm:$0xff] %v4644
          %4649 = vst [vmem:[%s471 + $0x70] sm:$0xff] %v4645
          %4650 = vst [vmem:[%s471 + $0x78] sm:$0xff] %v4646
          %s4651 = sadd.s32 %s430, 8
          %s4652 = smul.u32 %s4651, 8
          %s4653 = smul.addr %s4652, 4
          %s4654 = scalar_lea.vmem %s5, %s4653
          %v4655 = vld [vmem:[%s4654] sm:$0xf]
          %v4656 = vld [vmem:[%s4654 + $0x4] sm:$0xf]
          %v4657 = vld [vmem:[%s4654 + $0x8] sm:$0xf]
          %v4658 = vld [vmem:[%s4654 + $0xc] sm:$0xf]
          %v4659 = vld [vmem:[%s4654 + $0x10] sm:$0xf]
          %v4660 = vld [vmem:[%s4654 + $0x14] sm:$0xf]
          %v4661 = vld [vmem:[%s4654 + $0x18] sm:$0xf]
          %v4662 = vld [vmem:[%s4654 + $0x1c] sm:$0xf]
          %s4663 = smul.u32 %s4651, 64
          %s4664 = scalar_lea.vmem %s6, %s4663
          %v4665 = vld [vmem:[%s4664] sm:$0xff]
          %v4666 = vld [vmem:[%s4664 + $0x8] sm:$0xff]
          %v4667 = vld [vmem:[%s4664 + $0x10] sm:$0xff]
          %v4668 = vld [vmem:[%s4664 + $0x18] sm:$0xff]
          %v4669 = vld [vmem:[%s4664 + $0x20] sm:$0xff]
          %v4670 = vld [vmem:[%s4664 + $0x28] sm:$0xff]
          %v4671 = vld [vmem:[%s4664 + $0x30] sm:$0xff]
          %v4672 = vld [vmem:[%s4664 + $0x38] sm:$0xff]
          %s4673 = smul.u32 %s4651, 2
          %s4674 = smul.addr %s4673, 4
          %s4675 = scalar_lea.vmem %s7, %s4674
          %v4676 = vld [vmem:[%s4675] sm:$0xf]
          %v4677 = vld [vmem:[%s4675 + $0x4] sm:$0xf]
          %s4678 = smul.u32 %s4651, 16
          %s4679 = scalar_lea.vmem %s8, %s4678
          %v4680 = vld [vmem:[%s4679] sm:$0xff]
          %v4681 = vld [vmem:[%s4679 + $0x8] sm:$0xff]
          %s4682 = smul.addr %s4673, 4
          %s4683 = scalar_lea.vmem %s3, %s4682
          %v4684 = vld [vmem:[%s4683] sm:$0xf]
          %v4685 = vld [vmem:[%s4683 + $0x4] sm:$0xf]
          %s4686 = scalar_lea.vmem %s4, %s4678
          %v4687 = vld [vmem:[%s4686] sm:$0xff]
          %v4688 = vld [vmem:[%s4686 + $0x8] sm:$0xff]
          %v4689 = vld [vmem:[%s471 + $0x18] sm:$0xff]
          %v4690 = vld [vmem:[%s471 + $0x20] sm:$0xff]
          %v4691 = vld [vmem:[%s471 + $0x68] sm:$0xff]
          %v4692 = vld [vmem:[%s471 + $0x70] sm:$0xff]
          %v4693 = vld [vmem:[%s471 + $0x28] sm:$0xff]
          %v4694 = vld [vmem:[%s471 + $0x30] sm:$0xff]
          %v4695 = vld [vmem:[%s471 + $0x78] sm:$0xff]
          %v4696 = vld [vmem:[%s471 + $0x80] sm:$0xff]
          %v4697 = vpack.c.bf16 %v4691, %v4689
          %v4698 = vpack.c.bf16 %v4692, %v4690
          %v4699 = vpack.c.bf16 %v4695, %v4693
          %v4700 = vpack.c.bf16 %v4696, %v4694
          %4702 = vset.pattern.permute.xlu0 0
          %4703 = vperm.xlu0 %4702, %v4665
          %v4704 = vpop.permute.xlu0 %4703
          %4707 = vset.pattern.permute.xlu0 0
          %4708 = vperm.xlu0 %4707, %v4666
          %v4709 = vpop.permute.xlu0 %4708
          %4712 = vset.pattern.permute.xlu0 0
          %4713 = vperm.xlu0 %4712, %v4667
          %v4714 = vpop.permute.xlu0 %4713
          %4717 = vset.pattern.permute.xlu0 0
          %4718 = vperm.xlu0 %4717, %v4668
          %v4719 = vpop.permute.xlu0 %4718
          %4722 = vset.pattern.permute.xlu0 0
          %4723 = vperm.xlu0 %4722, %v4669
          %v4724 = vpop.permute.xlu0 %4723
          %4727 = vset.pattern.permute.xlu0 0
          %4728 = vperm.xlu0 %4727, %v4670
          %v4729 = vpop.permute.xlu0 %4728
          %4732 = vset.pattern.permute.xlu0 0
          %4733 = vperm.xlu0 %4732, %v4671
          %v4734 = vpop.permute.xlu0 %4733
          %4737 = vset.pattern.permute.xlu0 0
          %4738 = vperm.xlu0 %4737, %v4672
          %v4739 = vpop.permute.xlu0 %4738
          %v4749 = vunpack.c.l.b16 %v4655
          %v4750 = vunpack.c.l.b16 %v4656
          %v4751 = vunpack.c.l.b16 %v4657
          %v4752 = vunpack.c.l.b16 %v4658
          %v4753 = vunpack.c.l.b16 %v4659
          %v4754 = vunpack.c.l.b16 %v4660
          %v4755 = vunpack.c.l.b16 %v4661
          %v4756 = vunpack.c.l.b16 %v4662
          %v4757 = vpack.c.b16 %v4750, %v4749
          %v4758 = vpack.c.b16 %v4752, %v4751
          %v4759 = vpack.c.b16 %v4754, %v4753
          %v4760 = vpack.c.b16 %v4756, %v4755
          %v4762 = vsel %vm569, %v4757, 0
          %v4765 = vsel %vm569, %v4758, 0
          %v4768 = vsel %vm569, %v4759, 0
          %v4771 = vsel %vm569, %v4760, 0
          %4773 = vmatpush.bf16.msra.mxu0 0
          %4774 = vmatpush.bf16.msra.mxu0 0
          %4775 = vmatpush.bf16.msra.mxu0 0
          %4776 = vmatpush.bf16.msra.mxu0 0
          %4777 = vmatpush.bf16.msra.mxu0 0
          %4778 = vmatpush.bf16.msra.mxu0 0
          %4779 = vmatpush.bf16.msra.mxu0 %v4699
          %4780 = vmatpush.bf16.msra.mxu0 %v4697
          %4781 = vmatmul.bf16.gmra.mxu0 %v4762
          %v4782 = vpop.f32.mrf.mxu0
          %v4783 = vadd.f32 %v4704, %v4782
          %v4784 = vpop.f32.mrf.mxu0
          %v4785 = vadd.f32 %v4709, %v4784
          %4786 = vmatmul.bf16.gmra.mxu0 %v4765
          %v4787 = vpop.f32.mrf.mxu0
          %v4788 = vadd.f32 %v4714, %v4787
          %v4789 = vpop.f32.mrf.mxu0
          %v4790 = vadd.f32 %v4719, %v4789
          %4791 = vmatmul.bf16.gmra.mxu0 %v4768
          %v4792 = vpop.f32.mrf.mxu0
          %v4793 = vadd.f32 %v4724, %v4792
          %v4794 = vpop.f32.mrf.mxu0
          %v4795 = vadd.f32 %v4729, %v4794
          %4796 = vmatmul.bf16.gmra.mxu0 %v4771
          %v4797 = vpop.f32.mrf.mxu0
          %v4798 = vadd.f32 %v4734, %v4797
          %v4799 = vpop.f32.mrf.mxu0
          %v4800 = vadd.f32 %v4739, %v4799
          %4801 = vdwg.mxu0
          %4802 = vmatpush.bf16.msra.mxu0 0
          %4803 = vmatpush.bf16.msra.mxu0 0
          %4804 = vmatpush.bf16.msra.mxu0 0
          %4805 = vmatpush.bf16.msra.mxu0 0
          %4806 = vmatpush.bf16.msra.mxu0 0
          %4807 = vmatpush.bf16.msra.mxu0 0
          %4808 = vmatpush.bf16.msra.mxu0 %v4700
          %4809 = vmatpush.bf16.msra.mxu0 %v4698
          %4810 = vmatmul.bf16.gmra.mxu0 %v4762
          %v4811 = vpop.f32.mrf.mxu0
          %v4812 = vadd.f32 %v4704, %v4811
          %v4813 = vpop.f32.mrf.mxu0
          %v4814 = vadd.f32 %v4709, %v4813
          %4815 = vmatmul.bf16.gmra.mxu0 %v4765
          %v4816 = vpop.f32.mrf.mxu0
          %v4817 = vadd.f32 %v4714, %v4816
          %v4818 = vpop.f32.mrf.mxu0
          %v4819 = vadd.f32 %v4719, %v4818
          %4820 = vmatmul.bf16.gmra.mxu0 %v4768
          %v4821 = vpop.f32.mrf.mxu0
          %v4822 = vadd.f32 %v4724, %v4821
          %v4823 = vpop.f32.mrf.mxu0
          %v4824 = vadd.f32 %v4729, %v4823
          %4825 = vmatmul.bf16.gmra.mxu0 %v4771
          %v4826 = vpop.f32.mrf.mxu0
          %v4827 = vadd.f32 %v4734, %v4826
          %v4828 = vpop.f32.mrf.mxu0
          %v4829 = vadd.f32 %v4739, %v4828
          %4830 = vdwg.mxu0
          %v4831 = vtanh.pop %v4783
          %v4832 = vtanh.pop %v4812
          %v4833 = vtanh.pop %v4785
          %v4834 = vtanh.pop %v4814
          %v4835 = vtanh.pop %v4788
          %v4836 = vtanh.pop %v4817
          %v4837 = vtanh.pop %v4790
          %v4838 = vtanh.pop %v4819
          %v4839 = vxor.u32 %v4793, 2147483648
          %v4840 = vxor.u32 %v4822, 2147483648
          %v4841 = vxor.u32 %v4795, 2147483648
          %v4842 = vxor.u32 %v4824, 2147483648
          %v4843 = vxor.u32 %v4798, 2147483648
          %v4844 = vxor.u32 %v4827, 2147483648
          %v4845 = vxor.u32 %v4800, 2147483648
          %v4846 = vxor.u32 %v4829, 2147483648
          %v4847 = vmul.f32 %v4839, 1.442695
          %v4848 = vpow.pop %v4847
          %v4849 = vmul.f32 %v4840, 1.442695
          %v4850 = vpow.pop %v4849
          %v4851 = vmul.f32 %v4841, 1.442695
          %v4852 = vpow.pop %v4851
          %v4853 = vmul.f32 %v4842, 1.442695
          %v4854 = vpow.pop %v4853
          %v4855 = vmul.f32 %v4843, 1.442695
          %v4856 = vpow.pop %v4855
          %v4857 = vmul.f32 %v4844, 1.442695
          %v4858 = vpow.pop %v4857
          %v4859 = vmul.f32 %v4845, 1.442695
          %v4860 = vpow.pop %v4859
          %v4861 = vmul.f32 %v4846, 1.442695
          %v4862 = vpow.pop %v4861
          %v4863 = vadd.f32 %v4848, 1.0
          %v4864 = vadd.f32 %v4850, 1.0
          %v4865 = vadd.f32 %v4852, 1.0
          %v4866 = vadd.f32 %v4854, 1.0
          %v4867 = vadd.f32 %v4856, 1.0
          %v4868 = vadd.f32 %v4858, 1.0
          %v4869 = vadd.f32 %v4860, 1.0
          %v4870 = vadd.f32 %v4862, 1.0
          %v4871 = vrcp.pop %v4863
          %v4872 = vmul.f32 %v4863, %v4871
          %v4873 = vsub.f32 1.0, %v4872
          %v4874 = vmul.f32 %v4871, %v4873
          %v4875 = vadd.f32 %v4871, %v4874
          %vm4876 = vweird.f32 %v4863
          %vm4877 = vweird.f32 %v4871
          %vm4878 = vmor %vm4876, %vm4877
          %v4879 = vsel %vm4878, %v4871, %v4875
          %v4880 = vand.u32 2147483647, %v4863
          %vm4881 = vcmp.eq.f32.partialorder %v4880, 8.507059e+37
          %v4882 = vand.u32 %v4863, 2147483648
          %v4883 = vor.u32 1.1754944e-38, %v4882
          %v4884 = vsel %vm4881, %v4883, %v4879
          %v4885 = vmul.f32 1.0, %v4884
          %v4886 = vrcp.pop %v4864
          %v4887 = vmul.f32 %v4864, %v4886
          %v4888 = vsub.f32 1.0, %v4887
          %v4889 = vmul.f32 %v4886, %v4888
          %v4890 = vadd.f32 %v4886, %v4889
          %vm4891 = vweird.f32 %v4864
          %vm4892 = vweird.f32 %v4886
          %vm4893 = vmor %vm4891, %vm4892
          %v4894 = vsel %vm4893, %v4886, %v4890
          %v4895 = vand.u32 2147483647, %v4864
          %vm4896 = vcmp.eq.f32.partialorder %v4895, 8.507059e+37
          %v4897 = vand.u32 %v4864, 2147483648
          %v4898 = vor.u32 1.1754944e-38, %v4897
          %v4899 = vsel %vm4896, %v4898, %v4894
          %v4900 = vmul.f32 1.0, %v4899
          %v4901 = vrcp.pop %v4865
          %v4902 = vmul.f32 %v4865, %v4901
          %v4903 = vsub.f32 1.0, %v4902
          %v4904 = vmul.f32 %v4901, %v4903
          %v4905 = vadd.f32 %v4901, %v4904
          %vm4906 = vweird.f32 %v4865
          %vm4907 = vweird.f32 %v4901
          %vm4908 = vmor %vm4906, %vm4907
          %v4909 = vsel %vm4908, %v4901, %v4905
          %v4910 = vand.u32 2147483647, %v4865
          %vm4911 = vcmp.eq.f32.partialorder %v4910, 8.507059e+37
          %v4912 = vand.u32 %v4865, 2147483648
          %v4913 = vor.u32 1.1754944e-38, %v4912
          %v4914 = vsel %vm4911, %v4913, %v4909
          %v4915 = vmul.f32 1.0, %v4914
          %v4916 = vrcp.pop %v4866
          %v4917 = vmul.f32 %v4866, %v4916
          %v4918 = vsub.f32 1.0, %v4917
          %v4919 = vmul.f32 %v4916, %v4918
          %v4920 = vadd.f32 %v4916, %v4919
          %vm4921 = vweird.f32 %v4866
          %vm4922 = vweird.f32 %v4916
          %vm4923 = vmor %vm4921, %vm4922
          %v4924 = vsel %vm4923, %v4916, %v4920
          %v4925 = vand.u32 2147483647, %v4866
          %vm4926 = vcmp.eq.f32.partialorder %v4925, 8.507059e+37
          %v4927 = vand.u32 %v4866, 2147483648
          %v4928 = vor.u32 1.1754944e-38, %v4927
          %v4929 = vsel %vm4926, %v4928, %v4924
          %v4930 = vmul.f32 1.0, %v4929
          %v4931 = vrcp.pop %v4867
          %v4932 = vmul.f32 %v4867, %v4931
          %v4933 = vsub.f32 1.0, %v4932
          %v4934 = vmul.f32 %v4931, %v4933
          %v4935 = vadd.f32 %v4931, %v4934
          %vm4936 = vweird.f32 %v4867
          %vm4937 = vweird.f32 %v4931
          %vm4938 = vmor %vm4936, %vm4937
          %v4939 = vsel %vm4938, %v4931, %v4935
          %v4940 = vand.u32 2147483647, %v4867
          %vm4941 = vcmp.eq.f32.partialorder %v4940, 8.507059e+37
          %v4942 = vand.u32 %v4867, 2147483648
          %v4943 = vor.u32 1.1754944e-38, %v4942
          %v4944 = vsel %vm4941, %v4943, %v4939
          %v4945 = vmul.f32 1.0, %v4944
          %v4946 = vrcp.pop %v4868
          %v4947 = vmul.f32 %v4868, %v4946
          %v4948 = vsub.f32 1.0, %v4947
          %v4949 = vmul.f32 %v4946, %v4948
          %v4950 = vadd.f32 %v4946, %v4949
          %vm4951 = vweird.f32 %v4868
          %vm4952 = vweird.f32 %v4946
          %vm4953 = vmor %vm4951, %vm4952
          %v4954 = vsel %vm4953, %v4946, %v4950
          %v4955 = vand.u32 2147483647, %v4868
          %vm4956 = vcmp.eq.f32.partialorder %v4955, 8.507059e+37
          %v4957 = vand.u32 %v4868, 2147483648
          %v4958 = vor.u32 1.1754944e-38, %v4957
          %v4959 = vsel %vm4956, %v4958, %v4954
          %v4960 = vmul.f32 1.0, %v4959
          %v4961 = vrcp.pop %v4869
          %v4962 = vmul.f32 %v4869, %v4961
          %v4963 = vsub.f32 1.0, %v4962
          %v4964 = vmul.f32 %v4961, %v4963
          %v4965 = vadd.f32 %v4961, %v4964
          %vm4966 = vweird.f32 %v4869
          %vm4967 = vweird.f32 %v4961
          %vm4968 = vmor %vm4966, %vm4967
          %v4969 = vsel %vm4968, %v4961, %v4965
          %v4970 = vand.u32 2147483647, %v4869
          %vm4971 = vcmp.eq.f32.partialorder %v4970, 8.507059e+37
          %v4972 = vand.u32 %v4869, 2147483648
          %v4973 = vor.u32 1.1754944e-38, %v4972
          %v4974 = vsel %vm4971, %v4973, %v4969
          %v4975 = vmul.f32 1.0, %v4974
          %v4976 = vrcp.pop %v4870
          %v4977 = vmul.f32 %v4870, %v4976
          %v4978 = vsub.f32 1.0, %v4977
          %v4979 = vmul.f32 %v4976, %v4978
          %v4980 = vadd.f32 %v4976, %v4979
          %vm4981 = vweird.f32 %v4870
          %vm4982 = vweird.f32 %v4976
          %vm4983 = vmor %vm4981, %vm4982
          %v4984 = vsel %vm4983, %v4976, %v4980
          %v4985 = vand.u32 2147483647, %v4870
          %vm4986 = vcmp.eq.f32.partialorder %v4985, 8.507059e+37
          %v4987 = vand.u32 %v4870, 2147483648
          %v4988 = vor.u32 1.1754944e-38, %v4987
          %v4989 = vsel %vm4986, %v4988, %v4984
          %v4990 = vmul.f32 1.0, %v4989
          %v4991 = vmul.f32 %v4831, %v4885
          %v4992 = vmul.f32 %v4832, %v4900
          %v4993 = vmul.f32 %v4833, %v4915
          %v4994 = vmul.f32 %v4834, %v4930
          %v4995 = vmul.f32 %v4835, %v4945
          %v4996 = vmul.f32 %v4836, %v4960
          %v4997 = vmul.f32 %v4837, %v4975
          %v4998 = vmul.f32 %v4838, %v4990
          %v4999 = vpack.c.bf16 %v4993, %v4991
          %v5000 = vpack.c.bf16 %v4994, %v4992
          %v5001 = vpack.c.bf16 %v4997, %v4995
          %v5002 = vpack.c.bf16 %v4998, %v4996
          %5004 = vset.pattern.permute.xlu0 0
          %5005 = vperm.xlu0 %5004, %v4680
          %v5006 = vpop.permute.xlu0 %5005
          %5009 = vset.pattern.permute.xlu0 0
          %5010 = vperm.xlu0 %5009, %v4681
          %v5011 = vpop.permute.xlu0 %5010
          %v5015 = vunpack.c.l.b16 %v4676
          %v5016 = vunpack.c.l.b16 %v4677
          %v5017 = vpack.c.b16 %v5016, %v5015
          %v5019 = vsel %vm569, %v5017, 0
          %5021 = vmatpush.bf16.msra.mxu0 0
          %5022 = vmatpush.bf16.msra.mxu0 0
          %5023 = vmatpush.bf16.msra.mxu0 0
          %5024 = vmatpush.bf16.msra.mxu0 0
          %5025 = vmatpush.bf16.msra.mxu0 0
          %5026 = vmatpush.bf16.msra.mxu0 0
          %5027 = vmatpush.bf16.msra.mxu0 %v5001
          %5028 = vmatpush.bf16.msra.mxu0 %v4999
          %5029 = vmatmul.bf16.gmra.mxu0 %v5019
          %v5030 = vpop.f32.mrf.mxu0
          %v5031 = vadd.f32 %v5006, %v5030
          %v5032 = vpop.f32.mrf.mxu0
          %v5033 = vadd.f32 %v5011, %v5032
          %5034 = vdwg.mxu0
          %5035 = vmatpush.bf16.msra.mxu0 0
          %5036 = vmatpush.bf16.msra.mxu0 0
          %5037 = vmatpush.bf16.msra.mxu0 0
          %5038 = vmatpush.bf16.msra.mxu0 0
          %5039 = vmatpush.bf16.msra.mxu0 0
          %5040 = vmatpush.bf16.msra.mxu0 0
          %5041 = vmatpush.bf16.msra.mxu0 %v5002
          %5042 = vmatpush.bf16.msra.mxu0 %v5000
          %5043 = vmatmul.bf16.gmra.mxu0 %v5019
          %v5044 = vpop.f32.mrf.mxu0
          %v5045 = vadd.f32 %v5006, %v5044
          %v5046 = vpop.f32.mrf.mxu0
          %v5047 = vadd.f32 %v5011, %v5046
          %5048 = vdwg.mxu0
          %v5049 = vmax.f32 %v5031, 0.0
          %v5050 = vmax.f32 %v5045, 0.0
          %v5051 = vmax.f32 %v5033, 0.0
          %v5052 = vmax.f32 %v5047, 0.0
          %v5053 = vld [vmem:[#allocation3] sm:$0xff]
          %v5054 = vld [vmem:[#allocation3 + $0x8] sm:$0xff]
          %v5055 = vld [vmem:[#allocation3 + $0x10] sm:$0xff]
          %v5056 = vld [vmem:[#allocation3 + $0x18] sm:$0xff]
          %v5057 = vadd.f32 %v5053, %v5049
          %v5058 = vadd.f32 %v5054, %v5050
          %v5059 = vadd.f32 %v5055, %v5051
          %v5060 = vadd.f32 %v5056, %v5052
          %5061 = vst [vmem:[#allocation3] sm:$0xff] %v5057
          %5062 = vst [vmem:[#allocation3 + $0x8] sm:$0xff] %v5058
          %5063 = vst [vmem:[#allocation3 + $0x10] sm:$0xff] %v5059
          %5064 = vst [vmem:[#allocation3 + $0x18] sm:$0xff] %v5060
          %v5065 = vld [vmem:[%s471 + $0x20] sm:$0xff]
          %v5066 = vld [vmem:[%s471 + $0x28] sm:$0xff]
          %v5067 = vld [vmem:[%s471 + $0x70] sm:$0xff]
          %v5068 = vld [vmem:[%s471 + $0x78] sm:$0xff]
          %v5069 = vadd.f32 %v5065, %v5049
          %v5070 = vadd.f32 %v5066, %v5050
          %v5071 = vadd.f32 %v5067, %v5051
          %v5072 = vadd.f32 %v5068, %v5052
          %v5073 = vpack.c.bf16 %v5071, %v5069
          %v5074 = vpack.c.bf16 %v5072, %v5070
          %5076 = vset.pattern.permute.xlu0 0
          %5077 = vperm.xlu0 %5076, %v4687
          %v5078 = vpop.permute.xlu0 %5077
          %5081 = vset.pattern.permute.xlu0 0
          %5082 = vperm.xlu0 %5081, %v4688
          %v5083 = vpop.permute.xlu0 %5082
          %v5087 = vunpack.c.l.b16 %v4684
          %v5088 = vunpack.c.l.b16 %v4685
          %v5089 = vpack.c.b16 %v5088, %v5087
          %v5091 = vsel %vm895, %v5089, 0
          %5093 = vmatpush.bf16.msra.mxu0 0
          %5094 = vmatpush.bf16.msra.mxu0 0
          %5095 = vmatpush.bf16.msra.mxu0 0
          %5096 = vmatpush.bf16.msra.mxu0 0
          %5097 = vmatpush.bf16.msra.mxu0 0
          %5098 = vmatpush.bf16.msra.mxu0 0
          %5099 = vmatpush.bf16.msra.mxu0 0
          %5100 = vmatpush.bf16.msra.mxu0 %v5073
          %5101 = vmatmul.bf16.gmra.mxu0 %v5091
          %v5102 = vpop.f32.mrf.mxu0
          %v5103 = vadd.f32 %v5078, %v5102
          %v5104 = vpop.f32.mrf.mxu0
          %v5105 = vadd.f32 %v5083, %v5104
          %5106 = vdwg.mxu0
          %5107 = vmatpush.bf16.msra.mxu0 0
          %5108 = vmatpush.bf16.msra.mxu0 0
          %5109 = vmatpush.bf16.msra.mxu0 0
          %5110 = vmatpush.bf16.msra.mxu0 0
          %5111 = vmatpush.bf16.msra.mxu0 0
          %5112 = vmatpush.bf16.msra.mxu0 0
          %5113 = vmatpush.bf16.msra.mxu0 0
          %5114 = vmatpush.bf16.msra.mxu0 %v5074
          %5115 = vmatmul.bf16.gmra.mxu0 %v5091
          %v5116 = vpop.f32.mrf.mxu0
          %v5117 = vadd.f32 %v5078, %v5116
          %v5118 = vpop.f32.mrf.mxu0
          %v5119 = vadd.f32 %v5083, %v5118
          %5120 = vdwg.mxu0
          %v5121 = vmax.f32 %v5103, 0.0
          %v5122 = vmax.f32 %v5117, 0.0
          %v5123 = vmax.f32 %v5105, 0.0
          %v5124 = vmax.f32 %v5119, 0.0
          %5125 = vst [vmem:[%s933 + $0x20] sm:$0xff] %v5121
          %5126 = vst [vmem:[%s933 + $0x28] sm:$0xff] %v5122
          %5127 = vst [vmem:[%s933 + $0x70] sm:$0xff] %v5123
          %5128 = vst [vmem:[%s933 + $0x78] sm:$0xff] %v5124
          %s5129 = sadd.s32 %s430, 9
          %s5130 = smul.u32 %s5129, 8
          %s5131 = smul.addr %s5130, 4
          %s5132 = scalar_lea.vmem %s5, %s5131
          %v5133 = vld [vmem:[%s5132] sm:$0xf]
          %v5134 = vld [vmem:[%s5132 + $0x4] sm:$0xf]
          %v5135 = vld [vmem:[%s5132 + $0x8] sm:$0xf]
          %v5136 = vld [vmem:[%s5132 + $0xc] sm:$0xf]
          %v5137 = vld [vmem:[%s5132 + $0x10] sm:$0xf]
          %v5138 = vld [vmem:[%s5132 + $0x14] sm:$0xf]
          %v5139 = vld [vmem:[%s5132 + $0x18] sm:$0xf]
          %v5140 = vld [vmem:[%s5132 + $0x1c] sm:$0xf]
          %s5141 = smul.u32 %s5129, 64
          %s5142 = scalar_lea.vmem %s6, %s5141
          %v5143 = vld [vmem:[%s5142] sm:$0xff]
          %v5144 = vld [vmem:[%s5142 + $0x8] sm:$0xff]
          %v5145 = vld [vmem:[%s5142 + $0x10] sm:$0xff]
          %v5146 = vld [vmem:[%s5142 + $0x18] sm:$0xff]
          %v5147 = vld [vmem:[%s5142 + $0x20] sm:$0xff]
          %v5148 = vld [vmem:[%s5142 + $0x28] sm:$0xff]
          %v5149 = vld [vmem:[%s5142 + $0x30] sm:$0xff]
          %v5150 = vld [vmem:[%s5142 + $0x38] sm:$0xff]
          %s5151 = smul.u32 %s5129, 2
          %s5152 = smul.addr %s5151, 4
          %s5153 = scalar_lea.vmem %s7, %s5152
          %v5154 = vld [vmem:[%s5153] sm:$0xf]
          %v5155 = vld [vmem:[%s5153 + $0x4] sm:$0xf]
          %s5156 = smul.u32 %s5129, 16
          %s5157 = scalar_lea.vmem %s8, %s5156
          %v5158 = vld [vmem:[%s5157] sm:$0xff]
          %v5159 = vld [vmem:[%s5157 + $0x8] sm:$0xff]
          %s5160 = smul.addr %s5151, 4
          %s5161 = scalar_lea.vmem %s3, %s5160
          %v5162 = vld [vmem:[%s5161] sm:$0xf]
          %v5163 = vld [vmem:[%s5161 + $0x4] sm:$0xf]
          %s5164 = scalar_lea.vmem %s4, %s5156
          %v5165 = vld [vmem:[%s5164] sm:$0xff]
          %v5166 = vld [vmem:[%s5164 + $0x8] sm:$0xff]
          %v5167 = vld [vmem:[%s933 + $0x10] sm:$0xff]
          %v5168 = vld [vmem:[%s933 + $0x18] sm:$0xff]
          %v5169 = vld [vmem:[%s933 + $0x60] sm:$0xff]
          %v5170 = vld [vmem:[%s933 + $0x68] sm:$0xff]
          %v5171 = vld [vmem:[%s933 + $0x30] sm:$0xff]
          %v5172 = vld [vmem:[%s933 + $0x38] sm:$0xff]
          %v5173 = vld [vmem:[%s933 + $0x80] sm:$0xff]
          %v5174 = vld [vmem:[%s933 + $0x88] sm:$0xff]
          %v5175 = vpack.c.bf16 %v5169, %v5167
          %v5176 = vpack.c.bf16 %v5170, %v5168
          %v5177 = vpack.c.bf16 %v5173, %v5171
          %v5178 = vpack.c.bf16 %v5174, %v5172
          %5180 = vset.pattern.permute.xlu0 0
          %5181 = vperm.xlu0 %5180, %v5143
          %v5182 = vpop.permute.xlu0 %5181
          %5185 = vset.pattern.permute.xlu0 0
          %5186 = vperm.xlu0 %5185, %v5144
          %v5187 = vpop.permute.xlu0 %5186
          %5190 = vset.pattern.permute.xlu0 0
          %5191 = vperm.xlu0 %5190, %v5145
          %v5192 = vpop.permute.xlu0 %5191
          %5195 = vset.pattern.permute.xlu0 0
          %5196 = vperm.xlu0 %5195, %v5146
          %v5197 = vpop.permute.xlu0 %5196
          %5200 = vset.pattern.permute.xlu0 0
          %5201 = vperm.xlu0 %5200, %v5147
          %v5202 = vpop.permute.xlu0 %5201
          %5205 = vset.pattern.permute.xlu0 0
          %5206 = vperm.xlu0 %5205, %v5148
          %v5207 = vpop.permute.xlu0 %5206
          %5210 = vset.pattern.permute.xlu0 0
          %5211 = vperm.xlu0 %5210, %v5149
          %v5212 = vpop.permute.xlu0 %5211
          %5215 = vset.pattern.permute.xlu0 0
          %5216 = vperm.xlu0 %5215, %v5150
          %v5217 = vpop.permute.xlu0 %5216
          %v5227 = vunpack.c.l.b16 %v5133
          %v5228 = vunpack.c.l.b16 %v5134
          %v5229 = vunpack.c.l.b16 %v5135
          %v5230 = vunpack.c.l.b16 %v5136
          %v5231 = vunpack.c.l.b16 %v5137
          %v5232 = vunpack.c.l.b16 %v5138
          %v5233 = vunpack.c.l.b16 %v5139
          %v5234 = vunpack.c.l.b16 %v5140
          %v5235 = vpack.c.b16 %v5228, %v5227
          %v5236 = vpack.c.b16 %v5230, %v5229
          %v5237 = vpack.c.b16 %v5232, %v5231
          %v5238 = vpack.c.b16 %v5234, %v5233
          %v5240 = vsel %vm569, %v5235, 0
          %v5243 = vsel %vm569, %v5236, 0
          %v5246 = vsel %vm569, %v5237, 0
          %v5249 = vsel %vm569, %v5238, 0
          %5251 = vmatpush.bf16.msra.mxu0 0
          %5252 = vmatpush.bf16.msra.mxu0 0
          %5253 = vmatpush.bf16.msra.mxu0 0
          %5254 = vmatpush.bf16.msra.mxu0 0
          %5255 = vmatpush.bf16.msra.mxu0 0
          %5256 = vmatpush.bf16.msra.mxu0 0
          %5257 = vmatpush.bf16.msra.mxu0 %v5177
          %5258 = vmatpush.bf16.msra.mxu0 %v5175
          %5259 = vmatmul.bf16.gmra.mxu0 %v5240
          %v5260 = vpop.f32.mrf.mxu0
          %v5261 = vadd.f32 %v5182, %v5260
          %v5262 = vpop.f32.mrf.mxu0
          %v5263 = vadd.f32 %v5187, %v5262
          %5264 = vmatmul.bf16.gmra.mxu0 %v5243
          %v5265 = vpop.f32.mrf.mxu0
          %v5266 = vadd.f32 %v5192, %v5265
          %v5267 = vpop.f32.mrf.mxu0
          %v5268 = vadd.f32 %v5197, %v5267
          %5269 = vmatmul.bf16.gmra.mxu0 %v5246
          %v5270 = vpop.f32.mrf.mxu0
          %v5271 = vadd.f32 %v5202, %v5270
          %v5272 = vpop.f32.mrf.mxu0
          %v5273 = vadd.f32 %v5207, %v5272
          %5274 = vmatmul.bf16.gmra.mxu0 %v5249
          %v5275 = vpop.f32.mrf.mxu0
          %v5276 = vadd.f32 %v5212, %v5275
          %v5277 = vpop.f32.mrf.mxu0
          %v5278 = vadd.f32 %v5217, %v5277
          %5279 = vdwg.mxu0
          %5280 = vmatpush.bf16.msra.mxu0 0
          %5281 = vmatpush.bf16.msra.mxu0 0
          %5282 = vmatpush.bf16.msra.mxu0 0
          %5283 = vmatpush.bf16.msra.mxu0 0
          %5284 = vmatpush.bf16.msra.mxu0 0
          %5285 = vmatpush.bf16.msra.mxu0 0
          %5286 = vmatpush.bf16.msra.mxu0 %v5178
          %5287 = vmatpush.bf16.msra.mxu0 %v5176
          %5288 = vmatmul.bf16.gmra.mxu0 %v5240
          %v5289 = vpop.f32.mrf.mxu0
          %v5290 = vadd.f32 %v5182, %v5289
          %v5291 = vpop.f32.mrf.mxu0
          %v5292 = vadd.f32 %v5187, %v5291
          %5293 = vmatmul.bf16.gmra.mxu0 %v5243
          %v5294 = vpop.f32.mrf.mxu0
          %v5295 = vadd.f32 %v5192, %v5294
          %v5296 = vpop.f32.mrf.mxu0
          %v5297 = vadd.f32 %v5197, %v5296
          %5298 = vmatmul.bf16.gmra.mxu0 %v5246
          %v5299 = vpop.f32.mrf.mxu0
          %v5300 = vadd.f32 %v5202, %v5299
          %v5301 = vpop.f32.mrf.mxu0
          %v5302 = vadd.f32 %v5207, %v5301
          %5303 = vmatmul.bf16.gmra.mxu0 %v5249
          %v5304 = vpop.f32.mrf.mxu0
          %v5305 = vadd.f32 %v5212, %v5304
          %v5306 = vpop.f32.mrf.mxu0
          %v5307 = vadd.f32 %v5217, %v5306
          %5308 = vdwg.mxu0
          %v5309 = vtanh.pop %v5261
          %v5310 = vtanh.pop %v5290
          %v5311 = vtanh.pop %v5263
          %v5312 = vtanh.pop %v5292
          %v5313 = vtanh.pop %v5266
          %v5314 = vtanh.pop %v5295
          %v5315 = vtanh.pop %v5268
          %v5316 = vtanh.pop %v5297
          %v5317 = vxor.u32 %v5271, 2147483648
          %v5318 = vxor.u32 %v5300, 2147483648
          %v5319 = vxor.u32 %v5273, 2147483648
          %v5320 = vxor.u32 %v5302, 2147483648
          %v5321 = vxor.u32 %v5276, 2147483648
          %v5322 = vxor.u32 %v5305, 2147483648
          %v5323 = vxor.u32 %v5278, 2147483648
          %v5324 = vxor.u32 %v5307, 2147483648
          %v5325 = vmul.f32 %v5317, 1.442695
          %v5326 = vpow.pop %v5325
          %v5327 = vmul.f32 %v5318, 1.442695
          %v5328 = vpow.pop %v5327
          %v5329 = vmul.f32 %v5319, 1.442695
          %v5330 = vpow.pop %v5329
          %v5331 = vmul.f32 %v5320, 1.442695
          %v5332 = vpow.pop %v5331
          %v5333 = vmul.f32 %v5321, 1.442695
          %v5334 = vpow.pop %v5333
          %v5335 = vmul.f32 %v5322, 1.442695
          %v5336 = vpow.pop %v5335
          %v5337 = vmul.f32 %v5323, 1.442695
          %v5338 = vpow.pop %v5337
          %v5339 = vmul.f32 %v5324, 1.442695
          %v5340 = vpow.pop %v5339
          %v5341 = vadd.f32 %v5326, 1.0
          %v5342 = vadd.f32 %v5328, 1.0
          %v5343 = vadd.f32 %v5330, 1.0
          %v5344 = vadd.f32 %v5332, 1.0
          %v5345 = vadd.f32 %v5334, 1.0
          %v5346 = vadd.f32 %v5336, 1.0
          %v5347 = vadd.f32 %v5338, 1.0
          %v5348 = vadd.f32 %v5340, 1.0
          %v5349 = vrcp.pop %v5341
          %v5350 = vmul.f32 %v5341, %v5349
          %v5351 = vsub.f32 1.0, %v5350
          %v5352 = vmul.f32 %v5349, %v5351
          %v5353 = vadd.f32 %v5349, %v5352
          %vm5354 = vweird.f32 %v5341
          %vm5355 = vweird.f32 %v5349
          %vm5356 = vmor %vm5354, %vm5355
          %v5357 = vsel %vm5356, %v5349, %v5353
          %v5358 = vand.u32 2147483647, %v5341
          %vm5359 = vcmp.eq.f32.partialorder %v5358, 8.507059e+37
          %v5360 = vand.u32 %v5341, 2147483648
          %v5361 = vor.u32 1.1754944e-38, %v5360
          %v5362 = vsel %vm5359, %v5361, %v5357
          %v5363 = vmul.f32 1.0, %v5362
          %v5364 = vrcp.pop %v5342
          %v5365 = vmul.f32 %v5342, %v5364
          %v5366 = vsub.f32 1.0, %v5365
          %v5367 = vmul.f32 %v5364, %v5366
          %v5368 = vadd.f32 %v5364, %v5367
          %vm5369 = vweird.f32 %v5342
          %vm5370 = vweird.f32 %v5364
          %vm5371 = vmor %vm5369, %vm5370
          %v5372 = vsel %vm5371, %v5364, %v5368
          %v5373 = vand.u32 2147483647, %v5342
          %vm5374 = vcmp.eq.f32.partialorder %v5373, 8.507059e+37
          %v5375 = vand.u32 %v5342, 2147483648
          %v5376 = vor.u32 1.1754944e-38, %v5375
          %v5377 = vsel %vm5374, %v5376, %v5372
          %v5378 = vmul.f32 1.0, %v5377
          %v5379 = vrcp.pop %v5343
          %v5380 = vmul.f32 %v5343, %v5379
          %v5381 = vsub.f32 1.0, %v5380
          %v5382 = vmul.f32 %v5379, %v5381
          %v5383 = vadd.f32 %v5379, %v5382
          %vm5384 = vweird.f32 %v5343
          %vm5385 = vweird.f32 %v5379
          %vm5386 = vmor %vm5384, %vm5385
          %v5387 = vsel %vm5386, %v5379, %v5383
          %v5388 = vand.u32 2147483647, %v5343
          %vm5389 = vcmp.eq.f32.partialorder %v5388, 8.507059e+37
          %v5390 = vand.u32 %v5343, 2147483648
          %v5391 = vor.u32 1.1754944e-38, %v5390
          %v5392 = vsel %vm5389, %v5391, %v5387
          %v5393 = vmul.f32 1.0, %v5392
          %v5394 = vrcp.pop %v5344
          %v5395 = vmul.f32 %v5344, %v5394
          %v5396 = vsub.f32 1.0, %v5395
          %v5397 = vmul.f32 %v5394, %v5396
          %v5398 = vadd.f32 %v5394, %v5397
          %vm5399 = vweird.f32 %v5344
          %vm5400 = vweird.f32 %v5394
          %vm5401 = vmor %vm5399, %vm5400
          %v5402 = vsel %vm5401, %v5394, %v5398
          %v5403 = vand.u32 2147483647, %v5344
          %vm5404 = vcmp.eq.f32.partialorder %v5403, 8.507059e+37
          %v5405 = vand.u32 %v5344, 2147483648
          %v5406 = vor.u32 1.1754944e-38, %v5405
          %v5407 = vsel %vm5404, %v5406, %v5402
          %v5408 = vmul.f32 1.0, %v5407
          %v5409 = vrcp.pop %v5345
          %v5410 = vmul.f32 %v5345, %v5409
          %v5411 = vsub.f32 1.0, %v5410
          %v5412 = vmul.f32 %v5409, %v5411
          %v5413 = vadd.f32 %v5409, %v5412
          %vm5414 = vweird.f32 %v5345
          %vm5415 = vweird.f32 %v5409
          %vm5416 = vmor %vm5414, %vm5415
          %v5417 = vsel %vm5416, %v5409, %v5413
          %v5418 = vand.u32 2147483647, %v5345
          %vm5419 = vcmp.eq.f32.partialorder %v5418, 8.507059e+37
          %v5420 = vand.u32 %v5345, 2147483648
          %v5421 = vor.u32 1.1754944e-38, %v5420
          %v5422 = vsel %vm5419, %v5421, %v5417
          %v5423 = vmul.f32 1.0, %v5422
          %v5424 = vrcp.pop %v5346
          %v5425 = vmul.f32 %v5346, %v5424
          %v5426 = vsub.f32 1.0, %v5425
          %v5427 = vmul.f32 %v5424, %v5426
          %v5428 = vadd.f32 %v5424, %v5427
          %vm5429 = vweird.f32 %v5346
          %vm5430 = vweird.f32 %v5424
          %vm5431 = vmor %vm5429, %vm5430
          %v5432 = vsel %vm5431, %v5424, %v5428
          %v5433 = vand.u32 2147483647, %v5346
          %vm5434 = vcmp.eq.f32.partialorder %v5433, 8.507059e+37
          %v5435 = vand.u32 %v5346, 2147483648
          %v5436 = vor.u32 1.1754944e-38, %v5435
          %v5437 = vsel %vm5434, %v5436, %v5432
          %v5438 = vmul.f32 1.0, %v5437
          %v5439 = vrcp.pop %v5347
          %v5440 = vmul.f32 %v5347, %v5439
          %v5441 = vsub.f32 1.0, %v5440
          %v5442 = vmul.f32 %v5439, %v5441
          %v5443 = vadd.f32 %v5439, %v5442
          %vm5444 = vweird.f32 %v5347
          %vm5445 = vweird.f32 %v5439
          %vm5446 = vmor %vm5444, %vm5445
          %v5447 = vsel %vm5446, %v5439, %v5443
          %v5448 = vand.u32 2147483647, %v5347
          %vm5449 = vcmp.eq.f32.partialorder %v5448, 8.507059e+37
          %v5450 = vand.u32 %v5347, 2147483648
          %v5451 = vor.u32 1.1754944e-38, %v5450
          %v5452 = vsel %vm5449, %v5451, %v5447
          %v5453 = vmul.f32 1.0, %v5452
          %v5454 = vrcp.pop %v5348
          %v5455 = vmul.f32 %v5348, %v5454
          %v5456 = vsub.f32 1.0, %v5455
          %v5457 = vmul.f32 %v5454, %v5456
          %v5458 = vadd.f32 %v5454, %v5457
          %vm5459 = vweird.f32 %v5348
          %vm5460 = vweird.f32 %v5454
          %vm5461 = vmor %vm5459, %vm5460
          %v5462 = vsel %vm5461, %v5454, %v5458
          %v5463 = vand.u32 2147483647, %v5348
          %vm5464 = vcmp.eq.f32.partialorder %v5463, 8.507059e+37
          %v5465 = vand.u32 %v5348, 2147483648
          %v5466 = vor.u32 1.1754944e-38, %v5465
          %v5467 = vsel %vm5464, %v5466, %v5462
          %v5468 = vmul.f32 1.0, %v5467
          %v5469 = vmul.f32 %v5309, %v5363
          %v5470 = vmul.f32 %v5310, %v5378
          %v5471 = vmul.f32 %v5311, %v5393
          %v5472 = vmul.f32 %v5312, %v5408
          %v5473 = vmul.f32 %v5313, %v5423
          %v5474 = vmul.f32 %v5314, %v5438
          %v5475 = vmul.f32 %v5315, %v5453
          %v5476 = vmul.f32 %v5316, %v5468
          %v5477 = vpack.c.bf16 %v5471, %v5469
          %v5478 = vpack.c.bf16 %v5472, %v5470
          %v5479 = vpack.c.bf16 %v5475, %v5473
          %v5480 = vpack.c.bf16 %v5476, %v5474
          %5482 = vset.pattern.permute.xlu0 0
          %5483 = vperm.xlu0 %5482, %v5158
          %v5484 = vpop.permute.xlu0 %5483
          %5487 = vset.pattern.permute.xlu0 0
          %5488 = vperm.xlu0 %5487, %v5159
          %v5489 = vpop.permute.xlu0 %5488
          %v5493 = vunpack.c.l.b16 %v5154
          %v5494 = vunpack.c.l.b16 %v5155
          %v5495 = vpack.c.b16 %v5494, %v5493
          %v5497 = vsel %vm569, %v5495, 0
          %5499 = vmatpush.bf16.msra.mxu0 0
          %5500 = vmatpush.bf16.msra.mxu0 0
          %5501 = vmatpush.bf16.msra.mxu0 0
          %5502 = vmatpush.bf16.msra.mxu0 0
          %5503 = vmatpush.bf16.msra.mxu0 0
          %5504 = vmatpush.bf16.msra.mxu0 0
          %5505 = vmatpush.bf16.msra.mxu0 %v5479
          %5506 = vmatpush.bf16.msra.mxu0 %v5477
          %5507 = vmatmul.bf16.gmra.mxu0 %v5497
          %v5508 = vpop.f32.mrf.mxu0
          %v5509 = vadd.f32 %v5484, %v5508
          %v5510 = vpop.f32.mrf.mxu0
          %v5511 = vadd.f32 %v5489, %v5510
          %5512 = vdwg.mxu0
          %5513 = vmatpush.bf16.msra.mxu0 0
          %5514 = vmatpush.bf16.msra.mxu0 0
          %5515 = vmatpush.bf16.msra.mxu0 0
          %5516 = vmatpush.bf16.msra.mxu0 0
          %5517 = vmatpush.bf16.msra.mxu0 0
          %5518 = vmatpush.bf16.msra.mxu0 0
          %5519 = vmatpush.bf16.msra.mxu0 %v5480
          %5520 = vmatpush.bf16.msra.mxu0 %v5478
          %5521 = vmatmul.bf16.gmra.mxu0 %v5497
          %v5522 = vpop.f32.mrf.mxu0
          %v5523 = vadd.f32 %v5484, %v5522
          %v5524 = vpop.f32.mrf.mxu0
          %v5525 = vadd.f32 %v5489, %v5524
          %5526 = vdwg.mxu0
          %v5527 = vmax.f32 %v5509, 0.0
          %v5528 = vmax.f32 %v5523, 0.0
          %v5529 = vmax.f32 %v5511, 0.0
          %v5530 = vmax.f32 %v5525, 0.0
          %v5531 = vld [vmem:[#allocation3] sm:$0xff]
          %v5532 = vld [vmem:[#allocation3 + $0x8] sm:$0xff]
          %v5533 = vld [vmem:[#allocation3 + $0x10] sm:$0xff]
          %v5534 = vld [vmem:[#allocation3 + $0x18] sm:$0xff]
          %v5535 = vadd.f32 %v5531, %v5527
          %v5536 = vadd.f32 %v5532, %v5528
          %v5537 = vadd.f32 %v5533, %v5529
          %v5538 = vadd.f32 %v5534, %v5530
          %5539 = vst [vmem:[#allocation3] sm:$0xff] %v5535
          %5540 = vst [vmem:[#allocation3 + $0x8] sm:$0xff] %v5536
          %5541 = vst [vmem:[#allocation3 + $0x10] sm:$0xff] %v5537
          %5542 = vst [vmem:[#allocation3 + $0x18] sm:$0xff] %v5538
          %v5543 = vld [vmem:[%s933 + $0x20] sm:$0xff]
          %v5544 = vld [vmem:[%s933 + $0x28] sm:$0xff]
          %v5545 = vld [vmem:[%s933 + $0x70] sm:$0xff]
          %v5546 = vld [vmem:[%s933 + $0x78] sm:$0xff]
          %v5547 = vadd.f32 %v5543, %v5527
          %v5548 = vadd.f32 %v5544, %v5528
          %v5549 = vadd.f32 %v5545, %v5529
          %v5550 = vadd.f32 %v5546, %v5530
          %v5551 = vpack.c.bf16 %v5549, %v5547
          %v5552 = vpack.c.bf16 %v5550, %v5548
          %5554 = vset.pattern.permute.xlu0 0
          %5555 = vperm.xlu0 %5554, %v5165
          %v5556 = vpop.permute.xlu0 %5555
          %5559 = vset.pattern.permute.xlu0 0
          %5560 = vperm.xlu0 %5559, %v5166
          %v5561 = vpop.permute.xlu0 %5560
          %v5565 = vunpack.c.l.b16 %v5162
          %v5566 = vunpack.c.l.b16 %v5163
          %v5567 = vpack.c.b16 %v5566, %v5565
          %v5569 = vsel %vm895, %v5567, 0
          %5571 = vmatpush.bf16.msra.mxu0 0
          %5572 = vmatpush.bf16.msra.mxu0 0
          %5573 = vmatpush.bf16.msra.mxu0 0
          %5574 = vmatpush.bf16.msra.mxu0 0
          %5575 = vmatpush.bf16.msra.mxu0 0
          %5576 = vmatpush.bf16.msra.mxu0 0
          %5577 = vmatpush.bf16.msra.mxu0 0
          %5578 = vmatpush.bf16.msra.mxu0 %v5551
          %5579 = vmatmul.bf16.gmra.mxu0 %v5569
          %v5580 = vpop.f32.mrf.mxu0
          %v5581 = vadd.f32 %v5556, %v5580
          %v5582 = vpop.f32.mrf.mxu0
          %v5583 = vadd.f32 %v5561, %v5582
          %5584 = vdwg.mxu0
          %5585 = vmatpush.bf16.msra.mxu0 0
          %5586 = vmatpush.bf16.msra.mxu0 0
          %5587 = vmatpush.bf16.msra.mxu0 0
          %5588 = vmatpush.bf16.msra.mxu0 0
          %5589 = vmatpush.bf16.msra.mxu0 0
          %5590 = vmatpush.bf16.msra.mxu0 0
          %5591 = vmatpush.bf16.msra.mxu0 0
          %5592 = vmatpush.bf16.msra.mxu0 %v5552
          %5593 = vmatmul.bf16.gmra.mxu0 %v5569
          %v5594 = vpop.f32.mrf.mxu0
          %v5595 = vadd.f32 %v5556, %v5594
          %v5596 = vpop.f32.mrf.mxu0
          %v5597 = vadd.f32 %v5561, %v5596
          %5598 = vdwg.mxu0
          %v5599 = vmax.f32 %v5581, 0.0
          %v5600 = vmax.f32 %v5595, 0.0
          %v5601 = vmax.f32 %v5583, 0.0
          %v5602 = vmax.f32 %v5597, 0.0
          %5603 = vst [vmem:[%s471 + $0x20] sm:$0xff] %v5599
          %5604 = vst [vmem:[%s471 + $0x28] sm:$0xff] %v5600
          %5605 = vst [vmem:[%s471 + $0x70] sm:$0xff] %v5601
          %5606 = vst [vmem:[%s471 + $0x78] sm:$0xff] %v5602
          %s5607 = sadd.s32 %s430, 10
          %s5608 = smul.u32 %s5607, 8
          %s5609 = smul.addr %s5608, 4
          %s5610 = scalar_lea.vmem %s5, %s5609
          %v5611 = vld [vmem:[%s5610] sm:$0xf]
          %v5612 = vld [vmem:[%s5610 + $0x4] sm:$0xf]
          %v5613 = vld [vmem:[%s5610 + $0x8] sm:$0xf]
          %v5614 = vld [vmem:[%s5610 + $0xc] sm:$0xf]
          %v5615 = vld [vmem:[%s5610 + $0x10] sm:$0xf]
          %v5616 = vld [vmem:[%s5610 + $0x14] sm:$0xf]
          %v5617 = vld [vmem:[%s5610 + $0x18] sm:$0xf]
          %v5618 = vld [vmem:[%s5610 + $0x1c] sm:$0xf]
          %s5619 = smul.u32 %s5607, 64
          %s5620 = scalar_lea.vmem %s6, %s5619
          %v5621 = vld [vmem:[%s5620] sm:$0xff]
          %v5622 = vld [vmem:[%s5620 + $0x8] sm:$0xff]
          %v5623 = vld [vmem:[%s5620 + $0x10] sm:$0xff]
          %v5624 = vld [vmem:[%s5620 + $0x18] sm:$0xff]
          %v5625 = vld [vmem:[%s5620 + $0x20] sm:$0xff]
          %v5626 = vld [vmem:[%s5620 + $0x28] sm:$0xff]
          %v5627 = vld [vmem:[%s5620 + $0x30] sm:$0xff]
          %v5628 = vld [vmem:[%s5620 + $0x38] sm:$0xff]
          %s5629 = smul.u32 %s5607, 2
          %s5630 = smul.addr %s5629, 4
          %s5631 = scalar_lea.vmem %s7, %s5630
          %v5632 = vld [vmem:[%s5631] sm:$0xf]
          %v5633 = vld [vmem:[%s5631 + $0x4] sm:$0xf]
          %s5634 = smul.u32 %s5607, 16
          %s5635 = scalar_lea.vmem %s8, %s5634
          %v5636 = vld [vmem:[%s5635] sm:$0xff]
          %v5637 = vld [vmem:[%s5635 + $0x8] sm:$0xff]
          %s5638 = smul.addr %s5629, 4
          %s5639 = scalar_lea.vmem %s3, %s5638
          %v5640 = vld [vmem:[%s5639] sm:$0xf]
          %v5641 = vld [vmem:[%s5639 + $0x4] sm:$0xf]
          %s5642 = scalar_lea.vmem %s4, %s5634
          %v5643 = vld [vmem:[%s5642] sm:$0xff]
          %v5644 = vld [vmem:[%s5642 + $0x8] sm:$0xff]
          %v5645 = vld [vmem:[%s471] sm:$0xff]
          %v5646 = vld [vmem:[%s471 + $0x8] sm:$0xff]
          %v5647 = vld [vmem:[%s471 + $0x50] sm:$0xff]
          %v5648 = vld [vmem:[%s471 + $0x58] sm:$0xff]
          %v5649 = vld [vmem:[%s471 + $0x40] sm:$0xff]
          %v5650 = vld [vmem:[%s471 + $0x48] sm:$0xff]
          %v5651 = vld [vmem:[%s471 + $0x90] sm:$0xff]
          %v5652 = vld [vmem:[%s471 + $0x98] sm:$0xff]
          %v5653 = vpack.c.bf16 %v5647, %v5645
          %v5654 = vpack.c.bf16 %v5648, %v5646
          %v5655 = vpack.c.bf16 %v5651, %v5649
          %v5656 = vpack.c.bf16 %v5652, %v5650
          %5658 = vset.pattern.permute.xlu0 0
          %5659 = vperm.xlu0 %5658, %v5621
          %v5660 = vpop.permute.xlu0 %5659
          %5663 = vset.pattern.permute.xlu0 0
          %5664 = vperm.xlu0 %5663, %v5622
          %v5665 = vpop.permute.xlu0 %5664
          %5668 = vset.pattern.permute.xlu0 0
          %5669 = vperm.xlu0 %5668, %v5623
          %v5670 = vpop.permute.xlu0 %5669
          %5673 = vset.pattern.permute.xlu0 0
          %5674 = vperm.xlu0 %5673, %v5624
          %v5675 = vpop.permute.xlu0 %5674
          %5678 = vset.pattern.permute.xlu0 0
          %5679 = vperm.xlu0 %5678, %v5625
          %v5680 = vpop.permute.xlu0 %5679
          %5683 = vset.pattern.permute.xlu0 0
          %5684 = vperm.xlu0 %5683, %v5626
          %v5685 = vpop.permute.xlu0 %5684
          %5688 = vset.pattern.permute.xlu0 0
          %5689 = vperm.xlu0 %5688, %v5627
          %v5690 = vpop.permute.xlu0 %5689
          %5693 = vset.pattern.permute.xlu0 0
          %5694 = vperm.xlu0 %5693, %v5628
          %v5695 = vpop.permute.xlu0 %5694
          %v5705 = vunpack.c.l.b16 %v5611
          %v5706 = vunpack.c.l.b16 %v5612
          %v5707 = vunpack.c.l.b16 %v5613
          %v5708 = vunpack.c.l.b16 %v5614
          %v5709 = vunpack.c.l.b16 %v5615
          %v5710 = vunpack.c.l.b16 %v5616
          %v5711 = vunpack.c.l.b16 %v5617
          %v5712 = vunpack.c.l.b16 %v5618
          %v5713 = vpack.c.b16 %v5706, %v5705
          %v5714 = vpack.c.b16 %v5708, %v5707
          %v5715 = vpack.c.b16 %v5710, %v5709
          %v5716 = vpack.c.b16 %v5712, %v5711
          %v5718 = vsel %vm569, %v5713, 0
          %v5721 = vsel %vm569, %v5714, 0
          %v5724 = vsel %vm569, %v5715, 0
          %v5727 = vsel %vm569, %v5716, 0
          %5729 = vmatpush.bf16.msra.mxu0 0
          %5730 = vmatpush.bf16.msra.mxu0 0
          %5731 = vmatpush.bf16.msra.mxu0 0
          %5732 = vmatpush.bf16.msra.mxu0 0
          %5733 = vmatpush.bf16.msra.mxu0 0
          %5734 = vmatpush.bf16.msra.mxu0 0
          %5735 = vmatpush.bf16.msra.mxu0 %v5655
          %5736 = vmatpush.bf16.msra.mxu0 %v5653
          %5737 = vmatmul.bf16.gmra.mxu0 %v5718
          %v5738 = vpop.f32.mrf.mxu0
          %v5739 = vadd.f32 %v5660, %v5738
          %v5740 = vpop.f32.mrf.mxu0
          %v5741 = vadd.f32 %v5665, %v5740
          %5742 = vmatmul.bf16.gmra.mxu0 %v5721
          %v5743 = vpop.f32.mrf.mxu0
          %v5744 = vadd.f32 %v5670, %v5743
          %v5745 = vpop.f32.mrf.mxu0
          %v5746 = vadd.f32 %v5675, %v5745
          %5747 = vmatmul.bf16.gmra.mxu0 %v5724
          %v5748 = vpop.f32.mrf.mxu0
          %v5749 = vadd.f32 %v5680, %v5748
          %v5750 = vpop.f32.mrf.mxu0
          %v5751 = vadd.f32 %v5685, %v5750
          %5752 = vmatmul.bf16.gmra.mxu0 %v5727
          %v5753 = vpop.f32.mrf.mxu0
          %v5754 = vadd.f32 %v5690, %v5753
          %v5755 = vpop.f32.mrf.mxu0
          %v5756 = vadd.f32 %v5695, %v5755
          %5757 = vdwg.mxu0
          %5758 = vmatpush.bf16.msra.mxu0 0
          %5759 = vmatpush.bf16.msra.mxu0 0
          %5760 = vmatpush.bf16.msra.mxu0 0
          %5761 = vmatpush.bf16.msra.mxu0 0
          %5762 = vmatpush.bf16.msra.mxu0 0
          %5763 = vmatpush.bf16.msra.mxu0 0
          %5764 = vmatpush.bf16.msra.mxu0 %v5656
          %5765 = vmatpush.bf16.msra.mxu0 %v5654
          %5766 = vmatmul.bf16.gmra.mxu0 %v5718
          %v5767 = vpop.f32.mrf.mxu0
          %v5768 = vadd.f32 %v5660, %v5767
          %v5769 = vpop.f32.mrf.mxu0
          %v5770 = vadd.f32 %v5665, %v5769
          %5771 = vmatmul.bf16.gmra.mxu0 %v5721
          %v5772 = vpop.f32.mrf.mxu0
          %v5773 = vadd.f32 %v5670, %v5772
          %v5774 = vpop.f32.mrf.mxu0
          %v5775 = vadd.f32 %v5675, %v5774
          %5776 = vmatmul.bf16.gmra.mxu0 %v5724
          %v5777 = vpop.f32.mrf.mxu0
          %v5778 = vadd.f32 %v5680, %v5777
          %v5779 = vpop.f32.mrf.mxu0
          %v5780 = vadd.f32 %v5685, %v5779
          %5781 = vmatmul.bf16.gmra.mxu0 %v5727
          %v5782 = vpop.f32.mrf.mxu0
          %v5783 = vadd.f32 %v5690, %v5782
          %v5784 = vpop.f32.mrf.mxu0
          %v5785 = vadd.f32 %v5695, %v5784
          %5786 = vdwg.mxu0
          %v5787 = vtanh.pop %v5739
          %v5788 = vtanh.pop %v5768
          %v5789 = vtanh.pop %v5741
          %v5790 = vtanh.pop %v5770
          %v5791 = vtanh.pop %v5744
          %v5792 = vtanh.pop %v5773
          %v5793 = vtanh.pop %v5746
          %v5794 = vtanh.pop %v5775
          %v5795 = vxor.u32 %v5749, 2147483648
          %v5796 = vxor.u32 %v5778, 2147483648
          %v5797 = vxor.u32 %v5751, 2147483648
          %v5798 = vxor.u32 %v5780, 2147483648
          %v5799 = vxor.u32 %v5754, 2147483648
          %v5800 = vxor.u32 %v5783, 2147483648
          %v5801 = vxor.u32 %v5756, 2147483648
          %v5802 = vxor.u32 %v5785, 2147483648
          %v5803 = vmul.f32 %v5795, 1.442695
          %v5804 = vpow.pop %v5803
          %v5805 = vmul.f32 %v5796, 1.442695
          %v5806 = vpow.pop %v5805
          %v5807 = vmul.f32 %v5797, 1.442695
          %v5808 = vpow.pop %v5807
          %v5809 = vmul.f32 %v5798, 1.442695
          %v5810 = vpow.pop %v5809
          %v5811 = vmul.f32 %v5799, 1.442695
          %v5812 = vpow.pop %v5811
          %v5813 = vmul.f32 %v5800, 1.442695
          %v5814 = vpow.pop %v5813
          %v5815 = vmul.f32 %v5801, 1.442695
          %v5816 = vpow.pop %v5815
          %v5817 = vmul.f32 %v5802, 1.442695
          %v5818 = vpow.pop %v5817
          %v5819 = vadd.f32 %v5804, 1.0
          %v5820 = vadd.f32 %v5806, 1.0
          %v5821 = vadd.f32 %v5808, 1.0
          %v5822 = vadd.f32 %v5810, 1.0
          %v5823 = vadd.f32 %v5812, 1.0
          %v5824 = vadd.f32 %v5814, 1.0
          %v5825 = vadd.f32 %v5816, 1.0
          %v5826 = vadd.f32 %v5818, 1.0
          %v5827 = vrcp.pop %v5819
          %v5828 = vmul.f32 %v5819, %v5827
          %v5829 = vsub.f32 1.0, %v5828
          %v5830 = vmul.f32 %v5827, %v5829
          %v5831 = vadd.f32 %v5827, %v5830
          %vm5832 = vweird.f32 %v5819
          %vm5833 = vweird.f32 %v5827
          %vm5834 = vmor %vm5832, %vm5833
          %v5835 = vsel %vm5834, %v5827, %v5831
          %v5836 = vand.u32 2147483647, %v5819
          %vm5837 = vcmp.eq.f32.partialorder %v5836, 8.507059e+37
          %v5838 = vand.u32 %v5819, 2147483648
          %v5839 = vor.u32 1.1754944e-38, %v5838
          %v5840 = vsel %vm5837, %v5839, %v5835
          %v5841 = vmul.f32 1.0, %v5840
          %v5842 = vrcp.pop %v5820
          %v5843 = vmul.f32 %v5820, %v5842
          %v5844 = vsub.f32 1.0, %v5843
          %v5845 = vmul.f32 %v5842, %v5844
          %v5846 = vadd.f32 %v5842, %v5845
          %vm5847 = vweird.f32 %v5820
          %vm5848 = vweird.f32 %v5842
          %vm5849 = vmor %vm5847, %vm5848
          %v5850 = vsel %vm5849, %v5842, %v5846
          %v5851 = vand.u32 2147483647, %v5820
          %vm5852 = vcmp.eq.f32.partialorder %v5851, 8.507059e+37
          %v5853 = vand.u32 %v5820, 2147483648
          %v5854 = vor.u32 1.1754944e-38, %v5853
          %v5855 = vsel %vm5852, %v5854, %v5850
          %v5856 = vmul.f32 1.0, %v5855
          %v5857 = vrcp.pop %v5821
          %v5858 = vmul.f32 %v5821, %v5857
          %v5859 = vsub.f32 1.0, %v5858
          %v5860 = vmul.f32 %v5857, %v5859
          %v5861 = vadd.f32 %v5857, %v5860
          %vm5862 = vweird.f32 %v5821
          %vm5863 = vweird.f32 %v5857
          %vm5864 = vmor %vm5862, %vm5863
          %v5865 = vsel %vm5864, %v5857, %v5861
          %v5866 = vand.u32 2147483647, %v5821
          %vm5867 = vcmp.eq.f32.partialorder %v5866, 8.507059e+37
          %v5868 = vand.u32 %v5821, 2147483648
          %v5869 = vor.u32 1.1754944e-38, %v5868
          %v5870 = vsel %vm5867, %v5869, %v5865
          %v5871 = vmul.f32 1.0, %v5870
          %v5872 = vrcp.pop %v5822
          %v5873 = vmul.f32 %v5822, %v5872
          %v5874 = vsub.f32 1.0, %v5873
          %v5875 = vmul.f32 %v5872, %v5874
          %v5876 = vadd.f32 %v5872, %v5875
          %vm5877 = vweird.f32 %v5822
          %vm5878 = vweird.f32 %v5872
          %vm5879 = vmor %vm5877, %vm5878
          %v5880 = vsel %vm5879, %v5872, %v5876
          %v5881 = vand.u32 2147483647, %v5822
          %vm5882 = vcmp.eq.f32.partialorder %v5881, 8.507059e+37
          %v5883 = vand.u32 %v5822, 2147483648
          %v5884 = vor.u32 1.1754944e-38, %v5883
          %v5885 = vsel %vm5882, %v5884, %v5880
          %v5886 = vmul.f32 1.0, %v5885
          %v5887 = vrcp.pop %v5823
          %v5888 = vmul.f32 %v5823, %v5887
          %v5889 = vsub.f32 1.0, %v5888
          %v5890 = vmul.f32 %v5887, %v5889
          %v5891 = vadd.f32 %v5887, %v5890
          %vm5892 = vweird.f32 %v5823
          %vm5893 = vweird.f32 %v5887
          %vm5894 = vmor %vm5892, %vm5893
          %v5895 = vsel %vm5894, %v5887, %v5891
          %v5896 = vand.u32 2147483647, %v5823
          %vm5897 = vcmp.eq.f32.partialorder %v5896, 8.507059e+37
          %v5898 = vand.u32 %v5823, 2147483648
          %v5899 = vor.u32 1.1754944e-38, %v5898
          %v5900 = vsel %vm5897, %v5899, %v5895
          %v5901 = vmul.f32 1.0, %v5900
          %v5902 = vrcp.pop %v5824
          %v5903 = vmul.f32 %v5824, %v5902
          %v5904 = vsub.f32 1.0, %v5903
          %v5905 = vmul.f32 %v5902, %v5904
          %v5906 = vadd.f32 %v5902, %v5905
          %vm5907 = vweird.f32 %v5824
          %vm5908 = vweird.f32 %v5902
          %vm5909 = vmor %vm5907, %vm5908
          %v5910 = vsel %vm5909, %v5902, %v5906
          %v5911 = vand.u32 2147483647, %v5824
          %vm5912 = vcmp.eq.f32.partialorder %v5911, 8.507059e+37
          %v5913 = vand.u32 %v5824, 2147483648
          %v5914 = vor.u32 1.1754944e-38, %v5913
          %v5915 = vsel %vm5912, %v5914, %v5910
          %v5916 = vmul.f32 1.0, %v5915
          %v5917 = vrcp.pop %v5825
          %v5918 = vmul.f32 %v5825, %v5917
          %v5919 = vsub.f32 1.0, %v5918
          %v5920 = vmul.f32 %v5917, %v5919
          %v5921 = vadd.f32 %v5917, %v5920
          %vm5922 = vweird.f32 %v5825
          %vm5923 = vweird.f32 %v5917
          %vm5924 = vmor %vm5922, %vm5923
          %v5925 = vsel %vm5924, %v5917, %v5921
          %v5926 = vand.u32 2147483647, %v5825
          %vm5927 = vcmp.eq.f32.partialorder %v5926, 8.507059e+37
          %v5928 = vand.u32 %v5825, 2147483648
          %v5929 = vor.u32 1.1754944e-38, %v5928
          %v5930 = vsel %vm5927, %v5929, %v5925
          %v5931 = vmul.f32 1.0, %v5930
          %v5932 = vrcp.pop %v5826
          %v5933 = vmul.f32 %v5826, %v5932
          %v5934 = vsub.f32 1.0, %v5933
          %v5935 = vmul.f32 %v5932, %v5934
          %v5936 = vadd.f32 %v5932, %v5935
          %vm5937 = vweird.f32 %v5826
          %vm5938 = vweird.f32 %v5932
          %vm5939 = vmor %vm5937, %vm5938
          %v5940 = vsel %vm5939, %v5932, %v5936
          %v5941 = vand.u32 2147483647, %v5826
          %vm5942 = vcmp.eq.f32.partialorder %v5941, 8.507059e+37
          %v5943 = vand.u32 %v5826, 2147483648
          %v5944 = vor.u32 1.1754944e-38, %v5943
          %v5945 = vsel %vm5942, %v5944, %v5940
          %v5946 = vmul.f32 1.0, %v5945
          %v5947 = vmul.f32 %v5787, %v5841
          %v5948 = vmul.f32 %v5788, %v5856
          %v5949 = vmul.f32 %v5789, %v5871
          %v5950 = vmul.f32 %v5790, %v5886
          %v5951 = vmul.f32 %v5791, %v5901
          %v5952 = vmul.f32 %v5792, %v5916
          %v5953 = vmul.f32 %v5793, %v5931
          %v5954 = vmul.f32 %v5794, %v5946
          %v5955 = vpack.c.bf16 %v5949, %v5947
          %v5956 = vpack.c.bf16 %v5950, %v5948
          %v5957 = vpack.c.bf16 %v5953, %v5951
          %v5958 = vpack.c.bf16 %v5954, %v5952
          %5960 = vset.pattern.permute.xlu0 0
          %5961 = vperm.xlu0 %5960, %v5636
          %v5962 = vpop.permute.xlu0 %5961
          %5965 = vset.pattern.permute.xlu0 0
          %5966 = vperm.xlu0 %5965, %v5637
          %v5967 = vpop.permute.xlu0 %5966
          %v5971 = vunpack.c.l.b16 %v5632
          %v5972 = vunpack.c.l.b16 %v5633
          %v5973 = vpack.c.b16 %v5972, %v5971
          %v5975 = vsel %vm569, %v5973, 0
          %5977 = vmatpush.bf16.msra.mxu0 0
          %5978 = vmatpush.bf16.msra.mxu0 0
          %5979 = vmatpush.bf16.msra.mxu0 0
          %5980 = vmatpush.bf16.msra.mxu0 0
          %5981 = vmatpush.bf16.msra.mxu0 0
          %5982 = vmatpush.bf16.msra.mxu0 0
          %5983 = vmatpush.bf16.msra.mxu0 %v5957
          %5984 = vmatpush.bf16.msra.mxu0 %v5955
          %5985 = vmatmul.bf16.gmra.mxu0 %v5975
          %v5986 = vpop.f32.mrf.mxu0
          %v5987 = vadd.f32 %v5962, %v5986
          %v5988 = vpop.f32.mrf.mxu0
          %v5989 = vadd.f32 %v5967, %v5988
          %5990 = vdwg.mxu0
          %5991 = vmatpush.bf16.msra.mxu0 0
          %5992 = vmatpush.bf16.msra.mxu0 0
          %5993 = vmatpush.bf16.msra.mxu0 0
          %5994 = vmatpush.bf16.msra.mxu0 0
          %5995 = vmatpush.bf16.msra.mxu0 0
          %5996 = vmatpush.bf16.msra.mxu0 0
          %5997 = vmatpush.bf16.msra.mxu0 %v5958
          %5998 = vmatpush.bf16.msra.mxu0 %v5956
          %5999 = vmatmul.bf16.gmra.mxu0 %v5975
          %v6000 = vpop.f32.mrf.mxu0
          %v6001 = vadd.f32 %v5962, %v6000
          %v6002 = vpop.f32.mrf.mxu0
          %v6003 = vadd.f32 %v5967, %v6002
          %6004 = vdwg.mxu0
          %v6005 = vmax.f32 %v5987, 0.0
          %v6006 = vmax.f32 %v6001, 0.0
          %v6007 = vmax.f32 %v5989, 0.0
          %v6008 = vmax.f32 %v6003, 0.0
          %v6009 = vld [vmem:[#allocation3] sm:$0xff]
          %v6010 = vld [vmem:[#allocation3 + $0x8] sm:$0xff]
          %v6011 = vld [vmem:[#allocation3 + $0x10] sm:$0xff]
          %v6012 = vld [vmem:[#allocation3 + $0x18] sm:$0xff]
          %v6013 = vadd.f32 %v6009, %v6005
          %v6014 = vadd.f32 %v6010, %v6006
          %v6015 = vadd.f32 %v6011, %v6007
          %v6016 = vadd.f32 %v6012, %v6008
          %6017 = vst [vmem:[#allocation3] sm:$0xff] %v6013
          %6018 = vst [vmem:[#allocation3 + $0x8] sm:$0xff] %v6014
          %6019 = vst [vmem:[#allocation3 + $0x10] sm:$0xff] %v6015
          %6020 = vst [vmem:[#allocation3 + $0x18] sm:$0xff] %v6016
          %v6021 = vld [vmem:[%s471 + $0x20] sm:$0xff]
          %v6022 = vld [vmem:[%s471 + $0x28] sm:$0xff]
          %v6023 = vld [vmem:[%s471 + $0x70] sm:$0xff]
          %v6024 = vld [vmem:[%s471 + $0x78] sm:$0xff]
          %v6025 = vadd.f32 %v6021, %v6005
          %v6026 = vadd.f32 %v6022, %v6006
          %v6027 = vadd.f32 %v6023, %v6007
          %v6028 = vadd.f32 %v6024, %v6008
          %v6029 = vpack.c.bf16 %v6027, %v6025
          %v6030 = vpack.c.bf16 %v6028, %v6026
          %6032 = vset.pattern.permute.xlu0 0
          %6033 = vperm.xlu0 %6032, %v5643
          %v6034 = vpop.permute.xlu0 %6033
          %6037 = vset.pattern.permute.xlu0 0
          %6038 = vperm.xlu0 %6037, %v5644
          %v6039 = vpop.permute.xlu0 %6038
          %v6043 = vunpack.c.l.b16 %v5640
          %v6044 = vunpack.c.l.b16 %v5641
          %v6045 = vpack.c.b16 %v6044, %v6043
          %v6047 = vsel %vm895, %v6045, 0
          %6049 = vmatpush.bf16.msra.mxu0 0
          %6050 = vmatpush.bf16.msra.mxu0 0
          %6051 = vmatpush.bf16.msra.mxu0 0
          %6052 = vmatpush.bf16.msra.mxu0 0
          %6053 = vmatpush.bf16.msra.mxu0 0
          %6054 = vmatpush.bf16.msra.mxu0 0
          %6055 = vmatpush.bf16.msra.mxu0 0
          %6056 = vmatpush.bf16.msra.mxu0 %v6029
          %6057 = vmatmul.bf16.gmra.mxu0 %v6047
          %v6058 = vpop.f32.mrf.mxu0
          %v6059 = vadd.f32 %v6034, %v6058
          %v6060 = vpop.f32.mrf.mxu0
          %v6061 = vadd.f32 %v6039, %v6060
          %6062 = vdwg.mxu0
          %6063 = vmatpush.bf16.msra.mxu0 0
          %6064 = vmatpush.bf16.msra.mxu0 0
          %6065 = vmatpush.bf16.msra.mxu0 0
          %6066 = vmatpush.bf16.msra.mxu0 0
          %6067 = vmatpush.bf16.msra.mxu0 0
          %6068 = vmatpush.bf16.msra.mxu0 0
          %6069 = vmatpush.bf16.msra.mxu0 0
          %6070 = vmatpush.bf16.msra.mxu0 %v6030
          %6071 = vmatmul.bf16.gmra.mxu0 %v6047
          %v6072 = vpop.f32.mrf.mxu0
          %v6073 = vadd.f32 %v6034, %v6072
          %v6074 = vpop.f32.mrf.mxu0
          %v6075 = vadd.f32 %v6039, %v6074
          %6076 = vdwg.mxu0
          %v6077 = vmax.f32 %v6059, 0.0
          %v6078 = vmax.f32 %v6073, 0.0
          %v6079 = vmax.f32 %v6061, 0.0
          %v6080 = vmax.f32 %v6075, 0.0
          %6081 = vst [vmem:[%s933 + $0x20] sm:$0xff] %v6077
          %6082 = vst [vmem:[%s933 + $0x28] sm:$0xff] %v6078
          %6083 = vst [vmem:[%s933 + $0x70] sm:$0xff] %v6079
          %6084 = vst [vmem:[%s933 + $0x78] sm:$0xff] %v6080
        $region61: #{tpu_custom_call.1} parent=55 // loop_footer
          %s417 = sadd.s32 1, %s413
        $region62: #{tpu_custom_call.1} parent=55 // loop_footer_branch
          %412 = sbr.rel target = $region58
        $region63: #{tpu_custom_call.1} parent=55 // loop_exit
          _
        %v6085 = vld [vmem:[#allocation3] sm:$0xff]
        %v6086 = vld [vmem:[#allocation3 + $0x8] sm:$0xff]
        %v6087 = vld [vmem:[#allocation3 + $0x10] sm:$0xff]
        %v6088 = vld [vmem:[#allocation3 + $0x18] sm:$0xff]
        %v6089 = vmax.f32 %v6085, 0.0
        %v6090 = vmax.f32 %v6086, 0.0
        %v6091 = vmax.f32 %v6087, 0.0
        %v6092 = vmax.f32 %v6088, 0.0
        %6093 = vst [vmem:[%s323] sm:$0xff] %v6089
        %6094 = vst [vmem:[%s323 + $0x8] sm:$0xff] %v6090
        %6095 = vst [vmem:[%s323 + $0x10] sm:$0xff] %v6091
        %6096 = vst [vmem:[%s323 + $0x18] sm:$0xff] %v6092
        %s6097 = sand.u32 %s225, 1
        %s6098 = scalar_lea.sflag [#allocation5], %s6097
        %s6099 = sand.u32 %s225, 1
        %s6100 = smul.addr %s6099, 32
        %s6101 = scalar_lea.vmem [#allocation4], %s6100
        // Predicated region
        $region64: #{tpu_custom_call.1} parent=55 // pred_check
          %p6102 = pneg %p235
        $region65: #{tpu_custom_call.1} parent=55 // pred_check_branch
          %6104 = sbr.rel (%p6102) target = $region67
        $region66: #{tpu_custom_call.1} parent=55 // pred_region
          %6106 = vsyncadd %s6098, 0
          %s6107 = smul.addr %s23, 4
          %s6108 = smul.addr %s6107, 8
          %s6109 = scalar_lea.hbm %s9, %s6108
          %s6110 = sshll.u32 %s6101, 4
          %s6111 = int_to_ptr.vmem [resolvable:$true] %s6110
          %s6112 = sshll.u32 %s6109, 4
          %s6113 = int_to_ptr.hbm [resolvable:$true] %s6112
          %6118 = dma.vmem_to_hbm [thread:$0]  %s6111, 512, %s6113, %s6098, 256, 256, 16
        $region67: #{tpu_custom_call.1} parent=55 // pred_fallthru
          _
      $region56: #{tpu_custom_call.1} parent=5 // pred_fallthru
        _
      %p6119 = scmp.le.s32.totalorder 2, %s18
      // Predicated region
      $region68: #{tpu_custom_call.1} parent=5 // pred_check
        %p6120 = pneg %p6119
      $region69: #{tpu_custom_call.1} parent=5 // pred_check_branch
        %6122 = sbr.rel (%p6120) target = $region71
      $region70: #{tpu_custom_call.1} parent=5 // pred_region
        %s6123 = ssub.s32 %s18, 2
        // Predicated region
        $region72: #{tpu_custom_call.1} parent=70 // pred_check
          %p6124 = pneg %p241
        $region73: #{tpu_custom_call.1} parent=70 // pred_check_branch
          %6126 = sbr.rel (%p6124) target = $region75
        $region74: #{tpu_custom_call.1} parent=70 // pred_region
          %s6127 = sand.u32 %s226, 1
          %s6128 = scalar_lea.sflag [#allocation5], %s6127
          %s6129 = sand.u32 %s226, 1
          %s6130 = smul.addr %s6129, 32
          %s6131 = scalar_lea.vmem [#allocation4], %s6130
          %6133 = dma.done %s6128, 512
        $region75: #{tpu_custom_call.1} parent=70 // pred_fallthru
          _
      $region71: #{tpu_custom_call.1} parent=5 // pred_fallthru
        _
    $region6: #{tpu_custom_call.1} parent=1 // loop_footer
      %s22 = sadd.s32 1, %s18
    $region7: #{tpu_custom_call.1} parent=1 // loop_footer_branch
      %17 = sbr.rel target = $region3
    $region8: #{tpu_custom_call.1} parent=1 // loop_exit
      _
    %6134 = vsyncpa [#allocation5], 1
    %s6135 = scalar_lea.sflag [#allocation5], 1
    %6136 = vsyncpa %s6135, 1

</llo_original>
